<compile_context>
chip_gen: v7x
topology: tpu7x:2x2x1
jax: 0.10.0
libtpu: 0.0.40
codegen_flags: <defaults>
</compile_context>

<pallas_src>
import functools

import jax
import jax.numpy as jnp
from jax.experimental import pallas as pl
from jax.experimental.pallas import tpu as pltpu


def _min_grid_steps() -> int:
    """v7x has 2 TensorCores per chip -> give the 'parallel' batch axis at
    least 2 steps so both get work; v5e/v6e have 1 TC -> fewest steps wins."""
    try:
        kind = jax.devices()[0].device_kind.lower()
    except Exception:
        return 1
    return 2 if "7" in kind else 1


def _choose_batch_tile(B: int, cap: int, min_steps: int) -> int:
    """Pick a batch tile that divides B so no host-side pad/slice is needed.

    Legality: x block is (TB, CLI) -> TB % 8 == 0 unless TB == B; the output
    block is (1, TB) of a (1, B) array -> TB % 128 == 0 unless TB == B.
    Preference: largest legal TB <= cap that still yields >= min_steps steps.
    """
    cap = max(128, cap - cap % 128)
    if min_steps <= 1 and B <= cap:
        return B                                   # one full-array block
    best = 0
    for t in range(128, min(B, cap) + 1, 128):
        if B % t == 0 and B // t >= min_steps:
            best = t
    if best:
        return best
    if B <= cap:
        return B       # no suitable divisor; single block (one idle TC on v7x)
    return cap         # awkward huge B: fall back to a padded final tile


def _mlp_kernel(x_ref, w1_ref, b1_ref, w2_ref, b2_ref, w3_ref, b3_ref, o_ref,
                *, apply_sigmoid: bool):
    cdtype = x_ref.dtype
    # f32 operands: HIGHEST so the MXU actually delivers f32-grade accuracy
    # (DEFAULT would silently run truncated-bf16 passes).  bf16 operands:
    # DEFAULT is the native single-pass MXU rate.
    prec = (jax.lax.Precision.HIGHEST if cdtype == jnp.float32
            else jax.lax.Precision.DEFAULT)

    # fc1 + relu  (MXU, f32 accumulation; biases stay f32)
    h = jnp.dot(x_ref[...], w1_ref[...],
                preferred_element_type=jnp.float32, precision=prec)
    h = jnp.maximum(h + b1_ref[...], 0.0)

    # fc2 + relu  (MXU)
    h = jnp.dot(h.astype(cdtype), w2_ref[...],
                preferred_element_type=jnp.float32, precision=prec)
    h = jnp.maximum(h + b2_ref[...], 0.0)

    # fc3: N=1 "matmul" as VPU multiply + XLU lane reduction (no MXU
    # push/drain for a single output column).  w3_ref is a (1, HID) f32 row;
    # b3 is an SMEM scalar.  Result is relaid out to a lane-dense (1, TB) row
    # (one small XLU op) so the store and the sigmoid are lane-major.
    y = jnp.sum(h * w3_ref[...], axis=-1)          # (TB,)
    y = jnp.reshape(y, (1, -1)) + b3_ref[0]        # (1, TB) lane-dense row
    if apply_sigmoid:
        y = jax.nn.sigmoid(y)
    o_ref[...] = y.astype(o_ref.dtype)


def mlp_forward(inputs, params, *, apply_sigmoid: bool, block_b: int = 2048,
                compute_dtype=jnp.float32):
    """inputs: sequence of arrays; last one is (B, cli_size) float32.

    params = (w1 (CLI,HID), b1 (1,HID), w2 (HID,HID), b2 (1,HID),
              w3_row (1,HID), b3 (1,))  -- w3 stored as a row, b3 as a scalar.

    compute_dtype: jnp.float32 (Precision.HIGHEST matmuls) or jnp.bfloat16
    (native MXU rate, half the x / weight DMA bytes; accumulation stays f32).
    """
    x = inputs[-1]
    w1, b1, w2, b2, w3_row, b3 = params
    B, CLI = x.shape
    HID = w1.shape[1]

    cdtype = jnp.dtype(compute_dtype)
    # Cast matmul operands once, wrapper-side; biases / fc3 row stay f32.
    if x.dtype != cdtype:
        x = x.astype(cdtype)
    w1 = w1.astype(cdtype)
    w2 = w2.astype(cdtype)

    TB = _choose_batch_tile(B, block_b, _min_grid_steps())
    pad = (-B) % TB
    if pad:  # only hit for awkward B with no 128-multiple divisor <= cap
        x = jnp.pad(x, ((0, pad), (0, 0)))
    Bp = B + pad
    grid = (Bp // TB,)

    kernel = functools.partial(_mlp_kernel, apply_sigmoid=apply_sigmoid)

    def resident(shape):
        # Constant block index across the grid -> DMA'd once, VMEM-resident.
        return pl.BlockSpec(shape, lambda i: (0, 0),
                            memory_space=pltpu.MemorySpace.VMEM)

    in_specs = [
        # x: batch-tiled, pipelined/double-buffered by Pallas.
        pl.BlockSpec((TB, CLI), lambda i: (i, 0),
                     memory_space=pltpu.MemorySpace.VMEM),
        resident((CLI, HID)),            # w1
        resident((1, HID)),              # b1
        resident((HID, HID)),            # w2
        resident((1, HID)),              # b2
        resident((1, HID)),              # w3 row (f32)
        pl.BlockSpec(memory_space=pltpu.MemorySpace.SMEM),   # b3 scalar
    ]
    # Lane-dense output: one (1, TB) row of a (1, Bp) array per grid step.
    out_spec = pl.BlockSpec((1, TB), lambda i: (0, i),
                            memory_space=pltpu.MemorySpace.VMEM)

    out = pl.pallas_call(
        kernel,
        out_shape=jax.ShapeDtypeStruct((1, Bp), jnp.float32),
        grid=grid,
        in_specs=in_specs,
        out_specs=out_spec,
        compiler_params=pltpu.CompilerParams(
            dimension_semantics=("parallel",)),
    )(x, w1, b1, w2, b2, w3_row, b3)

    out = out[0, :B] if pad else out[0]
    return out.reshape(B, 1)   # match the PyTorch module's (B, 1) output


def init_params(key, cli_size, hidden_dim):
    """Deterministic init mimicking nn.Linear's U(-1/sqrt(fan_in), 1/sqrt(fan_in)).

    Weights are stored as (in_features, out_features); fc3's weight is kept as
    a (1, hidden_dim) row and its bias as a (1,) scalar for the kernel."""
    ks = jax.random.split(key, 6)

    def lin(kw, kb, fan_in, fan_out):
        bound = 1.0 / jnp.sqrt(fan_in)
        w = jax.random.uniform(kw, (fan_in, fan_out), jnp.float32, -bound, bound)
        b = jax.random.uniform(kb, (1, fan_out), jnp.float32, -bound, bound)
        return w, b

    w1, b1 = lin(ks[0], ks[1], cli_size, hidden_dim)
    w2, b2 = lin(ks[2], ks[3], hidden_dim, hidden_dim)
    w3, b3 = lin(ks[4], ks[5], hidden_dim, 1)
    w3_row = w3.T                      # (1, hidden_dim)
    b3_scalar = b3.reshape((1,))       # (1,) for SMEM
    return (w1, b1, w2, b2, w3_row, b3_scalar)


def mlp_reference(inputs, params, *, apply_sigmoid: bool,
                  compute_dtype=jnp.float32):
    """Pure-JAX reference with the same cast/precision points as the kernel."""
    x = inputs[-1]
    w1, b1, w2, b2, w3_row, b3 = params
    cdtype = jnp.dtype(compute_dtype)
    prec = (jax.lax.Precision.HIGHEST if cdtype == jnp.dtype(jnp.float32)
            else jax.lax.Precision.DEFAULT)
    h = jnp.dot(x.astype(cdtype), w1.astype(cdtype),
                preferred_element_type=jnp.float32, precision=prec)
    h = jax.nn.relu(h + b1)
    h = jnp.dot(h.astype(cdtype), w2.astype(cdtype),
                preferred_element_type=jnp.float32, precision=prec)
    h = jax.nn.relu(h + b2)
    y = jnp.sum(h * w3_row, axis=-1, keepdims=True) + b3   # (B, 1)
    return jax.nn.sigmoid(y) if apply_sigmoid else y


if __name__ == "__main__":
    # Small shapes consistent with the module's forward:
    #   config['cli_size'] = 32, hidden_dim = 128, batch = 256.
    # Tile selection is generation-aware: one (256, 32) tile on v5e/v6e,
    # two (128, 32) tiles on v7x so both TensorCores get work.
    B, CLI, HID = 256, 32, 128
    # config['class_weight'] is None  -> sigmoid branch is taken
    apply_sigmoid = True

    key = jax.random.PRNGKey(0)
    k_x, k_p = jax.random.split(key)

    # `inputs` is a tuple; the model only uses inputs[-1].
    x = jax.random.normal(k_x, (B, CLI), jnp.float32)
    inputs = (x,)
    params = init_params(k_p, CLI, HID)

    # f32 path (Precision.HIGHEST on the MXU): tight tolerance vs f32 ref.
    out = jax.block_until_ready(
        mlp_forward(inputs, params, apply_sigmoid=apply_sigmoid))
    ref = mlp_reference(inputs, params, apply_sigmoid=apply_sigmoid)
    assert out.shape == (B, 1), out.shape
    assert jnp.allclose(out, ref, atol=1e-5, rtol=1e-5), (
        f"f32 path max abs err {jnp.max(jnp.abs(out - ref))}")

    # bf16 matmul path (native MXU rate, half the x/weight DMA bytes),
    # compared against a reference that casts at the same points.
    out_bf16 = jax.block_until_ready(
        mlp_forward(inputs, params, apply_sigmoid=apply_sigmoid,
                    compute_dtype=jnp.bfloat16))
    ref_bf16 = mlp_reference(inputs, params, apply_sigmoid=apply_sigmoid,
                             compute_dtype=jnp.bfloat16)
    assert out_bf16.shape == (B, 1), out_bf16.shape
    assert jnp.allclose(out_bf16, ref_bf16, atol=5e-3, rtol=5e-3), (
        f"bf16 path max abs err {jnp.max(jnp.abs(out_bf16 - ref_bf16))}")

    print("KERNEL_OK")
</pallas_src>

<mosaic_0001>
module attributes {stable_mosaic.version = 11 : i64} {
  func.func @_mlp_kernel(%arg0: i32, %arg1: memref<256x32xf32, #tpu.memory_space<vmem>>, %arg2: memref<32x128xf32, #tpu.memory_space<vmem>>, %arg3: memref<1x128xf32, #tpu.memory_space<vmem>>, %arg4: memref<128x128xf32, #tpu.memory_space<vmem>>, %arg5: memref<1x128xf32, #tpu.memory_space<vmem>>, %arg6: memref<1x128xf32, #tpu.memory_space<vmem>>, %arg7: memref<1xf32, #tpu.memory_space<smem>>, %arg8: memref<1x256xf32, #tpu.memory_space<vmem>>) attributes {dimension_semantics = [#tpu.dimension_semantics<parallel>], iteration_bounds = array<i64: 1>, scalar_prefetch = 0 : i64, scratch_operands = 0 : i64, tpu.core_type = #tpu.core_type<tc>, window_params = [{transform_indices = @transform_0, window_bounds = array<i64: 256, 32>}, {pipeline_mode = #tpu.pipeline_mode<synchronous>, transform_indices = @transform_1, window_bounds = array<i64: 32, 128>}, {pipeline_mode = #tpu.pipeline_mode<synchronous>, transform_indices = @transform_2, window_bounds = array<i64: 1, 128>}, {pipeline_mode = #tpu.pipeline_mode<synchronous>, transform_indices = @transform_3, window_bounds = array<i64: 128, 128>}, {pipeline_mode = #tpu.pipeline_mode<synchronous>, transform_indices = @transform_4, window_bounds = array<i64: 1, 128>}, {pipeline_mode = #tpu.pipeline_mode<synchronous>, transform_indices = @transform_5, window_bounds = array<i64: 1, 128>}, {transform_indices = @transform_6, window_bounds = array<i64: 1>}, {transform_indices = @transform_7, window_bounds = array<i64: 1, 256>}]} {
    %c0 = arith.constant 0 : index
    %c0_0 = arith.constant 0 : index
    %0 = vector.load %arg1[%c0, %c0_0] : memref<256x32xf32, #tpu.memory_space<vmem>>, vector<256x32xf32>
    %c0_1 = arith.constant 0 : index
    %c0_2 = arith.constant 0 : index
    %1 = vector.load %arg2[%c0_1, %c0_2] : memref<32x128xf32, #tpu.memory_space<vmem>>, vector<32x128xf32>
    %cst = arith.constant dense<0.000000e+00> : vector<256x128xf32>
    %2 = tpu.matmul %0, %1, %cst {dimension_numbers = #tpu.dot_dimension_numbers<[1], [0], [0], [1], [0, 0, 1, 1], [], []>, precision = #tpu.contract_precision<fp32>} : vector<256x32xf32>, vector<32x128xf32>, vector<256x128xf32> -> vector<256x128xf32>
    %c0_3 = arith.constant 0 : index
    %c0_4 = arith.constant 0 : index
    %3 = vector.load %arg3[%c0_3, %c0_4] : memref<1x128xf32, #tpu.memory_space<vmem>>, vector<1x128xf32>
    %4 = vector.broadcast %3 : vector<1x128xf32> to vector<256x128xf32>
    %5 = arith.addf %2, %4 : vector<256x128xf32>
    %cst_5 = arith.constant 0.000000e+00 : f32
    %6 = vector.broadcast %cst_5 : f32 to vector<256x128xf32>
    %7 = arith.maximumf %5, %6 : vector<256x128xf32>
    %c0_6 = arith.constant 0 : index
    %c0_7 = arith.constant 0 : index
    %8 = vector.load %arg4[%c0_6, %c0_7] : memref<128x128xf32, #tpu.memory_space<vmem>>, vector<128x128xf32>
    %cst_8 = arith.constant dense<0.000000e+00> : vector<256x128xf32>
    %9 = tpu.matmul %7, %8, %cst_8 {dimension_numbers = #tpu.dot_dimension_numbers<[1], [0], [0], [1], [0, 0, 1, 1], [], []>, precision = #tpu.contract_precision<fp32>} : vector<256x128xf32>, vector<128x128xf32>, vector<256x128xf32> -> vector<256x128xf32>
    %c0_9 = arith.constant 0 : index
    %c0_10 = arith.constant 0 : index
    %10 = vector.load %arg5[%c0_9, %c0_10] : memref<1x128xf32, #tpu.memory_space<vmem>>, vector<1x128xf32>
    %11 = vector.broadcast %10 : vector<1x128xf32> to vector<256x128xf32>
    %12 = arith.addf %9, %11 : vector<256x128xf32>
    %cst_11 = arith.constant 0.000000e+00 : f32
    %13 = vector.broadcast %cst_11 : f32 to vector<256x128xf32>
    %14 = arith.maximumf %12, %13 : vector<256x128xf32>
    %c0_12 = arith.constant 0 : index
    %c0_13 = arith.constant 0 : index
    %15 = vector.load %arg6[%c0_12, %c0_13] : memref<1x128xf32, #tpu.memory_space<vmem>>, vector<1x128xf32>
    %16 = vector.broadcast %15 : vector<1x128xf32> to vector<256x128xf32>
    %17 = arith.mulf %14, %16 : vector<256x128xf32>
    %cst_14 = arith.constant dense<0.000000e+00> : vector<256xf32>
    %18 = vector.multi_reduction <add>, %17, %cst_14 [1] : vector<256x128xf32> to vector<256xf32>
    %19 = vector.shape_cast %18 : vector<256xf32> to vector<1x256xf32>
    %c0_15 = arith.constant 0 : index
    %20 = memref.load %arg7[%c0_15] : memref<1xf32, #tpu.memory_space<smem>>
    %21 = vector.broadcast %20 : f32 to vector<1x256xf32>
    %22 = arith.addf %19, %21 : vector<1x256xf32>
    %23 = arith.negf %22 : vector<1x256xf32>
    %24 = math.exp %23 : vector<1x256xf32>
    %cst_16 = arith.constant 1.000000e+00 : f32
    %25 = vector.broadcast %cst_16 : f32 to vector<1x256xf32>
    %26 = arith.addf %25, %24 : vector<1x256xf32>
    %27 = arith.divf %25, %26 : vector<1x256xf32>
    %c0_17 = arith.constant 0 : index
    %c0_18 = arith.constant 0 : index
    %28 = vector.load %arg8[%c0_17, %c0_18] : memref<1x256xf32, #tpu.memory_space<vmem>>, vector<1x256xf32>
    tpu.vector_store %arg8[%c0_17, %c0_18], %27 {strides = array<i32>} : memref<1x256xf32, #tpu.memory_space<vmem>>, vector<1x256xf32>,
    return
  }
  func.func @transform_0(%arg0: i32) -> (i32, i32) {
    %c0_i32 = arith.constant 0 : i32
    %c0_i32_0 = arith.constant 0 : i32
    return %arg0, %c0_i32 : i32, i32
  }
  func.func @transform_1(%arg0: i32) -> (i32, i32) {
    %c0_i32 = arith.constant 0 : i32
    %c0_i32_0 = arith.constant 0 : i32
    %c0_i32_1 = arith.constant 0 : i32
    return %c0_i32, %c0_i32_0 : i32, i32
  }
  func.func @transform_2(%arg0: i32) -> (i32, i32) {
    %c0_i32 = arith.constant 0 : i32
    %c0_i32_0 = arith.constant 0 : i32
    %c0_i32_1 = arith.constant 0 : i32
    return %c0_i32, %c0_i32_0 : i32, i32
  }
  func.func @transform_3(%arg0: i32) -> (i32, i32) {
    %c0_i32 = arith.constant 0 : i32
    %c0_i32_0 = arith.constant 0 : i32
    %c0_i32_1 = arith.constant 0 : i32
    return %c0_i32, %c0_i32_0 : i32, i32
  }
  func.func @transform_4(%arg0: i32) -> (i32, i32) {
    %c0_i32 = arith.constant 0 : i32
    %c0_i32_0 = arith.constant 0 : i32
    %c0_i32_1 = arith.constant 0 : i32
    return %c0_i32, %c0_i32_0 : i32, i32
  }
  func.func @transform_5(%arg0: i32) -> (i32, i32) {
    %c0_i32 = arith.constant 0 : i32
    %c0_i32_0 = arith.constant 0 : i32
    %c0_i32_1 = arith.constant 0 : i32
    return %c0_i32, %c0_i32_0 : i32, i32
  }
  func.func @transform_6(%arg0: i32) -> i32 {
    %c0_i32 = arith.constant 0 : i32
    %c0_i32_0 = arith.constant 0 : i32
    return %c0_i32 : i32
  }
  func.func @transform_7(%arg0: i32) -> (i32, i32) {
    %c0_i32 = arith.constant 0 : i32
    %c0_i32_0 = arith.constant 0 : i32
    return %c0_i32, %arg0 : i32, i32
  }
}

</mosaic_0001>

<llo_original>
// kernel: tpu_custom_call.1
$region0: #{tpu_custom_call.1}
  #allocation0 [shape = 'u32[]', space=smem, size = 0x4, offset = 0x4, fixed_abs, tag = 'smem constant byte address 0x4 - core index']
  #allocation1 [shape = 'u32[144,128]{1,0:T(1,128)}', space=vmem, size = 0x12000, scoped, tag = 'internal scratch']
  #allocation2 [shape = 'f32[1]{0:T(128)S(6)}', space=smem, size = 0x200, scoped, tag = 'scoped memory for tpu_custom_call.1']
  %s0 = inlined_call_operand.vmem [shape: f32[256,32], index: 0, kind: input, shape index: {}]
  %s1 = inlined_call_operand.vmem [shape: f32[32,128], index: 1, kind: input, shape index: {}]
  %s2 = inlined_call_operand.vmem [shape: f32[1,128], index: 2, kind: input, shape index: {}]
  %s3 = inlined_call_operand.vmem [shape: f32[128,128], index: 3, kind: input, shape index: {}]
  %s4 = inlined_call_operand.vmem [shape: f32[1,128], index: 4, kind: input, shape index: {}]
  %s5 = inlined_call_operand.vmem [shape: f32[1,128], index: 5, kind: input, shape index: {}]
  %s6 = inlined_call_operand.<no memory space> [shape: f32[1], index: 6, kind: input, shape index: {}]
  %s7 = inlined_call_operand.hbm [shape: f32[1,256], index: 7, kind: output, shape index: {}]
  %s8 = sld [smem:[#allocation0]]
  $region38: #{tpu_custom_call.1} parent=0
    _
  %s10 = ssub.s32 1, %s8
  %s11 = scalar_select 0, %s10, %s8
  %12 = sst [smem:[#allocation2]] %s6
  $region1: #{tpu_custom_call.1} parent=0
    #allocation3 [shape = 'u8[1024]{0}', space=vmem, size = 0x400, scoped, tag = 'output window, operand 0, single buffered']
    #allocation4 [shape = 's32[1]{0}', space=sflag, size = 0x4, scoped, tag = 'scoped memory for tpu_custom_call.1']
    %13 = vsyncpa [#allocation4], 0
    // Predicated region
    $region2: #{tpu_custom_call.1} parent=1 // pred_check
      _
    $region3: #{tpu_custom_call.1} parent=1 // pred_check_branch
      %15 = sbr.rel (0) target = $region5
    $region4: #{tpu_custom_call.1} parent=1 // pred_region
      _
    $region5: #{tpu_custom_call.1} parent=1 // pred_fallthru
      _
    // Predicated region
    $region6: #{tpu_custom_call.1} parent=1 // pred_check
      _
    $region7: #{tpu_custom_call.1} parent=1 // pred_check_branch
      %17 = sbr.rel (0) target = $region9
    $region8: #{tpu_custom_call.1} parent=1 // pred_region
      _
    $region9: #{tpu_custom_call.1} parent=1 // pred_fallthru
      _
    // Predicated region
    $region10: #{tpu_custom_call.1} parent=1 // pred_check
      _
    $region11: #{tpu_custom_call.1} parent=1 // pred_check_branch
      %19 = sbr.rel (0) target = $region13
    $region12: #{tpu_custom_call.1} parent=1 // pred_region
      _
    $region13: #{tpu_custom_call.1} parent=1 // pred_fallthru
      _
    // Predicated region
    $region14: #{tpu_custom_call.1} parent=1 // pred_check
      _
    $region15: #{tpu_custom_call.1} parent=1 // pred_check_branch
      %21 = sbr.rel (0) target = $region17
    $region16: #{tpu_custom_call.1} parent=1 // pred_region
      _
    $region17: #{tpu_custom_call.1} parent=1 // pred_fallthru
      _
    // Predicated region
    $region18: #{tpu_custom_call.1} parent=1 // pred_check
      _
    $region19: #{tpu_custom_call.1} parent=1 // pred_check_branch
      %23 = sbr.rel (0) target = $region21
    $region20: #{tpu_custom_call.1} parent=1 // pred_region
      _
    $region21: #{tpu_custom_call.1} parent=1 // pred_fallthru
      _
    // Predicated region
    $region22: #{tpu_custom_call.1} parent=1 // pred_check
      _
    $region23: #{tpu_custom_call.1} parent=1 // pred_check_branch
      %25 = sbr.rel (0) target = $region25
    $region24: #{tpu_custom_call.1} parent=1 // pred_region
      _
    $region25: #{tpu_custom_call.1} parent=1 // pred_fallthru
      _
    // Predicated region
    $region26: #{tpu_custom_call.1} parent=1 // pred_check
      _
    $region27: #{tpu_custom_call.1} parent=1 // pred_check_branch
      %27 = sbr.rel (0) target = $region29
    $region28: #{tpu_custom_call.1} parent=1 // pred_region
      _
    $region29: #{tpu_custom_call.1} parent=1 // pred_fallthru
      _
    %v28 = vld [vmem:[%s0] sm:$0xff]
    %v29 = vld [vmem:[%s0 + $0x8] sm:$0xff]
    %v30 = vld [vmem:[%s0 + $0x10] sm:$0xff]
    %v31 = vld [vmem:[%s0 + $0x18] sm:$0xff]
    %v32 = vld [vmem:[%s0 + $0x20] sm:$0xff]
    %v33 = vld [vmem:[%s0 + $0x28] sm:$0xff]
    %v34 = vld [vmem:[%s0 + $0x30] sm:$0xff]
    %v35 = vld [vmem:[%s0 + $0x38] sm:$0xff]
    %v36 = vld [vmem:[%s0 + $0x40] sm:$0xff]
    %v37 = vld [vmem:[%s0 + $0x48] sm:$0xff]
    %v38 = vld [vmem:[%s0 + $0x50] sm:$0xff]
    %v39 = vld [vmem:[%s0 + $0x58] sm:$0xff]
    %v40 = vld [vmem:[%s0 + $0x60] sm:$0xff]
    %v41 = vld [vmem:[%s0 + $0x68] sm:$0xff]
    %v42 = vld [vmem:[%s0 + $0x70] sm:$0xff]
    %v43 = vld [vmem:[%s0 + $0x78] sm:$0xff]
    %v44 = vld [vmem:[%s0 + $0x80] sm:$0xff]
    %v45 = vld [vmem:[%s0 + $0x88] sm:$0xff]
    %v46 = vld [vmem:[%s0 + $0x90] sm:$0xff]
    %v47 = vld [vmem:[%s0 + $0x98] sm:$0xff]
    %v48 = vld [vmem:[%s0 + $0xa0] sm:$0xff]
    %v49 = vld [vmem:[%s0 + $0xa8] sm:$0xff]
    %v50 = vld [vmem:[%s0 + $0xb0] sm:$0xff]
    %v51 = vld [vmem:[%s0 + $0xb8] sm:$0xff]
    %v52 = vld [vmem:[%s0 + $0xc0] sm:$0xff]
    %v53 = vld [vmem:[%s0 + $0xc8] sm:$0xff]
    %v54 = vld [vmem:[%s0 + $0xd0] sm:$0xff]
    %v55 = vld [vmem:[%s0 + $0xd8] sm:$0xff]
    %v56 = vld [vmem:[%s0 + $0xe0] sm:$0xff]
    %v57 = vld [vmem:[%s0 + $0xe8] sm:$0xff]
    %v58 = vld [vmem:[%s0 + $0xf0] sm:$0xff]
    %v59 = vld [vmem:[%s0 + $0xf8] sm:$0xff]
    %v60 = vld [vmem:[%s1] sm:$0xff]
    %v61 = vld [vmem:[%s1 + $0x8] sm:$0xff]
    %v62 = vld [vmem:[%s1 + $0x10] sm:$0xff]
    %v63 = vld [vmem:[%s1 + $0x18] sm:$0xff]
    %v64 = vld [vmem:[%s2] sm:$0x1]
    %v66 = vlaneseq
    %v67 = vshrl.u32 %v66, 7
    %v68 = vsub.s32 0, %v67
    %v69 = vrot.slane %v64, %v68
    %vm71 = vcmask 261120
    %v73 = vsel %vm71, %v28, 0
    %v76 = vsel %vm71, %v29, 0
    %v79 = vsel %vm71, %v30, 0
    %v82 = vsel %vm71, %v31, 0
    %v85 = vsel %vm71, %v32, 0
    %v88 = vsel %vm71, %v33, 0
    %v91 = vsel %vm71, %v34, 0
    %v94 = vsel %vm71, %v35, 0
    %v97 = vsel %vm71, %v36, 0
    %v100 = vsel %vm71, %v37, 0
    %v103 = vsel %vm71, %v38, 0
    %v106 = vsel %vm71, %v39, 0
    %v109 = vsel %vm71, %v40, 0
    %v112 = vsel %vm71, %v41, 0
    %v115 = vsel %vm71, %v42, 0
    %v118 = vsel %vm71, %v43, 0
    %v121 = vsel %vm71, %v44, 0
    %v124 = vsel %vm71, %v45, 0
    %v127 = vsel %vm71, %v46, 0
    %v130 = vsel %vm71, %v47, 0
    %v133 = vsel %vm71, %v48, 0
    %v136 = vsel %vm71, %v49, 0
    %v139 = vsel %vm71, %v50, 0
    %v142 = vsel %vm71, %v51, 0
    %v145 = vsel %vm71, %v52, 0
    %v148 = vsel %vm71, %v53, 0
    %v151 = vsel %vm71, %v54, 0
    %v154 = vsel %vm71, %v55, 0
    %v157 = vsel %vm71, %v56, 0
    %v160 = vsel %vm71, %v57, 0
    %v163 = vsel %vm71, %v58, 0
    %v166 = vsel %vm71, %v59, 0
    %168 = vmatprep.subr.mxu0 0.0
    %v169 = vand.u32 %v60, 4294901760
    %170 = vmatpush1.msra.mxu0 %v169
    %171 = vmatprep.subr.mxu0 0.0
    %v172 = vand.u32 %v61, 4294901760
    %173 = vmatpush1.msra.mxu0 %v172
    %174 = vmatprep.subr.mxu0 0.0
    %v175 = vand.u32 %v62, 4294901760
    %176 = vmatpush1.msra.mxu0 %v175
    %177 = vmatprep.subr.mxu0 0.0
    %v178 = vand.u32 %v63, 4294901760
    %179 = vmatpush1.msra.mxu0 %v178
    %180 = vmatprep.subr.mxu0 0.0
    %181 = vmatpush1.msra.mxu0 0.0
    %182 = vmatprep.subr.mxu0 0.0
    %183 = vmatpush1.msra.mxu0 0.0
    %184 = vmatprep.subr.mxu0 0.0
    %185 = vmatpush1.msra.mxu0 0.0
    %186 = vmatprep.subr.mxu0 0.0
    %187 = vmatpush1.msra.mxu0 0.0
    %188 = vmatprep.subr.mxu0 0.0
    %189 = vmatpush1.msra.mxu0 0.0
    %190 = vmatprep.subr.mxu0 0.0
    %191 = vmatpush1.msra.mxu0 0.0
    %192 = vmatprep.subr.mxu0 0.0
    %193 = vmatpush1.msra.mxu0 0.0
    %194 = vmatprep.subr.mxu0 0.0
    %195 = vmatpush1.msra.mxu0 0.0
    %196 = vmatprep.subr.mxu0 0.0
    %197 = vmatpush1.msra.mxu0 0.0
    %198 = vmatprep.subr.mxu0 0.0
    %199 = vmatpush1.msra.mxu0 0.0
    %200 = vmatprep.subr.mxu0 0.0
    %201 = vmatpush1.msra.mxu0 0.0
    %202 = vmatprep.subr.mxu0 0.0
    %203 = vmatpush1.msra.mxu0 0.0
    %204 = vmatprep.subr.mxu0 0.0
    %205 = vmatpush1.msra.mxu0 0.0
    %206 = vmatprep.subr.mxu0 0.0
    %207 = vmatpush1.msra.mxu0 0.0
    %208 = vmatprep.subr.mxu0 0.0
    %209 = vmatpush1.msra.mxu0 0.0
    %210 = vmatprep.subr.mxu0 0.0
    %211 = vmatpush1.msra.mxu0 0.0
    %212 = vmatprep.subr.mxu0 0.0
    %213 = vmatpush1.msra.mxu0 0.0
    %214 = vmatprep.subr.mxu0 0.0
    %215 = vmatpush1.msra.mxu0 0.0
    %216 = vmatprep.subr.mxu0 0.0
    %217 = vmatpush1.msra.mxu0 0.0
    %218 = vmatprep.subr.mxu0 0.0
    %219 = vmatpush1.msra.mxu0 0.0
    %220 = vmatprep.subr.mxu0 0.0
    %221 = vmatpush1.msra.mxu0 0.0
    %222 = vmatprep.subr.mxu0 0.0
    %223 = vmatpush1.msra.mxu0 0.0
    %224 = vmatprep.subr.mxu0 0.0
    %225 = vmatpush1.msra.mxu0 0.0
    %226 = vmatprep.subr.mxu0 0.0
    %227 = vmatpush1.msra.mxu0 0.0
    %228 = vmatprep.subr.mxu0 0.0
    %229 = vmatpush1.msra.mxu0 0.0
    %230 = vmatprep.subr.mxu0 0.0
    %231 = vmatpush1.msra.mxu0 0.0
    %232 = vmatprep.subr.mxu0 0.0
    %233 = vmatpush1.msra.mxu0 0.0
    %234 = vmatprep.subr.mxu0 0.0
    %235 = vmatpush1.msra.mxu0 0.0
    %236 = vmatprep.mubr.f32.mxu0 0.0
    %v237 = vand.u32 %v73, 4294901760
    %v238 = vsub.f32 %v73, %v237
    %v239 = vand.u32 %v238, 4294901760
    %v240 = vsub.f32 %v238, %v239
    %v241 = vand.u32 %v240, 4294901760
    %242 = vmatmul.mubr.f32.gmra.mrb[0].mxu0 %v241
    %v243 = vpop.f32.mrb[0].mxu0
    %v244 = vadd.f32 %v69, %v243
    %v245 = vpop.f32.mrb[0].mxu0
    %246 = vmatprep.mubr.f32.mxu0 0.0
    %v247 = vand.u32 %v76, 4294901760
    %v248 = vsub.f32 %v76, %v247
    %v249 = vand.u32 %v248, 4294901760
    %v250 = vsub.f32 %v248, %v249
    %v251 = vand.u32 %v250, 4294901760
    %252 = vmatmul.mubr.f32.gmra.mrb[0].mxu0 %v251
    %v253 = vpop.f32.mrb[0].mxu0
    %v254 = vadd.f32 %v69, %v253
    %v255 = vpop.f32.mrb[0].mxu0
    %256 = vmatprep.mubr.f32.mxu0 0.0
    %v257 = vand.u32 %v79, 4294901760
    %v258 = vsub.f32 %v79, %v257
    %v259 = vand.u32 %v258, 4294901760
    %v260 = vsub.f32 %v258, %v259
    %v261 = vand.u32 %v260, 4294901760
    %262 = vmatmul.mubr.f32.gmra.mrb[0].mxu0 %v261
    %v263 = vpop.f32.mrb[0].mxu0
    %v264 = vadd.f32 %v69, %v263
    %v265 = vpop.f32.mrb[0].mxu0
    %266 = vmatprep.mubr.f32.mxu0 0.0
    %v267 = vand.u32 %v82, 4294901760
    %v268 = vsub.f32 %v82, %v267
    %v269 = vand.u32 %v268, 4294901760
    %v270 = vsub.f32 %v268, %v269
    %v271 = vand.u32 %v270, 4294901760
    %272 = vmatmul.mubr.f32.gmra.mrb[0].mxu0 %v271
    %v273 = vpop.f32.mrb[0].mxu0
    %v274 = vadd.f32 %v69, %v273
    %v275 = vpop.f32.mrb[0].mxu0
    %276 = vmatprep.mubr.f32.mxu0 0.0
    %v277 = vand.u32 %v85, 4294901760
    %v278 = vsub.f32 %v85, %v277
    %v279 = vand.u32 %v278, 4294901760
    %v280 = vsub.f32 %v278, %v279
    %v281 = vand.u32 %v280, 4294901760
    %282 = vmatmul.mubr.f32.gmra.mrb[0].mxu0 %v281
    %v283 = vpop.f32.mrb[0].mxu0
    %v284 = vadd.f32 %v69, %v283
    %v285 = vpop.f32.mrb[0].mxu0
    %286 = vmatprep.mubr.f32.mxu0 0.0
    %v287 = vand.u32 %v88, 4294901760
    %v288 = vsub.f32 %v88, %v287
    %v289 = vand.u32 %v288, 4294901760
    %v290 = vsub.f32 %v288, %v289
    %v291 = vand.u32 %v290, 4294901760
    %292 = vmatmul.mubr.f32.gmra.mrb[0].mxu0 %v291
    %v293 = vpop.f32.mrb[0].mxu0
    %v294 = vadd.f32 %v69, %v293
    %v295 = vpop.f32.mrb[0].mxu0
    %296 = vmatprep.mubr.f32.mxu0 0.0
    %v297 = vand.u32 %v91, 4294901760
    %v298 = vsub.f32 %v91, %v297
    %v299 = vand.u32 %v298, 4294901760
    %v300 = vsub.f32 %v298, %v299
    %v301 = vand.u32 %v300, 4294901760
    %302 = vmatmul.mubr.f32.gmra.mrb[0].mxu0 %v301
    %v303 = vpop.f32.mrb[0].mxu0
    %v304 = vadd.f32 %v69, %v303
    %v305 = vpop.f32.mrb[0].mxu0
    %306 = vmatprep.mubr.f32.mxu0 0.0
    %v307 = vand.u32 %v94, 4294901760
    %v308 = vsub.f32 %v94, %v307
    %v309 = vand.u32 %v308, 4294901760
    %v310 = vsub.f32 %v308, %v309
    %v311 = vand.u32 %v310, 4294901760
    %312 = vmatmul.mubr.f32.gmra.mrb[0].mxu0 %v311
    %v313 = vpop.f32.mrb[0].mxu0
    %v314 = vadd.f32 %v69, %v313
    %v315 = vpop.f32.mrb[0].mxu0
    %316 = vmatprep.mubr.f32.mxu0 0.0
    %v317 = vand.u32 %v97, 4294901760
    %v318 = vsub.f32 %v97, %v317
    %v319 = vand.u32 %v318, 4294901760
    %v320 = vsub.f32 %v318, %v319
    %v321 = vand.u32 %v320, 4294901760
    %322 = vmatmul.mubr.f32.gmra.mrb[0].mxu0 %v321
    %v323 = vpop.f32.mrb[0].mxu0
    %v324 = vadd.f32 %v69, %v323
    %v325 = vpop.f32.mrb[0].mxu0
    %326 = vmatprep.mubr.f32.mxu0 0.0
    %v327 = vand.u32 %v100, 4294901760
    %v328 = vsub.f32 %v100, %v327
    %v329 = vand.u32 %v328, 4294901760
    %v330 = vsub.f32 %v328, %v329
    %v331 = vand.u32 %v330, 4294901760
    %332 = vmatmul.mubr.f32.gmra.mrb[0].mxu0 %v331
    %v333 = vpop.f32.mrb[0].mxu0
    %v334 = vadd.f32 %v69, %v333
    %v335 = vpop.f32.mrb[0].mxu0
    %336 = vmatprep.mubr.f32.mxu0 0.0
    %v337 = vand.u32 %v103, 4294901760
    %v338 = vsub.f32 %v103, %v337
    %v339 = vand.u32 %v338, 4294901760
    %v340 = vsub.f32 %v338, %v339
    %v341 = vand.u32 %v340, 4294901760
    %342 = vmatmul.mubr.f32.gmra.mrb[0].mxu0 %v341
    %v343 = vpop.f32.mrb[0].mxu0
    %v344 = vadd.f32 %v69, %v343
    %v345 = vpop.f32.mrb[0].mxu0
    %346 = vmatprep.mubr.f32.mxu0 0.0
    %v347 = vand.u32 %v106, 4294901760
    %v348 = vsub.f32 %v106, %v347
    %v349 = vand.u32 %v348, 4294901760
    %v350 = vsub.f32 %v348, %v349
    %v351 = vand.u32 %v350, 4294901760
    %352 = vmatmul.mubr.f32.gmra.mrb[0].mxu0 %v351
    %v353 = vpop.f32.mrb[0].mxu0
    %v354 = vadd.f32 %v69, %v353
    %v355 = vpop.f32.mrb[0].mxu0
    %356 = vmatprep.mubr.f32.mxu0 0.0
    %v357 = vand.u32 %v109, 4294901760
    %v358 = vsub.f32 %v109, %v357
    %v359 = vand.u32 %v358, 4294901760
    %v360 = vsub.f32 %v358, %v359
    %v361 = vand.u32 %v360, 4294901760
    %362 = vmatmul.mubr.f32.gmra.mrb[0].mxu0 %v361
    %v363 = vpop.f32.mrb[0].mxu0
    %v364 = vadd.f32 %v69, %v363
    %v365 = vpop.f32.mrb[0].mxu0
    %366 = vmatprep.mubr.f32.mxu0 0.0
    %v367 = vand.u32 %v112, 4294901760
    %v368 = vsub.f32 %v112, %v367
    %v369 = vand.u32 %v368, 4294901760
    %v370 = vsub.f32 %v368, %v369
    %v371 = vand.u32 %v370, 4294901760
    %372 = vmatmul.mubr.f32.gmra.mrb[0].mxu0 %v371
    %v373 = vpop.f32.mrb[0].mxu0
    %v374 = vadd.f32 %v69, %v373
    %v375 = vpop.f32.mrb[0].mxu0
    %376 = vmatprep.mubr.f32.mxu0 0.0
    %v377 = vand.u32 %v115, 4294901760
    %v378 = vsub.f32 %v115, %v377
    %v379 = vand.u32 %v378, 4294901760
    %v380 = vsub.f32 %v378, %v379
    %v381 = vand.u32 %v380, 4294901760
    %382 = vmatmul.mubr.f32.gmra.mrb[0].mxu0 %v381
    %v383 = vpop.f32.mrb[0].mxu0
    %v384 = vadd.f32 %v69, %v383
    %v385 = vpop.f32.mrb[0].mxu0
    %386 = vmatprep.mubr.f32.mxu0 0.0
    %v387 = vand.u32 %v118, 4294901760
    %v388 = vsub.f32 %v118, %v387
    %v389 = vand.u32 %v388, 4294901760
    %v390 = vsub.f32 %v388, %v389
    %v391 = vand.u32 %v390, 4294901760
    %392 = vmatmul.mubr.f32.gmra.mrb[0].mxu0 %v391
    %v393 = vpop.f32.mrb[0].mxu0
    %v394 = vadd.f32 %v69, %v393
    %v395 = vpop.f32.mrb[0].mxu0
    %396 = vmatprep.mubr.f32.mxu0 0.0
    %v397 = vand.u32 %v121, 4294901760
    %v398 = vsub.f32 %v121, %v397
    %v399 = vand.u32 %v398, 4294901760
    %v400 = vsub.f32 %v398, %v399
    %v401 = vand.u32 %v400, 4294901760
    %402 = vmatmul.mubr.f32.gmra.mrb[0].mxu0 %v401
    %v403 = vpop.f32.mrb[0].mxu0
    %v404 = vadd.f32 %v69, %v403
    %v405 = vpop.f32.mrb[0].mxu0
    %406 = vmatprep.mubr.f32.mxu0 0.0
    %v407 = vand.u32 %v124, 4294901760
    %v408 = vsub.f32 %v124, %v407
    %v409 = vand.u32 %v408, 4294901760
    %v410 = vsub.f32 %v408, %v409
    %v411 = vand.u32 %v410, 4294901760
    %412 = vmatmul.mubr.f32.gmra.mrb[0].mxu0 %v411
    %v413 = vpop.f32.mrb[0].mxu0
    %v414 = vadd.f32 %v69, %v413
    %v415 = vpop.f32.mrb[0].mxu0
    %416 = vmatprep.mubr.f32.mxu0 0.0
    %v417 = vand.u32 %v127, 4294901760
    %v418 = vsub.f32 %v127, %v417
    %v419 = vand.u32 %v418, 4294901760
    %v420 = vsub.f32 %v418, %v419
    %v421 = vand.u32 %v420, 4294901760
    %422 = vmatmul.mubr.f32.gmra.mrb[0].mxu0 %v421
    %v423 = vpop.f32.mrb[0].mxu0
    %v424 = vadd.f32 %v69, %v423
    %v425 = vpop.f32.mrb[0].mxu0
    %426 = vmatprep.mubr.f32.mxu0 0.0
    %v427 = vand.u32 %v130, 4294901760
    %v428 = vsub.f32 %v130, %v427
    %v429 = vand.u32 %v428, 4294901760
    %v430 = vsub.f32 %v428, %v429
    %v431 = vand.u32 %v430, 4294901760
    %432 = vmatmul.mubr.f32.gmra.mrb[0].mxu0 %v431
    %v433 = vpop.f32.mrb[0].mxu0
    %v434 = vadd.f32 %v69, %v433
    %v435 = vpop.f32.mrb[0].mxu0
    %436 = vmatprep.mubr.f32.mxu0 0.0
    %v437 = vand.u32 %v133, 4294901760
    %v438 = vsub.f32 %v133, %v437
    %v439 = vand.u32 %v438, 4294901760
    %v440 = vsub.f32 %v438, %v439
    %v441 = vand.u32 %v440, 4294901760
    %442 = vmatmul.mubr.f32.gmra.mrb[0].mxu0 %v441
    %v443 = vpop.f32.mrb[0].mxu0
    %v444 = vadd.f32 %v69, %v443
    %v445 = vpop.f32.mrb[0].mxu0
    %446 = vmatprep.mubr.f32.mxu0 0.0
    %v447 = vand.u32 %v136, 4294901760
    %v448 = vsub.f32 %v136, %v447
    %v449 = vand.u32 %v448, 4294901760
    %v450 = vsub.f32 %v448, %v449
    %v451 = vand.u32 %v450, 4294901760
    %452 = vmatmul.mubr.f32.gmra.mrb[0].mxu0 %v451
    %v453 = vpop.f32.mrb[0].mxu0
    %v454 = vadd.f32 %v69, %v453
    %v455 = vpop.f32.mrb[0].mxu0
    %456 = vmatprep.mubr.f32.mxu0 0.0
    %v457 = vand.u32 %v139, 4294901760
    %v458 = vsub.f32 %v139, %v457
    %v459 = vand.u32 %v458, 4294901760
    %v460 = vsub.f32 %v458, %v459
    %v461 = vand.u32 %v460, 4294901760
    %462 = vmatmul.mubr.f32.gmra.mrb[0].mxu0 %v461
    %v463 = vpop.f32.mrb[0].mxu0
    %v464 = vadd.f32 %v69, %v463
    %v465 = vpop.f32.mrb[0].mxu0
    %466 = vmatprep.mubr.f32.mxu0 0.0
    %v467 = vand.u32 %v142, 4294901760
    %v468 = vsub.f32 %v142, %v467
    %v469 = vand.u32 %v468, 4294901760
    %v470 = vsub.f32 %v468, %v469
    %v471 = vand.u32 %v470, 4294901760
    %472 = vmatmul.mubr.f32.gmra.mrb[0].mxu0 %v471
    %v473 = vpop.f32.mrb[0].mxu0
    %v474 = vadd.f32 %v69, %v473
    %v475 = vpop.f32.mrb[0].mxu0
    %476 = vmatprep.mubr.f32.mxu0 0.0
    %v477 = vand.u32 %v145, 4294901760
    %v478 = vsub.f32 %v145, %v477
    %v479 = vand.u32 %v478, 4294901760
    %v480 = vsub.f32 %v478, %v479
    %v481 = vand.u32 %v480, 4294901760
    %482 = vmatmul.mubr.f32.gmra.mrb[0].mxu0 %v481
    %v483 = vpop.f32.mrb[0].mxu0
    %v484 = vadd.f32 %v69, %v483
    %v485 = vpop.f32.mrb[0].mxu0
    %486 = vmatprep.mubr.f32.mxu0 0.0
    %v487 = vand.u32 %v148, 4294901760
    %v488 = vsub.f32 %v148, %v487
    %v489 = vand.u32 %v488, 4294901760
    %v490 = vsub.f32 %v488, %v489
    %v491 = vand.u32 %v490, 4294901760
    %492 = vmatmul.mubr.f32.gmra.mrb[0].mxu0 %v491
    %v493 = vpop.f32.mrb[0].mxu0
    %v494 = vadd.f32 %v69, %v493
    %v495 = vpop.f32.mrb[0].mxu0
    %496 = vmatprep.mubr.f32.mxu0 0.0
    %v497 = vand.u32 %v151, 4294901760
    %v498 = vsub.f32 %v151, %v497
    %v499 = vand.u32 %v498, 4294901760
    %v500 = vsub.f32 %v498, %v499
    %v501 = vand.u32 %v500, 4294901760
    %502 = vmatmul.mubr.f32.gmra.mrb[0].mxu0 %v501
    %v503 = vpop.f32.mrb[0].mxu0
    %v504 = vadd.f32 %v69, %v503
    %v505 = vpop.f32.mrb[0].mxu0
    %506 = vmatprep.mubr.f32.mxu0 0.0
    %v507 = vand.u32 %v154, 4294901760
    %v508 = vsub.f32 %v154, %v507
    %v509 = vand.u32 %v508, 4294901760
    %v510 = vsub.f32 %v508, %v509
    %v511 = vand.u32 %v510, 4294901760
    %512 = vmatmul.mubr.f32.gmra.mrb[0].mxu0 %v511
    %v513 = vpop.f32.mrb[0].mxu0
    %v514 = vadd.f32 %v69, %v513
    %v515 = vpop.f32.mrb[0].mxu0
    %516 = vmatprep.mubr.f32.mxu0 0.0
    %v517 = vand.u32 %v157, 4294901760
    %v518 = vsub.f32 %v157, %v517
    %v519 = vand.u32 %v518, 4294901760
    %v520 = vsub.f32 %v518, %v519
    %v521 = vand.u32 %v520, 4294901760
    %522 = vmatmul.mubr.f32.gmra.mrb[0].mxu0 %v521
    %v523 = vpop.f32.mrb[0].mxu0
    %v524 = vadd.f32 %v69, %v523
    %v525 = vpop.f32.mrb[0].mxu0
    %526 = vmatprep.mubr.f32.mxu0 0.0
    %v527 = vand.u32 %v160, 4294901760
    %v528 = vsub.f32 %v160, %v527
    %v529 = vand.u32 %v528, 4294901760
    %v530 = vsub.f32 %v528, %v529
    %v531 = vand.u32 %v530, 4294901760
    %532 = vmatmul.mubr.f32.gmra.mrb[0].mxu0 %v531
    %v533 = vpop.f32.mrb[0].mxu0
    %v534 = vadd.f32 %v69, %v533
    %v535 = vpop.f32.mrb[0].mxu0
    %536 = vmatprep.mubr.f32.mxu0 0.0
    %v537 = vand.u32 %v163, 4294901760
    %v538 = vsub.f32 %v163, %v537
    %v539 = vand.u32 %v538, 4294901760
    %v540 = vsub.f32 %v538, %v539
    %v541 = vand.u32 %v540, 4294901760
    %542 = vmatmul.mubr.f32.gmra.mrb[0].mxu0 %v541
    %v543 = vpop.f32.mrb[0].mxu0
    %v544 = vadd.f32 %v69, %v543
    %v545 = vpop.f32.mrb[0].mxu0
    %546 = vmatprep.mubr.f32.mxu0 0.0
    %v547 = vand.u32 %v166, 4294901760
    %v548 = vsub.f32 %v166, %v547
    %v549 = vand.u32 %v548, 4294901760
    %v550 = vsub.f32 %v548, %v549
    %v551 = vand.u32 %v550, 4294901760
    %552 = vmatmul.mubr.f32.gmra.mrb[0].mxu0 %v551
    %v553 = vpop.f32.mrb[0].mxu0
    %v554 = vadd.f32 %v69, %v553
    %v555 = vpop.f32.mrb[0].mxu0
    %556 = vdwg.mxu0
    %557 = vmatprep.subr.mxu0 0.0
    %v558 = vand.u32 %v60, 4294901760
    %v559 = vsub.f32 %v60, %v558
    %v560 = vand.u32 %v559, 4294901760
    %v561 = vsub.f32 %v559, %v560
    %v562 = vand.u32 %v561, 4294901760
    %563 = vmatpush1.msra.mxu0 %v562
    %564 = vmatprep.subr.mxu0 0.0
    %v565 = vand.u32 %v61, 4294901760
    %v566 = vsub.f32 %v61, %v565
    %v567 = vand.u32 %v566, 4294901760
    %v568 = vsub.f32 %v566, %v567
    %v569 = vand.u32 %v568, 4294901760
    %570 = vmatpush1.msra.mxu0 %v569
    %571 = vmatprep.subr.mxu0 0.0
    %v572 = vand.u32 %v62, 4294901760
    %v573 = vsub.f32 %v62, %v572
    %v574 = vand.u32 %v573, 4294901760
    %v575 = vsub.f32 %v573, %v574
    %v576 = vand.u32 %v575, 4294901760
    %577 = vmatpush1.msra.mxu0 %v576
    %578 = vmatprep.subr.mxu0 0.0
    %v579 = vand.u32 %v63, 4294901760
    %v580 = vsub.f32 %v63, %v579
    %v581 = vand.u32 %v580, 4294901760
    %v582 = vsub.f32 %v580, %v581
    %v583 = vand.u32 %v582, 4294901760
    %584 = vmatpush1.msra.mxu0 %v583
    %585 = vmatprep.subr.mxu0 0.0
    %586 = vmatpush1.msra.mxu0 0.0
    %587 = vmatprep.subr.mxu0 0.0
    %588 = vmatpush1.msra.mxu0 0.0
    %589 = vmatprep.subr.mxu0 0.0
    %590 = vmatpush1.msra.mxu0 0.0
    %591 = vmatprep.subr.mxu0 0.0
    %592 = vmatpush1.msra.mxu0 0.0
    %593 = vmatprep.subr.mxu0 0.0
    %594 = vmatpush1.msra.mxu0 0.0
    %595 = vmatprep.subr.mxu0 0.0
    %596 = vmatpush1.msra.mxu0 0.0
    %597 = vmatprep.subr.mxu0 0.0
    %598 = vmatpush1.msra.mxu0 0.0
    %599 = vmatprep.subr.mxu0 0.0
    %600 = vmatpush1.msra.mxu0 0.0
    %601 = vmatprep.subr.mxu0 0.0
    %602 = vmatpush1.msra.mxu0 0.0
    %603 = vmatprep.subr.mxu0 0.0
    %604 = vmatpush1.msra.mxu0 0.0
    %605 = vmatprep.subr.mxu0 0.0
    %606 = vmatpush1.msra.mxu0 0.0
    %607 = vmatprep.subr.mxu0 0.0
    %608 = vmatpush1.msra.mxu0 0.0
    %609 = vmatprep.subr.mxu0 0.0
    %610 = vmatpush1.msra.mxu0 0.0
    %611 = vmatprep.subr.mxu0 0.0
    %612 = vmatpush1.msra.mxu0 0.0
    %613 = vmatprep.subr.mxu0 0.0
    %614 = vmatpush1.msra.mxu0 0.0
    %615 = vmatprep.subr.mxu0 0.0
    %616 = vmatpush1.msra.mxu0 0.0
    %617 = vmatprep.subr.mxu0 0.0
    %618 = vmatpush1.msra.mxu0 0.0
    %619 = vmatprep.subr.mxu0 0.0
    %620 = vmatpush1.msra.mxu0 0.0
    %621 = vmatprep.subr.mxu0 0.0
    %622 = vmatpush1.msra.mxu0 0.0
    %623 = vmatprep.subr.mxu0 0.0
    %624 = vmatpush1.msra.mxu0 0.0
    %625 = vmatprep.subr.mxu0 0.0
    %626 = vmatpush1.msra.mxu0 0.0
    %627 = vmatprep.subr.mxu0 0.0
    %628 = vmatpush1.msra.mxu0 0.0
    %629 = vmatprep.subr.mxu0 0.0
    %630 = vmatpush1.msra.mxu0 0.0
    %631 = vmatprep.subr.mxu0 0.0
    %632 = vmatpush1.msra.mxu0 0.0
    %633 = vmatprep.subr.mxu0 0.0
    %634 = vmatpush1.msra.mxu0 0.0
    %635 = vmatprep.subr.mxu0 0.0
    %636 = vmatpush1.msra.mxu0 0.0
    %637 = vmatprep.subr.mxu0 0.0
    %638 = vmatpush1.msra.mxu0 0.0
    %639 = vmatprep.subr.mxu0 0.0
    %640 = vmatpush1.msra.mxu0 0.0
    %641 = vmatprep.mubr.f32.mxu0 0.0
    %v642 = vand.u32 %v73, 4294901760
    %643 = vmatmul.mubr.f32.gmra.mrb[0].mxu0 %v642
    %v644 = vpop.f32.mrb[0].mxu0
    %v645 = vadd.f32 %v244, %v644
    %v646 = vpop.f32.mrb[0].mxu0
    %647 = vmatprep.mubr.f32.mxu0 0.0
    %v648 = vand.u32 %v76, 4294901760
    %649 = vmatmul.mubr.f32.gmra.mrb[0].mxu0 %v648
    %v650 = vpop.f32.mrb[0].mxu0
    %v651 = vadd.f32 %v254, %v650
    %v652 = vpop.f32.mrb[0].mxu0
    %653 = vmatprep.mubr.f32.mxu0 0.0
    %v654 = vand.u32 %v79, 4294901760
    %655 = vmatmul.mubr.f32.gmra.mrb[0].mxu0 %v654
    %v656 = vpop.f32.mrb[0].mxu0
    %v657 = vadd.f32 %v264, %v656
    %v658 = vpop.f32.mrb[0].mxu0
    %659 = vmatprep.mubr.f32.mxu0 0.0
    %v660 = vand.u32 %v82, 4294901760
    %661 = vmatmul.mubr.f32.gmra.mrb[0].mxu0 %v660
    %v662 = vpop.f32.mrb[0].mxu0
    %v663 = vadd.f32 %v274, %v662
    %v664 = vpop.f32.mrb[0].mxu0
    %665 = vmatprep.mubr.f32.mxu0 0.0
    %v666 = vand.u32 %v85, 4294901760
    %667 = vmatmul.mubr.f32.gmra.mrb[0].mxu0 %v666
    %v668 = vpop.f32.mrb[0].mxu0
    %v669 = vadd.f32 %v284, %v668
    %v670 = vpop.f32.mrb[0].mxu0
    %671 = vmatprep.mubr.f32.mxu0 0.0
    %v672 = vand.u32 %v88, 4294901760
    %673 = vmatmul.mubr.f32.gmra.mrb[0].mxu0 %v672
    %v674 = vpop.f32.mrb[0].mxu0
    %v675 = vadd.f32 %v294, %v674
    %v676 = vpop.f32.mrb[0].mxu0
    %677 = vmatprep.mubr.f32.mxu0 0.0
    %v678 = vand.u32 %v91, 4294901760
    %679 = vmatmul.mubr.f32.gmra.mrb[0].mxu0 %v678
    %v680 = vpop.f32.mrb[0].mxu0
    %v681 = vadd.f32 %v304, %v680
    %v682 = vpop.f32.mrb[0].mxu0
    %683 = vmatprep.mubr.f32.mxu0 0.0
    %v684 = vand.u32 %v94, 4294901760
    %685 = vmatmul.mubr.f32.gmra.mrb[0].mxu0 %v684
    %v686 = vpop.f32.mrb[0].mxu0
    %v687 = vadd.f32 %v314, %v686
    %v688 = vpop.f32.mrb[0].mxu0
    %689 = vmatprep.mubr.f32.mxu0 0.0
    %v690 = vand.u32 %v97, 4294901760
    %691 = vmatmul.mubr.f32.gmra.mrb[0].mxu0 %v690
    %v692 = vpop.f32.mrb[0].mxu0
    %v693 = vadd.f32 %v324, %v692
    %v694 = vpop.f32.mrb[0].mxu0
    %695 = vmatprep.mubr.f32.mxu0 0.0
    %v696 = vand.u32 %v100, 4294901760
    %697 = vmatmul.mubr.f32.gmra.mrb[0].mxu0 %v696
    %v698 = vpop.f32.mrb[0].mxu0
    %v699 = vadd.f32 %v334, %v698
    %v700 = vpop.f32.mrb[0].mxu0
    %701 = vmatprep.mubr.f32.mxu0 0.0
    %v702 = vand.u32 %v103, 4294901760
    %703 = vmatmul.mubr.f32.gmra.mrb[0].mxu0 %v702
    %v704 = vpop.f32.mrb[0].mxu0
    %v705 = vadd.f32 %v344, %v704
    %v706 = vpop.f32.mrb[0].mxu0
    %707 = vmatprep.mubr.f32.mxu0 0.0
    %v708 = vand.u32 %v106, 4294901760
    %709 = vmatmul.mubr.f32.gmra.mrb[0].mxu0 %v708
    %v710 = vpop.f32.mrb[0].mxu0
    %v711 = vadd.f32 %v354, %v710
    %v712 = vpop.f32.mrb[0].mxu0
    %713 = vmatprep.mubr.f32.mxu0 0.0
    %v714 = vand.u32 %v109, 4294901760
    %715 = vmatmul.mubr.f32.gmra.mrb[0].mxu0 %v714
    %v716 = vpop.f32.mrb[0].mxu0
    %v717 = vadd.f32 %v364, %v716
    %v718 = vpop.f32.mrb[0].mxu0
    %719 = vmatprep.mubr.f32.mxu0 0.0
    %v720 = vand.u32 %v112, 4294901760
    %721 = vmatmul.mubr.f32.gmra.mrb[0].mxu0 %v720
    %v722 = vpop.f32.mrb[0].mxu0
    %v723 = vadd.f32 %v374, %v722
    %v724 = vpop.f32.mrb[0].mxu0
    %725 = vmatprep.mubr.f32.mxu0 0.0
    %v726 = vand.u32 %v115, 4294901760
    %727 = vmatmul.mubr.f32.gmra.mrb[0].mxu0 %v726
    %v728 = vpop.f32.mrb[0].mxu0
    %v729 = vadd.f32 %v384, %v728
    %v730 = vpop.f32.mrb[0].mxu0
    %731 = vmatprep.mubr.f32.mxu0 0.0
    %v732 = vand.u32 %v118, 4294901760
    %733 = vmatmul.mubr.f32.gmra.mrb[0].mxu0 %v732
    %v734 = vpop.f32.mrb[0].mxu0
    %v735 = vadd.f32 %v394, %v734
    %v736 = vpop.f32.mrb[0].mxu0
    %737 = vmatprep.mubr.f32.mxu0 0.0
    %v738 = vand.u32 %v121, 4294901760
    %739 = vmatmul.mubr.f32.gmra.mrb[0].mxu0 %v738
    %v740 = vpop.f32.mrb[0].mxu0
    %v741 = vadd.f32 %v404, %v740
    %v742 = vpop.f32.mrb[0].mxu0
    %743 = vmatprep.mubr.f32.mxu0 0.0
    %v744 = vand.u32 %v124, 4294901760
    %745 = vmatmul.mubr.f32.gmra.mrb[0].mxu0 %v744
    %v746 = vpop.f32.mrb[0].mxu0
    %v747 = vadd.f32 %v414, %v746
    %v748 = vpop.f32.mrb[0].mxu0
    %749 = vmatprep.mubr.f32.mxu0 0.0
    %v750 = vand.u32 %v127, 4294901760
    %751 = vmatmul.mubr.f32.gmra.mrb[0].mxu0 %v750
    %v752 = vpop.f32.mrb[0].mxu0
    %v753 = vadd.f32 %v424, %v752
    %v754 = vpop.f32.mrb[0].mxu0
    %755 = vmatprep.mubr.f32.mxu0 0.0
    %v756 = vand.u32 %v130, 4294901760
    %757 = vmatmul.mubr.f32.gmra.mrb[0].mxu0 %v756
    %v758 = vpop.f32.mrb[0].mxu0
    %v759 = vadd.f32 %v434, %v758
    %v760 = vpop.f32.mrb[0].mxu0
    %761 = vmatprep.mubr.f32.mxu0 0.0
    %v762 = vand.u32 %v133, 4294901760
    %763 = vmatmul.mubr.f32.gmra.mrb[0].mxu0 %v762
    %v764 = vpop.f32.mrb[0].mxu0
    %v765 = vadd.f32 %v444, %v764
    %v766 = vpop.f32.mrb[0].mxu0
    %767 = vmatprep.mubr.f32.mxu0 0.0
    %v768 = vand.u32 %v136, 4294901760
    %769 = vmatmul.mubr.f32.gmra.mrb[0].mxu0 %v768
    %v770 = vpop.f32.mrb[0].mxu0
    %v771 = vadd.f32 %v454, %v770
    %v772 = vpop.f32.mrb[0].mxu0
    %773 = vmatprep.mubr.f32.mxu0 0.0
    %v774 = vand.u32 %v139, 4294901760
    %775 = vmatmul.mubr.f32.gmra.mrb[0].mxu0 %v774
    %v776 = vpop.f32.mrb[0].mxu0
    %v777 = vadd.f32 %v464, %v776
    %v778 = vpop.f32.mrb[0].mxu0
    %779 = vmatprep.mubr.f32.mxu0 0.0
    %v780 = vand.u32 %v142, 4294901760
    %781 = vmatmul.mubr.f32.gmra.mrb[0].mxu0 %v780
    %v782 = vpop.f32.mrb[0].mxu0
    %v783 = vadd.f32 %v474, %v782
    %v784 = vpop.f32.mrb[0].mxu0
    %785 = vmatprep.mubr.f32.mxu0 0.0
    %v786 = vand.u32 %v145, 4294901760
    %787 = vmatmul.mubr.f32.gmra.mrb[0].mxu0 %v786
    %v788 = vpop.f32.mrb[0].mxu0
    %v789 = vadd.f32 %v484, %v788
    %v790 = vpop.f32.mrb[0].mxu0
    %791 = vmatprep.mubr.f32.mxu0 0.0
    %v792 = vand.u32 %v148, 4294901760
    %793 = vmatmul.mubr.f32.gmra.mrb[0].mxu0 %v792
    %v794 = vpop.f32.mrb[0].mxu0
    %v795 = vadd.f32 %v494, %v794
    %v796 = vpop.f32.mrb[0].mxu0
    %797 = vmatprep.mubr.f32.mxu0 0.0
    %v798 = vand.u32 %v151, 4294901760
    %799 = vmatmul.mubr.f32.gmra.mrb[0].mxu0 %v798
    %v800 = vpop.f32.mrb[0].mxu0
    %v801 = vadd.f32 %v504, %v800
    %v802 = vpop.f32.mrb[0].mxu0
    %803 = vmatprep.mubr.f32.mxu0 0.0
    %v804 = vand.u32 %v154, 4294901760
    %805 = vmatmul.mubr.f32.gmra.mrb[0].mxu0 %v804
    %v806 = vpop.f32.mrb[0].mxu0
    %v807 = vadd.f32 %v514, %v806
    %v808 = vpop.f32.mrb[0].mxu0
    %809 = vmatprep.mubr.f32.mxu0 0.0
    %v810 = vand.u32 %v157, 4294901760
    %811 = vmatmul.mubr.f32.gmra.mrb[0].mxu0 %v810
    %v812 = vpop.f32.mrb[0].mxu0
    %v813 = vadd.f32 %v524, %v812
    %v814 = vpop.f32.mrb[0].mxu0
    %815 = vmatprep.mubr.f32.mxu0 0.0
    %v816 = vand.u32 %v160, 4294901760
    %817 = vmatmul.mubr.f32.gmra.mrb[0].mxu0 %v816
    %v818 = vpop.f32.mrb[0].mxu0
    %v819 = vadd.f32 %v534, %v818
    %v820 = vpop.f32.mrb[0].mxu0
    %821 = vmatprep.mubr.f32.mxu0 0.0
    %v822 = vand.u32 %v163, 4294901760
    %823 = vmatmul.mubr.f32.gmra.mrb[0].mxu0 %v822
    %v824 = vpop.f32.mrb[0].mxu0
    %v825 = vadd.f32 %v544, %v824
    %v826 = vpop.f32.mrb[0].mxu0
    %827 = vmatprep.mubr.f32.mxu0 0.0
    %v828 = vand.u32 %v166, 4294901760
    %829 = vmatmul.mubr.f32.gmra.mrb[0].mxu0 %v828
    %v830 = vpop.f32.mrb[0].mxu0
    %v831 = vadd.f32 %v554, %v830
    %v832 = vpop.f32.mrb[0].mxu0
    %833 = vdwg.mxu0
    %834 = vmatprep.subr.mxu0 0.0
    %v835 = vand.u32 %v60, 4294901760
    %v836 = vsub.f32 %v60, %v835
    %837 = vmatpush1.msra.mxu0 %v836
    %838 = vmatprep.subr.mxu0 0.0
    %v839 = vand.u32 %v61, 4294901760
    %v840 = vsub.f32 %v61, %v839
    %841 = vmatpush1.msra.mxu0 %v840
    %842 = vmatprep.subr.mxu0 0.0
    %v843 = vand.u32 %v62, 4294901760
    %v844 = vsub.f32 %v62, %v843
    %845 = vmatpush1.msra.mxu0 %v844
    %846 = vmatprep.subr.mxu0 0.0
    %v847 = vand.u32 %v63, 4294901760
    %v848 = vsub.f32 %v63, %v847
    %849 = vmatpush1.msra.mxu0 %v848
    %850 = vmatprep.subr.mxu0 0.0
    %851 = vmatpush1.msra.mxu0 0.0
    %852 = vmatprep.subr.mxu0 0.0
    %853 = vmatpush1.msra.mxu0 0.0
    %854 = vmatprep.subr.mxu0 0.0
    %855 = vmatpush1.msra.mxu0 0.0
    %856 = vmatprep.subr.mxu0 0.0
    %857 = vmatpush1.msra.mxu0 0.0
    %858 = vmatprep.subr.mxu0 0.0
    %859 = vmatpush1.msra.mxu0 0.0
    %860 = vmatprep.subr.mxu0 0.0
    %861 = vmatpush1.msra.mxu0 0.0
    %862 = vmatprep.subr.mxu0 0.0
    %863 = vmatpush1.msra.mxu0 0.0
    %864 = vmatprep.subr.mxu0 0.0
    %865 = vmatpush1.msra.mxu0 0.0
    %866 = vmatprep.subr.mxu0 0.0
    %867 = vmatpush1.msra.mxu0 0.0
    %868 = vmatprep.subr.mxu0 0.0
    %869 = vmatpush1.msra.mxu0 0.0
    %870 = vmatprep.subr.mxu0 0.0
    %871 = vmatpush1.msra.mxu0 0.0
    %872 = vmatprep.subr.mxu0 0.0
    %873 = vmatpush1.msra.mxu0 0.0
    %874 = vmatprep.subr.mxu0 0.0
    %875 = vmatpush1.msra.mxu0 0.0
    %876 = vmatprep.subr.mxu0 0.0
    %877 = vmatpush1.msra.mxu0 0.0
    %878 = vmatprep.subr.mxu0 0.0
    %879 = vmatpush1.msra.mxu0 0.0
    %880 = vmatprep.subr.mxu0 0.0
    %881 = vmatpush1.msra.mxu0 0.0
    %882 = vmatprep.subr.mxu0 0.0
    %883 = vmatpush1.msra.mxu0 0.0
    %884 = vmatprep.subr.mxu0 0.0
    %885 = vmatpush1.msra.mxu0 0.0
    %886 = vmatprep.subr.mxu0 0.0
    %887 = vmatpush1.msra.mxu0 0.0
    %888 = vmatprep.subr.mxu0 0.0
    %889 = vmatpush1.msra.mxu0 0.0
    %890 = vmatprep.subr.mxu0 0.0
    %891 = vmatpush1.msra.mxu0 0.0
    %892 = vmatprep.subr.mxu0 0.0
    %893 = vmatpush1.msra.mxu0 0.0
    %894 = vmatprep.subr.mxu0 0.0
    %895 = vmatpush1.msra.mxu0 0.0
    %896 = vmatprep.subr.mxu0 0.0
    %897 = vmatpush1.msra.mxu0 0.0
    %898 = vmatprep.subr.mxu0 0.0
    %899 = vmatpush1.msra.mxu0 0.0
    %900 = vmatprep.subr.mxu0 0.0
    %901 = vmatpush1.msra.mxu0 0.0
    %902 = vmatprep.subr.mxu0 0.0
    %903 = vmatpush1.msra.mxu0 0.0
    %904 = vmatprep.subr.mxu0 0.0
    %905 = vmatpush1.msra.mxu0 0.0
    %906 = vmatprep.mubr.f32.mxu0 0.0
    %v907 = vand.u32 %v73, 4294901760
    %v908 = vsub.f32 %v73, %v907
    %909 = vmatmul.mubr.f32.gmra.mrb[0].mxu0 %v908
    %v910 = vpop.f32.mrb[0].mxu0
    %v911 = vadd.f32 %v645, %v910
    %v912 = vpop.f32.mrb[0].mxu0
    %913 = vmatprep.mubr.f32.mxu0 0.0
    %v914 = vand.u32 %v76, 4294901760
    %v915 = vsub.f32 %v76, %v914
    %916 = vmatmul.mubr.f32.gmra.mrb[0].mxu0 %v915
    %v917 = vpop.f32.mrb[0].mxu0
    %v918 = vadd.f32 %v651, %v917
    %v919 = vpop.f32.mrb[0].mxu0
    %920 = vmatprep.mubr.f32.mxu0 0.0
    %v921 = vand.u32 %v79, 4294901760
    %v922 = vsub.f32 %v79, %v921
    %923 = vmatmul.mubr.f32.gmra.mrb[0].mxu0 %v922
    %v924 = vpop.f32.mrb[0].mxu0
    %v925 = vadd.f32 %v657, %v924
    %v926 = vpop.f32.mrb[0].mxu0
    %927 = vmatprep.mubr.f32.mxu0 0.0
    %v928 = vand.u32 %v82, 4294901760
    %v929 = vsub.f32 %v82, %v928
    %930 = vmatmul.mubr.f32.gmra.mrb[0].mxu0 %v929
    %v931 = vpop.f32.mrb[0].mxu0
    %v932 = vadd.f32 %v663, %v931
    %v933 = vpop.f32.mrb[0].mxu0
    %934 = vmatprep.mubr.f32.mxu0 0.0
    %v935 = vand.u32 %v85, 4294901760
    %v936 = vsub.f32 %v85, %v935
    %937 = vmatmul.mubr.f32.gmra.mrb[0].mxu0 %v936
    %v938 = vpop.f32.mrb[0].mxu0
    %v939 = vadd.f32 %v669, %v938
    %v940 = vpop.f32.mrb[0].mxu0
    %941 = vmatprep.mubr.f32.mxu0 0.0
    %v942 = vand.u32 %v88, 4294901760
    %v943 = vsub.f32 %v88, %v942
    %944 = vmatmul.mubr.f32.gmra.mrb[0].mxu0 %v943
    %v945 = vpop.f32.mrb[0].mxu0
    %v946 = vadd.f32 %v675, %v945
    %v947 = vpop.f32.mrb[0].mxu0
    %948 = vmatprep.mubr.f32.mxu0 0.0
    %v949 = vand.u32 %v91, 4294901760
    %v950 = vsub.f32 %v91, %v949
    %951 = vmatmul.mubr.f32.gmra.mrb[0].mxu0 %v950
    %v952 = vpop.f32.mrb[0].mxu0
    %v953 = vadd.f32 %v681, %v952
    %v954 = vpop.f32.mrb[0].mxu0
    %955 = vmatprep.mubr.f32.mxu0 0.0
    %v956 = vand.u32 %v94, 4294901760
    %v957 = vsub.f32 %v94, %v956
    %958 = vmatmul.mubr.f32.gmra.mrb[0].mxu0 %v957
    %v959 = vpop.f32.mrb[0].mxu0
    %v960 = vadd.f32 %v687, %v959
    %v961 = vpop.f32.mrb[0].mxu0
    %962 = vmatprep.mubr.f32.mxu0 0.0
    %v963 = vand.u32 %v97, 4294901760
    %v964 = vsub.f32 %v97, %v963
    %965 = vmatmul.mubr.f32.gmra.mrb[0].mxu0 %v964
    %v966 = vpop.f32.mrb[0].mxu0
    %v967 = vadd.f32 %v693, %v966
    %v968 = vpop.f32.mrb[0].mxu0
    %969 = vmatprep.mubr.f32.mxu0 0.0
    %v970 = vand.u32 %v100, 4294901760
    %v971 = vsub.f32 %v100, %v970
    %972 = vmatmul.mubr.f32.gmra.mrb[0].mxu0 %v971
    %v973 = vpop.f32.mrb[0].mxu0
    %v974 = vadd.f32 %v699, %v973
    %v975 = vpop.f32.mrb[0].mxu0
    %976 = vmatprep.mubr.f32.mxu0 0.0
    %v977 = vand.u32 %v103, 4294901760
    %v978 = vsub.f32 %v103, %v977
    %979 = vmatmul.mubr.f32.gmra.mrb[0].mxu0 %v978
    %v980 = vpop.f32.mrb[0].mxu0
    %v981 = vadd.f32 %v705, %v980
    %v982 = vpop.f32.mrb[0].mxu0
    %983 = vmatprep.mubr.f32.mxu0 0.0
    %v984 = vand.u32 %v106, 4294901760
    %v985 = vsub.f32 %v106, %v984
    %986 = vmatmul.mubr.f32.gmra.mrb[0].mxu0 %v985
    %v987 = vpop.f32.mrb[0].mxu0
    %v988 = vadd.f32 %v711, %v987
    %v989 = vpop.f32.mrb[0].mxu0
    %990 = vmatprep.mubr.f32.mxu0 0.0
    %v991 = vand.u32 %v109, 4294901760
    %v992 = vsub.f32 %v109, %v991
    %993 = vmatmul.mubr.f32.gmra.mrb[0].mxu0 %v992
    %v994 = vpop.f32.mrb[0].mxu0
    %v995 = vadd.f32 %v717, %v994
    %v996 = vpop.f32.mrb[0].mxu0
    %997 = vmatprep.mubr.f32.mxu0 0.0
    %v998 = vand.u32 %v112, 4294901760
    %v999 = vsub.f32 %v112, %v998
    %1000 = vmatmul.mubr.f32.gmra.mrb[0].mxu0 %v999
    %v1001 = vpop.f32.mrb[0].mxu0
    %v1002 = vadd.f32 %v723, %v1001
    %v1003 = vpop.f32.mrb[0].mxu0
    %1004 = vmatprep.mubr.f32.mxu0 0.0
    %v1005 = vand.u32 %v115, 4294901760
    %v1006 = vsub.f32 %v115, %v1005
    %1007 = vmatmul.mubr.f32.gmra.mrb[0].mxu0 %v1006
    %v1008 = vpop.f32.mrb[0].mxu0
    %v1009 = vadd.f32 %v729, %v1008
    %v1010 = vpop.f32.mrb[0].mxu0
    %1011 = vmatprep.mubr.f32.mxu0 0.0
    %v1012 = vand.u32 %v118, 4294901760
    %v1013 = vsub.f32 %v118, %v1012
    %1014 = vmatmul.mubr.f32.gmra.mrb[0].mxu0 %v1013
    %v1015 = vpop.f32.mrb[0].mxu0
    %v1016 = vadd.f32 %v735, %v1015
    %v1017 = vpop.f32.mrb[0].mxu0
    %1018 = vmatprep.mubr.f32.mxu0 0.0
    %v1019 = vand.u32 %v121, 4294901760
    %v1020 = vsub.f32 %v121, %v1019
    %1021 = vmatmul.mubr.f32.gmra.mrb[0].mxu0 %v1020
    %v1022 = vpop.f32.mrb[0].mxu0
    %v1023 = vadd.f32 %v741, %v1022
    %v1024 = vpop.f32.mrb[0].mxu0
    %1025 = vmatprep.mubr.f32.mxu0 0.0
    %v1026 = vand.u32 %v124, 4294901760
    %v1027 = vsub.f32 %v124, %v1026
    %1028 = vmatmul.mubr.f32.gmra.mrb[0].mxu0 %v1027
    %v1029 = vpop.f32.mrb[0].mxu0
    %v1030 = vadd.f32 %v747, %v1029
    %v1031 = vpop.f32.mrb[0].mxu0
    %1032 = vmatprep.mubr.f32.mxu0 0.0
    %v1033 = vand.u32 %v127, 4294901760
    %v1034 = vsub.f32 %v127, %v1033
    %1035 = vmatmul.mubr.f32.gmra.mrb[0].mxu0 %v1034
    %v1036 = vpop.f32.mrb[0].mxu0
    %v1037 = vadd.f32 %v753, %v1036
    %v1038 = vpop.f32.mrb[0].mxu0
    %1039 = vmatprep.mubr.f32.mxu0 0.0
    %v1040 = vand.u32 %v130, 4294901760
    %v1041 = vsub.f32 %v130, %v1040
    %1042 = vmatmul.mubr.f32.gmra.mrb[0].mxu0 %v1041
    %v1043 = vpop.f32.mrb[0].mxu0
    %v1044 = vadd.f32 %v759, %v1043
    %v1045 = vpop.f32.mrb[0].mxu0
    %1046 = vmatprep.mubr.f32.mxu0 0.0
    %v1047 = vand.u32 %v133, 4294901760
    %v1048 = vsub.f32 %v133, %v1047
    %1049 = vmatmul.mubr.f32.gmra.mrb[0].mxu0 %v1048
    %v1050 = vpop.f32.mrb[0].mxu0
    %v1051 = vadd.f32 %v765, %v1050
    %v1052 = vpop.f32.mrb[0].mxu0
    %1053 = vmatprep.mubr.f32.mxu0 0.0
    %v1054 = vand.u32 %v136, 4294901760
    %v1055 = vsub.f32 %v136, %v1054
    %1056 = vmatmul.mubr.f32.gmra.mrb[0].mxu0 %v1055
    %v1057 = vpop.f32.mrb[0].mxu0
    %v1058 = vadd.f32 %v771, %v1057
    %v1059 = vpop.f32.mrb[0].mxu0
    %1060 = vmatprep.mubr.f32.mxu0 0.0
    %v1061 = vand.u32 %v139, 4294901760
    %v1062 = vsub.f32 %v139, %v1061
    %1063 = vmatmul.mubr.f32.gmra.mrb[0].mxu0 %v1062
    %v1064 = vpop.f32.mrb[0].mxu0
    %v1065 = vadd.f32 %v777, %v1064
    %v1066 = vpop.f32.mrb[0].mxu0
    %1067 = vmatprep.mubr.f32.mxu0 0.0
    %v1068 = vand.u32 %v142, 4294901760
    %v1069 = vsub.f32 %v142, %v1068
    %1070 = vmatmul.mubr.f32.gmra.mrb[0].mxu0 %v1069
    %v1071 = vpop.f32.mrb[0].mxu0
    %v1072 = vadd.f32 %v783, %v1071
    %v1073 = vpop.f32.mrb[0].mxu0
    %1074 = vmatprep.mubr.f32.mxu0 0.0
    %v1075 = vand.u32 %v145, 4294901760
    %v1076 = vsub.f32 %v145, %v1075
    %1077 = vmatmul.mubr.f32.gmra.mrb[0].mxu0 %v1076
    %v1078 = vpop.f32.mrb[0].mxu0
    %v1079 = vadd.f32 %v789, %v1078
    %v1080 = vpop.f32.mrb[0].mxu0
    %1081 = vmatprep.mubr.f32.mxu0 0.0
    %v1082 = vand.u32 %v148, 4294901760
    %v1083 = vsub.f32 %v148, %v1082
    %1084 = vmatmul.mubr.f32.gmra.mrb[0].mxu0 %v1083
    %v1085 = vpop.f32.mrb[0].mxu0
    %v1086 = vadd.f32 %v795, %v1085
    %v1087 = vpop.f32.mrb[0].mxu0
    %1088 = vmatprep.mubr.f32.mxu0 0.0
    %v1089 = vand.u32 %v151, 4294901760
    %v1090 = vsub.f32 %v151, %v1089
    %1091 = vmatmul.mubr.f32.gmra.mrb[0].mxu0 %v1090
    %v1092 = vpop.f32.mrb[0].mxu0
    %v1093 = vadd.f32 %v801, %v1092
    %v1094 = vpop.f32.mrb[0].mxu0
    %1095 = vmatprep.mubr.f32.mxu0 0.0
    %v1096 = vand.u32 %v154, 4294901760
    %v1097 = vsub.f32 %v154, %v1096
    %1098 = vmatmul.mubr.f32.gmra.mrb[0].mxu0 %v1097
    %v1099 = vpop.f32.mrb[0].mxu0
    %v1100 = vadd.f32 %v807, %v1099
    %v1101 = vpop.f32.mrb[0].mxu0
    %1102 = vmatprep.mubr.f32.mxu0 0.0
    %v1103 = vand.u32 %v157, 4294901760
    %v1104 = vsub.f32 %v157, %v1103
    %1105 = vmatmul.mubr.f32.gmra.mrb[0].mxu0 %v1104
    %v1106 = vpop.f32.mrb[0].mxu0
    %v1107 = vadd.f32 %v813, %v1106
    %v1108 = vpop.f32.mrb[0].mxu0
    %1109 = vmatprep.mubr.f32.mxu0 0.0
    %v1110 = vand.u32 %v160, 4294901760
    %v1111 = vsub.f32 %v160, %v1110
    %1112 = vmatmul.mubr.f32.gmra.mrb[0].mxu0 %v1111
    %v1113 = vpop.f32.mrb[0].mxu0
    %v1114 = vadd.f32 %v819, %v1113
    %v1115 = vpop.f32.mrb[0].mxu0
    %1116 = vmatprep.mubr.f32.mxu0 0.0
    %v1117 = vand.u32 %v163, 4294901760
    %v1118 = vsub.f32 %v163, %v1117
    %1119 = vmatmul.mubr.f32.gmra.mrb[0].mxu0 %v1118
    %v1120 = vpop.f32.mrb[0].mxu0
    %v1121 = vadd.f32 %v825, %v1120
    %v1122 = vpop.f32.mrb[0].mxu0
    %1123 = vmatprep.mubr.f32.mxu0 0.0
    %v1124 = vand.u32 %v166, 4294901760
    %v1125 = vsub.f32 %v166, %v1124
    %1126 = vmatmul.mubr.f32.gmra.mrb[0].mxu0 %v1125
    %v1127 = vpop.f32.mrb[0].mxu0
    %v1128 = vadd.f32 %v831, %v1127
    %v1129 = vpop.f32.mrb[0].mxu0
    %1130 = vdwg.mxu0
    %1131 = vmatprep.subr.mxu0 0.0
    %v1132 = vand.u32 %v60, 4294901760
    %1133 = vmatpush1.msra.mxu0 %v1132
    %1134 = vmatprep.subr.mxu0 0.0
    %v1135 = vand.u32 %v61, 4294901760
    %1136 = vmatpush1.msra.mxu0 %v1135
    %1137 = vmatprep.subr.mxu0 0.0
    %v1138 = vand.u32 %v62, 4294901760
    %1139 = vmatpush1.msra.mxu0 %v1138
    %1140 = vmatprep.subr.mxu0 0.0
    %v1141 = vand.u32 %v63, 4294901760
    %1142 = vmatpush1.msra.mxu0 %v1141
    %1143 = vmatprep.subr.mxu0 0.0
    %1144 = vmatpush1.msra.mxu0 0.0
    %1145 = vmatprep.subr.mxu0 0.0
    %1146 = vmatpush1.msra.mxu0 0.0
    %1147 = vmatprep.subr.mxu0 0.0
    %1148 = vmatpush1.msra.mxu0 0.0
    %1149 = vmatprep.subr.mxu0 0.0
    %1150 = vmatpush1.msra.mxu0 0.0
    %1151 = vmatprep.subr.mxu0 0.0
    %1152 = vmatpush1.msra.mxu0 0.0
    %1153 = vmatprep.subr.mxu0 0.0
    %1154 = vmatpush1.msra.mxu0 0.0
    %1155 = vmatprep.subr.mxu0 0.0
    %1156 = vmatpush1.msra.mxu0 0.0
    %1157 = vmatprep.subr.mxu0 0.0
    %1158 = vmatpush1.msra.mxu0 0.0
    %1159 = vmatprep.subr.mxu0 0.0
    %1160 = vmatpush1.msra.mxu0 0.0
    %1161 = vmatprep.subr.mxu0 0.0
    %1162 = vmatpush1.msra.mxu0 0.0
    %1163 = vmatprep.subr.mxu0 0.0
    %1164 = vmatpush1.msra.mxu0 0.0
    %1165 = vmatprep.subr.mxu0 0.0
    %1166 = vmatpush1.msra.mxu0 0.0
    %1167 = vmatprep.subr.mxu0 0.0
    %1168 = vmatpush1.msra.mxu0 0.0
    %1169 = vmatprep.subr.mxu0 0.0
    %1170 = vmatpush1.msra.mxu0 0.0
    %1171 = vmatprep.subr.mxu0 0.0
    %1172 = vmatpush1.msra.mxu0 0.0
    %1173 = vmatprep.subr.mxu0 0.0
    %1174 = vmatpush1.msra.mxu0 0.0
    %1175 = vmatprep.subr.mxu0 0.0
    %1176 = vmatpush1.msra.mxu0 0.0
    %1177 = vmatprep.subr.mxu0 0.0
    %1178 = vmatpush1.msra.mxu0 0.0
    %1179 = vmatprep.subr.mxu0 0.0
    %1180 = vmatpush1.msra.mxu0 0.0
    %1181 = vmatprep.subr.mxu0 0.0
    %1182 = vmatpush1.msra.mxu0 0.0
    %1183 = vmatprep.subr.mxu0 0.0
    %1184 = vmatpush1.msra.mxu0 0.0
    %1185 = vmatprep.subr.mxu0 0.0
    %1186 = vmatpush1.msra.mxu0 0.0
    %1187 = vmatprep.subr.mxu0 0.0
    %1188 = vmatpush1.msra.mxu0 0.0
    %1189 = vmatprep.subr.mxu0 0.0
    %1190 = vmatpush1.msra.mxu0 0.0
    %1191 = vmatprep.subr.mxu0 0.0
    %1192 = vmatpush1.msra.mxu0 0.0
    %1193 = vmatprep.subr.mxu0 0.0
    %1194 = vmatpush1.msra.mxu0 0.0
    %1195 = vmatprep.subr.mxu0 0.0
    %1196 = vmatpush1.msra.mxu0 0.0
    %1197 = vmatprep.subr.mxu0 0.0
    %1198 = vmatpush1.msra.mxu0 0.0
    %1199 = vmatprep.mubr.f32.mxu0 0.0
    %v1200 = vand.u32 %v73, 4294901760
    %v1201 = vsub.f32 %v73, %v1200
    %v1202 = vand.u32 %v1201, 4294901760
    %1203 = vmatmul.mubr.f32.gmra.mrb[0].mxu0 %v1202
    %v1204 = vpop.f32.mrb[0].mxu0
    %v1205 = vadd.f32 %v911, %v1204
    %v1206 = vpop.f32.mrb[0].mxu0
    %1207 = vmatprep.mubr.f32.mxu0 0.0
    %v1208 = vand.u32 %v76, 4294901760
    %v1209 = vsub.f32 %v76, %v1208
    %v1210 = vand.u32 %v1209, 4294901760
    %1211 = vmatmul.mubr.f32.gmra.mrb[0].mxu0 %v1210
    %v1212 = vpop.f32.mrb[0].mxu0
    %v1213 = vadd.f32 %v918, %v1212
    %v1214 = vpop.f32.mrb[0].mxu0
    %1215 = vmatprep.mubr.f32.mxu0 0.0
    %v1216 = vand.u32 %v79, 4294901760
    %v1217 = vsub.f32 %v79, %v1216
    %v1218 = vand.u32 %v1217, 4294901760
    %1219 = vmatmul.mubr.f32.gmra.mrb[0].mxu0 %v1218
    %v1220 = vpop.f32.mrb[0].mxu0
    %v1221 = vadd.f32 %v925, %v1220
    %v1222 = vpop.f32.mrb[0].mxu0
    %1223 = vmatprep.mubr.f32.mxu0 0.0
    %v1224 = vand.u32 %v82, 4294901760
    %v1225 = vsub.f32 %v82, %v1224
    %v1226 = vand.u32 %v1225, 4294901760
    %1227 = vmatmul.mubr.f32.gmra.mrb[0].mxu0 %v1226
    %v1228 = vpop.f32.mrb[0].mxu0
    %v1229 = vadd.f32 %v932, %v1228
    %v1230 = vpop.f32.mrb[0].mxu0
    %1231 = vmatprep.mubr.f32.mxu0 0.0
    %v1232 = vand.u32 %v85, 4294901760
    %v1233 = vsub.f32 %v85, %v1232
    %v1234 = vand.u32 %v1233, 4294901760
    %1235 = vmatmul.mubr.f32.gmra.mrb[0].mxu0 %v1234
    %v1236 = vpop.f32.mrb[0].mxu0
    %v1237 = vadd.f32 %v939, %v1236
    %v1238 = vpop.f32.mrb[0].mxu0
    %1239 = vmatprep.mubr.f32.mxu0 0.0
    %v1240 = vand.u32 %v88, 4294901760
    %v1241 = vsub.f32 %v88, %v1240
    %v1242 = vand.u32 %v1241, 4294901760
    %1243 = vmatmul.mubr.f32.gmra.mrb[0].mxu0 %v1242
    %v1244 = vpop.f32.mrb[0].mxu0
    %v1245 = vadd.f32 %v946, %v1244
    %v1246 = vpop.f32.mrb[0].mxu0
    %1247 = vmatprep.mubr.f32.mxu0 0.0
    %v1248 = vand.u32 %v91, 4294901760
    %v1249 = vsub.f32 %v91, %v1248
    %v1250 = vand.u32 %v1249, 4294901760
    %1251 = vmatmul.mubr.f32.gmra.mrb[0].mxu0 %v1250
    %v1252 = vpop.f32.mrb[0].mxu0
    %v1253 = vadd.f32 %v953, %v1252
    %v1254 = vpop.f32.mrb[0].mxu0
    %1255 = vmatprep.mubr.f32.mxu0 0.0
    %v1256 = vand.u32 %v94, 4294901760
    %v1257 = vsub.f32 %v94, %v1256
    %v1258 = vand.u32 %v1257, 4294901760
    %1259 = vmatmul.mubr.f32.gmra.mrb[0].mxu0 %v1258
    %v1260 = vpop.f32.mrb[0].mxu0
    %v1261 = vadd.f32 %v960, %v1260
    %v1262 = vpop.f32.mrb[0].mxu0
    %1263 = vmatprep.mubr.f32.mxu0 0.0
    %v1264 = vand.u32 %v97, 4294901760
    %v1265 = vsub.f32 %v97, %v1264
    %v1266 = vand.u32 %v1265, 4294901760
    %1267 = vmatmul.mubr.f32.gmra.mrb[0].mxu0 %v1266
    %v1268 = vpop.f32.mrb[0].mxu0
    %v1269 = vadd.f32 %v967, %v1268
    %v1270 = vpop.f32.mrb[0].mxu0
    %1271 = vmatprep.mubr.f32.mxu0 0.0
    %v1272 = vand.u32 %v100, 4294901760
    %v1273 = vsub.f32 %v100, %v1272
    %v1274 = vand.u32 %v1273, 4294901760
    %1275 = vmatmul.mubr.f32.gmra.mrb[0].mxu0 %v1274
    %v1276 = vpop.f32.mrb[0].mxu0
    %v1277 = vadd.f32 %v974, %v1276
    %v1278 = vpop.f32.mrb[0].mxu0
    %1279 = vmatprep.mubr.f32.mxu0 0.0
    %v1280 = vand.u32 %v103, 4294901760
    %v1281 = vsub.f32 %v103, %v1280
    %v1282 = vand.u32 %v1281, 4294901760
    %1283 = vmatmul.mubr.f32.gmra.mrb[0].mxu0 %v1282
    %v1284 = vpop.f32.mrb[0].mxu0
    %v1285 = vadd.f32 %v981, %v1284
    %v1286 = vpop.f32.mrb[0].mxu0
    %1287 = vmatprep.mubr.f32.mxu0 0.0
    %v1288 = vand.u32 %v106, 4294901760
    %v1289 = vsub.f32 %v106, %v1288
    %v1290 = vand.u32 %v1289, 4294901760
    %1291 = vmatmul.mubr.f32.gmra.mrb[0].mxu0 %v1290
    %v1292 = vpop.f32.mrb[0].mxu0
    %v1293 = vadd.f32 %v988, %v1292
    %v1294 = vpop.f32.mrb[0].mxu0
    %1295 = vmatprep.mubr.f32.mxu0 0.0
    %v1296 = vand.u32 %v109, 4294901760
    %v1297 = vsub.f32 %v109, %v1296
    %v1298 = vand.u32 %v1297, 4294901760
    %1299 = vmatmul.mubr.f32.gmra.mrb[0].mxu0 %v1298
    %v1300 = vpop.f32.mrb[0].mxu0
    %v1301 = vadd.f32 %v995, %v1300
    %v1302 = vpop.f32.mrb[0].mxu0
    %1303 = vmatprep.mubr.f32.mxu0 0.0
    %v1304 = vand.u32 %v112, 4294901760
    %v1305 = vsub.f32 %v112, %v1304
    %v1306 = vand.u32 %v1305, 4294901760
    %1307 = vmatmul.mubr.f32.gmra.mrb[0].mxu0 %v1306
    %v1308 = vpop.f32.mrb[0].mxu0
    %v1309 = vadd.f32 %v1002, %v1308
    %v1310 = vpop.f32.mrb[0].mxu0
    %1311 = vmatprep.mubr.f32.mxu0 0.0
    %v1312 = vand.u32 %v115, 4294901760
    %v1313 = vsub.f32 %v115, %v1312
    %v1314 = vand.u32 %v1313, 4294901760
    %1315 = vmatmul.mubr.f32.gmra.mrb[0].mxu0 %v1314
    %v1316 = vpop.f32.mrb[0].mxu0
    %v1317 = vadd.f32 %v1009, %v1316
    %v1318 = vpop.f32.mrb[0].mxu0
    %1319 = vmatprep.mubr.f32.mxu0 0.0
    %v1320 = vand.u32 %v118, 4294901760
    %v1321 = vsub.f32 %v118, %v1320
    %v1322 = vand.u32 %v1321, 4294901760
    %1323 = vmatmul.mubr.f32.gmra.mrb[0].mxu0 %v1322
    %v1324 = vpop.f32.mrb[0].mxu0
    %v1325 = vadd.f32 %v1016, %v1324
    %v1326 = vpop.f32.mrb[0].mxu0
    %1327 = vmatprep.mubr.f32.mxu0 0.0
    %v1328 = vand.u32 %v121, 4294901760
    %v1329 = vsub.f32 %v121, %v1328
    %v1330 = vand.u32 %v1329, 4294901760
    %1331 = vmatmul.mubr.f32.gmra.mrb[0].mxu0 %v1330
    %v1332 = vpop.f32.mrb[0].mxu0
    %v1333 = vadd.f32 %v1023, %v1332
    %v1334 = vpop.f32.mrb[0].mxu0
    %1335 = vmatprep.mubr.f32.mxu0 0.0
    %v1336 = vand.u32 %v124, 4294901760
    %v1337 = vsub.f32 %v124, %v1336
    %v1338 = vand.u32 %v1337, 4294901760
    %1339 = vmatmul.mubr.f32.gmra.mrb[0].mxu0 %v1338
    %v1340 = vpop.f32.mrb[0].mxu0
    %v1341 = vadd.f32 %v1030, %v1340
    %v1342 = vpop.f32.mrb[0].mxu0
    %1343 = vmatprep.mubr.f32.mxu0 0.0
    %v1344 = vand.u32 %v127, 4294901760
    %v1345 = vsub.f32 %v127, %v1344
    %v1346 = vand.u32 %v1345, 4294901760
    %1347 = vmatmul.mubr.f32.gmra.mrb[0].mxu0 %v1346
    %v1348 = vpop.f32.mrb[0].mxu0
    %v1349 = vadd.f32 %v1037, %v1348
    %v1350 = vpop.f32.mrb[0].mxu0
    %1351 = vmatprep.mubr.f32.mxu0 0.0
    %v1352 = vand.u32 %v130, 4294901760
    %v1353 = vsub.f32 %v130, %v1352
    %v1354 = vand.u32 %v1353, 4294901760
    %1355 = vmatmul.mubr.f32.gmra.mrb[0].mxu0 %v1354
    %v1356 = vpop.f32.mrb[0].mxu0
    %v1357 = vadd.f32 %v1044, %v1356
    %v1358 = vpop.f32.mrb[0].mxu0
    %1359 = vmatprep.mubr.f32.mxu0 0.0
    %v1360 = vand.u32 %v133, 4294901760
    %v1361 = vsub.f32 %v133, %v1360
    %v1362 = vand.u32 %v1361, 4294901760
    %1363 = vmatmul.mubr.f32.gmra.mrb[0].mxu0 %v1362
    %v1364 = vpop.f32.mrb[0].mxu0
    %v1365 = vadd.f32 %v1051, %v1364
    %v1366 = vpop.f32.mrb[0].mxu0
    %1367 = vmatprep.mubr.f32.mxu0 0.0
    %v1368 = vand.u32 %v136, 4294901760
    %v1369 = vsub.f32 %v136, %v1368
    %v1370 = vand.u32 %v1369, 4294901760
    %1371 = vmatmul.mubr.f32.gmra.mrb[0].mxu0 %v1370
    %v1372 = vpop.f32.mrb[0].mxu0
    %v1373 = vadd.f32 %v1058, %v1372
    %v1374 = vpop.f32.mrb[0].mxu0
    %1375 = vmatprep.mubr.f32.mxu0 0.0
    %v1376 = vand.u32 %v139, 4294901760
    %v1377 = vsub.f32 %v139, %v1376
    %v1378 = vand.u32 %v1377, 4294901760
    %1379 = vmatmul.mubr.f32.gmra.mrb[0].mxu0 %v1378
    %v1380 = vpop.f32.mrb[0].mxu0
    %v1381 = vadd.f32 %v1065, %v1380
    %v1382 = vpop.f32.mrb[0].mxu0
    %1383 = vmatprep.mubr.f32.mxu0 0.0
    %v1384 = vand.u32 %v142, 4294901760
    %v1385 = vsub.f32 %v142, %v1384
    %v1386 = vand.u32 %v1385, 4294901760
    %1387 = vmatmul.mubr.f32.gmra.mrb[0].mxu0 %v1386
    %v1388 = vpop.f32.mrb[0].mxu0
    %v1389 = vadd.f32 %v1072, %v1388
    %v1390 = vpop.f32.mrb[0].mxu0
    %1391 = vmatprep.mubr.f32.mxu0 0.0
    %v1392 = vand.u32 %v145, 4294901760
    %v1393 = vsub.f32 %v145, %v1392
    %v1394 = vand.u32 %v1393, 4294901760
    %1395 = vmatmul.mubr.f32.gmra.mrb[0].mxu0 %v1394
    %v1396 = vpop.f32.mrb[0].mxu0
    %v1397 = vadd.f32 %v1079, %v1396
    %v1398 = vpop.f32.mrb[0].mxu0
    %1399 = vmatprep.mubr.f32.mxu0 0.0
    %v1400 = vand.u32 %v148, 4294901760
    %v1401 = vsub.f32 %v148, %v1400
    %v1402 = vand.u32 %v1401, 4294901760
    %1403 = vmatmul.mubr.f32.gmra.mrb[0].mxu0 %v1402
    %v1404 = vpop.f32.mrb[0].mxu0
    %v1405 = vadd.f32 %v1086, %v1404
    %v1406 = vpop.f32.mrb[0].mxu0
    %1407 = vmatprep.mubr.f32.mxu0 0.0
    %v1408 = vand.u32 %v151, 4294901760
    %v1409 = vsub.f32 %v151, %v1408
    %v1410 = vand.u32 %v1409, 4294901760
    %1411 = vmatmul.mubr.f32.gmra.mrb[0].mxu0 %v1410
    %v1412 = vpop.f32.mrb[0].mxu0
    %v1413 = vadd.f32 %v1093, %v1412
    %v1414 = vpop.f32.mrb[0].mxu0
    %1415 = vmatprep.mubr.f32.mxu0 0.0
    %v1416 = vand.u32 %v154, 4294901760
    %v1417 = vsub.f32 %v154, %v1416
    %v1418 = vand.u32 %v1417, 4294901760
    %1419 = vmatmul.mubr.f32.gmra.mrb[0].mxu0 %v1418
    %v1420 = vpop.f32.mrb[0].mxu0
    %v1421 = vadd.f32 %v1100, %v1420
    %v1422 = vpop.f32.mrb[0].mxu0
    %1423 = vmatprep.mubr.f32.mxu0 0.0
    %v1424 = vand.u32 %v157, 4294901760
    %v1425 = vsub.f32 %v157, %v1424
    %v1426 = vand.u32 %v1425, 4294901760
    %1427 = vmatmul.mubr.f32.gmra.mrb[0].mxu0 %v1426
    %v1428 = vpop.f32.mrb[0].mxu0
    %v1429 = vadd.f32 %v1107, %v1428
    %v1430 = vpop.f32.mrb[0].mxu0
    %1431 = vmatprep.mubr.f32.mxu0 0.0
    %v1432 = vand.u32 %v160, 4294901760
    %v1433 = vsub.f32 %v160, %v1432
    %v1434 = vand.u32 %v1433, 4294901760
    %1435 = vmatmul.mubr.f32.gmra.mrb[0].mxu0 %v1434
    %v1436 = vpop.f32.mrb[0].mxu0
    %v1437 = vadd.f32 %v1114, %v1436
    %v1438 = vpop.f32.mrb[0].mxu0
    %1439 = vmatprep.mubr.f32.mxu0 0.0
    %v1440 = vand.u32 %v163, 4294901760
    %v1441 = vsub.f32 %v163, %v1440
    %v1442 = vand.u32 %v1441, 4294901760
    %1443 = vmatmul.mubr.f32.gmra.mrb[0].mxu0 %v1442
    %v1444 = vpop.f32.mrb[0].mxu0
    %v1445 = vadd.f32 %v1121, %v1444
    %v1446 = vpop.f32.mrb[0].mxu0
    %1447 = vmatprep.mubr.f32.mxu0 0.0
    %v1448 = vand.u32 %v166, 4294901760
    %v1449 = vsub.f32 %v166, %v1448
    %v1450 = vand.u32 %v1449, 4294901760
    %1451 = vmatmul.mubr.f32.gmra.mrb[0].mxu0 %v1450
    %v1452 = vpop.f32.mrb[0].mxu0
    %v1453 = vadd.f32 %v1128, %v1452
    %v1454 = vpop.f32.mrb[0].mxu0
    %1455 = vdwg.mxu0
    %1456 = vmatprep.subr.mxu0 0.0
    %v1457 = vand.u32 %v60, 4294901760
    %v1458 = vsub.f32 %v60, %v1457
    %v1459 = vand.u32 %v1458, 4294901760
    %1460 = vmatpush1.msra.mxu0 %v1459
    %1461 = vmatprep.subr.mxu0 0.0
    %v1462 = vand.u32 %v61, 4294901760
    %v1463 = vsub.f32 %v61, %v1462
    %v1464 = vand.u32 %v1463, 4294901760
    %1465 = vmatpush1.msra.mxu0 %v1464
    %1466 = vmatprep.subr.mxu0 0.0
    %v1467 = vand.u32 %v62, 4294901760
    %v1468 = vsub.f32 %v62, %v1467
    %v1469 = vand.u32 %v1468, 4294901760
    %1470 = vmatpush1.msra.mxu0 %v1469
    %1471 = vmatprep.subr.mxu0 0.0
    %v1472 = vand.u32 %v63, 4294901760
    %v1473 = vsub.f32 %v63, %v1472
    %v1474 = vand.u32 %v1473, 4294901760
    %1475 = vmatpush1.msra.mxu0 %v1474
    %1476 = vmatprep.subr.mxu0 0.0
    %1477 = vmatpush1.msra.mxu0 0.0
    %1478 = vmatprep.subr.mxu0 0.0
    %1479 = vmatpush1.msra.mxu0 0.0
    %1480 = vmatprep.subr.mxu0 0.0
    %1481 = vmatpush1.msra.mxu0 0.0
    %1482 = vmatprep.subr.mxu0 0.0
    %1483 = vmatpush1.msra.mxu0 0.0
    %1484 = vmatprep.subr.mxu0 0.0
    %1485 = vmatpush1.msra.mxu0 0.0
    %1486 = vmatprep.subr.mxu0 0.0
    %1487 = vmatpush1.msra.mxu0 0.0
    %1488 = vmatprep.subr.mxu0 0.0
    %1489 = vmatpush1.msra.mxu0 0.0
    %1490 = vmatprep.subr.mxu0 0.0
    %1491 = vmatpush1.msra.mxu0 0.0
    %1492 = vmatprep.subr.mxu0 0.0
    %1493 = vmatpush1.msra.mxu0 0.0
    %1494 = vmatprep.subr.mxu0 0.0
    %1495 = vmatpush1.msra.mxu0 0.0
    %1496 = vmatprep.subr.mxu0 0.0
    %1497 = vmatpush1.msra.mxu0 0.0
    %1498 = vmatprep.subr.mxu0 0.0
    %1499 = vmatpush1.msra.mxu0 0.0
    %1500 = vmatprep.subr.mxu0 0.0
    %1501 = vmatpush1.msra.mxu0 0.0
    %1502 = vmatprep.subr.mxu0 0.0
    %1503 = vmatpush1.msra.mxu0 0.0
    %1504 = vmatprep.subr.mxu0 0.0
    %1505 = vmatpush1.msra.mxu0 0.0
    %1506 = vmatprep.subr.mxu0 0.0
    %1507 = vmatpush1.msra.mxu0 0.0
    %1508 = vmatprep.subr.mxu0 0.0
    %1509 = vmatpush1.msra.mxu0 0.0
    %1510 = vmatprep.subr.mxu0 0.0
    %1511 = vmatpush1.msra.mxu0 0.0
    %1512 = vmatprep.subr.mxu0 0.0
    %1513 = vmatpush1.msra.mxu0 0.0
    %1514 = vmatprep.subr.mxu0 0.0
    %1515 = vmatpush1.msra.mxu0 0.0
    %1516 = vmatprep.subr.mxu0 0.0
    %1517 = vmatpush1.msra.mxu0 0.0
    %1518 = vmatprep.subr.mxu0 0.0
    %1519 = vmatpush1.msra.mxu0 0.0
    %1520 = vmatprep.subr.mxu0 0.0
    %1521 = vmatpush1.msra.mxu0 0.0
    %1522 = vmatprep.subr.mxu0 0.0
    %1523 = vmatpush1.msra.mxu0 0.0
    %1524 = vmatprep.subr.mxu0 0.0
    %1525 = vmatpush1.msra.mxu0 0.0
    %1526 = vmatprep.subr.mxu0 0.0
    %1527 = vmatpush1.msra.mxu0 0.0
    %1528 = vmatprep.subr.mxu0 0.0
    %1529 = vmatpush1.msra.mxu0 0.0
    %1530 = vmatprep.subr.mxu0 0.0
    %1531 = vmatpush1.msra.mxu0 0.0
    %1532 = vmatprep.mubr.f32.mxu0 0.0
    %v1533 = vand.u32 %v73, 4294901760
    %1534 = vmatmul.mubr.f32.gmra.mrb[0].mxu0 %v1533
    %v1535 = vpop.f32.mrb[0].mxu0
    %v1536 = vadd.f32 %v1205, %v1535
    %v1537 = vpop.f32.mrb[0].mxu0
    %1538 = vmatprep.mubr.f32.mxu0 0.0
    %v1539 = vand.u32 %v76, 4294901760
    %1540 = vmatmul.mubr.f32.gmra.mrb[0].mxu0 %v1539
    %v1541 = vpop.f32.mrb[0].mxu0
    %v1542 = vadd.f32 %v1213, %v1541
    %v1543 = vpop.f32.mrb[0].mxu0
    %1544 = vmatprep.mubr.f32.mxu0 0.0
    %v1545 = vand.u32 %v79, 4294901760
    %1546 = vmatmul.mubr.f32.gmra.mrb[0].mxu0 %v1545
    %v1547 = vpop.f32.mrb[0].mxu0
    %v1548 = vadd.f32 %v1221, %v1547
    %v1549 = vpop.f32.mrb[0].mxu0
    %1550 = vmatprep.mubr.f32.mxu0 0.0
    %v1551 = vand.u32 %v82, 4294901760
    %1552 = vmatmul.mubr.f32.gmra.mrb[0].mxu0 %v1551
    %v1553 = vpop.f32.mrb[0].mxu0
    %v1554 = vadd.f32 %v1229, %v1553
    %v1555 = vpop.f32.mrb[0].mxu0
    %1556 = vmatprep.mubr.f32.mxu0 0.0
    %v1557 = vand.u32 %v85, 4294901760
    %1558 = vmatmul.mubr.f32.gmra.mrb[0].mxu0 %v1557
    %v1559 = vpop.f32.mrb[0].mxu0
    %v1560 = vadd.f32 %v1237, %v1559
    %v1561 = vpop.f32.mrb[0].mxu0
    %1562 = vmatprep.mubr.f32.mxu0 0.0
    %v1563 = vand.u32 %v88, 4294901760
    %1564 = vmatmul.mubr.f32.gmra.mrb[0].mxu0 %v1563
    %v1565 = vpop.f32.mrb[0].mxu0
    %v1566 = vadd.f32 %v1245, %v1565
    %v1567 = vpop.f32.mrb[0].mxu0
    %1568 = vmatprep.mubr.f32.mxu0 0.0
    %v1569 = vand.u32 %v91, 4294901760
    %1570 = vmatmul.mubr.f32.gmra.mrb[0].mxu0 %v1569
    %v1571 = vpop.f32.mrb[0].mxu0
    %v1572 = vadd.f32 %v1253, %v1571
    %v1573 = vpop.f32.mrb[0].mxu0
    %1574 = vmatprep.mubr.f32.mxu0 0.0
    %v1575 = vand.u32 %v94, 4294901760
    %1576 = vmatmul.mubr.f32.gmra.mrb[0].mxu0 %v1575
    %v1577 = vpop.f32.mrb[0].mxu0
    %v1578 = vadd.f32 %v1261, %v1577
    %v1579 = vpop.f32.mrb[0].mxu0
    %1580 = vmatprep.mubr.f32.mxu0 0.0
    %v1581 = vand.u32 %v97, 4294901760
    %1582 = vmatmul.mubr.f32.gmra.mrb[0].mxu0 %v1581
    %v1583 = vpop.f32.mrb[0].mxu0
    %v1584 = vadd.f32 %v1269, %v1583
    %v1585 = vpop.f32.mrb[0].mxu0
    %1586 = vmatprep.mubr.f32.mxu0 0.0
    %v1587 = vand.u32 %v100, 4294901760
    %1588 = vmatmul.mubr.f32.gmra.mrb[0].mxu0 %v1587
    %v1589 = vpop.f32.mrb[0].mxu0
    %v1590 = vadd.f32 %v1277, %v1589
    %v1591 = vpop.f32.mrb[0].mxu0
    %1592 = vmatprep.mubr.f32.mxu0 0.0
    %v1593 = vand.u32 %v103, 4294901760
    %1594 = vmatmul.mubr.f32.gmra.mrb[0].mxu0 %v1593
    %v1595 = vpop.f32.mrb[0].mxu0
    %v1596 = vadd.f32 %v1285, %v1595
    %v1597 = vpop.f32.mrb[0].mxu0
    %1598 = vmatprep.mubr.f32.mxu0 0.0
    %v1599 = vand.u32 %v106, 4294901760
    %1600 = vmatmul.mubr.f32.gmra.mrb[0].mxu0 %v1599
    %v1601 = vpop.f32.mrb[0].mxu0
    %v1602 = vadd.f32 %v1293, %v1601
    %v1603 = vpop.f32.mrb[0].mxu0
    %1604 = vmatprep.mubr.f32.mxu0 0.0
    %v1605 = vand.u32 %v109, 4294901760
    %1606 = vmatmul.mubr.f32.gmra.mrb[0].mxu0 %v1605
    %v1607 = vpop.f32.mrb[0].mxu0
    %v1608 = vadd.f32 %v1301, %v1607
    %v1609 = vpop.f32.mrb[0].mxu0
    %1610 = vmatprep.mubr.f32.mxu0 0.0
    %v1611 = vand.u32 %v112, 4294901760
    %1612 = vmatmul.mubr.f32.gmra.mrb[0].mxu0 %v1611
    %v1613 = vpop.f32.mrb[0].mxu0
    %v1614 = vadd.f32 %v1309, %v1613
    %v1615 = vpop.f32.mrb[0].mxu0
    %1616 = vmatprep.mubr.f32.mxu0 0.0
    %v1617 = vand.u32 %v115, 4294901760
    %1618 = vmatmul.mubr.f32.gmra.mrb[0].mxu0 %v1617
    %v1619 = vpop.f32.mrb[0].mxu0
    %v1620 = vadd.f32 %v1317, %v1619
    %v1621 = vpop.f32.mrb[0].mxu0
    %1622 = vmatprep.mubr.f32.mxu0 0.0
    %v1623 = vand.u32 %v118, 4294901760
    %1624 = vmatmul.mubr.f32.gmra.mrb[0].mxu0 %v1623
    %v1625 = vpop.f32.mrb[0].mxu0
    %v1626 = vadd.f32 %v1325, %v1625
    %v1627 = vpop.f32.mrb[0].mxu0
    %1628 = vmatprep.mubr.f32.mxu0 0.0
    %v1629 = vand.u32 %v121, 4294901760
    %1630 = vmatmul.mubr.f32.gmra.mrb[0].mxu0 %v1629
    %v1631 = vpop.f32.mrb[0].mxu0
    %v1632 = vadd.f32 %v1333, %v1631
    %v1633 = vpop.f32.mrb[0].mxu0
    %1634 = vmatprep.mubr.f32.mxu0 0.0
    %v1635 = vand.u32 %v124, 4294901760
    %1636 = vmatmul.mubr.f32.gmra.mrb[0].mxu0 %v1635
    %v1637 = vpop.f32.mrb[0].mxu0
    %v1638 = vadd.f32 %v1341, %v1637
    %v1639 = vpop.f32.mrb[0].mxu0
    %1640 = vmatprep.mubr.f32.mxu0 0.0
    %v1641 = vand.u32 %v127, 4294901760
    %1642 = vmatmul.mubr.f32.gmra.mrb[0].mxu0 %v1641
    %v1643 = vpop.f32.mrb[0].mxu0
    %v1644 = vadd.f32 %v1349, %v1643
    %v1645 = vpop.f32.mrb[0].mxu0
    %1646 = vmatprep.mubr.f32.mxu0 0.0
    %v1647 = vand.u32 %v130, 4294901760
    %1648 = vmatmul.mubr.f32.gmra.mrb[0].mxu0 %v1647
    %v1649 = vpop.f32.mrb[0].mxu0
    %v1650 = vadd.f32 %v1357, %v1649
    %v1651 = vpop.f32.mrb[0].mxu0
    %1652 = vmatprep.mubr.f32.mxu0 0.0
    %v1653 = vand.u32 %v133, 4294901760
    %1654 = vmatmul.mubr.f32.gmra.mrb[0].mxu0 %v1653
    %v1655 = vpop.f32.mrb[0].mxu0
    %v1656 = vadd.f32 %v1365, %v1655
    %v1657 = vpop.f32.mrb[0].mxu0
    %1658 = vmatprep.mubr.f32.mxu0 0.0
    %v1659 = vand.u32 %v136, 4294901760
    %1660 = vmatmul.mubr.f32.gmra.mrb[0].mxu0 %v1659
    %v1661 = vpop.f32.mrb[0].mxu0
    %v1662 = vadd.f32 %v1373, %v1661
    %v1663 = vpop.f32.mrb[0].mxu0
    %1664 = vmatprep.mubr.f32.mxu0 0.0
    %v1665 = vand.u32 %v139, 4294901760
    %1666 = vmatmul.mubr.f32.gmra.mrb[0].mxu0 %v1665
    %v1667 = vpop.f32.mrb[0].mxu0
    %v1668 = vadd.f32 %v1381, %v1667
    %v1669 = vpop.f32.mrb[0].mxu0
    %1670 = vmatprep.mubr.f32.mxu0 0.0
    %v1671 = vand.u32 %v142, 4294901760
    %1672 = vmatmul.mubr.f32.gmra.mrb[0].mxu0 %v1671
    %v1673 = vpop.f32.mrb[0].mxu0
    %v1674 = vadd.f32 %v1389, %v1673
    %v1675 = vpop.f32.mrb[0].mxu0
    %1676 = vmatprep.mubr.f32.mxu0 0.0
    %v1677 = vand.u32 %v145, 4294901760
    %1678 = vmatmul.mubr.f32.gmra.mrb[0].mxu0 %v1677
    %v1679 = vpop.f32.mrb[0].mxu0
    %v1680 = vadd.f32 %v1397, %v1679
    %v1681 = vpop.f32.mrb[0].mxu0
    %1682 = vmatprep.mubr.f32.mxu0 0.0
    %v1683 = vand.u32 %v148, 4294901760
    %1684 = vmatmul.mubr.f32.gmra.mrb[0].mxu0 %v1683
    %v1685 = vpop.f32.mrb[0].mxu0
    %v1686 = vadd.f32 %v1405, %v1685
    %v1687 = vpop.f32.mrb[0].mxu0
    %1688 = vmatprep.mubr.f32.mxu0 0.0
    %v1689 = vand.u32 %v151, 4294901760
    %1690 = vmatmul.mubr.f32.gmra.mrb[0].mxu0 %v1689
    %v1691 = vpop.f32.mrb[0].mxu0
    %v1692 = vadd.f32 %v1413, %v1691
    %v1693 = vpop.f32.mrb[0].mxu0
    %1694 = vmatprep.mubr.f32.mxu0 0.0
    %v1695 = vand.u32 %v154, 4294901760
    %1696 = vmatmul.mubr.f32.gmra.mrb[0].mxu0 %v1695
    %v1697 = vpop.f32.mrb[0].mxu0
    %v1698 = vadd.f32 %v1421, %v1697
    %v1699 = vpop.f32.mrb[0].mxu0
    %1700 = vmatprep.mubr.f32.mxu0 0.0
    %v1701 = vand.u32 %v157, 4294901760
    %1702 = vmatmul.mubr.f32.gmra.mrb[0].mxu0 %v1701
    %v1703 = vpop.f32.mrb[0].mxu0
    %v1704 = vadd.f32 %v1429, %v1703
    %v1705 = vpop.f32.mrb[0].mxu0
    %1706 = vmatprep.mubr.f32.mxu0 0.0
    %v1707 = vand.u32 %v160, 4294901760
    %1708 = vmatmul.mubr.f32.gmra.mrb[0].mxu0 %v1707
    %v1709 = vpop.f32.mrb[0].mxu0
    %v1710 = vadd.f32 %v1437, %v1709
    %v1711 = vpop.f32.mrb[0].mxu0
    %1712 = vmatprep.mubr.f32.mxu0 0.0
    %v1713 = vand.u32 %v163, 4294901760
    %1714 = vmatmul.mubr.f32.gmra.mrb[0].mxu0 %v1713
    %v1715 = vpop.f32.mrb[0].mxu0
    %v1716 = vadd.f32 %v1445, %v1715
    %v1717 = vpop.f32.mrb[0].mxu0
    %1718 = vmatprep.mubr.f32.mxu0 0.0
    %v1719 = vand.u32 %v166, 4294901760
    %1720 = vmatmul.mubr.f32.gmra.mrb[0].mxu0 %v1719
    %v1721 = vpop.f32.mrb[0].mxu0
    %v1722 = vadd.f32 %v1453, %v1721
    %v1723 = vpop.f32.mrb[0].mxu0
    %1724 = vdwg.mxu0
    %1725 = vmatprep.subr.mxu0 0.0
    %v1726 = vand.u32 %v60, 4294901760
    %1727 = vmatpush1.msra.mxu0 %v1726
    %1728 = vmatprep.subr.mxu0 0.0
    %v1729 = vand.u32 %v61, 4294901760
    %1730 = vmatpush1.msra.mxu0 %v1729
    %1731 = vmatprep.subr.mxu0 0.0
    %v1732 = vand.u32 %v62, 4294901760
    %1733 = vmatpush1.msra.mxu0 %v1732
    %1734 = vmatprep.subr.mxu0 0.0
    %v1735 = vand.u32 %v63, 4294901760
    %1736 = vmatpush1.msra.mxu0 %v1735
    %1737 = vmatprep.subr.mxu0 0.0
    %1738 = vmatpush1.msra.mxu0 0.0
    %1739 = vmatprep.subr.mxu0 0.0
    %1740 = vmatpush1.msra.mxu0 0.0
    %1741 = vmatprep.subr.mxu0 0.0
    %1742 = vmatpush1.msra.mxu0 0.0
    %1743 = vmatprep.subr.mxu0 0.0
    %1744 = vmatpush1.msra.mxu0 0.0
    %1745 = vmatprep.subr.mxu0 0.0
    %1746 = vmatpush1.msra.mxu0 0.0
    %1747 = vmatprep.subr.mxu0 0.0
    %1748 = vmatpush1.msra.mxu0 0.0
    %1749 = vmatprep.subr.mxu0 0.0
    %1750 = vmatpush1.msra.mxu0 0.0
    %1751 = vmatprep.subr.mxu0 0.0
    %1752 = vmatpush1.msra.mxu0 0.0
    %1753 = vmatprep.subr.mxu0 0.0
    %1754 = vmatpush1.msra.mxu0 0.0
    %1755 = vmatprep.subr.mxu0 0.0
    %1756 = vmatpush1.msra.mxu0 0.0
    %1757 = vmatprep.subr.mxu0 0.0
    %1758 = vmatpush1.msra.mxu0 0.0
    %1759 = vmatprep.subr.mxu0 0.0
    %1760 = vmatpush1.msra.mxu0 0.0
    %1761 = vmatprep.subr.mxu0 0.0
    %1762 = vmatpush1.msra.mxu0 0.0
    %1763 = vmatprep.subr.mxu0 0.0
    %1764 = vmatpush1.msra.mxu0 0.0
    %1765 = vmatprep.subr.mxu0 0.0
    %1766 = vmatpush1.msra.mxu0 0.0
    %1767 = vmatprep.subr.mxu0 0.0
    %1768 = vmatpush1.msra.mxu0 0.0
    %1769 = vmatprep.subr.mxu0 0.0
    %1770 = vmatpush1.msra.mxu0 0.0
    %1771 = vmatprep.subr.mxu0 0.0
    %1772 = vmatpush1.msra.mxu0 0.0
    %1773 = vmatprep.subr.mxu0 0.0
    %1774 = vmatpush1.msra.mxu0 0.0
    %1775 = vmatprep.subr.mxu0 0.0
    %1776 = vmatpush1.msra.mxu0 0.0
    %1777 = vmatprep.subr.mxu0 0.0
    %1778 = vmatpush1.msra.mxu0 0.0
    %1779 = vmatprep.subr.mxu0 0.0
    %1780 = vmatpush1.msra.mxu0 0.0
    %1781 = vmatprep.subr.mxu0 0.0
    %1782 = vmatpush1.msra.mxu0 0.0
    %1783 = vmatprep.subr.mxu0 0.0
    %1784 = vmatpush1.msra.mxu0 0.0
    %1785 = vmatprep.subr.mxu0 0.0
    %1786 = vmatpush1.msra.mxu0 0.0
    %1787 = vmatprep.subr.mxu0 0.0
    %1788 = vmatpush1.msra.mxu0 0.0
    %1789 = vmatprep.subr.mxu0 0.0
    %1790 = vmatpush1.msra.mxu0 0.0
    %1791 = vmatprep.subr.mxu0 0.0
    %1792 = vmatpush1.msra.mxu0 0.0
    %1793 = vmatprep.mubr.f32.mxu0 0.0
    %v1794 = vand.u32 %v73, 4294901760
    %1795 = vmatmul.mubr.f32.gmra.mrb[0].mxu0 %v1794
    %v1796 = vpop.f32.mrb[0].mxu0
    %v1797 = vadd.f32 %v1536, %v1796
    %v1798 = vpop.f32.mrb[0].mxu0
    %1799 = vmatprep.mubr.f32.mxu0 0.0
    %v1800 = vand.u32 %v76, 4294901760
    %1801 = vmatmul.mubr.f32.gmra.mrb[0].mxu0 %v1800
    %v1802 = vpop.f32.mrb[0].mxu0
    %v1803 = vadd.f32 %v1542, %v1802
    %v1804 = vpop.f32.mrb[0].mxu0
    %1805 = vmatprep.mubr.f32.mxu0 0.0
    %v1806 = vand.u32 %v79, 4294901760
    %1807 = vmatmul.mubr.f32.gmra.mrb[0].mxu0 %v1806
    %v1808 = vpop.f32.mrb[0].mxu0
    %v1809 = vadd.f32 %v1548, %v1808
    %v1810 = vpop.f32.mrb[0].mxu0
    %1811 = vmatprep.mubr.f32.mxu0 0.0
    %v1812 = vand.u32 %v82, 4294901760
    %1813 = vmatmul.mubr.f32.gmra.mrb[0].mxu0 %v1812
    %v1814 = vpop.f32.mrb[0].mxu0
    %v1815 = vadd.f32 %v1554, %v1814
    %v1816 = vpop.f32.mrb[0].mxu0
    %1817 = vmatprep.mubr.f32.mxu0 0.0
    %v1818 = vand.u32 %v85, 4294901760
    %1819 = vmatmul.mubr.f32.gmra.mrb[0].mxu0 %v1818
    %v1820 = vpop.f32.mrb[0].mxu0
    %v1821 = vadd.f32 %v1560, %v1820
    %v1822 = vpop.f32.mrb[0].mxu0
    %1823 = vmatprep.mubr.f32.mxu0 0.0
    %v1824 = vand.u32 %v88, 4294901760
    %1825 = vmatmul.mubr.f32.gmra.mrb[0].mxu0 %v1824
    %v1826 = vpop.f32.mrb[0].mxu0
    %v1827 = vadd.f32 %v1566, %v1826
    %v1828 = vpop.f32.mrb[0].mxu0
    %1829 = vmatprep.mubr.f32.mxu0 0.0
    %v1830 = vand.u32 %v91, 4294901760
    %1831 = vmatmul.mubr.f32.gmra.mrb[0].mxu0 %v1830
    %v1832 = vpop.f32.mrb[0].mxu0
    %v1833 = vadd.f32 %v1572, %v1832
    %v1834 = vpop.f32.mrb[0].mxu0
    %1835 = vmatprep.mubr.f32.mxu0 0.0
    %v1836 = vand.u32 %v94, 4294901760
    %1837 = vmatmul.mubr.f32.gmra.mrb[0].mxu0 %v1836
    %v1838 = vpop.f32.mrb[0].mxu0
    %v1839 = vadd.f32 %v1578, %v1838
    %v1840 = vpop.f32.mrb[0].mxu0
    %1841 = vmatprep.mubr.f32.mxu0 0.0
    %v1842 = vand.u32 %v97, 4294901760
    %1843 = vmatmul.mubr.f32.gmra.mrb[0].mxu0 %v1842
    %v1844 = vpop.f32.mrb[0].mxu0
    %v1845 = vadd.f32 %v1584, %v1844
    %v1846 = vpop.f32.mrb[0].mxu0
    %1847 = vmatprep.mubr.f32.mxu0 0.0
    %v1848 = vand.u32 %v100, 4294901760
    %1849 = vmatmul.mubr.f32.gmra.mrb[0].mxu0 %v1848
    %v1850 = vpop.f32.mrb[0].mxu0
    %v1851 = vadd.f32 %v1590, %v1850
    %v1852 = vpop.f32.mrb[0].mxu0
    %1853 = vmatprep.mubr.f32.mxu0 0.0
    %v1854 = vand.u32 %v103, 4294901760
    %1855 = vmatmul.mubr.f32.gmra.mrb[0].mxu0 %v1854
    %v1856 = vpop.f32.mrb[0].mxu0
    %v1857 = vadd.f32 %v1596, %v1856
    %v1858 = vpop.f32.mrb[0].mxu0
    %1859 = vmatprep.mubr.f32.mxu0 0.0
    %v1860 = vand.u32 %v106, 4294901760
    %1861 = vmatmul.mubr.f32.gmra.mrb[0].mxu0 %v1860
    %v1862 = vpop.f32.mrb[0].mxu0
    %v1863 = vadd.f32 %v1602, %v1862
    %v1864 = vpop.f32.mrb[0].mxu0
    %1865 = vmatprep.mubr.f32.mxu0 0.0
    %v1866 = vand.u32 %v109, 4294901760
    %1867 = vmatmul.mubr.f32.gmra.mrb[0].mxu0 %v1866
    %v1868 = vpop.f32.mrb[0].mxu0
    %v1869 = vadd.f32 %v1608, %v1868
    %v1870 = vpop.f32.mrb[0].mxu0
    %1871 = vmatprep.mubr.f32.mxu0 0.0
    %v1872 = vand.u32 %v112, 4294901760
    %1873 = vmatmul.mubr.f32.gmra.mrb[0].mxu0 %v1872
    %v1874 = vpop.f32.mrb[0].mxu0
    %v1875 = vadd.f32 %v1614, %v1874
    %v1876 = vpop.f32.mrb[0].mxu0
    %1877 = vmatprep.mubr.f32.mxu0 0.0
    %v1878 = vand.u32 %v115, 4294901760
    %1879 = vmatmul.mubr.f32.gmra.mrb[0].mxu0 %v1878
    %v1880 = vpop.f32.mrb[0].mxu0
    %v1881 = vadd.f32 %v1620, %v1880
    %v1882 = vpop.f32.mrb[0].mxu0
    %1883 = vmatprep.mubr.f32.mxu0 0.0
    %v1884 = vand.u32 %v118, 4294901760
    %1885 = vmatmul.mubr.f32.gmra.mrb[0].mxu0 %v1884
    %v1886 = vpop.f32.mrb[0].mxu0
    %v1887 = vadd.f32 %v1626, %v1886
    %v1888 = vpop.f32.mrb[0].mxu0
    %1889 = vmatprep.mubr.f32.mxu0 0.0
    %v1890 = vand.u32 %v121, 4294901760
    %1891 = vmatmul.mubr.f32.gmra.mrb[0].mxu0 %v1890
    %v1892 = vpop.f32.mrb[0].mxu0
    %v1893 = vadd.f32 %v1632, %v1892
    %v1894 = vpop.f32.mrb[0].mxu0
    %1895 = vmatprep.mubr.f32.mxu0 0.0
    %v1896 = vand.u32 %v124, 4294901760
    %1897 = vmatmul.mubr.f32.gmra.mrb[0].mxu0 %v1896
    %v1898 = vpop.f32.mrb[0].mxu0
    %v1899 = vadd.f32 %v1638, %v1898
    %v1900 = vpop.f32.mrb[0].mxu0
    %1901 = vmatprep.mubr.f32.mxu0 0.0
    %v1902 = vand.u32 %v127, 4294901760
    %1903 = vmatmul.mubr.f32.gmra.mrb[0].mxu0 %v1902
    %v1904 = vpop.f32.mrb[0].mxu0
    %v1905 = vadd.f32 %v1644, %v1904
    %v1906 = vpop.f32.mrb[0].mxu0
    %1907 = vmatprep.mubr.f32.mxu0 0.0
    %v1908 = vand.u32 %v130, 4294901760
    %1909 = vmatmul.mubr.f32.gmra.mrb[0].mxu0 %v1908
    %v1910 = vpop.f32.mrb[0].mxu0
    %v1911 = vadd.f32 %v1650, %v1910
    %v1912 = vpop.f32.mrb[0].mxu0
    %1913 = vmatprep.mubr.f32.mxu0 0.0
    %v1914 = vand.u32 %v133, 4294901760
    %1915 = vmatmul.mubr.f32.gmra.mrb[0].mxu0 %v1914
    %v1916 = vpop.f32.mrb[0].mxu0
    %v1917 = vadd.f32 %v1656, %v1916
    %v1918 = vpop.f32.mrb[0].mxu0
    %1919 = vmatprep.mubr.f32.mxu0 0.0
    %v1920 = vand.u32 %v136, 4294901760
    %1921 = vmatmul.mubr.f32.gmra.mrb[0].mxu0 %v1920
    %v1922 = vpop.f32.mrb[0].mxu0
    %v1923 = vadd.f32 %v1662, %v1922
    %v1924 = vpop.f32.mrb[0].mxu0
    %1925 = vmatprep.mubr.f32.mxu0 0.0
    %v1926 = vand.u32 %v139, 4294901760
    %1927 = vmatmul.mubr.f32.gmra.mrb[0].mxu0 %v1926
    %v1928 = vpop.f32.mrb[0].mxu0
    %v1929 = vadd.f32 %v1668, %v1928
    %v1930 = vpop.f32.mrb[0].mxu0
    %1931 = vmatprep.mubr.f32.mxu0 0.0
    %v1932 = vand.u32 %v142, 4294901760
    %1933 = vmatmul.mubr.f32.gmra.mrb[0].mxu0 %v1932
    %v1934 = vpop.f32.mrb[0].mxu0
    %v1935 = vadd.f32 %v1674, %v1934
    %v1936 = vpop.f32.mrb[0].mxu0
    %1937 = vmatprep.mubr.f32.mxu0 0.0
    %v1938 = vand.u32 %v145, 4294901760
    %1939 = vmatmul.mubr.f32.gmra.mrb[0].mxu0 %v1938
    %v1940 = vpop.f32.mrb[0].mxu0
    %v1941 = vadd.f32 %v1680, %v1940
    %v1942 = vpop.f32.mrb[0].mxu0
    %1943 = vmatprep.mubr.f32.mxu0 0.0
    %v1944 = vand.u32 %v148, 4294901760
    %1945 = vmatmul.mubr.f32.gmra.mrb[0].mxu0 %v1944
    %v1946 = vpop.f32.mrb[0].mxu0
    %v1947 = vadd.f32 %v1686, %v1946
    %v1948 = vpop.f32.mrb[0].mxu0
    %1949 = vmatprep.mubr.f32.mxu0 0.0
    %v1950 = vand.u32 %v151, 4294901760
    %1951 = vmatmul.mubr.f32.gmra.mrb[0].mxu0 %v1950
    %v1952 = vpop.f32.mrb[0].mxu0
    %v1953 = vadd.f32 %v1692, %v1952
    %v1954 = vpop.f32.mrb[0].mxu0
    %1955 = vmatprep.mubr.f32.mxu0 0.0
    %v1956 = vand.u32 %v154, 4294901760
    %1957 = vmatmul.mubr.f32.gmra.mrb[0].mxu0 %v1956
    %v1958 = vpop.f32.mrb[0].mxu0
    %v1959 = vadd.f32 %v1698, %v1958
    %v1960 = vpop.f32.mrb[0].mxu0
    %1961 = vmatprep.mubr.f32.mxu0 0.0
    %v1962 = vand.u32 %v157, 4294901760
    %1963 = vmatmul.mubr.f32.gmra.mrb[0].mxu0 %v1962
    %v1964 = vpop.f32.mrb[0].mxu0
    %v1965 = vadd.f32 %v1704, %v1964
    %v1966 = vpop.f32.mrb[0].mxu0
    %1967 = vmatprep.mubr.f32.mxu0 0.0
    %v1968 = vand.u32 %v160, 4294901760
    %1969 = vmatmul.mubr.f32.gmra.mrb[0].mxu0 %v1968
    %v1970 = vpop.f32.mrb[0].mxu0
    %v1971 = vadd.f32 %v1710, %v1970
    %v1972 = vpop.f32.mrb[0].mxu0
    %1973 = vmatprep.mubr.f32.mxu0 0.0
    %v1974 = vand.u32 %v163, 4294901760
    %1975 = vmatmul.mubr.f32.gmra.mrb[0].mxu0 %v1974
    %v1976 = vpop.f32.mrb[0].mxu0
    %v1977 = vadd.f32 %v1716, %v1976
    %v1978 = vpop.f32.mrb[0].mxu0
    %1979 = vmatprep.mubr.f32.mxu0 0.0
    %v1980 = vand.u32 %v166, 4294901760
    %1981 = vmatmul.mubr.f32.gmra.mrb[0].mxu0 %v1980
    %v1982 = vpop.f32.mrb[0].mxu0
    %v1983 = vadd.f32 %v1722, %v1982
    %v1984 = vpop.f32.mrb[0].mxu0
    %1985 = vdwg.mxu0
    %v1986 = vmax.f32 %v1797, 0.0
    %v1987 = vmax.f32 %v1803, 0.0
    %v1988 = vmax.f32 %v1809, 0.0
    %v1989 = vmax.f32 %v1815, 0.0
    %v1990 = vmax.f32 %v1821, 0.0
    %v1991 = vmax.f32 %v1827, 0.0
    %v1992 = vmax.f32 %v1833, 0.0
    %v1993 = vmax.f32 %v1839, 0.0
    %v1994 = vmax.f32 %v1845, 0.0
    %v1995 = vmax.f32 %v1851, 0.0
    %v1996 = vmax.f32 %v1857, 0.0
    %v1997 = vmax.f32 %v1863, 0.0
    %v1998 = vmax.f32 %v1869, 0.0
    %v1999 = vmax.f32 %v1875, 0.0
    %v2000 = vmax.f32 %v1881, 0.0
    %v2001 = vmax.f32 %v1887, 0.0
    %v2002 = vmax.f32 %v1893, 0.0
    %v2003 = vmax.f32 %v1899, 0.0
    %v2004 = vmax.f32 %v1905, 0.0
    %v2005 = vmax.f32 %v1911, 0.0
    %v2006 = vmax.f32 %v1917, 0.0
    %v2007 = vmax.f32 %v1923, 0.0
    %v2008 = vmax.f32 %v1929, 0.0
    %v2009 = vmax.f32 %v1935, 0.0
    %v2010 = vmax.f32 %v1941, 0.0
    %v2011 = vmax.f32 %v1947, 0.0
    %v2012 = vmax.f32 %v1953, 0.0
    %v2013 = vmax.f32 %v1959, 0.0
    %v2014 = vmax.f32 %v1965, 0.0
    %v2015 = vmax.f32 %v1971, 0.0
    %v2016 = vmax.f32 %v1977, 0.0
    %v2017 = vmax.f32 %v1983, 0.0
    %v2018 = vld [vmem:[%s3] sm:$0xff]
    %v2019 = vld [vmem:[%s3 + $0x8] sm:$0xff]
    %v2020 = vld [vmem:[%s3 + $0x10] sm:$0xff]
    %v2021 = vld [vmem:[%s3 + $0x18] sm:$0xff]
    %v2022 = vld [vmem:[%s3 + $0x20] sm:$0xff]
    %v2023 = vld [vmem:[%s3 + $0x28] sm:$0xff]
    %v2024 = vld [vmem:[%s3 + $0x30] sm:$0xff]
    %v2025 = vld [vmem:[%s3 + $0x38] sm:$0xff]
    %v2026 = vld [vmem:[%s3 + $0x40] sm:$0xff]
    %v2027 = vld [vmem:[%s3 + $0x48] sm:$0xff]
    %v2028 = vld [vmem:[%s3 + $0x50] sm:$0xff]
    %v2029 = vld [vmem:[%s3 + $0x58] sm:$0xff]
    %v2030 = vld [vmem:[%s3 + $0x60] sm:$0xff]
    %v2031 = vld [vmem:[%s3 + $0x68] sm:$0xff]
    %v2032 = vld [vmem:[%s3 + $0x70] sm:$0xff]
    %v2033 = vld [vmem:[%s3 + $0x78] sm:$0xff]
    %v2034 = vld [vmem:[%s4] sm:$0x1]
    %v2036 = vlaneseq
    %v2037 = vshrl.u32 %v2036, 7
    %v2038 = vsub.s32 0, %v2037
    %v2039 = vrot.slane %v2034, %v2038
    %2041 = vmatprep.subr.mxu0 0.0
    %v2042 = vand.u32 %v2018, 4294901760
    %2043 = vmatpush1.msra.mxu0 %v2042
    %2044 = vmatprep.subr.mxu0 0.0
    %v2045 = vand.u32 %v2019, 4294901760
    %2046 = vmatpush1.msra.mxu0 %v2045
    %2047 = vmatprep.subr.mxu0 0.0
    %v2048 = vand.u32 %v2020, 4294901760
    %2049 = vmatpush1.msra.mxu0 %v2048
    %2050 = vmatprep.subr.mxu0 0.0
    %v2051 = vand.u32 %v2021, 4294901760
    %2052 = vmatpush1.msra.mxu0 %v2051
    %2053 = vmatprep.subr.mxu0 0.0
    %v2054 = vand.u32 %v2022, 4294901760
    %2055 = vmatpush1.msra.mxu0 %v2054
    %2056 = vmatprep.subr.mxu0 0.0
    %v2057 = vand.u32 %v2023, 4294901760
    %2058 = vmatpush1.msra.mxu0 %v2057
    %2059 = vmatprep.subr.mxu0 0.0
    %v2060 = vand.u32 %v2024, 4294901760
    %2061 = vmatpush1.msra.mxu0 %v2060
    %2062 = vmatprep.subr.mxu0 0.0
    %v2063 = vand.u32 %v2025, 4294901760
    %2064 = vmatpush1.msra.mxu0 %v2063
    %2065 = vmatprep.subr.mxu0 0.0
    %v2066 = vand.u32 %v2026, 4294901760
    %2067 = vmatpush1.msra.mxu0 %v2066
    %2068 = vmatprep.subr.mxu0 0.0
    %v2069 = vand.u32 %v2027, 4294901760
    %2070 = vmatpush1.msra.mxu0 %v2069
    %2071 = vmatprep.subr.mxu0 0.0
    %v2072 = vand.u32 %v2028, 4294901760
    %2073 = vmatpush1.msra.mxu0 %v2072
    %2074 = vmatprep.subr.mxu0 0.0
    %v2075 = vand.u32 %v2029, 4294901760
    %2076 = vmatpush1.msra.mxu0 %v2075
    %2077 = vmatprep.subr.mxu0 0.0
    %v2078 = vand.u32 %v2030, 4294901760
    %2079 = vmatpush1.msra.mxu0 %v2078
    %2080 = vmatprep.subr.mxu0 0.0
    %v2081 = vand.u32 %v2031, 4294901760
    %2082 = vmatpush1.msra.mxu0 %v2081
    %2083 = vmatprep.subr.mxu0 0.0
    %v2084 = vand.u32 %v2032, 4294901760
    %2085 = vmatpush1.msra.mxu0 %v2084
    %2086 = vmatprep.subr.mxu0 0.0
    %v2087 = vand.u32 %v2033, 4294901760
    %2088 = vmatpush1.msra.mxu0 %v2087
    %2089 = vmatprep.subr.mxu0 0.0
    %2090 = vmatpush1.msra.mxu0 0.0
    %2091 = vmatprep.subr.mxu0 0.0
    %2092 = vmatpush1.msra.mxu0 0.0
    %2093 = vmatprep.subr.mxu0 0.0
    %2094 = vmatpush1.msra.mxu0 0.0
    %2095 = vmatprep.subr.mxu0 0.0
    %2096 = vmatpush1.msra.mxu0 0.0
    %2097 = vmatprep.subr.mxu0 0.0
    %2098 = vmatpush1.msra.mxu0 0.0
    %2099 = vmatprep.subr.mxu0 0.0
    %2100 = vmatpush1.msra.mxu0 0.0
    %2101 = vmatprep.subr.mxu0 0.0
    %2102 = vmatpush1.msra.mxu0 0.0
    %2103 = vmatprep.subr.mxu0 0.0
    %2104 = vmatpush1.msra.mxu0 0.0
    %2105 = vmatprep.subr.mxu0 0.0
    %2106 = vmatpush1.msra.mxu0 0.0
    %2107 = vmatprep.subr.mxu0 0.0
    %2108 = vmatpush1.msra.mxu0 0.0
    %2109 = vmatprep.subr.mxu0 0.0
    %2110 = vmatpush1.msra.mxu0 0.0
    %2111 = vmatprep.subr.mxu0 0.0
    %2112 = vmatpush1.msra.mxu0 0.0
    %2113 = vmatprep.subr.mxu0 0.0
    %2114 = vmatpush1.msra.mxu0 0.0
    %2115 = vmatprep.subr.mxu0 0.0
    %2116 = vmatpush1.msra.mxu0 0.0
    %2117 = vmatprep.subr.mxu0 0.0
    %2118 = vmatpush1.msra.mxu0 0.0
    %2119 = vmatprep.subr.mxu0 0.0
    %2120 = vmatpush1.msra.mxu0 0.0
    %2121 = vmatprep.mubr.f32.mxu0 0.0
    %v2122 = vand.u32 %v1986, 4294901760
    %v2123 = vsub.f32 %v1986, %v2122
    %v2124 = vand.u32 %v2123, 4294901760
    %v2125 = vsub.f32 %v2123, %v2124
    %v2126 = vand.u32 %v2125, 4294901760
    %2127 = vmatmul.mubr.f32.gmra.mrb[0].mxu0 %v2126
    %v2128 = vpop.f32.mrb[0].mxu0
    %v2129 = vadd.f32 %v2039, %v2128
    %v2130 = vpop.f32.mrb[0].mxu0
    %2131 = vmatprep.mubr.f32.mxu0 0.0
    %v2132 = vand.u32 %v1987, 4294901760
    %v2133 = vsub.f32 %v1987, %v2132
    %v2134 = vand.u32 %v2133, 4294901760
    %v2135 = vsub.f32 %v2133, %v2134
    %v2136 = vand.u32 %v2135, 4294901760
    %2137 = vmatmul.mubr.f32.gmra.mrb[0].mxu0 %v2136
    %v2138 = vpop.f32.mrb[0].mxu0
    %v2139 = vadd.f32 %v2039, %v2138
    %v2140 = vpop.f32.mrb[0].mxu0
    %2141 = vmatprep.mubr.f32.mxu0 0.0
    %v2142 = vand.u32 %v1988, 4294901760
    %v2143 = vsub.f32 %v1988, %v2142
    %v2144 = vand.u32 %v2143, 4294901760
    %v2145 = vsub.f32 %v2143, %v2144
    %v2146 = vand.u32 %v2145, 4294901760
    %2147 = vmatmul.mubr.f32.gmra.mrb[0].mxu0 %v2146
    %v2148 = vpop.f32.mrb[0].mxu0
    %v2149 = vadd.f32 %v2039, %v2148
    %v2150 = vpop.f32.mrb[0].mxu0
    %2151 = vmatprep.mubr.f32.mxu0 0.0
    %v2152 = vand.u32 %v1989, 4294901760
    %v2153 = vsub.f32 %v1989, %v2152
    %v2154 = vand.u32 %v2153, 4294901760
    %v2155 = vsub.f32 %v2153, %v2154
    %v2156 = vand.u32 %v2155, 4294901760
    %2157 = vmatmul.mubr.f32.gmra.mrb[0].mxu0 %v2156
    %v2158 = vpop.f32.mrb[0].mxu0
    %v2159 = vadd.f32 %v2039, %v2158
    %v2160 = vpop.f32.mrb[0].mxu0
    %2161 = vmatprep.mubr.f32.mxu0 0.0
    %v2162 = vand.u32 %v1990, 4294901760
    %v2163 = vsub.f32 %v1990, %v2162
    %v2164 = vand.u32 %v2163, 4294901760
    %v2165 = vsub.f32 %v2163, %v2164
    %v2166 = vand.u32 %v2165, 4294901760
    %2167 = vmatmul.mubr.f32.gmra.mrb[0].mxu0 %v2166
    %v2168 = vpop.f32.mrb[0].mxu0
    %v2169 = vadd.f32 %v2039, %v2168
    %v2170 = vpop.f32.mrb[0].mxu0
    %2171 = vmatprep.mubr.f32.mxu0 0.0
    %v2172 = vand.u32 %v1991, 4294901760
    %v2173 = vsub.f32 %v1991, %v2172
    %v2174 = vand.u32 %v2173, 4294901760
    %v2175 = vsub.f32 %v2173, %v2174
    %v2176 = vand.u32 %v2175, 4294901760
    %2177 = vmatmul.mubr.f32.gmra.mrb[0].mxu0 %v2176
    %v2178 = vpop.f32.mrb[0].mxu0
    %v2179 = vadd.f32 %v2039, %v2178
    %v2180 = vpop.f32.mrb[0].mxu0
    %2181 = vmatprep.mubr.f32.mxu0 0.0
    %v2182 = vand.u32 %v1992, 4294901760
    %v2183 = vsub.f32 %v1992, %v2182
    %v2184 = vand.u32 %v2183, 4294901760
    %v2185 = vsub.f32 %v2183, %v2184
    %v2186 = vand.u32 %v2185, 4294901760
    %2187 = vmatmul.mubr.f32.gmra.mrb[0].mxu0 %v2186
    %v2188 = vpop.f32.mrb[0].mxu0
    %v2189 = vadd.f32 %v2039, %v2188
    %v2190 = vpop.f32.mrb[0].mxu0
    %2191 = vmatprep.mubr.f32.mxu0 0.0
    %v2192 = vand.u32 %v1993, 4294901760
    %v2193 = vsub.f32 %v1993, %v2192
    %v2194 = vand.u32 %v2193, 4294901760
    %v2195 = vsub.f32 %v2193, %v2194
    %v2196 = vand.u32 %v2195, 4294901760
    %2197 = vmatmul.mubr.f32.gmra.mrb[0].mxu0 %v2196
    %v2198 = vpop.f32.mrb[0].mxu0
    %v2199 = vadd.f32 %v2039, %v2198
    %v2200 = vpop.f32.mrb[0].mxu0
    %2201 = vmatprep.mubr.f32.mxu0 0.0
    %v2202 = vand.u32 %v1994, 4294901760
    %v2203 = vsub.f32 %v1994, %v2202
    %v2204 = vand.u32 %v2203, 4294901760
    %v2205 = vsub.f32 %v2203, %v2204
    %v2206 = vand.u32 %v2205, 4294901760
    %2207 = vmatmul.mubr.f32.gmra.mrb[0].mxu0 %v2206
    %v2208 = vpop.f32.mrb[0].mxu0
    %v2209 = vadd.f32 %v2039, %v2208
    %v2210 = vpop.f32.mrb[0].mxu0
    %2211 = vmatprep.mubr.f32.mxu0 0.0
    %v2212 = vand.u32 %v1995, 4294901760
    %v2213 = vsub.f32 %v1995, %v2212
    %v2214 = vand.u32 %v2213, 4294901760
    %v2215 = vsub.f32 %v2213, %v2214
    %v2216 = vand.u32 %v2215, 4294901760
    %2217 = vmatmul.mubr.f32.gmra.mrb[0].mxu0 %v2216
    %v2218 = vpop.f32.mrb[0].mxu0
    %v2219 = vadd.f32 %v2039, %v2218
    %v2220 = vpop.f32.mrb[0].mxu0
    %2221 = vmatprep.mubr.f32.mxu0 0.0
    %v2222 = vand.u32 %v1996, 4294901760
    %v2223 = vsub.f32 %v1996, %v2222
    %v2224 = vand.u32 %v2223, 4294901760
    %v2225 = vsub.f32 %v2223, %v2224
    %v2226 = vand.u32 %v2225, 4294901760
    %2227 = vmatmul.mubr.f32.gmra.mrb[0].mxu0 %v2226
    %v2228 = vpop.f32.mrb[0].mxu0
    %v2229 = vadd.f32 %v2039, %v2228
    %v2230 = vpop.f32.mrb[0].mxu0
    %2231 = vmatprep.mubr.f32.mxu0 0.0
    %v2232 = vand.u32 %v1997, 4294901760
    %v2233 = vsub.f32 %v1997, %v2232
    %v2234 = vand.u32 %v2233, 4294901760
    %v2235 = vsub.f32 %v2233, %v2234
    %v2236 = vand.u32 %v2235, 4294901760
    %2237 = vmatmul.mubr.f32.gmra.mrb[0].mxu0 %v2236
    %v2238 = vpop.f32.mrb[0].mxu0
    %v2239 = vadd.f32 %v2039, %v2238
    %v2240 = vpop.f32.mrb[0].mxu0
    %2241 = vmatprep.mubr.f32.mxu0 0.0
    %v2242 = vand.u32 %v1998, 4294901760
    %v2243 = vsub.f32 %v1998, %v2242
    %v2244 = vand.u32 %v2243, 4294901760
    %v2245 = vsub.f32 %v2243, %v2244
    %v2246 = vand.u32 %v2245, 4294901760
    %2247 = vmatmul.mubr.f32.gmra.mrb[0].mxu0 %v2246
    %v2248 = vpop.f32.mrb[0].mxu0
    %v2249 = vadd.f32 %v2039, %v2248
    %v2250 = vpop.f32.mrb[0].mxu0
    %2251 = vmatprep.mubr.f32.mxu0 0.0
    %v2252 = vand.u32 %v1999, 4294901760
    %v2253 = vsub.f32 %v1999, %v2252
    %v2254 = vand.u32 %v2253, 4294901760
    %v2255 = vsub.f32 %v2253, %v2254
    %v2256 = vand.u32 %v2255, 4294901760
    %2257 = vmatmul.mubr.f32.gmra.mrb[0].mxu0 %v2256
    %v2258 = vpop.f32.mrb[0].mxu0
    %v2259 = vadd.f32 %v2039, %v2258
    %v2260 = vpop.f32.mrb[0].mxu0
    %2261 = vmatprep.mubr.f32.mxu0 0.0
    %v2262 = vand.u32 %v2000, 4294901760
    %v2263 = vsub.f32 %v2000, %v2262
    %v2264 = vand.u32 %v2263, 4294901760
    %v2265 = vsub.f32 %v2263, %v2264
    %v2266 = vand.u32 %v2265, 4294901760
    %2267 = vmatmul.mubr.f32.gmra.mrb[0].mxu0 %v2266
    %v2268 = vpop.f32.mrb[0].mxu0
    %v2269 = vadd.f32 %v2039, %v2268
    %v2270 = vpop.f32.mrb[0].mxu0
    %2271 = vmatprep.mubr.f32.mxu0 0.0
    %v2272 = vand.u32 %v2001, 4294901760
    %v2273 = vsub.f32 %v2001, %v2272
    %v2274 = vand.u32 %v2273, 4294901760
    %v2275 = vsub.f32 %v2273, %v2274
    %v2276 = vand.u32 %v2275, 4294901760
    %2277 = vmatmul.mubr.f32.gmra.mrb[0].mxu0 %v2276
    %v2278 = vpop.f32.mrb[0].mxu0
    %v2279 = vadd.f32 %v2039, %v2278
    %v2280 = vpop.f32.mrb[0].mxu0
    %2281 = vmatprep.mubr.f32.mxu0 0.0
    %v2282 = vand.u32 %v2002, 4294901760
    %v2283 = vsub.f32 %v2002, %v2282
    %v2284 = vand.u32 %v2283, 4294901760
    %v2285 = vsub.f32 %v2283, %v2284
    %v2286 = vand.u32 %v2285, 4294901760
    %2287 = vmatmul.mubr.f32.gmra.mrb[0].mxu0 %v2286
    %v2288 = vpop.f32.mrb[0].mxu0
    %v2289 = vadd.f32 %v2039, %v2288
    %v2290 = vpop.f32.mrb[0].mxu0
    %2291 = vmatprep.mubr.f32.mxu0 0.0
    %v2292 = vand.u32 %v2003, 4294901760
    %v2293 = vsub.f32 %v2003, %v2292
    %v2294 = vand.u32 %v2293, 4294901760
    %v2295 = vsub.f32 %v2293, %v2294
    %v2296 = vand.u32 %v2295, 4294901760
    %2297 = vmatmul.mubr.f32.gmra.mrb[0].mxu0 %v2296
    %v2298 = vpop.f32.mrb[0].mxu0
    %v2299 = vadd.f32 %v2039, %v2298
    %v2300 = vpop.f32.mrb[0].mxu0
    %2301 = vmatprep.mubr.f32.mxu0 0.0
    %v2302 = vand.u32 %v2004, 4294901760
    %v2303 = vsub.f32 %v2004, %v2302
    %v2304 = vand.u32 %v2303, 4294901760
    %v2305 = vsub.f32 %v2303, %v2304
    %v2306 = vand.u32 %v2305, 4294901760
    %2307 = vmatmul.mubr.f32.gmra.mrb[0].mxu0 %v2306
    %v2308 = vpop.f32.mrb[0].mxu0
    %v2309 = vadd.f32 %v2039, %v2308
    %v2310 = vpop.f32.mrb[0].mxu0
    %2311 = vmatprep.mubr.f32.mxu0 0.0
    %v2312 = vand.u32 %v2005, 4294901760
    %v2313 = vsub.f32 %v2005, %v2312
    %v2314 = vand.u32 %v2313, 4294901760
    %v2315 = vsub.f32 %v2313, %v2314
    %v2316 = vand.u32 %v2315, 4294901760
    %2317 = vmatmul.mubr.f32.gmra.mrb[0].mxu0 %v2316
    %v2318 = vpop.f32.mrb[0].mxu0
    %v2319 = vadd.f32 %v2039, %v2318
    %v2320 = vpop.f32.mrb[0].mxu0
    %2321 = vmatprep.mubr.f32.mxu0 0.0
    %v2322 = vand.u32 %v2006, 4294901760
    %v2323 = vsub.f32 %v2006, %v2322
    %v2324 = vand.u32 %v2323, 4294901760
    %v2325 = vsub.f32 %v2323, %v2324
    %v2326 = vand.u32 %v2325, 4294901760
    %2327 = vmatmul.mubr.f32.gmra.mrb[0].mxu0 %v2326
    %v2328 = vpop.f32.mrb[0].mxu0
    %v2329 = vadd.f32 %v2039, %v2328
    %v2330 = vpop.f32.mrb[0].mxu0
    %2331 = vmatprep.mubr.f32.mxu0 0.0
    %v2332 = vand.u32 %v2007, 4294901760
    %v2333 = vsub.f32 %v2007, %v2332
    %v2334 = vand.u32 %v2333, 4294901760
    %v2335 = vsub.f32 %v2333, %v2334
    %v2336 = vand.u32 %v2335, 4294901760
    %2337 = vmatmul.mubr.f32.gmra.mrb[0].mxu0 %v2336
    %v2338 = vpop.f32.mrb[0].mxu0
    %v2339 = vadd.f32 %v2039, %v2338
    %v2340 = vpop.f32.mrb[0].mxu0
    %2341 = vmatprep.mubr.f32.mxu0 0.0
    %v2342 = vand.u32 %v2008, 4294901760
    %v2343 = vsub.f32 %v2008, %v2342
    %v2344 = vand.u32 %v2343, 4294901760
    %v2345 = vsub.f32 %v2343, %v2344
    %v2346 = vand.u32 %v2345, 4294901760
    %2347 = vmatmul.mubr.f32.gmra.mrb[0].mxu0 %v2346
    %v2348 = vpop.f32.mrb[0].mxu0
    %v2349 = vadd.f32 %v2039, %v2348
    %v2350 = vpop.f32.mrb[0].mxu0
    %2351 = vmatprep.mubr.f32.mxu0 0.0
    %v2352 = vand.u32 %v2009, 4294901760
    %v2353 = vsub.f32 %v2009, %v2352
    %v2354 = vand.u32 %v2353, 4294901760
    %v2355 = vsub.f32 %v2353, %v2354
    %v2356 = vand.u32 %v2355, 4294901760
    %2357 = vmatmul.mubr.f32.gmra.mrb[0].mxu0 %v2356
    %v2358 = vpop.f32.mrb[0].mxu0
    %v2359 = vadd.f32 %v2039, %v2358
    %v2360 = vpop.f32.mrb[0].mxu0
    %2361 = vmatprep.mubr.f32.mxu0 0.0
    %v2362 = vand.u32 %v2010, 4294901760
    %v2363 = vsub.f32 %v2010, %v2362
    %v2364 = vand.u32 %v2363, 4294901760
    %v2365 = vsub.f32 %v2363, %v2364
    %v2366 = vand.u32 %v2365, 4294901760
    %2367 = vmatmul.mubr.f32.gmra.mrb[0].mxu0 %v2366
    %v2368 = vpop.f32.mrb[0].mxu0
    %v2369 = vadd.f32 %v2039, %v2368
    %v2370 = vpop.f32.mrb[0].mxu0
    %2371 = vmatprep.mubr.f32.mxu0 0.0
    %v2372 = vand.u32 %v2011, 4294901760
    %v2373 = vsub.f32 %v2011, %v2372
    %v2374 = vand.u32 %v2373, 4294901760
    %v2375 = vsub.f32 %v2373, %v2374
    %v2376 = vand.u32 %v2375, 4294901760
    %2377 = vmatmul.mubr.f32.gmra.mrb[0].mxu0 %v2376
    %v2378 = vpop.f32.mrb[0].mxu0
    %v2379 = vadd.f32 %v2039, %v2378
    %v2380 = vpop.f32.mrb[0].mxu0
    %2381 = vmatprep.mubr.f32.mxu0 0.0
    %v2382 = vand.u32 %v2012, 4294901760
    %v2383 = vsub.f32 %v2012, %v2382
    %v2384 = vand.u32 %v2383, 4294901760
    %v2385 = vsub.f32 %v2383, %v2384
    %v2386 = vand.u32 %v2385, 4294901760
    %2387 = vmatmul.mubr.f32.gmra.mrb[0].mxu0 %v2386
    %v2388 = vpop.f32.mrb[0].mxu0
    %v2389 = vadd.f32 %v2039, %v2388
    %v2390 = vpop.f32.mrb[0].mxu0
    %2391 = vmatprep.mubr.f32.mxu0 0.0
    %v2392 = vand.u32 %v2013, 4294901760
    %v2393 = vsub.f32 %v2013, %v2392
    %v2394 = vand.u32 %v2393, 4294901760
    %v2395 = vsub.f32 %v2393, %v2394
    %v2396 = vand.u32 %v2395, 4294901760
    %2397 = vmatmul.mubr.f32.gmra.mrb[0].mxu0 %v2396
    %v2398 = vpop.f32.mrb[0].mxu0
    %v2399 = vadd.f32 %v2039, %v2398
    %v2400 = vpop.f32.mrb[0].mxu0
    %2401 = vmatprep.mubr.f32.mxu0 0.0
    %v2402 = vand.u32 %v2014, 4294901760
    %v2403 = vsub.f32 %v2014, %v2402
    %v2404 = vand.u32 %v2403, 4294901760
    %v2405 = vsub.f32 %v2403, %v2404
    %v2406 = vand.u32 %v2405, 4294901760
    %2407 = vmatmul.mubr.f32.gmra.mrb[0].mxu0 %v2406
    %v2408 = vpop.f32.mrb[0].mxu0
    %v2409 = vadd.f32 %v2039, %v2408
    %v2410 = vpop.f32.mrb[0].mxu0
    %2411 = vmatprep.mubr.f32.mxu0 0.0
    %v2412 = vand.u32 %v2015, 4294901760
    %v2413 = vsub.f32 %v2015, %v2412
    %v2414 = vand.u32 %v2413, 4294901760
    %v2415 = vsub.f32 %v2413, %v2414
    %v2416 = vand.u32 %v2415, 4294901760
    %2417 = vmatmul.mubr.f32.gmra.mrb[0].mxu0 %v2416
    %v2418 = vpop.f32.mrb[0].mxu0
    %v2419 = vadd.f32 %v2039, %v2418
    %v2420 = vpop.f32.mrb[0].mxu0
    %2421 = vmatprep.mubr.f32.mxu0 0.0
    %v2422 = vand.u32 %v2016, 4294901760
    %v2423 = vsub.f32 %v2016, %v2422
    %v2424 = vand.u32 %v2423, 4294901760
    %v2425 = vsub.f32 %v2423, %v2424
    %v2426 = vand.u32 %v2425, 4294901760
    %2427 = vmatmul.mubr.f32.gmra.mrb[0].mxu0 %v2426
    %v2428 = vpop.f32.mrb[0].mxu0
    %v2429 = vadd.f32 %v2039, %v2428
    %v2430 = vpop.f32.mrb[0].mxu0
    %2431 = vmatprep.mubr.f32.mxu0 0.0
    %v2432 = vand.u32 %v2017, 4294901760
    %v2433 = vsub.f32 %v2017, %v2432
    %v2434 = vand.u32 %v2433, 4294901760
    %v2435 = vsub.f32 %v2433, %v2434
    %v2436 = vand.u32 %v2435, 4294901760
    %2437 = vmatmul.mubr.f32.gmra.mrb[0].mxu0 %v2436
    %v2438 = vpop.f32.mrb[0].mxu0
    %v2439 = vadd.f32 %v2039, %v2438
    %v2440 = vpop.f32.mrb[0].mxu0
    %2441 = vdwg.mxu0
    %2442 = vmatprep.subr.mxu0 0.0
    %v2443 = vand.u32 %v2018, 4294901760
    %v2444 = vsub.f32 %v2018, %v2443
    %v2445 = vand.u32 %v2444, 4294901760
    %v2446 = vsub.f32 %v2444, %v2445
    %v2447 = vand.u32 %v2446, 4294901760
    %2448 = vmatpush1.msra.mxu0 %v2447
    %2449 = vmatprep.subr.mxu0 0.0
    %v2450 = vand.u32 %v2019, 4294901760
    %v2451 = vsub.f32 %v2019, %v2450
    %v2452 = vand.u32 %v2451, 4294901760
    %v2453 = vsub.f32 %v2451, %v2452
    %v2454 = vand.u32 %v2453, 4294901760
    %2455 = vmatpush1.msra.mxu0 %v2454
    %2456 = vmatprep.subr.mxu0 0.0
    %v2457 = vand.u32 %v2020, 4294901760
    %v2458 = vsub.f32 %v2020, %v2457
    %v2459 = vand.u32 %v2458, 4294901760
    %v2460 = vsub.f32 %v2458, %v2459
    %v2461 = vand.u32 %v2460, 4294901760
    %2462 = vmatpush1.msra.mxu0 %v2461
    %2463 = vmatprep.subr.mxu0 0.0
    %v2464 = vand.u32 %v2021, 4294901760
    %v2465 = vsub.f32 %v2021, %v2464
    %v2466 = vand.u32 %v2465, 4294901760
    %v2467 = vsub.f32 %v2465, %v2466
    %v2468 = vand.u32 %v2467, 4294901760
    %2469 = vmatpush1.msra.mxu0 %v2468
    %2470 = vmatprep.subr.mxu0 0.0
    %v2471 = vand.u32 %v2022, 4294901760
    %v2472 = vsub.f32 %v2022, %v2471
    %v2473 = vand.u32 %v2472, 4294901760
    %v2474 = vsub.f32 %v2472, %v2473
    %v2475 = vand.u32 %v2474, 4294901760
    %2476 = vmatpush1.msra.mxu0 %v2475
    %2477 = vmatprep.subr.mxu0 0.0
    %v2478 = vand.u32 %v2023, 4294901760
    %v2479 = vsub.f32 %v2023, %v2478
    %v2480 = vand.u32 %v2479, 4294901760
    %v2481 = vsub.f32 %v2479, %v2480
    %v2482 = vand.u32 %v2481, 4294901760
    %2483 = vmatpush1.msra.mxu0 %v2482
    %2484 = vmatprep.subr.mxu0 0.0
    %v2485 = vand.u32 %v2024, 4294901760
    %v2486 = vsub.f32 %v2024, %v2485
    %v2487 = vand.u32 %v2486, 4294901760
    %v2488 = vsub.f32 %v2486, %v2487
    %v2489 = vand.u32 %v2488, 4294901760
    %2490 = vmatpush1.msra.mxu0 %v2489
    %2491 = vmatprep.subr.mxu0 0.0
    %v2492 = vand.u32 %v2025, 4294901760
    %v2493 = vsub.f32 %v2025, %v2492
    %v2494 = vand.u32 %v2493, 4294901760
    %v2495 = vsub.f32 %v2493, %v2494
    %v2496 = vand.u32 %v2495, 4294901760
    %2497 = vmatpush1.msra.mxu0 %v2496
    %2498 = vmatprep.subr.mxu0 0.0
    %v2499 = vand.u32 %v2026, 4294901760
    %v2500 = vsub.f32 %v2026, %v2499
    %v2501 = vand.u32 %v2500, 4294901760
    %v2502 = vsub.f32 %v2500, %v2501
    %v2503 = vand.u32 %v2502, 4294901760
    %2504 = vmatpush1.msra.mxu0 %v2503
    %2505 = vmatprep.subr.mxu0 0.0
    %v2506 = vand.u32 %v2027, 4294901760
    %v2507 = vsub.f32 %v2027, %v2506
    %v2508 = vand.u32 %v2507, 4294901760
    %v2509 = vsub.f32 %v2507, %v2508
    %v2510 = vand.u32 %v2509, 4294901760
    %2511 = vmatpush1.msra.mxu0 %v2510
    %2512 = vmatprep.subr.mxu0 0.0
    %v2513 = vand.u32 %v2028, 4294901760
    %v2514 = vsub.f32 %v2028, %v2513
    %v2515 = vand.u32 %v2514, 4294901760
    %v2516 = vsub.f32 %v2514, %v2515
    %v2517 = vand.u32 %v2516, 4294901760
    %2518 = vmatpush1.msra.mxu0 %v2517
    %2519 = vmatprep.subr.mxu0 0.0
    %v2520 = vand.u32 %v2029, 4294901760
    %v2521 = vsub.f32 %v2029, %v2520
    %v2522 = vand.u32 %v2521, 4294901760
    %v2523 = vsub.f32 %v2521, %v2522
    %v2524 = vand.u32 %v2523, 4294901760
    %2525 = vmatpush1.msra.mxu0 %v2524
    %2526 = vmatprep.subr.mxu0 0.0
    %v2527 = vand.u32 %v2030, 4294901760
    %v2528 = vsub.f32 %v2030, %v2527
    %v2529 = vand.u32 %v2528, 4294901760
    %v2530 = vsub.f32 %v2528, %v2529
    %v2531 = vand.u32 %v2530, 4294901760
    %2532 = vmatpush1.msra.mxu0 %v2531
    %2533 = vmatprep.subr.mxu0 0.0
    %v2534 = vand.u32 %v2031, 4294901760
    %v2535 = vsub.f32 %v2031, %v2534
    %v2536 = vand.u32 %v2535, 4294901760
    %v2537 = vsub.f32 %v2535, %v2536
    %v2538 = vand.u32 %v2537, 4294901760
    %2539 = vmatpush1.msra.mxu0 %v2538
    %2540 = vmatprep.subr.mxu0 0.0
    %v2541 = vand.u32 %v2032, 4294901760
    %v2542 = vsub.f32 %v2032, %v2541
    %v2543 = vand.u32 %v2542, 4294901760
    %v2544 = vsub.f32 %v2542, %v2543
    %v2545 = vand.u32 %v2544, 4294901760
    %2546 = vmatpush1.msra.mxu0 %v2545
    %2547 = vmatprep.subr.mxu0 0.0
    %v2548 = vand.u32 %v2033, 4294901760
    %v2549 = vsub.f32 %v2033, %v2548
    %v2550 = vand.u32 %v2549, 4294901760
    %v2551 = vsub.f32 %v2549, %v2550
    %v2552 = vand.u32 %v2551, 4294901760
    %2553 = vmatpush1.msra.mxu0 %v2552
    %2554 = vmatprep.subr.mxu0 0.0
    %2555 = vmatpush1.msra.mxu0 0.0
    %2556 = vmatprep.subr.mxu0 0.0
    %2557 = vmatpush1.msra.mxu0 0.0
    %2558 = vmatprep.subr.mxu0 0.0
    %2559 = vmatpush1.msra.mxu0 0.0
    %2560 = vmatprep.subr.mxu0 0.0
    %2561 = vmatpush1.msra.mxu0 0.0
    %2562 = vmatprep.subr.mxu0 0.0
    %2563 = vmatpush1.msra.mxu0 0.0
    %2564 = vmatprep.subr.mxu0 0.0
    %2565 = vmatpush1.msra.mxu0 0.0
    %2566 = vmatprep.subr.mxu0 0.0
    %2567 = vmatpush1.msra.mxu0 0.0
    %2568 = vmatprep.subr.mxu0 0.0
    %2569 = vmatpush1.msra.mxu0 0.0
    %2570 = vmatprep.subr.mxu0 0.0
    %2571 = vmatpush1.msra.mxu0 0.0
    %2572 = vmatprep.subr.mxu0 0.0
    %2573 = vmatpush1.msra.mxu0 0.0
    %2574 = vmatprep.subr.mxu0 0.0
    %2575 = vmatpush1.msra.mxu0 0.0
    %2576 = vmatprep.subr.mxu0 0.0
    %2577 = vmatpush1.msra.mxu0 0.0
    %2578 = vmatprep.subr.mxu0 0.0
    %2579 = vmatpush1.msra.mxu0 0.0
    %2580 = vmatprep.subr.mxu0 0.0
    %2581 = vmatpush1.msra.mxu0 0.0
    %2582 = vmatprep.subr.mxu0 0.0
    %2583 = vmatpush1.msra.mxu0 0.0
    %2584 = vmatprep.subr.mxu0 0.0
    %2585 = vmatpush1.msra.mxu0 0.0
    %2586 = vmatprep.mubr.f32.mxu0 0.0
    %v2587 = vand.u32 %v1986, 4294901760
    %2588 = vmatmul.mubr.f32.gmra.mrb[0].mxu0 %v2587
    %v2589 = vpop.f32.mrb[0].mxu0
    %v2590 = vadd.f32 %v2129, %v2589
    %v2591 = vpop.f32.mrb[0].mxu0
    %2592 = vmatprep.mubr.f32.mxu0 0.0
    %v2593 = vand.u32 %v1987, 4294901760
    %2594 = vmatmul.mubr.f32.gmra.mrb[0].mxu0 %v2593
    %v2595 = vpop.f32.mrb[0].mxu0
    %v2596 = vadd.f32 %v2139, %v2595
    %v2597 = vpop.f32.mrb[0].mxu0
    %2598 = vmatprep.mubr.f32.mxu0 0.0
    %v2599 = vand.u32 %v1988, 4294901760
    %2600 = vmatmul.mubr.f32.gmra.mrb[0].mxu0 %v2599
    %v2601 = vpop.f32.mrb[0].mxu0
    %v2602 = vadd.f32 %v2149, %v2601
    %v2603 = vpop.f32.mrb[0].mxu0
    %2604 = vmatprep.mubr.f32.mxu0 0.0
    %v2605 = vand.u32 %v1989, 4294901760
    %2606 = vmatmul.mubr.f32.gmra.mrb[0].mxu0 %v2605
    %v2607 = vpop.f32.mrb[0].mxu0
    %v2608 = vadd.f32 %v2159, %v2607
    %v2609 = vpop.f32.mrb[0].mxu0
    %2610 = vmatprep.mubr.f32.mxu0 0.0
    %v2611 = vand.u32 %v1990, 4294901760
    %2612 = vmatmul.mubr.f32.gmra.mrb[0].mxu0 %v2611
    %v2613 = vpop.f32.mrb[0].mxu0
    %v2614 = vadd.f32 %v2169, %v2613
    %v2615 = vpop.f32.mrb[0].mxu0
    %2616 = vmatprep.mubr.f32.mxu0 0.0
    %v2617 = vand.u32 %v1991, 4294901760
    %2618 = vmatmul.mubr.f32.gmra.mrb[0].mxu0 %v2617
    %v2619 = vpop.f32.mrb[0].mxu0
    %v2620 = vadd.f32 %v2179, %v2619
    %v2621 = vpop.f32.mrb[0].mxu0
    %2622 = vmatprep.mubr.f32.mxu0 0.0
    %v2623 = vand.u32 %v1992, 4294901760
    %2624 = vmatmul.mubr.f32.gmra.mrb[0].mxu0 %v2623
    %v2625 = vpop.f32.mrb[0].mxu0
    %v2626 = vadd.f32 %v2189, %v2625
    %v2627 = vpop.f32.mrb[0].mxu0
    %2628 = vmatprep.mubr.f32.mxu0 0.0
    %v2629 = vand.u32 %v1993, 4294901760
    %2630 = vmatmul.mubr.f32.gmra.mrb[0].mxu0 %v2629
    %v2631 = vpop.f32.mrb[0].mxu0
    %v2632 = vadd.f32 %v2199, %v2631
    %v2633 = vpop.f32.mrb[0].mxu0
    %2634 = vmatprep.mubr.f32.mxu0 0.0
    %v2635 = vand.u32 %v1994, 4294901760
    %2636 = vmatmul.mubr.f32.gmra.mrb[0].mxu0 %v2635
    %v2637 = vpop.f32.mrb[0].mxu0
    %v2638 = vadd.f32 %v2209, %v2637
    %v2639 = vpop.f32.mrb[0].mxu0
    %2640 = vmatprep.mubr.f32.mxu0 0.0
    %v2641 = vand.u32 %v1995, 4294901760
    %2642 = vmatmul.mubr.f32.gmra.mrb[0].mxu0 %v2641
    %v2643 = vpop.f32.mrb[0].mxu0
    %v2644 = vadd.f32 %v2219, %v2643
    %v2645 = vpop.f32.mrb[0].mxu0
    %2646 = vmatprep.mubr.f32.mxu0 0.0
    %v2647 = vand.u32 %v1996, 4294901760
    %2648 = vmatmul.mubr.f32.gmra.mrb[0].mxu0 %v2647
    %v2649 = vpop.f32.mrb[0].mxu0
    %v2650 = vadd.f32 %v2229, %v2649
    %v2651 = vpop.f32.mrb[0].mxu0
    %2652 = vmatprep.mubr.f32.mxu0 0.0
    %v2653 = vand.u32 %v1997, 4294901760
    %2654 = vmatmul.mubr.f32.gmra.mrb[0].mxu0 %v2653
    %v2655 = vpop.f32.mrb[0].mxu0
    %v2656 = vadd.f32 %v2239, %v2655
    %v2657 = vpop.f32.mrb[0].mxu0
    %2658 = vmatprep.mubr.f32.mxu0 0.0
    %v2659 = vand.u32 %v1998, 4294901760
    %2660 = vmatmul.mubr.f32.gmra.mrb[0].mxu0 %v2659
    %v2661 = vpop.f32.mrb[0].mxu0
    %v2662 = vadd.f32 %v2249, %v2661
    %v2663 = vpop.f32.mrb[0].mxu0
    %2664 = vmatprep.mubr.f32.mxu0 0.0
    %v2665 = vand.u32 %v1999, 4294901760
    %2666 = vmatmul.mubr.f32.gmra.mrb[0].mxu0 %v2665
    %v2667 = vpop.f32.mrb[0].mxu0
    %v2668 = vadd.f32 %v2259, %v2667
    %v2669 = vpop.f32.mrb[0].mxu0
    %2670 = vmatprep.mubr.f32.mxu0 0.0
    %v2671 = vand.u32 %v2000, 4294901760
    %2672 = vmatmul.mubr.f32.gmra.mrb[0].mxu0 %v2671
    %v2673 = vpop.f32.mrb[0].mxu0
    %v2674 = vadd.f32 %v2269, %v2673
    %v2675 = vpop.f32.mrb[0].mxu0
    %2676 = vmatprep.mubr.f32.mxu0 0.0
    %v2677 = vand.u32 %v2001, 4294901760
    %2678 = vmatmul.mubr.f32.gmra.mrb[0].mxu0 %v2677
    %v2679 = vpop.f32.mrb[0].mxu0
    %v2680 = vadd.f32 %v2279, %v2679
    %v2681 = vpop.f32.mrb[0].mxu0
    %2682 = vmatprep.mubr.f32.mxu0 0.0
    %v2683 = vand.u32 %v2002, 4294901760
    %2684 = vmatmul.mubr.f32.gmra.mrb[0].mxu0 %v2683
    %v2685 = vpop.f32.mrb[0].mxu0
    %v2686 = vadd.f32 %v2289, %v2685
    %v2687 = vpop.f32.mrb[0].mxu0
    %2688 = vmatprep.mubr.f32.mxu0 0.0
    %v2689 = vand.u32 %v2003, 4294901760
    %2690 = vmatmul.mubr.f32.gmra.mrb[0].mxu0 %v2689
    %v2691 = vpop.f32.mrb[0].mxu0
    %v2692 = vadd.f32 %v2299, %v2691
    %v2693 = vpop.f32.mrb[0].mxu0
    %2694 = vmatprep.mubr.f32.mxu0 0.0
    %v2695 = vand.u32 %v2004, 4294901760
    %2696 = vmatmul.mubr.f32.gmra.mrb[0].mxu0 %v2695
    %v2697 = vpop.f32.mrb[0].mxu0
    %v2698 = vadd.f32 %v2309, %v2697
    %v2699 = vpop.f32.mrb[0].mxu0
    %2700 = vmatprep.mubr.f32.mxu0 0.0
    %v2701 = vand.u32 %v2005, 4294901760
    %2702 = vmatmul.mubr.f32.gmra.mrb[0].mxu0 %v2701
    %v2703 = vpop.f32.mrb[0].mxu0
    %v2704 = vadd.f32 %v2319, %v2703
    %v2705 = vpop.f32.mrb[0].mxu0
    %2706 = vmatprep.mubr.f32.mxu0 0.0
    %v2707 = vand.u32 %v2006, 4294901760
    %2708 = vmatmul.mubr.f32.gmra.mrb[0].mxu0 %v2707
    %v2709 = vpop.f32.mrb[0].mxu0
    %v2710 = vadd.f32 %v2329, %v2709
    %v2711 = vpop.f32.mrb[0].mxu0
    %2712 = vmatprep.mubr.f32.mxu0 0.0
    %v2713 = vand.u32 %v2007, 4294901760
    %2714 = vmatmul.mubr.f32.gmra.mrb[0].mxu0 %v2713
    %v2715 = vpop.f32.mrb[0].mxu0
    %v2716 = vadd.f32 %v2339, %v2715
    %v2717 = vpop.f32.mrb[0].mxu0
    %2718 = vmatprep.mubr.f32.mxu0 0.0
    %v2719 = vand.u32 %v2008, 4294901760
    %2720 = vmatmul.mubr.f32.gmra.mrb[0].mxu0 %v2719
    %v2721 = vpop.f32.mrb[0].mxu0
    %v2722 = vadd.f32 %v2349, %v2721
    %v2723 = vpop.f32.mrb[0].mxu0
    %2724 = vmatprep.mubr.f32.mxu0 0.0
    %v2725 = vand.u32 %v2009, 4294901760
    %2726 = vmatmul.mubr.f32.gmra.mrb[0].mxu0 %v2725
    %v2727 = vpop.f32.mrb[0].mxu0
    %v2728 = vadd.f32 %v2359, %v2727
    %v2729 = vpop.f32.mrb[0].mxu0
    %2730 = vmatprep.mubr.f32.mxu0 0.0
    %v2731 = vand.u32 %v2010, 4294901760
    %2732 = vmatmul.mubr.f32.gmra.mrb[0].mxu0 %v2731
    %v2733 = vpop.f32.mrb[0].mxu0
    %v2734 = vadd.f32 %v2369, %v2733
    %v2735 = vpop.f32.mrb[0].mxu0
    %2736 = vmatprep.mubr.f32.mxu0 0.0
    %v2737 = vand.u32 %v2011, 4294901760
    %2738 = vmatmul.mubr.f32.gmra.mrb[0].mxu0 %v2737
    %v2739 = vpop.f32.mrb[0].mxu0
    %v2740 = vadd.f32 %v2379, %v2739
    %v2741 = vpop.f32.mrb[0].mxu0
    %2742 = vmatprep.mubr.f32.mxu0 0.0
    %v2743 = vand.u32 %v2012, 4294901760
    %2744 = vmatmul.mubr.f32.gmra.mrb[0].mxu0 %v2743
    %v2745 = vpop.f32.mrb[0].mxu0
    %v2746 = vadd.f32 %v2389, %v2745
    %v2747 = vpop.f32.mrb[0].mxu0
    %2748 = vmatprep.mubr.f32.mxu0 0.0
    %v2749 = vand.u32 %v2013, 4294901760
    %2750 = vmatmul.mubr.f32.gmra.mrb[0].mxu0 %v2749
    %v2751 = vpop.f32.mrb[0].mxu0
    %v2752 = vadd.f32 %v2399, %v2751
    %v2753 = vpop.f32.mrb[0].mxu0
    %2754 = vmatprep.mubr.f32.mxu0 0.0
    %v2755 = vand.u32 %v2014, 4294901760
    %2756 = vmatmul.mubr.f32.gmra.mrb[0].mxu0 %v2755
    %v2757 = vpop.f32.mrb[0].mxu0
    %v2758 = vadd.f32 %v2409, %v2757
    %v2759 = vpop.f32.mrb[0].mxu0
    %2760 = vmatprep.mubr.f32.mxu0 0.0
    %v2761 = vand.u32 %v2015, 4294901760
    %2762 = vmatmul.mubr.f32.gmra.mrb[0].mxu0 %v2761
    %v2763 = vpop.f32.mrb[0].mxu0
    %v2764 = vadd.f32 %v2419, %v2763
    %v2765 = vpop.f32.mrb[0].mxu0
    %2766 = vmatprep.mubr.f32.mxu0 0.0
    %v2767 = vand.u32 %v2016, 4294901760
    %2768 = vmatmul.mubr.f32.gmra.mrb[0].mxu0 %v2767
    %v2769 = vpop.f32.mrb[0].mxu0
    %v2770 = vadd.f32 %v2429, %v2769
    %v2771 = vpop.f32.mrb[0].mxu0
    %2772 = vmatprep.mubr.f32.mxu0 0.0
    %v2773 = vand.u32 %v2017, 4294901760
    %2774 = vmatmul.mubr.f32.gmra.mrb[0].mxu0 %v2773
    %v2775 = vpop.f32.mrb[0].mxu0
    %v2776 = vadd.f32 %v2439, %v2775
    %v2777 = vpop.f32.mrb[0].mxu0
    %2778 = vdwg.mxu0
    %2779 = vmatprep.subr.mxu0 0.0
    %v2780 = vand.u32 %v2018, 4294901760
    %v2781 = vsub.f32 %v2018, %v2780
    %2782 = vmatpush1.msra.mxu0 %v2781
    %2783 = vmatprep.subr.mxu0 0.0
    %v2784 = vand.u32 %v2019, 4294901760
    %v2785 = vsub.f32 %v2019, %v2784
    %2786 = vmatpush1.msra.mxu0 %v2785
    %2787 = vmatprep.subr.mxu0 0.0
    %v2788 = vand.u32 %v2020, 4294901760
    %v2789 = vsub.f32 %v2020, %v2788
    %2790 = vmatpush1.msra.mxu0 %v2789
    %2791 = vmatprep.subr.mxu0 0.0
    %v2792 = vand.u32 %v2021, 4294901760
    %v2793 = vsub.f32 %v2021, %v2792
    %2794 = vmatpush1.msra.mxu0 %v2793
    %2795 = vmatprep.subr.mxu0 0.0
    %v2796 = vand.u32 %v2022, 4294901760
    %v2797 = vsub.f32 %v2022, %v2796
    %2798 = vmatpush1.msra.mxu0 %v2797
    %2799 = vmatprep.subr.mxu0 0.0
    %v2800 = vand.u32 %v2023, 4294901760
    %v2801 = vsub.f32 %v2023, %v2800
    %2802 = vmatpush1.msra.mxu0 %v2801
    %2803 = vmatprep.subr.mxu0 0.0
    %v2804 = vand.u32 %v2024, 4294901760
    %v2805 = vsub.f32 %v2024, %v2804
    %2806 = vmatpush1.msra.mxu0 %v2805
    %2807 = vmatprep.subr.mxu0 0.0
    %v2808 = vand.u32 %v2025, 4294901760
    %v2809 = vsub.f32 %v2025, %v2808
    %2810 = vmatpush1.msra.mxu0 %v2809
    %2811 = vmatprep.subr.mxu0 0.0
    %v2812 = vand.u32 %v2026, 4294901760
    %v2813 = vsub.f32 %v2026, %v2812
    %2814 = vmatpush1.msra.mxu0 %v2813
    %2815 = vmatprep.subr.mxu0 0.0
    %v2816 = vand.u32 %v2027, 4294901760
    %v2817 = vsub.f32 %v2027, %v2816
    %2818 = vmatpush1.msra.mxu0 %v2817
    %2819 = vmatprep.subr.mxu0 0.0
    %v2820 = vand.u32 %v2028, 4294901760
    %v2821 = vsub.f32 %v2028, %v2820
    %2822 = vmatpush1.msra.mxu0 %v2821
    %2823 = vmatprep.subr.mxu0 0.0
    %v2824 = vand.u32 %v2029, 4294901760
    %v2825 = vsub.f32 %v2029, %v2824
    %2826 = vmatpush1.msra.mxu0 %v2825
    %2827 = vmatprep.subr.mxu0 0.0
    %v2828 = vand.u32 %v2030, 4294901760
    %v2829 = vsub.f32 %v2030, %v2828
    %2830 = vmatpush1.msra.mxu0 %v2829
    %2831 = vmatprep.subr.mxu0 0.0
    %v2832 = vand.u32 %v2031, 4294901760
    %v2833 = vsub.f32 %v2031, %v2832
    %2834 = vmatpush1.msra.mxu0 %v2833
    %2835 = vmatprep.subr.mxu0 0.0
    %v2836 = vand.u32 %v2032, 4294901760
    %v2837 = vsub.f32 %v2032, %v2836
    %2838 = vmatpush1.msra.mxu0 %v2837
    %2839 = vmatprep.subr.mxu0 0.0
    %v2840 = vand.u32 %v2033, 4294901760
    %v2841 = vsub.f32 %v2033, %v2840
    %2842 = vmatpush1.msra.mxu0 %v2841
    %2843 = vmatprep.subr.mxu0 0.0
    %2844 = vmatpush1.msra.mxu0 0.0
    %2845 = vmatprep.subr.mxu0 0.0
    %2846 = vmatpush1.msra.mxu0 0.0
    %2847 = vmatprep.subr.mxu0 0.0
    %2848 = vmatpush1.msra.mxu0 0.0
    %2849 = vmatprep.subr.mxu0 0.0
    %2850 = vmatpush1.msra.mxu0 0.0
    %2851 = vmatprep.subr.mxu0 0.0
    %2852 = vmatpush1.msra.mxu0 0.0
    %2853 = vmatprep.subr.mxu0 0.0
    %2854 = vmatpush1.msra.mxu0 0.0
    %2855 = vmatprep.subr.mxu0 0.0
    %2856 = vmatpush1.msra.mxu0 0.0
    %2857 = vmatprep.subr.mxu0 0.0
    %2858 = vmatpush1.msra.mxu0 0.0
    %2859 = vmatprep.subr.mxu0 0.0
    %2860 = vmatpush1.msra.mxu0 0.0
    %2861 = vmatprep.subr.mxu0 0.0
    %2862 = vmatpush1.msra.mxu0 0.0
    %2863 = vmatprep.subr.mxu0 0.0
    %2864 = vmatpush1.msra.mxu0 0.0
    %2865 = vmatprep.subr.mxu0 0.0
    %2866 = vmatpush1.msra.mxu0 0.0
    %2867 = vmatprep.subr.mxu0 0.0
    %2868 = vmatpush1.msra.mxu0 0.0
    %2869 = vmatprep.subr.mxu0 0.0
    %2870 = vmatpush1.msra.mxu0 0.0
    %2871 = vmatprep.subr.mxu0 0.0
    %2872 = vmatpush1.msra.mxu0 0.0
    %2873 = vmatprep.subr.mxu0 0.0
    %2874 = vmatpush1.msra.mxu0 0.0
    %2875 = vmatprep.mubr.f32.mxu0 0.0
    %v2876 = vand.u32 %v1986, 4294901760
    %v2877 = vsub.f32 %v1986, %v2876
    %2878 = vmatmul.mubr.f32.gmra.mrb[0].mxu0 %v2877
    %v2879 = vpop.f32.mrb[0].mxu0
    %v2880 = vadd.f32 %v2590, %v2879
    %v2881 = vpop.f32.mrb[0].mxu0
    %2882 = vmatprep.mubr.f32.mxu0 0.0
    %v2883 = vand.u32 %v1987, 4294901760
    %v2884 = vsub.f32 %v1987, %v2883
    %2885 = vmatmul.mubr.f32.gmra.mrb[0].mxu0 %v2884
    %v2886 = vpop.f32.mrb[0].mxu0
    %v2887 = vadd.f32 %v2596, %v2886
    %v2888 = vpop.f32.mrb[0].mxu0
    %2889 = vmatprep.mubr.f32.mxu0 0.0
    %v2890 = vand.u32 %v1988, 4294901760
    %v2891 = vsub.f32 %v1988, %v2890
    %2892 = vmatmul.mubr.f32.gmra.mrb[0].mxu0 %v2891
    %v2893 = vpop.f32.mrb[0].mxu0
    %v2894 = vadd.f32 %v2602, %v2893
    %v2895 = vpop.f32.mrb[0].mxu0
    %2896 = vmatprep.mubr.f32.mxu0 0.0
    %v2897 = vand.u32 %v1989, 4294901760
    %v2898 = vsub.f32 %v1989, %v2897
    %2899 = vmatmul.mubr.f32.gmra.mrb[0].mxu0 %v2898
    %v2900 = vpop.f32.mrb[0].mxu0
    %v2901 = vadd.f32 %v2608, %v2900
    %v2902 = vpop.f32.mrb[0].mxu0
    %2903 = vmatprep.mubr.f32.mxu0 0.0
    %v2904 = vand.u32 %v1990, 4294901760
    %v2905 = vsub.f32 %v1990, %v2904
    %2906 = vmatmul.mubr.f32.gmra.mrb[0].mxu0 %v2905
    %v2907 = vpop.f32.mrb[0].mxu0
    %v2908 = vadd.f32 %v2614, %v2907
    %v2909 = vpop.f32.mrb[0].mxu0
    %2910 = vmatprep.mubr.f32.mxu0 0.0
    %v2911 = vand.u32 %v1991, 4294901760
    %v2912 = vsub.f32 %v1991, %v2911
    %2913 = vmatmul.mubr.f32.gmra.mrb[0].mxu0 %v2912
    %v2914 = vpop.f32.mrb[0].mxu0
    %v2915 = vadd.f32 %v2620, %v2914
    %v2916 = vpop.f32.mrb[0].mxu0
    %2917 = vmatprep.mubr.f32.mxu0 0.0
    %v2918 = vand.u32 %v1992, 4294901760
    %v2919 = vsub.f32 %v1992, %v2918
    %2920 = vmatmul.mubr.f32.gmra.mrb[0].mxu0 %v2919
    %v2921 = vpop.f32.mrb[0].mxu0
    %v2922 = vadd.f32 %v2626, %v2921
    %v2923 = vpop.f32.mrb[0].mxu0
    %2924 = vmatprep.mubr.f32.mxu0 0.0
    %v2925 = vand.u32 %v1993, 4294901760
    %v2926 = vsub.f32 %v1993, %v2925
    %2927 = vmatmul.mubr.f32.gmra.mrb[0].mxu0 %v2926
    %v2928 = vpop.f32.mrb[0].mxu0
    %v2929 = vadd.f32 %v2632, %v2928
    %v2930 = vpop.f32.mrb[0].mxu0
    %2931 = vmatprep.mubr.f32.mxu0 0.0
    %v2932 = vand.u32 %v1994, 4294901760
    %v2933 = vsub.f32 %v1994, %v2932
    %2934 = vmatmul.mubr.f32.gmra.mrb[0].mxu0 %v2933
    %v2935 = vpop.f32.mrb[0].mxu0
    %v2936 = vadd.f32 %v2638, %v2935
    %v2937 = vpop.f32.mrb[0].mxu0
    %2938 = vmatprep.mubr.f32.mxu0 0.0
    %v2939 = vand.u32 %v1995, 4294901760
    %v2940 = vsub.f32 %v1995, %v2939
    %2941 = vmatmul.mubr.f32.gmra.mrb[0].mxu0 %v2940
    %v2942 = vpop.f32.mrb[0].mxu0
    %v2943 = vadd.f32 %v2644, %v2942
    %v2944 = vpop.f32.mrb[0].mxu0
    %2945 = vmatprep.mubr.f32.mxu0 0.0
    %v2946 = vand.u32 %v1996, 4294901760
    %v2947 = vsub.f32 %v1996, %v2946
    %2948 = vmatmul.mubr.f32.gmra.mrb[0].mxu0 %v2947
    %v2949 = vpop.f32.mrb[0].mxu0
    %v2950 = vadd.f32 %v2650, %v2949
    %v2951 = vpop.f32.mrb[0].mxu0
    %2952 = vmatprep.mubr.f32.mxu0 0.0
    %v2953 = vand.u32 %v1997, 4294901760
    %v2954 = vsub.f32 %v1997, %v2953
    %2955 = vmatmul.mubr.f32.gmra.mrb[0].mxu0 %v2954
    %v2956 = vpop.f32.mrb[0].mxu0
    %v2957 = vadd.f32 %v2656, %v2956
    %v2958 = vpop.f32.mrb[0].mxu0
    %2959 = vmatprep.mubr.f32.mxu0 0.0
    %v2960 = vand.u32 %v1998, 4294901760
    %v2961 = vsub.f32 %v1998, %v2960
    %2962 = vmatmul.mubr.f32.gmra.mrb[0].mxu0 %v2961
    %v2963 = vpop.f32.mrb[0].mxu0
    %v2964 = vadd.f32 %v2662, %v2963
    %v2965 = vpop.f32.mrb[0].mxu0
    %2966 = vmatprep.mubr.f32.mxu0 0.0
    %v2967 = vand.u32 %v1999, 4294901760
    %v2968 = vsub.f32 %v1999, %v2967
    %2969 = vmatmul.mubr.f32.gmra.mrb[0].mxu0 %v2968
    %v2970 = vpop.f32.mrb[0].mxu0
    %v2971 = vadd.f32 %v2668, %v2970
    %v2972 = vpop.f32.mrb[0].mxu0
    %2973 = vmatprep.mubr.f32.mxu0 0.0
    %v2974 = vand.u32 %v2000, 4294901760
    %v2975 = vsub.f32 %v2000, %v2974
    %2976 = vmatmul.mubr.f32.gmra.mrb[0].mxu0 %v2975
    %v2977 = vpop.f32.mrb[0].mxu0
    %v2978 = vadd.f32 %v2674, %v2977
    %v2979 = vpop.f32.mrb[0].mxu0
    %2980 = vmatprep.mubr.f32.mxu0 0.0
    %v2981 = vand.u32 %v2001, 4294901760
    %v2982 = vsub.f32 %v2001, %v2981
    %2983 = vmatmul.mubr.f32.gmra.mrb[0].mxu0 %v2982
    %v2984 = vpop.f32.mrb[0].mxu0
    %v2985 = vadd.f32 %v2680, %v2984
    %v2986 = vpop.f32.mrb[0].mxu0
    %2987 = vmatprep.mubr.f32.mxu0 0.0
    %v2988 = vand.u32 %v2002, 4294901760
    %v2989 = vsub.f32 %v2002, %v2988
    %2990 = vmatmul.mubr.f32.gmra.mrb[0].mxu0 %v2989
    %v2991 = vpop.f32.mrb[0].mxu0
    %v2992 = vadd.f32 %v2686, %v2991
    %v2993 = vpop.f32.mrb[0].mxu0
    %2994 = vmatprep.mubr.f32.mxu0 0.0
    %v2995 = vand.u32 %v2003, 4294901760
    %v2996 = vsub.f32 %v2003, %v2995
    %2997 = vmatmul.mubr.f32.gmra.mrb[0].mxu0 %v2996
    %v2998 = vpop.f32.mrb[0].mxu0
    %v2999 = vadd.f32 %v2692, %v2998
    %v3000 = vpop.f32.mrb[0].mxu0
    %3001 = vmatprep.mubr.f32.mxu0 0.0
    %v3002 = vand.u32 %v2004, 4294901760
    %v3003 = vsub.f32 %v2004, %v3002
    %3004 = vmatmul.mubr.f32.gmra.mrb[0].mxu0 %v3003
    %v3005 = vpop.f32.mrb[0].mxu0
    %v3006 = vadd.f32 %v2698, %v3005
    %v3007 = vpop.f32.mrb[0].mxu0
    %3008 = vmatprep.mubr.f32.mxu0 0.0
    %v3009 = vand.u32 %v2005, 4294901760
    %v3010 = vsub.f32 %v2005, %v3009
    %3011 = vmatmul.mubr.f32.gmra.mrb[0].mxu0 %v3010
    %v3012 = vpop.f32.mrb[0].mxu0
    %v3013 = vadd.f32 %v2704, %v3012
    %v3014 = vpop.f32.mrb[0].mxu0
    %3015 = vmatprep.mubr.f32.mxu0 0.0
    %v3016 = vand.u32 %v2006, 4294901760
    %v3017 = vsub.f32 %v2006, %v3016
    %3018 = vmatmul.mubr.f32.gmra.mrb[0].mxu0 %v3017
    %v3019 = vpop.f32.mrb[0].mxu0
    %v3020 = vadd.f32 %v2710, %v3019
    %v3021 = vpop.f32.mrb[0].mxu0
    %3022 = vmatprep.mubr.f32.mxu0 0.0
    %v3023 = vand.u32 %v2007, 4294901760
    %v3024 = vsub.f32 %v2007, %v3023
    %3025 = vmatmul.mubr.f32.gmra.mrb[0].mxu0 %v3024
    %v3026 = vpop.f32.mrb[0].mxu0
    %v3027 = vadd.f32 %v2716, %v3026
    %v3028 = vpop.f32.mrb[0].mxu0
    %3029 = vmatprep.mubr.f32.mxu0 0.0
    %v3030 = vand.u32 %v2008, 4294901760
    %v3031 = vsub.f32 %v2008, %v3030
    %3032 = vmatmul.mubr.f32.gmra.mrb[0].mxu0 %v3031
    %v3033 = vpop.f32.mrb[0].mxu0
    %v3034 = vadd.f32 %v2722, %v3033
    %v3035 = vpop.f32.mrb[0].mxu0
    %3036 = vmatprep.mubr.f32.mxu0 0.0
    %v3037 = vand.u32 %v2009, 4294901760
    %v3038 = vsub.f32 %v2009, %v3037
    %3039 = vmatmul.mubr.f32.gmra.mrb[0].mxu0 %v3038
    %v3040 = vpop.f32.mrb[0].mxu0
    %v3041 = vadd.f32 %v2728, %v3040
    %v3042 = vpop.f32.mrb[0].mxu0
    %3043 = vmatprep.mubr.f32.mxu0 0.0
    %v3044 = vand.u32 %v2010, 4294901760
    %v3045 = vsub.f32 %v2010, %v3044
    %3046 = vmatmul.mubr.f32.gmra.mrb[0].mxu0 %v3045
    %v3047 = vpop.f32.mrb[0].mxu0
    %v3048 = vadd.f32 %v2734, %v3047
    %v3049 = vpop.f32.mrb[0].mxu0
    %3050 = vmatprep.mubr.f32.mxu0 0.0
    %v3051 = vand.u32 %v2011, 4294901760
    %v3052 = vsub.f32 %v2011, %v3051
    %3053 = vmatmul.mubr.f32.gmra.mrb[0].mxu0 %v3052
    %v3054 = vpop.f32.mrb[0].mxu0
    %v3055 = vadd.f32 %v2740, %v3054
    %v3056 = vpop.f32.mrb[0].mxu0
    %3057 = vmatprep.mubr.f32.mxu0 0.0
    %v3058 = vand.u32 %v2012, 4294901760
    %v3059 = vsub.f32 %v2012, %v3058
    %3060 = vmatmul.mubr.f32.gmra.mrb[0].mxu0 %v3059
    %v3061 = vpop.f32.mrb[0].mxu0
    %v3062 = vadd.f32 %v2746, %v3061
    %v3063 = vpop.f32.mrb[0].mxu0
    %3064 = vmatprep.mubr.f32.mxu0 0.0
    %v3065 = vand.u32 %v2013, 4294901760
    %v3066 = vsub.f32 %v2013, %v3065
    %3067 = vmatmul.mubr.f32.gmra.mrb[0].mxu0 %v3066
    %v3068 = vpop.f32.mrb[0].mxu0
    %v3069 = vadd.f32 %v2752, %v3068
    %v3070 = vpop.f32.mrb[0].mxu0
    %3071 = vmatprep.mubr.f32.mxu0 0.0
    %v3072 = vand.u32 %v2014, 4294901760
    %v3073 = vsub.f32 %v2014, %v3072
    %3074 = vmatmul.mubr.f32.gmra.mrb[0].mxu0 %v3073
    %v3075 = vpop.f32.mrb[0].mxu0
    %v3076 = vadd.f32 %v2758, %v3075
    %v3077 = vpop.f32.mrb[0].mxu0
    %3078 = vmatprep.mubr.f32.mxu0 0.0
    %v3079 = vand.u32 %v2015, 4294901760
    %v3080 = vsub.f32 %v2015, %v3079
    %3081 = vmatmul.mubr.f32.gmra.mrb[0].mxu0 %v3080
    %v3082 = vpop.f32.mrb[0].mxu0
    %v3083 = vadd.f32 %v2764, %v3082
    %v3084 = vpop.f32.mrb[0].mxu0
    %3085 = vmatprep.mubr.f32.mxu0 0.0
    %v3086 = vand.u32 %v2016, 4294901760
    %v3087 = vsub.f32 %v2016, %v3086
    %3088 = vmatmul.mubr.f32.gmra.mrb[0].mxu0 %v3087
    %v3089 = vpop.f32.mrb[0].mxu0
    %v3090 = vadd.f32 %v2770, %v3089
    %v3091 = vpop.f32.mrb[0].mxu0
    %3092 = vmatprep.mubr.f32.mxu0 0.0
    %v3093 = vand.u32 %v2017, 4294901760
    %v3094 = vsub.f32 %v2017, %v3093
    %3095 = vmatmul.mubr.f32.gmra.mrb[0].mxu0 %v3094
    %v3096 = vpop.f32.mrb[0].mxu0
    %v3097 = vadd.f32 %v2776, %v3096
    %v3098 = vpop.f32.mrb[0].mxu0
    %3099 = vdwg.mxu0
    %3100 = vmatprep.subr.mxu0 0.0
    %v3101 = vand.u32 %v2018, 4294901760
    %3102 = vmatpush1.msra.mxu0 %v3101
    %3103 = vmatprep.subr.mxu0 0.0
    %v3104 = vand.u32 %v2019, 4294901760
    %3105 = vmatpush1.msra.mxu0 %v3104
    %3106 = vmatprep.subr.mxu0 0.0
    %v3107 = vand.u32 %v2020, 4294901760
    %3108 = vmatpush1.msra.mxu0 %v3107
    %3109 = vmatprep.subr.mxu0 0.0
    %v3110 = vand.u32 %v2021, 4294901760
    %3111 = vmatpush1.msra.mxu0 %v3110
    %3112 = vmatprep.subr.mxu0 0.0
    %v3113 = vand.u32 %v2022, 4294901760
    %3114 = vmatpush1.msra.mxu0 %v3113
    %3115 = vmatprep.subr.mxu0 0.0
    %v3116 = vand.u32 %v2023, 4294901760
    %3117 = vmatpush1.msra.mxu0 %v3116
    %3118 = vmatprep.subr.mxu0 0.0
    %v3119 = vand.u32 %v2024, 4294901760
    %3120 = vmatpush1.msra.mxu0 %v3119
    %3121 = vmatprep.subr.mxu0 0.0
    %v3122 = vand.u32 %v2025, 4294901760
    %3123 = vmatpush1.msra.mxu0 %v3122
    %3124 = vmatprep.subr.mxu0 0.0
    %v3125 = vand.u32 %v2026, 4294901760
    %3126 = vmatpush1.msra.mxu0 %v3125
    %3127 = vmatprep.subr.mxu0 0.0
    %v3128 = vand.u32 %v2027, 4294901760
    %3129 = vmatpush1.msra.mxu0 %v3128
    %3130 = vmatprep.subr.mxu0 0.0
    %v3131 = vand.u32 %v2028, 4294901760
    %3132 = vmatpush1.msra.mxu0 %v3131
    %3133 = vmatprep.subr.mxu0 0.0
    %v3134 = vand.u32 %v2029, 4294901760
    %3135 = vmatpush1.msra.mxu0 %v3134
    %3136 = vmatprep.subr.mxu0 0.0
    %v3137 = vand.u32 %v2030, 4294901760
    %3138 = vmatpush1.msra.mxu0 %v3137
    %3139 = vmatprep.subr.mxu0 0.0
    %v3140 = vand.u32 %v2031, 4294901760
    %3141 = vmatpush1.msra.mxu0 %v3140
    %3142 = vmatprep.subr.mxu0 0.0
    %v3143 = vand.u32 %v2032, 4294901760
    %3144 = vmatpush1.msra.mxu0 %v3143
    %3145 = vmatprep.subr.mxu0 0.0
    %v3146 = vand.u32 %v2033, 4294901760
    %3147 = vmatpush1.msra.mxu0 %v3146
    %3148 = vmatprep.subr.mxu0 0.0
    %3149 = vmatpush1.msra.mxu0 0.0
    %3150 = vmatprep.subr.mxu0 0.0
    %3151 = vmatpush1.msra.mxu0 0.0
    %3152 = vmatprep.subr.mxu0 0.0
    %3153 = vmatpush1.msra.mxu0 0.0
    %3154 = vmatprep.subr.mxu0 0.0
    %3155 = vmatpush1.msra.mxu0 0.0
    %3156 = vmatprep.subr.mxu0 0.0
    %3157 = vmatpush1.msra.mxu0 0.0
    %3158 = vmatprep.subr.mxu0 0.0
    %3159 = vmatpush1.msra.mxu0 0.0
    %3160 = vmatprep.subr.mxu0 0.0
    %3161 = vmatpush1.msra.mxu0 0.0
    %3162 = vmatprep.subr.mxu0 0.0
    %3163 = vmatpush1.msra.mxu0 0.0
    %3164 = vmatprep.subr.mxu0 0.0
    %3165 = vmatpush1.msra.mxu0 0.0
    %3166 = vmatprep.subr.mxu0 0.0
    %3167 = vmatpush1.msra.mxu0 0.0
    %3168 = vmatprep.subr.mxu0 0.0
    %3169 = vmatpush1.msra.mxu0 0.0
    %3170 = vmatprep.subr.mxu0 0.0
    %3171 = vmatpush1.msra.mxu0 0.0
    %3172 = vmatprep.subr.mxu0 0.0
    %3173 = vmatpush1.msra.mxu0 0.0
    %3174 = vmatprep.subr.mxu0 0.0
    %3175 = vmatpush1.msra.mxu0 0.0
    %3176 = vmatprep.subr.mxu0 0.0
    %3177 = vmatpush1.msra.mxu0 0.0
    %3178 = vmatprep.subr.mxu0 0.0
    %3179 = vmatpush1.msra.mxu0 0.0
    %3180 = vmatprep.mubr.f32.mxu0 0.0
    %v3181 = vand.u32 %v1986, 4294901760
    %v3182 = vsub.f32 %v1986, %v3181
    %v3183 = vand.u32 %v3182, 4294901760
    %3184 = vmatmul.mubr.f32.gmra.mrb[0].mxu0 %v3183
    %v3185 = vpop.f32.mrb[0].mxu0
    %v3186 = vadd.f32 %v2880, %v3185
    %v3187 = vpop.f32.mrb[0].mxu0
    %3188 = vmatprep.mubr.f32.mxu0 0.0
    %v3189 = vand.u32 %v1987, 4294901760
    %v3190 = vsub.f32 %v1987, %v3189
    %v3191 = vand.u32 %v3190, 4294901760
    %3192 = vmatmul.mubr.f32.gmra.mrb[0].mxu0 %v3191
    %v3193 = vpop.f32.mrb[0].mxu0
    %v3194 = vadd.f32 %v2887, %v3193
    %v3195 = vpop.f32.mrb[0].mxu0
    %3196 = vmatprep.mubr.f32.mxu0 0.0
    %v3197 = vand.u32 %v1988, 4294901760
    %v3198 = vsub.f32 %v1988, %v3197
    %v3199 = vand.u32 %v3198, 4294901760
    %3200 = vmatmul.mubr.f32.gmra.mrb[0].mxu0 %v3199
    %v3201 = vpop.f32.mrb[0].mxu0
    %v3202 = vadd.f32 %v2894, %v3201
    %v3203 = vpop.f32.mrb[0].mxu0
    %3204 = vmatprep.mubr.f32.mxu0 0.0
    %v3205 = vand.u32 %v1989, 4294901760
    %v3206 = vsub.f32 %v1989, %v3205
    %v3207 = vand.u32 %v3206, 4294901760
    %3208 = vmatmul.mubr.f32.gmra.mrb[0].mxu0 %v3207
    %v3209 = vpop.f32.mrb[0].mxu0
    %v3210 = vadd.f32 %v2901, %v3209
    %v3211 = vpop.f32.mrb[0].mxu0
    %3212 = vmatprep.mubr.f32.mxu0 0.0
    %v3213 = vand.u32 %v1990, 4294901760
    %v3214 = vsub.f32 %v1990, %v3213
    %v3215 = vand.u32 %v3214, 4294901760
    %3216 = vmatmul.mubr.f32.gmra.mrb[0].mxu0 %v3215
    %v3217 = vpop.f32.mrb[0].mxu0
    %v3218 = vadd.f32 %v2908, %v3217
    %v3219 = vpop.f32.mrb[0].mxu0
    %3220 = vmatprep.mubr.f32.mxu0 0.0
    %v3221 = vand.u32 %v1991, 4294901760
    %v3222 = vsub.f32 %v1991, %v3221
    %v3223 = vand.u32 %v3222, 4294901760
    %3224 = vmatmul.mubr.f32.gmra.mrb[0].mxu0 %v3223
    %v3225 = vpop.f32.mrb[0].mxu0
    %v3226 = vadd.f32 %v2915, %v3225
    %v3227 = vpop.f32.mrb[0].mxu0
    %3228 = vmatprep.mubr.f32.mxu0 0.0
    %v3229 = vand.u32 %v1992, 4294901760
    %v3230 = vsub.f32 %v1992, %v3229
    %v3231 = vand.u32 %v3230, 4294901760
    %3232 = vmatmul.mubr.f32.gmra.mrb[0].mxu0 %v3231
    %v3233 = vpop.f32.mrb[0].mxu0
    %v3234 = vadd.f32 %v2922, %v3233
    %v3235 = vpop.f32.mrb[0].mxu0
    %3236 = vmatprep.mubr.f32.mxu0 0.0
    %v3237 = vand.u32 %v1993, 4294901760
    %v3238 = vsub.f32 %v1993, %v3237
    %v3239 = vand.u32 %v3238, 4294901760
    %3240 = vmatmul.mubr.f32.gmra.mrb[0].mxu0 %v3239
    %v3241 = vpop.f32.mrb[0].mxu0
    %v3242 = vadd.f32 %v2929, %v3241
    %v3243 = vpop.f32.mrb[0].mxu0
    %3244 = vmatprep.mubr.f32.mxu0 0.0
    %v3245 = vand.u32 %v1994, 4294901760
    %v3246 = vsub.f32 %v1994, %v3245
    %v3247 = vand.u32 %v3246, 4294901760
    %3248 = vmatmul.mubr.f32.gmra.mrb[0].mxu0 %v3247
    %v3249 = vpop.f32.mrb[0].mxu0
    %v3250 = vadd.f32 %v2936, %v3249
    %v3251 = vpop.f32.mrb[0].mxu0
    %3252 = vmatprep.mubr.f32.mxu0 0.0
    %v3253 = vand.u32 %v1995, 4294901760
    %v3254 = vsub.f32 %v1995, %v3253
    %v3255 = vand.u32 %v3254, 4294901760
    %3256 = vmatmul.mubr.f32.gmra.mrb[0].mxu0 %v3255
    %v3257 = vpop.f32.mrb[0].mxu0
    %v3258 = vadd.f32 %v2943, %v3257
    %v3259 = vpop.f32.mrb[0].mxu0
    %3260 = vmatprep.mubr.f32.mxu0 0.0
    %v3261 = vand.u32 %v1996, 4294901760
    %v3262 = vsub.f32 %v1996, %v3261
    %v3263 = vand.u32 %v3262, 4294901760
    %3264 = vmatmul.mubr.f32.gmra.mrb[0].mxu0 %v3263
    %v3265 = vpop.f32.mrb[0].mxu0
    %v3266 = vadd.f32 %v2950, %v3265
    %v3267 = vpop.f32.mrb[0].mxu0
    %3268 = vmatprep.mubr.f32.mxu0 0.0
    %v3269 = vand.u32 %v1997, 4294901760
    %v3270 = vsub.f32 %v1997, %v3269
    %v3271 = vand.u32 %v3270, 4294901760
    %3272 = vmatmul.mubr.f32.gmra.mrb[0].mxu0 %v3271
    %v3273 = vpop.f32.mrb[0].mxu0
    %v3274 = vadd.f32 %v2957, %v3273
    %v3275 = vpop.f32.mrb[0].mxu0
    %3276 = vmatprep.mubr.f32.mxu0 0.0
    %v3277 = vand.u32 %v1998, 4294901760
    %v3278 = vsub.f32 %v1998, %v3277
    %v3279 = vand.u32 %v3278, 4294901760
    %3280 = vmatmul.mubr.f32.gmra.mrb[0].mxu0 %v3279
    %v3281 = vpop.f32.mrb[0].mxu0
    %v3282 = vadd.f32 %v2964, %v3281
    %v3283 = vpop.f32.mrb[0].mxu0
    %3284 = vmatprep.mubr.f32.mxu0 0.0
    %v3285 = vand.u32 %v1999, 4294901760
    %v3286 = vsub.f32 %v1999, %v3285
    %v3287 = vand.u32 %v3286, 4294901760
    %3288 = vmatmul.mubr.f32.gmra.mrb[0].mxu0 %v3287
    %v3289 = vpop.f32.mrb[0].mxu0
    %v3290 = vadd.f32 %v2971, %v3289
    %v3291 = vpop.f32.mrb[0].mxu0
    %3292 = vmatprep.mubr.f32.mxu0 0.0
    %v3293 = vand.u32 %v2000, 4294901760
    %v3294 = vsub.f32 %v2000, %v3293
    %v3295 = vand.u32 %v3294, 4294901760
    %3296 = vmatmul.mubr.f32.gmra.mrb[0].mxu0 %v3295
    %v3297 = vpop.f32.mrb[0].mxu0
    %v3298 = vadd.f32 %v2978, %v3297
    %v3299 = vpop.f32.mrb[0].mxu0
    %3300 = vmatprep.mubr.f32.mxu0 0.0
    %v3301 = vand.u32 %v2001, 4294901760
    %v3302 = vsub.f32 %v2001, %v3301
    %v3303 = vand.u32 %v3302, 4294901760
    %3304 = vmatmul.mubr.f32.gmra.mrb[0].mxu0 %v3303
    %v3305 = vpop.f32.mrb[0].mxu0
    %v3306 = vadd.f32 %v2985, %v3305
    %v3307 = vpop.f32.mrb[0].mxu0
    %3308 = vmatprep.mubr.f32.mxu0 0.0
    %v3309 = vand.u32 %v2002, 4294901760
    %v3310 = vsub.f32 %v2002, %v3309
    %v3311 = vand.u32 %v3310, 4294901760
    %3312 = vmatmul.mubr.f32.gmra.mrb[0].mxu0 %v3311
    %v3313 = vpop.f32.mrb[0].mxu0
    %v3314 = vadd.f32 %v2992, %v3313
    %v3315 = vpop.f32.mrb[0].mxu0
    %3316 = vmatprep.mubr.f32.mxu0 0.0
    %v3317 = vand.u32 %v2003, 4294901760
    %v3318 = vsub.f32 %v2003, %v3317
    %v3319 = vand.u32 %v3318, 4294901760
    %3320 = vmatmul.mubr.f32.gmra.mrb[0].mxu0 %v3319
    %v3321 = vpop.f32.mrb[0].mxu0
    %v3322 = vadd.f32 %v2999, %v3321
    %v3323 = vpop.f32.mrb[0].mxu0
    %3324 = vmatprep.mubr.f32.mxu0 0.0
    %v3325 = vand.u32 %v2004, 4294901760
    %v3326 = vsub.f32 %v2004, %v3325
    %v3327 = vand.u32 %v3326, 4294901760
    %3328 = vmatmul.mubr.f32.gmra.mrb[0].mxu0 %v3327
    %v3329 = vpop.f32.mrb[0].mxu0
    %v3330 = vadd.f32 %v3006, %v3329
    %v3331 = vpop.f32.mrb[0].mxu0
    %3332 = vmatprep.mubr.f32.mxu0 0.0
    %v3333 = vand.u32 %v2005, 4294901760
    %v3334 = vsub.f32 %v2005, %v3333
    %v3335 = vand.u32 %v3334, 4294901760
    %3336 = vmatmul.mubr.f32.gmra.mrb[0].mxu0 %v3335
    %v3337 = vpop.f32.mrb[0].mxu0
    %v3338 = vadd.f32 %v3013, %v3337
    %v3339 = vpop.f32.mrb[0].mxu0
    %3340 = vmatprep.mubr.f32.mxu0 0.0
    %v3341 = vand.u32 %v2006, 4294901760
    %v3342 = vsub.f32 %v2006, %v3341
    %v3343 = vand.u32 %v3342, 4294901760
    %3344 = vmatmul.mubr.f32.gmra.mrb[0].mxu0 %v3343
    %v3345 = vpop.f32.mrb[0].mxu0
    %v3346 = vadd.f32 %v3020, %v3345
    %v3347 = vpop.f32.mrb[0].mxu0
    %3348 = vmatprep.mubr.f32.mxu0 0.0
    %v3349 = vand.u32 %v2007, 4294901760
    %v3350 = vsub.f32 %v2007, %v3349
    %v3351 = vand.u32 %v3350, 4294901760
    %3352 = vmatmul.mubr.f32.gmra.mrb[0].mxu0 %v3351
    %v3353 = vpop.f32.mrb[0].mxu0
    %v3354 = vadd.f32 %v3027, %v3353
    %v3355 = vpop.f32.mrb[0].mxu0
    %3356 = vmatprep.mubr.f32.mxu0 0.0
    %v3357 = vand.u32 %v2008, 4294901760
    %v3358 = vsub.f32 %v2008, %v3357
    %v3359 = vand.u32 %v3358, 4294901760
    %3360 = vmatmul.mubr.f32.gmra.mrb[0].mxu0 %v3359
    %v3361 = vpop.f32.mrb[0].mxu0
    %v3362 = vadd.f32 %v3034, %v3361
    %v3363 = vpop.f32.mrb[0].mxu0
    %3364 = vmatprep.mubr.f32.mxu0 0.0
    %v3365 = vand.u32 %v2009, 4294901760
    %v3366 = vsub.f32 %v2009, %v3365
    %v3367 = vand.u32 %v3366, 4294901760
    %3368 = vmatmul.mubr.f32.gmra.mrb[0].mxu0 %v3367
    %v3369 = vpop.f32.mrb[0].mxu0
    %v3370 = vadd.f32 %v3041, %v3369
    %v3371 = vpop.f32.mrb[0].mxu0
    %3372 = vmatprep.mubr.f32.mxu0 0.0
    %v3373 = vand.u32 %v2010, 4294901760
    %v3374 = vsub.f32 %v2010, %v3373
    %v3375 = vand.u32 %v3374, 4294901760
    %3376 = vmatmul.mubr.f32.gmra.mrb[0].mxu0 %v3375
    %v3377 = vpop.f32.mrb[0].mxu0
    %v3378 = vadd.f32 %v3048, %v3377
    %v3379 = vpop.f32.mrb[0].mxu0
    %3380 = vmatprep.mubr.f32.mxu0 0.0
    %v3381 = vand.u32 %v2011, 4294901760
    %v3382 = vsub.f32 %v2011, %v3381
    %v3383 = vand.u32 %v3382, 4294901760
    %3384 = vmatmul.mubr.f32.gmra.mrb[0].mxu0 %v3383
    %v3385 = vpop.f32.mrb[0].mxu0
    %v3386 = vadd.f32 %v3055, %v3385
    %v3387 = vpop.f32.mrb[0].mxu0
    %3388 = vmatprep.mubr.f32.mxu0 0.0
    %v3389 = vand.u32 %v2012, 4294901760
    %v3390 = vsub.f32 %v2012, %v3389
    %v3391 = vand.u32 %v3390, 4294901760
    %3392 = vmatmul.mubr.f32.gmra.mrb[0].mxu0 %v3391
    %v3393 = vpop.f32.mrb[0].mxu0
    %v3394 = vadd.f32 %v3062, %v3393
    %v3395 = vpop.f32.mrb[0].mxu0
    %3396 = vmatprep.mubr.f32.mxu0 0.0
    %v3397 = vand.u32 %v2013, 4294901760
    %v3398 = vsub.f32 %v2013, %v3397
    %v3399 = vand.u32 %v3398, 4294901760
    %3400 = vmatmul.mubr.f32.gmra.mrb[0].mxu0 %v3399
    %v3401 = vpop.f32.mrb[0].mxu0
    %v3402 = vadd.f32 %v3069, %v3401
    %v3403 = vpop.f32.mrb[0].mxu0
    %3404 = vmatprep.mubr.f32.mxu0 0.0
    %v3405 = vand.u32 %v2014, 4294901760
    %v3406 = vsub.f32 %v2014, %v3405
    %v3407 = vand.u32 %v3406, 4294901760
    %3408 = vmatmul.mubr.f32.gmra.mrb[0].mxu0 %v3407
    %v3409 = vpop.f32.mrb[0].mxu0
    %v3410 = vadd.f32 %v3076, %v3409
    %v3411 = vpop.f32.mrb[0].mxu0
    %3412 = vmatprep.mubr.f32.mxu0 0.0
    %v3413 = vand.u32 %v2015, 4294901760
    %v3414 = vsub.f32 %v2015, %v3413
    %v3415 = vand.u32 %v3414, 4294901760
    %3416 = vmatmul.mubr.f32.gmra.mrb[0].mxu0 %v3415
    %v3417 = vpop.f32.mrb[0].mxu0
    %v3418 = vadd.f32 %v3083, %v3417
    %v3419 = vpop.f32.mrb[0].mxu0
    %3420 = vmatprep.mubr.f32.mxu0 0.0
    %v3421 = vand.u32 %v2016, 4294901760
    %v3422 = vsub.f32 %v2016, %v3421
    %v3423 = vand.u32 %v3422, 4294901760
    %3424 = vmatmul.mubr.f32.gmra.mrb[0].mxu0 %v3423
    %v3425 = vpop.f32.mrb[0].mxu0
    %v3426 = vadd.f32 %v3090, %v3425
    %v3427 = vpop.f32.mrb[0].mxu0
    %3428 = vmatprep.mubr.f32.mxu0 0.0
    %v3429 = vand.u32 %v2017, 4294901760
    %v3430 = vsub.f32 %v2017, %v3429
    %v3431 = vand.u32 %v3430, 4294901760
    %3432 = vmatmul.mubr.f32.gmra.mrb[0].mxu0 %v3431
    %v3433 = vpop.f32.mrb[0].mxu0
    %v3434 = vadd.f32 %v3097, %v3433
    %v3435 = vpop.f32.mrb[0].mxu0
    %3436 = vdwg.mxu0
    %3437 = vmatprep.subr.mxu0 0.0
    %v3438 = vand.u32 %v2018, 4294901760
    %v3439 = vsub.f32 %v2018, %v3438
    %v3440 = vand.u32 %v3439, 4294901760
    %3441 = vmatpush1.msra.mxu0 %v3440
    %3442 = vmatprep.subr.mxu0 0.0
    %v3443 = vand.u32 %v2019, 4294901760
    %v3444 = vsub.f32 %v2019, %v3443
    %v3445 = vand.u32 %v3444, 4294901760
    %3446 = vmatpush1.msra.mxu0 %v3445
    %3447 = vmatprep.subr.mxu0 0.0
    %v3448 = vand.u32 %v2020, 4294901760
    %v3449 = vsub.f32 %v2020, %v3448
    %v3450 = vand.u32 %v3449, 4294901760
    %3451 = vmatpush1.msra.mxu0 %v3450
    %3452 = vmatprep.subr.mxu0 0.0
    %v3453 = vand.u32 %v2021, 4294901760
    %v3454 = vsub.f32 %v2021, %v3453
    %v3455 = vand.u32 %v3454, 4294901760
    %3456 = vmatpush1.msra.mxu0 %v3455
    %3457 = vmatprep.subr.mxu0 0.0
    %v3458 = vand.u32 %v2022, 4294901760
    %v3459 = vsub.f32 %v2022, %v3458
    %v3460 = vand.u32 %v3459, 4294901760
    %3461 = vmatpush1.msra.mxu0 %v3460
    %3462 = vmatprep.subr.mxu0 0.0
    %v3463 = vand.u32 %v2023, 4294901760
    %v3464 = vsub.f32 %v2023, %v3463
    %v3465 = vand.u32 %v3464, 4294901760
    %3466 = vmatpush1.msra.mxu0 %v3465
    %3467 = vmatprep.subr.mxu0 0.0
    %v3468 = vand.u32 %v2024, 4294901760
    %v3469 = vsub.f32 %v2024, %v3468
    %v3470 = vand.u32 %v3469, 4294901760
    %3471 = vmatpush1.msra.mxu0 %v3470
    %3472 = vmatprep.subr.mxu0 0.0
    %v3473 = vand.u32 %v2025, 4294901760
    %v3474 = vsub.f32 %v2025, %v3473
    %v3475 = vand.u32 %v3474, 4294901760
    %3476 = vmatpush1.msra.mxu0 %v3475
    %3477 = vmatprep.subr.mxu0 0.0
    %v3478 = vand.u32 %v2026, 4294901760
    %v3479 = vsub.f32 %v2026, %v3478
    %v3480 = vand.u32 %v3479, 4294901760
    %3481 = vmatpush1.msra.mxu0 %v3480
    %3482 = vmatprep.subr.mxu0 0.0
    %v3483 = vand.u32 %v2027, 4294901760
    %v3484 = vsub.f32 %v2027, %v3483
    %v3485 = vand.u32 %v3484, 4294901760
    %3486 = vmatpush1.msra.mxu0 %v3485
    %3487 = vmatprep.subr.mxu0 0.0
    %v3488 = vand.u32 %v2028, 4294901760
    %v3489 = vsub.f32 %v2028, %v3488
    %v3490 = vand.u32 %v3489, 4294901760
    %3491 = vmatpush1.msra.mxu0 %v3490
    %3492 = vmatprep.subr.mxu0 0.0
    %v3493 = vand.u32 %v2029, 4294901760
    %v3494 = vsub.f32 %v2029, %v3493
    %v3495 = vand.u32 %v3494, 4294901760
    %3496 = vmatpush1.msra.mxu0 %v3495
    %3497 = vmatprep.subr.mxu0 0.0
    %v3498 = vand.u32 %v2030, 4294901760
    %v3499 = vsub.f32 %v2030, %v3498
    %v3500 = vand.u32 %v3499, 4294901760
    %3501 = vmatpush1.msra.mxu0 %v3500
    %3502 = vmatprep.subr.mxu0 0.0
    %v3503 = vand.u32 %v2031, 4294901760
    %v3504 = vsub.f32 %v2031, %v3503
    %v3505 = vand.u32 %v3504, 4294901760
    %3506 = vmatpush1.msra.mxu0 %v3505
    %3507 = vmatprep.subr.mxu0 0.0
    %v3508 = vand.u32 %v2032, 4294901760
    %v3509 = vsub.f32 %v2032, %v3508
    %v3510 = vand.u32 %v3509, 4294901760
    %3511 = vmatpush1.msra.mxu0 %v3510
    %3512 = vmatprep.subr.mxu0 0.0
    %v3513 = vand.u32 %v2033, 4294901760
    %v3514 = vsub.f32 %v2033, %v3513
    %v3515 = vand.u32 %v3514, 4294901760
    %3516 = vmatpush1.msra.mxu0 %v3515
    %3517 = vmatprep.subr.mxu0 0.0
    %3518 = vmatpush1.msra.mxu0 0.0
    %3519 = vmatprep.subr.mxu0 0.0
    %3520 = vmatpush1.msra.mxu0 0.0
    %3521 = vmatprep.subr.mxu0 0.0
    %3522 = vmatpush1.msra.mxu0 0.0
    %3523 = vmatprep.subr.mxu0 0.0
    %3524 = vmatpush1.msra.mxu0 0.0
    %3525 = vmatprep.subr.mxu0 0.0
    %3526 = vmatpush1.msra.mxu0 0.0
    %3527 = vmatprep.subr.mxu0 0.0
    %3528 = vmatpush1.msra.mxu0 0.0
    %3529 = vmatprep.subr.mxu0 0.0
    %3530 = vmatpush1.msra.mxu0 0.0
    %3531 = vmatprep.subr.mxu0 0.0
    %3532 = vmatpush1.msra.mxu0 0.0
    %3533 = vmatprep.subr.mxu0 0.0
    %3534 = vmatpush1.msra.mxu0 0.0
    %3535 = vmatprep.subr.mxu0 0.0
    %3536 = vmatpush1.msra.mxu0 0.0
    %3537 = vmatprep.subr.mxu0 0.0
    %3538 = vmatpush1.msra.mxu0 0.0
    %3539 = vmatprep.subr.mxu0 0.0
    %3540 = vmatpush1.msra.mxu0 0.0
    %3541 = vmatprep.subr.mxu0 0.0
    %3542 = vmatpush1.msra.mxu0 0.0
    %3543 = vmatprep.subr.mxu0 0.0
    %3544 = vmatpush1.msra.mxu0 0.0
    %3545 = vmatprep.subr.mxu0 0.0
    %3546 = vmatpush1.msra.mxu0 0.0
    %3547 = vmatprep.subr.mxu0 0.0
    %3548 = vmatpush1.msra.mxu0 0.0
    %3549 = vmatprep.mubr.f32.mxu0 0.0
    %v3550 = vand.u32 %v1986, 4294901760
    %3551 = vmatmul.mubr.f32.gmra.mrb[0].mxu0 %v3550
    %v3552 = vpop.f32.mrb[0].mxu0
    %v3553 = vadd.f32 %v3186, %v3552
    %v3554 = vpop.f32.mrb[0].mxu0
    %3555 = vmatprep.mubr.f32.mxu0 0.0
    %v3556 = vand.u32 %v1987, 4294901760
    %3557 = vmatmul.mubr.f32.gmra.mrb[0].mxu0 %v3556
    %v3558 = vpop.f32.mrb[0].mxu0
    %v3559 = vadd.f32 %v3194, %v3558
    %v3560 = vpop.f32.mrb[0].mxu0
    %3561 = vmatprep.mubr.f32.mxu0 0.0
    %v3562 = vand.u32 %v1988, 4294901760
    %3563 = vmatmul.mubr.f32.gmra.mrb[0].mxu0 %v3562
    %v3564 = vpop.f32.mrb[0].mxu0
    %v3565 = vadd.f32 %v3202, %v3564
    %v3566 = vpop.f32.mrb[0].mxu0
    %3567 = vmatprep.mubr.f32.mxu0 0.0
    %v3568 = vand.u32 %v1989, 4294901760
    %3569 = vmatmul.mubr.f32.gmra.mrb[0].mxu0 %v3568
    %v3570 = vpop.f32.mrb[0].mxu0
    %v3571 = vadd.f32 %v3210, %v3570
    %v3572 = vpop.f32.mrb[0].mxu0
    %3573 = vmatprep.mubr.f32.mxu0 0.0
    %v3574 = vand.u32 %v1990, 4294901760
    %3575 = vmatmul.mubr.f32.gmra.mrb[0].mxu0 %v3574
    %v3576 = vpop.f32.mrb[0].mxu0
    %v3577 = vadd.f32 %v3218, %v3576
    %v3578 = vpop.f32.mrb[0].mxu0
    %3579 = vmatprep.mubr.f32.mxu0 0.0
    %v3580 = vand.u32 %v1991, 4294901760
    %3581 = vmatmul.mubr.f32.gmra.mrb[0].mxu0 %v3580
    %v3582 = vpop.f32.mrb[0].mxu0
    %v3583 = vadd.f32 %v3226, %v3582
    %v3584 = vpop.f32.mrb[0].mxu0
    %3585 = vmatprep.mubr.f32.mxu0 0.0
    %v3586 = vand.u32 %v1992, 4294901760
    %3587 = vmatmul.mubr.f32.gmra.mrb[0].mxu0 %v3586
    %v3588 = vpop.f32.mrb[0].mxu0
    %v3589 = vadd.f32 %v3234, %v3588
    %v3590 = vpop.f32.mrb[0].mxu0
    %3591 = vmatprep.mubr.f32.mxu0 0.0
    %v3592 = vand.u32 %v1993, 4294901760
    %3593 = vmatmul.mubr.f32.gmra.mrb[0].mxu0 %v3592
    %v3594 = vpop.f32.mrb[0].mxu0
    %v3595 = vadd.f32 %v3242, %v3594
    %v3596 = vpop.f32.mrb[0].mxu0
    %3597 = vmatprep.mubr.f32.mxu0 0.0
    %v3598 = vand.u32 %v1994, 4294901760
    %3599 = vmatmul.mubr.f32.gmra.mrb[0].mxu0 %v3598
    %v3600 = vpop.f32.mrb[0].mxu0
    %v3601 = vadd.f32 %v3250, %v3600
    %v3602 = vpop.f32.mrb[0].mxu0
    %3603 = vmatprep.mubr.f32.mxu0 0.0
    %v3604 = vand.u32 %v1995, 4294901760
    %3605 = vmatmul.mubr.f32.gmra.mrb[0].mxu0 %v3604
    %v3606 = vpop.f32.mrb[0].mxu0
    %v3607 = vadd.f32 %v3258, %v3606
    %v3608 = vpop.f32.mrb[0].mxu0
    %3609 = vmatprep.mubr.f32.mxu0 0.0
    %v3610 = vand.u32 %v1996, 4294901760
    %3611 = vmatmul.mubr.f32.gmra.mrb[0].mxu0 %v3610
    %v3612 = vpop.f32.mrb[0].mxu0
    %v3613 = vadd.f32 %v3266, %v3612
    %v3614 = vpop.f32.mrb[0].mxu0
    %3615 = vmatprep.mubr.f32.mxu0 0.0
    %v3616 = vand.u32 %v1997, 4294901760
    %3617 = vmatmul.mubr.f32.gmra.mrb[0].mxu0 %v3616
    %v3618 = vpop.f32.mrb[0].mxu0
    %v3619 = vadd.f32 %v3274, %v3618
    %v3620 = vpop.f32.mrb[0].mxu0
    %3621 = vmatprep.mubr.f32.mxu0 0.0
    %v3622 = vand.u32 %v1998, 4294901760
    %3623 = vmatmul.mubr.f32.gmra.mrb[0].mxu0 %v3622
    %v3624 = vpop.f32.mrb[0].mxu0
    %v3625 = vadd.f32 %v3282, %v3624
    %v3626 = vpop.f32.mrb[0].mxu0
    %3627 = vmatprep.mubr.f32.mxu0 0.0
    %v3628 = vand.u32 %v1999, 4294901760
    %3629 = vmatmul.mubr.f32.gmra.mrb[0].mxu0 %v3628
    %v3630 = vpop.f32.mrb[0].mxu0
    %v3631 = vadd.f32 %v3290, %v3630
    %v3632 = vpop.f32.mrb[0].mxu0
    %3633 = vmatprep.mubr.f32.mxu0 0.0
    %v3634 = vand.u32 %v2000, 4294901760
    %3635 = vmatmul.mubr.f32.gmra.mrb[0].mxu0 %v3634
    %v3636 = vpop.f32.mrb[0].mxu0
    %v3637 = vadd.f32 %v3298, %v3636
    %v3638 = vpop.f32.mrb[0].mxu0
    %3639 = vmatprep.mubr.f32.mxu0 0.0
    %v3640 = vand.u32 %v2001, 4294901760
    %3641 = vmatmul.mubr.f32.gmra.mrb[0].mxu0 %v3640
    %v3642 = vpop.f32.mrb[0].mxu0
    %v3643 = vadd.f32 %v3306, %v3642
    %v3644 = vpop.f32.mrb[0].mxu0
    %3645 = vmatprep.mubr.f32.mxu0 0.0
    %v3646 = vand.u32 %v2002, 4294901760
    %3647 = vmatmul.mubr.f32.gmra.mrb[0].mxu0 %v3646
    %v3648 = vpop.f32.mrb[0].mxu0
    %v3649 = vadd.f32 %v3314, %v3648
    %v3650 = vpop.f32.mrb[0].mxu0
    %3651 = vmatprep.mubr.f32.mxu0 0.0
    %v3652 = vand.u32 %v2003, 4294901760
    %3653 = vmatmul.mubr.f32.gmra.mrb[0].mxu0 %v3652
    %v3654 = vpop.f32.mrb[0].mxu0
    %v3655 = vadd.f32 %v3322, %v3654
    %v3656 = vpop.f32.mrb[0].mxu0
    %3657 = vmatprep.mubr.f32.mxu0 0.0
    %v3658 = vand.u32 %v2004, 4294901760
    %3659 = vmatmul.mubr.f32.gmra.mrb[0].mxu0 %v3658
    %v3660 = vpop.f32.mrb[0].mxu0
    %v3661 = vadd.f32 %v3330, %v3660
    %v3662 = vpop.f32.mrb[0].mxu0
    %3663 = vmatprep.mubr.f32.mxu0 0.0
    %v3664 = vand.u32 %v2005, 4294901760
    %3665 = vmatmul.mubr.f32.gmra.mrb[0].mxu0 %v3664
    %v3666 = vpop.f32.mrb[0].mxu0
    %v3667 = vadd.f32 %v3338, %v3666
    %v3668 = vpop.f32.mrb[0].mxu0
    %3669 = vmatprep.mubr.f32.mxu0 0.0
    %v3670 = vand.u32 %v2006, 4294901760
    %3671 = vmatmul.mubr.f32.gmra.mrb[0].mxu0 %v3670
    %v3672 = vpop.f32.mrb[0].mxu0
    %v3673 = vadd.f32 %v3346, %v3672
    %v3674 = vpop.f32.mrb[0].mxu0
    %3675 = vmatprep.mubr.f32.mxu0 0.0
    %v3676 = vand.u32 %v2007, 4294901760
    %3677 = vmatmul.mubr.f32.gmra.mrb[0].mxu0 %v3676
    %v3678 = vpop.f32.mrb[0].mxu0
    %v3679 = vadd.f32 %v3354, %v3678
    %v3680 = vpop.f32.mrb[0].mxu0
    %3681 = vmatprep.mubr.f32.mxu0 0.0
    %v3682 = vand.u32 %v2008, 4294901760
    %3683 = vmatmul.mubr.f32.gmra.mrb[0].mxu0 %v3682
    %v3684 = vpop.f32.mrb[0].mxu0
    %v3685 = vadd.f32 %v3362, %v3684
    %v3686 = vpop.f32.mrb[0].mxu0
    %3687 = vmatprep.mubr.f32.mxu0 0.0
    %v3688 = vand.u32 %v2009, 4294901760
    %3689 = vmatmul.mubr.f32.gmra.mrb[0].mxu0 %v3688
    %v3690 = vpop.f32.mrb[0].mxu0
    %v3691 = vadd.f32 %v3370, %v3690
    %v3692 = vpop.f32.mrb[0].mxu0
    %3693 = vmatprep.mubr.f32.mxu0 0.0
    %v3694 = vand.u32 %v2010, 4294901760
    %3695 = vmatmul.mubr.f32.gmra.mrb[0].mxu0 %v3694
    %v3696 = vpop.f32.mrb[0].mxu0
    %v3697 = vadd.f32 %v3378, %v3696
    %v3698 = vpop.f32.mrb[0].mxu0
    %3699 = vmatprep.mubr.f32.mxu0 0.0
    %v3700 = vand.u32 %v2011, 4294901760
    %3701 = vmatmul.mubr.f32.gmra.mrb[0].mxu0 %v3700
    %v3702 = vpop.f32.mrb[0].mxu0
    %v3703 = vadd.f32 %v3386, %v3702
    %v3704 = vpop.f32.mrb[0].mxu0
    %3705 = vmatprep.mubr.f32.mxu0 0.0
    %v3706 = vand.u32 %v2012, 4294901760
    %3707 = vmatmul.mubr.f32.gmra.mrb[0].mxu0 %v3706
    %v3708 = vpop.f32.mrb[0].mxu0
    %v3709 = vadd.f32 %v3394, %v3708
    %v3710 = vpop.f32.mrb[0].mxu0
    %3711 = vmatprep.mubr.f32.mxu0 0.0
    %v3712 = vand.u32 %v2013, 4294901760
    %3713 = vmatmul.mubr.f32.gmra.mrb[0].mxu0 %v3712
    %v3714 = vpop.f32.mrb[0].mxu0
    %v3715 = vadd.f32 %v3402, %v3714
    %v3716 = vpop.f32.mrb[0].mxu0
    %3717 = vmatprep.mubr.f32.mxu0 0.0
    %v3718 = vand.u32 %v2014, 4294901760
    %3719 = vmatmul.mubr.f32.gmra.mrb[0].mxu0 %v3718
    %v3720 = vpop.f32.mrb[0].mxu0
    %v3721 = vadd.f32 %v3410, %v3720
    %v3722 = vpop.f32.mrb[0].mxu0
    %3723 = vmatprep.mubr.f32.mxu0 0.0
    %v3724 = vand.u32 %v2015, 4294901760
    %3725 = vmatmul.mubr.f32.gmra.mrb[0].mxu0 %v3724
    %v3726 = vpop.f32.mrb[0].mxu0
    %v3727 = vadd.f32 %v3418, %v3726
    %v3728 = vpop.f32.mrb[0].mxu0
    %3729 = vmatprep.mubr.f32.mxu0 0.0
    %v3730 = vand.u32 %v2016, 4294901760
    %3731 = vmatmul.mubr.f32.gmra.mrb[0].mxu0 %v3730
    %v3732 = vpop.f32.mrb[0].mxu0
    %v3733 = vadd.f32 %v3426, %v3732
    %v3734 = vpop.f32.mrb[0].mxu0
    %3735 = vmatprep.mubr.f32.mxu0 0.0
    %v3736 = vand.u32 %v2017, 4294901760
    %3737 = vmatmul.mubr.f32.gmra.mrb[0].mxu0 %v3736
    %v3738 = vpop.f32.mrb[0].mxu0
    %v3739 = vadd.f32 %v3434, %v3738
    %v3740 = vpop.f32.mrb[0].mxu0
    %3741 = vdwg.mxu0
    %3742 = vmatprep.subr.mxu0 0.0
    %v3743 = vand.u32 %v2018, 4294901760
    %3744 = vmatpush1.msra.mxu0 %v3743
    %3745 = vmatprep.subr.mxu0 0.0
    %v3746 = vand.u32 %v2019, 4294901760
    %3747 = vmatpush1.msra.mxu0 %v3746
    %3748 = vmatprep.subr.mxu0 0.0
    %v3749 = vand.u32 %v2020, 4294901760
    %3750 = vmatpush1.msra.mxu0 %v3749
    %3751 = vmatprep.subr.mxu0 0.0
    %v3752 = vand.u32 %v2021, 4294901760
    %3753 = vmatpush1.msra.mxu0 %v3752
    %3754 = vmatprep.subr.mxu0 0.0
    %v3755 = vand.u32 %v2022, 4294901760
    %3756 = vmatpush1.msra.mxu0 %v3755
    %3757 = vmatprep.subr.mxu0 0.0
    %v3758 = vand.u32 %v2023, 4294901760
    %3759 = vmatpush1.msra.mxu0 %v3758
    %3760 = vmatprep.subr.mxu0 0.0
    %v3761 = vand.u32 %v2024, 4294901760
    %3762 = vmatpush1.msra.mxu0 %v3761
    %3763 = vmatprep.subr.mxu0 0.0
    %v3764 = vand.u32 %v2025, 4294901760
    %3765 = vmatpush1.msra.mxu0 %v3764
    %3766 = vmatprep.subr.mxu0 0.0
    %v3767 = vand.u32 %v2026, 4294901760
    %3768 = vmatpush1.msra.mxu0 %v3767
    %3769 = vmatprep.subr.mxu0 0.0
    %v3770 = vand.u32 %v2027, 4294901760
    %3771 = vmatpush1.msra.mxu0 %v3770
    %3772 = vmatprep.subr.mxu0 0.0
    %v3773 = vand.u32 %v2028, 4294901760
    %3774 = vmatpush1.msra.mxu0 %v3773
    %3775 = vmatprep.subr.mxu0 0.0
    %v3776 = vand.u32 %v2029, 4294901760
    %3777 = vmatpush1.msra.mxu0 %v3776
    %3778 = vmatprep.subr.mxu0 0.0
    %v3779 = vand.u32 %v2030, 4294901760
    %3780 = vmatpush1.msra.mxu0 %v3779
    %3781 = vmatprep.subr.mxu0 0.0
    %v3782 = vand.u32 %v2031, 4294901760
    %3783 = vmatpush1.msra.mxu0 %v3782
    %3784 = vmatprep.subr.mxu0 0.0
    %v3785 = vand.u32 %v2032, 4294901760
    %3786 = vmatpush1.msra.mxu0 %v3785
    %3787 = vmatprep.subr.mxu0 0.0
    %v3788 = vand.u32 %v2033, 4294901760
    %3789 = vmatpush1.msra.mxu0 %v3788
    %3790 = vmatprep.subr.mxu0 0.0
    %3791 = vmatpush1.msra.mxu0 0.0
    %3792 = vmatprep.subr.mxu0 0.0
    %3793 = vmatpush1.msra.mxu0 0.0
    %3794 = vmatprep.subr.mxu0 0.0
    %3795 = vmatpush1.msra.mxu0 0.0
    %3796 = vmatprep.subr.mxu0 0.0
    %3797 = vmatpush1.msra.mxu0 0.0
    %3798 = vmatprep.subr.mxu0 0.0
    %3799 = vmatpush1.msra.mxu0 0.0
    %3800 = vmatprep.subr.mxu0 0.0
    %3801 = vmatpush1.msra.mxu0 0.0
    %3802 = vmatprep.subr.mxu0 0.0
    %3803 = vmatpush1.msra.mxu0 0.0
    %3804 = vmatprep.subr.mxu0 0.0
    %3805 = vmatpush1.msra.mxu0 0.0
    %3806 = vmatprep.subr.mxu0 0.0
    %3807 = vmatpush1.msra.mxu0 0.0
    %3808 = vmatprep.subr.mxu0 0.0
    %3809 = vmatpush1.msra.mxu0 0.0
    %3810 = vmatprep.subr.mxu0 0.0
    %3811 = vmatpush1.msra.mxu0 0.0
    %3812 = vmatprep.subr.mxu0 0.0
    %3813 = vmatpush1.msra.mxu0 0.0
    %3814 = vmatprep.subr.mxu0 0.0
    %3815 = vmatpush1.msra.mxu0 0.0
    %3816 = vmatprep.subr.mxu0 0.0
    %3817 = vmatpush1.msra.mxu0 0.0
    %3818 = vmatprep.subr.mxu0 0.0
    %3819 = vmatpush1.msra.mxu0 0.0
    %3820 = vmatprep.subr.mxu0 0.0
    %3821 = vmatpush1.msra.mxu0 0.0
    %3822 = vmatprep.mubr.f32.mxu0 0.0
    %v3823 = vand.u32 %v1986, 4294901760
    %3824 = vmatmul.mubr.f32.gmra.mrb[0].mxu0 %v3823
    %v3825 = vpop.f32.mrb[0].mxu0
    %v3826 = vadd.f32 %v3553, %v3825
    %v3827 = vpop.f32.mrb[0].mxu0
    %3828 = vmatprep.mubr.f32.mxu0 0.0
    %v3829 = vand.u32 %v1987, 4294901760
    %3830 = vmatmul.mubr.f32.gmra.mrb[0].mxu0 %v3829
    %v3831 = vpop.f32.mrb[0].mxu0
    %v3832 = vadd.f32 %v3559, %v3831
    %v3833 = vpop.f32.mrb[0].mxu0
    %3834 = vmatprep.mubr.f32.mxu0 0.0
    %v3835 = vand.u32 %v1988, 4294901760
    %3836 = vmatmul.mubr.f32.gmra.mrb[0].mxu0 %v3835
    %v3837 = vpop.f32.mrb[0].mxu0
    %v3838 = vadd.f32 %v3565, %v3837
    %v3839 = vpop.f32.mrb[0].mxu0
    %3840 = vmatprep.mubr.f32.mxu0 0.0
    %v3841 = vand.u32 %v1989, 4294901760
    %3842 = vmatmul.mubr.f32.gmra.mrb[0].mxu0 %v3841
    %v3843 = vpop.f32.mrb[0].mxu0
    %v3844 = vadd.f32 %v3571, %v3843
    %v3845 = vpop.f32.mrb[0].mxu0
    %3846 = vmatprep.mubr.f32.mxu0 0.0
    %v3847 = vand.u32 %v1990, 4294901760
    %3848 = vmatmul.mubr.f32.gmra.mrb[0].mxu0 %v3847
    %v3849 = vpop.f32.mrb[0].mxu0
    %v3850 = vadd.f32 %v3577, %v3849
    %v3851 = vpop.f32.mrb[0].mxu0
    %3852 = vmatprep.mubr.f32.mxu0 0.0
    %v3853 = vand.u32 %v1991, 4294901760
    %3854 = vmatmul.mubr.f32.gmra.mrb[0].mxu0 %v3853
    %v3855 = vpop.f32.mrb[0].mxu0
    %v3856 = vadd.f32 %v3583, %v3855
    %v3857 = vpop.f32.mrb[0].mxu0
    %3858 = vmatprep.mubr.f32.mxu0 0.0
    %v3859 = vand.u32 %v1992, 4294901760
    %3860 = vmatmul.mubr.f32.gmra.mrb[0].mxu0 %v3859
    %v3861 = vpop.f32.mrb[0].mxu0
    %v3862 = vadd.f32 %v3589, %v3861
    %v3863 = vpop.f32.mrb[0].mxu0
    %3864 = vmatprep.mubr.f32.mxu0 0.0
    %v3865 = vand.u32 %v1993, 4294901760
    %3866 = vmatmul.mubr.f32.gmra.mrb[0].mxu0 %v3865
    %v3867 = vpop.f32.mrb[0].mxu0
    %v3868 = vadd.f32 %v3595, %v3867
    %v3869 = vpop.f32.mrb[0].mxu0
    %3870 = vmatprep.mubr.f32.mxu0 0.0
    %v3871 = vand.u32 %v1994, 4294901760
    %3872 = vmatmul.mubr.f32.gmra.mrb[0].mxu0 %v3871
    %v3873 = vpop.f32.mrb[0].mxu0
    %v3874 = vadd.f32 %v3601, %v3873
    %v3875 = vpop.f32.mrb[0].mxu0
    %3876 = vmatprep.mubr.f32.mxu0 0.0
    %v3877 = vand.u32 %v1995, 4294901760
    %3878 = vmatmul.mubr.f32.gmra.mrb[0].mxu0 %v3877
    %v3879 = vpop.f32.mrb[0].mxu0
    %v3880 = vadd.f32 %v3607, %v3879
    %v3881 = vpop.f32.mrb[0].mxu0
    %3882 = vmatprep.mubr.f32.mxu0 0.0
    %v3883 = vand.u32 %v1996, 4294901760
    %3884 = vmatmul.mubr.f32.gmra.mrb[0].mxu0 %v3883
    %v3885 = vpop.f32.mrb[0].mxu0
    %v3886 = vadd.f32 %v3613, %v3885
    %v3887 = vpop.f32.mrb[0].mxu0
    %3888 = vmatprep.mubr.f32.mxu0 0.0
    %v3889 = vand.u32 %v1997, 4294901760
    %3890 = vmatmul.mubr.f32.gmra.mrb[0].mxu0 %v3889
    %v3891 = vpop.f32.mrb[0].mxu0
    %v3892 = vadd.f32 %v3619, %v3891
    %v3893 = vpop.f32.mrb[0].mxu0
    %3894 = vmatprep.mubr.f32.mxu0 0.0
    %v3895 = vand.u32 %v1998, 4294901760
    %3896 = vmatmul.mubr.f32.gmra.mrb[0].mxu0 %v3895
    %v3897 = vpop.f32.mrb[0].mxu0
    %v3898 = vadd.f32 %v3625, %v3897
    %v3899 = vpop.f32.mrb[0].mxu0
    %3900 = vmatprep.mubr.f32.mxu0 0.0
    %v3901 = vand.u32 %v1999, 4294901760
    %3902 = vmatmul.mubr.f32.gmra.mrb[0].mxu0 %v3901
    %v3903 = vpop.f32.mrb[0].mxu0
    %v3904 = vadd.f32 %v3631, %v3903
    %v3905 = vpop.f32.mrb[0].mxu0
    %3906 = vmatprep.mubr.f32.mxu0 0.0
    %v3907 = vand.u32 %v2000, 4294901760
    %3908 = vmatmul.mubr.f32.gmra.mrb[0].mxu0 %v3907
    %v3909 = vpop.f32.mrb[0].mxu0
    %v3910 = vadd.f32 %v3637, %v3909
    %v3911 = vpop.f32.mrb[0].mxu0
    %3912 = vmatprep.mubr.f32.mxu0 0.0
    %v3913 = vand.u32 %v2001, 4294901760
    %3914 = vmatmul.mubr.f32.gmra.mrb[0].mxu0 %v3913
    %v3915 = vpop.f32.mrb[0].mxu0
    %v3916 = vadd.f32 %v3643, %v3915
    %v3917 = vpop.f32.mrb[0].mxu0
    %3918 = vmatprep.mubr.f32.mxu0 0.0
    %v3919 = vand.u32 %v2002, 4294901760
    %3920 = vmatmul.mubr.f32.gmra.mrb[0].mxu0 %v3919
    %v3921 = vpop.f32.mrb[0].mxu0
    %v3922 = vadd.f32 %v3649, %v3921
    %v3923 = vpop.f32.mrb[0].mxu0
    %3924 = vmatprep.mubr.f32.mxu0 0.0
    %v3925 = vand.u32 %v2003, 4294901760
    %3926 = vmatmul.mubr.f32.gmra.mrb[0].mxu0 %v3925
    %v3927 = vpop.f32.mrb[0].mxu0
    %v3928 = vadd.f32 %v3655, %v3927
    %v3929 = vpop.f32.mrb[0].mxu0
    %3930 = vmatprep.mubr.f32.mxu0 0.0
    %v3931 = vand.u32 %v2004, 4294901760
    %3932 = vmatmul.mubr.f32.gmra.mrb[0].mxu0 %v3931
    %v3933 = vpop.f32.mrb[0].mxu0
    %v3934 = vadd.f32 %v3661, %v3933
    %v3935 = vpop.f32.mrb[0].mxu0
    %3936 = vmatprep.mubr.f32.mxu0 0.0
    %v3937 = vand.u32 %v2005, 4294901760
    %3938 = vmatmul.mubr.f32.gmra.mrb[0].mxu0 %v3937
    %v3939 = vpop.f32.mrb[0].mxu0
    %v3940 = vadd.f32 %v3667, %v3939
    %v3941 = vpop.f32.mrb[0].mxu0
    %3942 = vmatprep.mubr.f32.mxu0 0.0
    %v3943 = vand.u32 %v2006, 4294901760
    %3944 = vmatmul.mubr.f32.gmra.mrb[0].mxu0 %v3943
    %v3945 = vpop.f32.mrb[0].mxu0
    %v3946 = vadd.f32 %v3673, %v3945
    %v3947 = vpop.f32.mrb[0].mxu0
    %3948 = vmatprep.mubr.f32.mxu0 0.0
    %v3949 = vand.u32 %v2007, 4294901760
    %3950 = vmatmul.mubr.f32.gmra.mrb[0].mxu0 %v3949
    %v3951 = vpop.f32.mrb[0].mxu0
    %v3952 = vadd.f32 %v3679, %v3951
    %v3953 = vpop.f32.mrb[0].mxu0
    %3954 = vmatprep.mubr.f32.mxu0 0.0
    %v3955 = vand.u32 %v2008, 4294901760
    %3956 = vmatmul.mubr.f32.gmra.mrb[0].mxu0 %v3955
    %v3957 = vpop.f32.mrb[0].mxu0
    %v3958 = vadd.f32 %v3685, %v3957
    %v3959 = vpop.f32.mrb[0].mxu0
    %3960 = vmatprep.mubr.f32.mxu0 0.0
    %v3961 = vand.u32 %v2009, 4294901760
    %3962 = vmatmul.mubr.f32.gmra.mrb[0].mxu0 %v3961
    %v3963 = vpop.f32.mrb[0].mxu0
    %v3964 = vadd.f32 %v3691, %v3963
    %v3965 = vpop.f32.mrb[0].mxu0
    %3966 = vmatprep.mubr.f32.mxu0 0.0
    %v3967 = vand.u32 %v2010, 4294901760
    %3968 = vmatmul.mubr.f32.gmra.mrb[0].mxu0 %v3967
    %v3969 = vpop.f32.mrb[0].mxu0
    %v3970 = vadd.f32 %v3697, %v3969
    %v3971 = vpop.f32.mrb[0].mxu0
    %3972 = vmatprep.mubr.f32.mxu0 0.0
    %v3973 = vand.u32 %v2011, 4294901760
    %3974 = vmatmul.mubr.f32.gmra.mrb[0].mxu0 %v3973
    %v3975 = vpop.f32.mrb[0].mxu0
    %v3976 = vadd.f32 %v3703, %v3975
    %v3977 = vpop.f32.mrb[0].mxu0
    %3978 = vmatprep.mubr.f32.mxu0 0.0
    %v3979 = vand.u32 %v2012, 4294901760
    %3980 = vmatmul.mubr.f32.gmra.mrb[0].mxu0 %v3979
    %v3981 = vpop.f32.mrb[0].mxu0
    %v3982 = vadd.f32 %v3709, %v3981
    %v3983 = vpop.f32.mrb[0].mxu0
    %3984 = vmatprep.mubr.f32.mxu0 0.0
    %v3985 = vand.u32 %v2013, 4294901760
    %3986 = vmatmul.mubr.f32.gmra.mrb[0].mxu0 %v3985
    %v3987 = vpop.f32.mrb[0].mxu0
    %v3988 = vadd.f32 %v3715, %v3987
    %v3989 = vpop.f32.mrb[0].mxu0
    %3990 = vmatprep.mubr.f32.mxu0 0.0
    %v3991 = vand.u32 %v2014, 4294901760
    %3992 = vmatmul.mubr.f32.gmra.mrb[0].mxu0 %v3991
    %v3993 = vpop.f32.mrb[0].mxu0
    %v3994 = vadd.f32 %v3721, %v3993
    %v3995 = vpop.f32.mrb[0].mxu0
    %3996 = vmatprep.mubr.f32.mxu0 0.0
    %v3997 = vand.u32 %v2015, 4294901760
    %3998 = vmatmul.mubr.f32.gmra.mrb[0].mxu0 %v3997
    %v3999 = vpop.f32.mrb[0].mxu0
    %v4000 = vadd.f32 %v3727, %v3999
    %v4001 = vpop.f32.mrb[0].mxu0
    %4002 = vmatprep.mubr.f32.mxu0 0.0
    %v4003 = vand.u32 %v2016, 4294901760
    %4004 = vmatmul.mubr.f32.gmra.mrb[0].mxu0 %v4003
    %v4005 = vpop.f32.mrb[0].mxu0
    %v4006 = vadd.f32 %v3733, %v4005
    %v4007 = vpop.f32.mrb[0].mxu0
    %4008 = vmatprep.mubr.f32.mxu0 0.0
    %v4009 = vand.u32 %v2017, 4294901760
    %4010 = vmatmul.mubr.f32.gmra.mrb[0].mxu0 %v4009
    %v4011 = vpop.f32.mrb[0].mxu0
    %v4012 = vadd.f32 %v3739, %v4011
    %v4013 = vpop.f32.mrb[0].mxu0
    %4014 = vdwg.mxu0
    %v4015 = vmax.f32 %v3826, 0.0
    %v4016 = vmax.f32 %v3832, 0.0
    %v4017 = vmax.f32 %v3838, 0.0
    %v4018 = vmax.f32 %v3844, 0.0
    %v4019 = vmax.f32 %v3850, 0.0
    %v4020 = vmax.f32 %v3856, 0.0
    %v4021 = vmax.f32 %v3862, 0.0
    %v4022 = vmax.f32 %v3868, 0.0
    %v4023 = vmax.f32 %v3874, 0.0
    %v4024 = vmax.f32 %v3880, 0.0
    %v4025 = vmax.f32 %v3886, 0.0
    %v4026 = vmax.f32 %v3892, 0.0
    %v4027 = vmax.f32 %v3898, 0.0
    %v4028 = vmax.f32 %v3904, 0.0
    %v4029 = vmax.f32 %v3910, 0.0
    %v4030 = vmax.f32 %v3916, 0.0
    %v4031 = vmax.f32 %v3922, 0.0
    %v4032 = vmax.f32 %v3928, 0.0
    %v4033 = vmax.f32 %v3934, 0.0
    %v4034 = vmax.f32 %v3940, 0.0
    %v4035 = vmax.f32 %v3946, 0.0
    %v4036 = vmax.f32 %v3952, 0.0
    %v4037 = vmax.f32 %v3958, 0.0
    %v4038 = vmax.f32 %v3964, 0.0
    %v4039 = vmax.f32 %v3970, 0.0
    %v4040 = vmax.f32 %v3976, 0.0
    %v4041 = vmax.f32 %v3982, 0.0
    %v4042 = vmax.f32 %v3988, 0.0
    %v4043 = vmax.f32 %v3994, 0.0
    %v4044 = vmax.f32 %v4000, 0.0
    %v4045 = vmax.f32 %v4006, 0.0
    %v4046 = vmax.f32 %v4012, 0.0
    %v4047 = vld [vmem:[%s5] sm:$0x1]
    %v4049 = vlaneseq
    %v4050 = vshrl.u32 %v4049, 7
    %v4051 = vsub.s32 0, %v4050
    %v4052 = vrot.slane %v4047, %v4051
    %v4054 = vmul.f32 %v4015, %v4052
    %v4055 = vmul.f32 %v4016, %v4052
    %v4056 = vmul.f32 %v4017, %v4052
    %v4057 = vmul.f32 %v4018, %v4052
    %v4058 = vmul.f32 %v4019, %v4052
    %v4059 = vmul.f32 %v4020, %v4052
    %v4060 = vmul.f32 %v4021, %v4052
    %v4061 = vmul.f32 %v4022, %v4052
    %v4062 = vmul.f32 %v4023, %v4052
    %v4063 = vmul.f32 %v4024, %v4052
    %v4064 = vmul.f32 %v4025, %v4052
    %v4065 = vmul.f32 %v4026, %v4052
    %v4066 = vmul.f32 %v4027, %v4052
    %v4067 = vmul.f32 %v4028, %v4052
    %v4068 = vmul.f32 %v4029, %v4052
    %v4069 = vmul.f32 %v4030, %v4052
    %v4070 = vmul.f32 %v4031, %v4052
    %v4071 = vmul.f32 %v4032, %v4052
    %v4072 = vmul.f32 %v4033, %v4052
    %v4073 = vmul.f32 %v4034, %v4052
    %v4074 = vmul.f32 %v4035, %v4052
    %v4075 = vmul.f32 %v4036, %v4052
    %v4076 = vmul.f32 %v4037, %v4052
    %v4077 = vmul.f32 %v4038, %v4052
    %v4078 = vmul.f32 %v4039, %v4052
    %v4079 = vmul.f32 %v4040, %v4052
    %v4080 = vmul.f32 %v4041, %v4052
    %v4081 = vmul.f32 %v4042, %v4052
    %v4082 = vmul.f32 %v4043, %v4052
    %v4083 = vmul.f32 %v4044, %v4052
    %v4084 = vmul.f32 %v4045, %v4052
    %v4085 = vmul.f32 %v4046, %v4052
    %4086 = vadd.xlane.f32.xlu0 %v4054
    %v4087 = vpop.xlane.xlu0 %4086
    %4088 = vadd.xlane.f32.xlu0 %v4055
    %v4089 = vpop.xlane.xlu0 %4088
    %4090 = vadd.xlane.f32.xlu0 %v4056
    %v4091 = vpop.xlane.xlu0 %4090
    %4092 = vadd.xlane.f32.xlu0 %v4057
    %v4093 = vpop.xlane.xlu0 %4092
    %4094 = vadd.xlane.f32.xlu0 %v4058
    %v4095 = vpop.xlane.xlu0 %4094
    %4096 = vadd.xlane.f32.xlu0 %v4059
    %v4097 = vpop.xlane.xlu0 %4096
    %4098 = vadd.xlane.f32.xlu0 %v4060
    %v4099 = vpop.xlane.xlu0 %4098
    %4100 = vadd.xlane.f32.xlu0 %v4061
    %v4101 = vpop.xlane.xlu0 %4100
    %4102 = vadd.xlane.f32.xlu0 %v4062
    %v4103 = vpop.xlane.xlu0 %4102
    %4104 = vadd.xlane.f32.xlu0 %v4063
    %v4105 = vpop.xlane.xlu0 %4104
    %4106 = vadd.xlane.f32.xlu0 %v4064
    %v4107 = vpop.xlane.xlu0 %4106
    %4108 = vadd.xlane.f32.xlu0 %v4065
    %v4109 = vpop.xlane.xlu0 %4108
    %4110 = vadd.xlane.f32.xlu0 %v4066
    %v4111 = vpop.xlane.xlu0 %4110
    %4112 = vadd.xlane.f32.xlu0 %v4067
    %v4113 = vpop.xlane.xlu0 %4112
    %4114 = vadd.xlane.f32.xlu0 %v4068
    %v4115 = vpop.xlane.xlu0 %4114
    %4116 = vadd.xlane.f32.xlu0 %v4069
    %v4117 = vpop.xlane.xlu0 %4116
    %4118 = vadd.xlane.f32.xlu0 %v4070
    %v4119 = vpop.xlane.xlu0 %4118
    %4120 = vadd.xlane.f32.xlu0 %v4071
    %v4121 = vpop.xlane.xlu0 %4120
    %4122 = vadd.xlane.f32.xlu0 %v4072
    %v4123 = vpop.xlane.xlu0 %4122
    %4124 = vadd.xlane.f32.xlu0 %v4073
    %v4125 = vpop.xlane.xlu0 %4124
    %4126 = vadd.xlane.f32.xlu0 %v4074
    %v4127 = vpop.xlane.xlu0 %4126
    %4128 = vadd.xlane.f32.xlu0 %v4075
    %v4129 = vpop.xlane.xlu0 %4128
    %4130 = vadd.xlane.f32.xlu0 %v4076
    %v4131 = vpop.xlane.xlu0 %4130
    %4132 = vadd.xlane.f32.xlu0 %v4077
    %v4133 = vpop.xlane.xlu0 %4132
    %4134 = vadd.xlane.f32.xlu0 %v4078
    %v4135 = vpop.xlane.xlu0 %4134
    %4136 = vadd.xlane.f32.xlu0 %v4079
    %v4137 = vpop.xlane.xlu0 %4136
    %4138 = vadd.xlane.f32.xlu0 %v4080
    %v4139 = vpop.xlane.xlu0 %4138
    %4140 = vadd.xlane.f32.xlu0 %v4081
    %v4141 = vpop.xlane.xlu0 %4140
    %4142 = vadd.xlane.f32.xlu0 %v4082
    %v4143 = vpop.xlane.xlu0 %4142
    %4144 = vadd.xlane.f32.xlu0 %v4083
    %v4145 = vpop.xlane.xlu0 %4144
    %4146 = vadd.xlane.f32.xlu0 %v4084
    %v4147 = vpop.xlane.xlu0 %4146
    %4148 = vadd.xlane.f32.xlu0 %v4085
    %v4149 = vpop.xlane.xlu0 %4148
    %s4150 = sld [smem:[#allocation2]]
    %v4151 = vstv %s4150
    %v4152 = vadd.f32 %v4087, %v4151
    %v4153 = vadd.f32 %v4089, %v4151
    %v4154 = vadd.f32 %v4091, %v4151
    %v4155 = vadd.f32 %v4093, %v4151
    %v4156 = vadd.f32 %v4095, %v4151
    %v4157 = vadd.f32 %v4097, %v4151
    %v4158 = vadd.f32 %v4099, %v4151
    %v4159 = vadd.f32 %v4101, %v4151
    %v4160 = vadd.f32 %v4103, %v4151
    %v4161 = vadd.f32 %v4105, %v4151
    %v4162 = vadd.f32 %v4107, %v4151
    %v4163 = vadd.f32 %v4109, %v4151
    %v4164 = vadd.f32 %v4111, %v4151
    %v4165 = vadd.f32 %v4113, %v4151
    %v4166 = vadd.f32 %v4115, %v4151
    %v4167 = vadd.f32 %v4117, %v4151
    %v4168 = vadd.f32 %v4119, %v4151
    %v4169 = vadd.f32 %v4121, %v4151
    %v4170 = vadd.f32 %v4123, %v4151
    %v4171 = vadd.f32 %v4125, %v4151
    %v4172 = vadd.f32 %v4127, %v4151
    %v4173 = vadd.f32 %v4129, %v4151
    %v4174 = vadd.f32 %v4131, %v4151
    %v4175 = vadd.f32 %v4133, %v4151
    %v4176 = vadd.f32 %v4135, %v4151
    %v4177 = vadd.f32 %v4137, %v4151
    %v4178 = vadd.f32 %v4139, %v4151
    %v4179 = vadd.f32 %v4141, %v4151
    %v4180 = vadd.f32 %v4143, %v4151
    %v4181 = vadd.f32 %v4145, %v4151
    %v4182 = vadd.f32 %v4147, %v4151
    %v4183 = vadd.f32 %v4149, %v4151
    %v4184 = vxor.u32 %v4152, 2147483648
    %v4185 = vxor.u32 %v4153, 2147483648
    %v4186 = vxor.u32 %v4154, 2147483648
    %v4187 = vxor.u32 %v4155, 2147483648
    %v4188 = vxor.u32 %v4156, 2147483648
    %v4189 = vxor.u32 %v4157, 2147483648
    %v4190 = vxor.u32 %v4158, 2147483648
    %v4191 = vxor.u32 %v4159, 2147483648
    %v4192 = vxor.u32 %v4160, 2147483648
    %v4193 = vxor.u32 %v4161, 2147483648
    %v4194 = vxor.u32 %v4162, 2147483648
    %v4195 = vxor.u32 %v4163, 2147483648
    %v4196 = vxor.u32 %v4164, 2147483648
    %v4197 = vxor.u32 %v4165, 2147483648
    %v4198 = vxor.u32 %v4166, 2147483648
    %v4199 = vxor.u32 %v4167, 2147483648
    %v4200 = vxor.u32 %v4168, 2147483648
    %v4201 = vxor.u32 %v4169, 2147483648
    %v4202 = vxor.u32 %v4170, 2147483648
    %v4203 = vxor.u32 %v4171, 2147483648
    %v4204 = vxor.u32 %v4172, 2147483648
    %v4205 = vxor.u32 %v4173, 2147483648
    %v4206 = vxor.u32 %v4174, 2147483648
    %v4207 = vxor.u32 %v4175, 2147483648
    %v4208 = vxor.u32 %v4176, 2147483648
    %v4209 = vxor.u32 %v4177, 2147483648
    %v4210 = vxor.u32 %v4178, 2147483648
    %v4211 = vxor.u32 %v4179, 2147483648
    %v4212 = vxor.u32 %v4180, 2147483648
    %v4213 = vxor.u32 %v4181, 2147483648
    %v4214 = vxor.u32 %v4182, 2147483648
    %v4215 = vxor.u32 %v4183, 2147483648
    %v4216 = vmul.f32 %v4184, 1.442695
    %v4217 = vpow.pop %v4216
    %v4218 = vmul.f32 %v4185, 1.442695
    %v4219 = vpow.pop %v4218
    %v4220 = vmul.f32 %v4186, 1.442695
    %v4221 = vpow.pop %v4220
    %v4222 = vmul.f32 %v4187, 1.442695
    %v4223 = vpow.pop %v4222
    %v4224 = vmul.f32 %v4188, 1.442695
    %v4225 = vpow.pop %v4224
    %v4226 = vmul.f32 %v4189, 1.442695
    %v4227 = vpow.pop %v4226
    %v4228 = vmul.f32 %v4190, 1.442695
    %v4229 = vpow.pop %v4228
    %v4230 = vmul.f32 %v4191, 1.442695
    %v4231 = vpow.pop %v4230
    %v4232 = vmul.f32 %v4192, 1.442695
    %v4233 = vpow.pop %v4232
    %v4234 = vmul.f32 %v4193, 1.442695
    %v4235 = vpow.pop %v4234
    %v4236 = vmul.f32 %v4194, 1.442695
    %v4237 = vpow.pop %v4236
    %v4238 = vmul.f32 %v4195, 1.442695
    %v4239 = vpow.pop %v4238
    %v4240 = vmul.f32 %v4196, 1.442695
    %v4241 = vpow.pop %v4240
    %v4242 = vmul.f32 %v4197, 1.442695
    %v4243 = vpow.pop %v4242
    %v4244 = vmul.f32 %v4198, 1.442695
    %v4245 = vpow.pop %v4244
    %v4246 = vmul.f32 %v4199, 1.442695
    %v4247 = vpow.pop %v4246
    %v4248 = vmul.f32 %v4200, 1.442695
    %v4249 = vpow.pop %v4248
    %v4250 = vmul.f32 %v4201, 1.442695
    %v4251 = vpow.pop %v4250
    %v4252 = vmul.f32 %v4202, 1.442695
    %v4253 = vpow.pop %v4252
    %v4254 = vmul.f32 %v4203, 1.442695
    %v4255 = vpow.pop %v4254
    %v4256 = vmul.f32 %v4204, 1.442695
    %v4257 = vpow.pop %v4256
    %v4258 = vmul.f32 %v4205, 1.442695
    %v4259 = vpow.pop %v4258
    %v4260 = vmul.f32 %v4206, 1.442695
    %v4261 = vpow.pop %v4260
    %v4262 = vmul.f32 %v4207, 1.442695
    %v4263 = vpow.pop %v4262
    %v4264 = vmul.f32 %v4208, 1.442695
    %v4265 = vpow.pop %v4264
    %v4266 = vmul.f32 %v4209, 1.442695
    %v4267 = vpow.pop %v4266
    %v4268 = vmul.f32 %v4210, 1.442695
    %v4269 = vpow.pop %v4268
    %v4270 = vmul.f32 %v4211, 1.442695
    %v4271 = vpow.pop %v4270
    %v4272 = vmul.f32 %v4212, 1.442695
    %v4273 = vpow.pop %v4272
    %v4274 = vmul.f32 %v4213, 1.442695
    %v4275 = vpow.pop %v4274
    %v4276 = vmul.f32 %v4214, 1.442695
    %v4277 = vpow.pop %v4276
    %v4278 = vmul.f32 %v4215, 1.442695
    %v4279 = vpow.pop %v4278
    %v4280 = vadd.f32 %v4217, 1.0
    %v4281 = vadd.f32 %v4219, 1.0
    %v4282 = vadd.f32 %v4221, 1.0
    %v4283 = vadd.f32 %v4223, 1.0
    %v4284 = vadd.f32 %v4225, 1.0
    %v4285 = vadd.f32 %v4227, 1.0
    %v4286 = vadd.f32 %v4229, 1.0
    %v4287 = vadd.f32 %v4231, 1.0
    %v4288 = vadd.f32 %v4233, 1.0
    %v4289 = vadd.f32 %v4235, 1.0
    %v4290 = vadd.f32 %v4237, 1.0
    %v4291 = vadd.f32 %v4239, 1.0
    %v4292 = vadd.f32 %v4241, 1.0
    %v4293 = vadd.f32 %v4243, 1.0
    %v4294 = vadd.f32 %v4245, 1.0
    %v4295 = vadd.f32 %v4247, 1.0
    %v4296 = vadd.f32 %v4249, 1.0
    %v4297 = vadd.f32 %v4251, 1.0
    %v4298 = vadd.f32 %v4253, 1.0
    %v4299 = vadd.f32 %v4255, 1.0
    %v4300 = vadd.f32 %v4257, 1.0
    %v4301 = vadd.f32 %v4259, 1.0
    %v4302 = vadd.f32 %v4261, 1.0
    %v4303 = vadd.f32 %v4263, 1.0
    %v4304 = vadd.f32 %v4265, 1.0
    %v4305 = vadd.f32 %v4267, 1.0
    %v4306 = vadd.f32 %v4269, 1.0
    %v4307 = vadd.f32 %v4271, 1.0
    %v4308 = vadd.f32 %v4273, 1.0
    %v4309 = vadd.f32 %v4275, 1.0
    %v4310 = vadd.f32 %v4277, 1.0
    %v4311 = vadd.f32 %v4279, 1.0
    %v4312 = vrcp.pop %v4280
    %v4313 = vmul.f32 1.0, %v4312
    %v4314 = vrcp.pop %v4281
    %v4315 = vmul.f32 1.0, %v4314
    %v4316 = vrcp.pop %v4282
    %v4317 = vmul.f32 1.0, %v4316
    %v4318 = vrcp.pop %v4283
    %v4319 = vmul.f32 1.0, %v4318
    %v4320 = vrcp.pop %v4284
    %v4321 = vmul.f32 1.0, %v4320
    %v4322 = vrcp.pop %v4285
    %v4323 = vmul.f32 1.0, %v4322
    %v4324 = vrcp.pop %v4286
    %v4325 = vmul.f32 1.0, %v4324
    %v4326 = vrcp.pop %v4287
    %v4327 = vmul.f32 1.0, %v4326
    %v4328 = vrcp.pop %v4288
    %v4329 = vmul.f32 1.0, %v4328
    %v4330 = vrcp.pop %v4289
    %v4331 = vmul.f32 1.0, %v4330
    %v4332 = vrcp.pop %v4290
    %v4333 = vmul.f32 1.0, %v4332
    %v4334 = vrcp.pop %v4291
    %v4335 = vmul.f32 1.0, %v4334
    %v4336 = vrcp.pop %v4292
    %v4337 = vmul.f32 1.0, %v4336
    %v4338 = vrcp.pop %v4293
    %v4339 = vmul.f32 1.0, %v4338
    %v4340 = vrcp.pop %v4294
    %v4341 = vmul.f32 1.0, %v4340
    %v4342 = vrcp.pop %v4295
    %v4343 = vmul.f32 1.0, %v4342
    %v4344 = vrcp.pop %v4296
    %v4345 = vmul.f32 1.0, %v4344
    %v4346 = vrcp.pop %v4297
    %v4347 = vmul.f32 1.0, %v4346
    %v4348 = vrcp.pop %v4298
    %v4349 = vmul.f32 1.0, %v4348
    %v4350 = vrcp.pop %v4299
    %v4351 = vmul.f32 1.0, %v4350
    %v4352 = vrcp.pop %v4300
    %v4353 = vmul.f32 1.0, %v4352
    %v4354 = vrcp.pop %v4301
    %v4355 = vmul.f32 1.0, %v4354
    %v4356 = vrcp.pop %v4302
    %v4357 = vmul.f32 1.0, %v4356
    %v4358 = vrcp.pop %v4303
    %v4359 = vmul.f32 1.0, %v4358
    %v4360 = vrcp.pop %v4304
    %v4361 = vmul.f32 1.0, %v4360
    %v4362 = vrcp.pop %v4305
    %v4363 = vmul.f32 1.0, %v4362
    %v4364 = vrcp.pop %v4306
    %v4365 = vmul.f32 1.0, %v4364
    %v4366 = vrcp.pop %v4307
    %v4367 = vmul.f32 1.0, %v4366
    %v4368 = vrcp.pop %v4308
    %v4369 = vmul.f32 1.0, %v4368
    %v4370 = vrcp.pop %v4309
    %v4371 = vmul.f32 1.0, %v4370
    %v4372 = vrcp.pop %v4310
    %v4373 = vmul.f32 1.0, %v4372
    %v4374 = vrcp.pop %v4311
    %v4375 = vmul.f32 1.0, %v4374
    %v4408 = vlaneseq
    %v4409 = vshrl.u32 %v4408, 7
    %v4410 = vsub.s32 0, %v4409
    %v4411 = vrot.slane %v4313, %v4410
    %v4412 = vlaneseq
    %v4413 = vshrl.u32 %v4412, 7
    %v4414 = vsub.s32 1, %v4413
    %v4415 = vrot.slane %v4313, %v4414
    %v4416 = vlaneseq
    %v4417 = vshrl.u32 %v4416, 7
    %v4418 = vsub.s32 2, %v4417
    %v4419 = vrot.slane %v4313, %v4418
    %v4420 = vlaneseq
    %v4421 = vshrl.u32 %v4420, 7
    %v4422 = vsub.s32 3, %v4421
    %v4423 = vrot.slane %v4313, %v4422
    %v4424 = vlaneseq
    %v4425 = vshrl.u32 %v4424, 7
    %v4426 = vsub.s32 4, %v4425
    %v4427 = vrot.slane %v4313, %v4426
    %v4428 = vlaneseq
    %v4429 = vshrl.u32 %v4428, 7
    %v4430 = vsub.s32 5, %v4429
    %v4431 = vrot.slane %v4313, %v4430
    %v4432 = vlaneseq
    %v4433 = vshrl.u32 %v4432, 7
    %v4434 = vsub.s32 6, %v4433
    %v4435 = vrot.slane %v4313, %v4434
    %v4436 = vlaneseq
    %v4437 = vshrl.u32 %v4436, 7
    %v4438 = vsub.s32 7, %v4437
    %v4439 = vrot.slane %v4313, %v4438
    %v4440 = vlaneseq
    %v4441 = vshrl.u32 %v4440, 7
    %v4442 = vsub.s32 0, %v4441
    %v4443 = vrot.slane %v4315, %v4442
    %v4444 = vlaneseq
    %v4445 = vshrl.u32 %v4444, 7
    %v4446 = vsub.s32 1, %v4445
    %v4447 = vrot.slane %v4315, %v4446
    %v4448 = vlaneseq
    %v4449 = vshrl.u32 %v4448, 7
    %v4450 = vsub.s32 2, %v4449
    %v4451 = vrot.slane %v4315, %v4450
    %v4452 = vlaneseq
    %v4453 = vshrl.u32 %v4452, 7
    %v4454 = vsub.s32 3, %v4453
    %v4455 = vrot.slane %v4315, %v4454
    %v4456 = vlaneseq
    %v4457 = vshrl.u32 %v4456, 7
    %v4458 = vsub.s32 4, %v4457
    %v4459 = vrot.slane %v4315, %v4458
    %v4460 = vlaneseq
    %v4461 = vshrl.u32 %v4460, 7
    %v4462 = vsub.s32 5, %v4461
    %v4463 = vrot.slane %v4315, %v4462
    %v4464 = vlaneseq
    %v4465 = vshrl.u32 %v4464, 7
    %v4466 = vsub.s32 6, %v4465
    %v4467 = vrot.slane %v4315, %v4466
    %v4468 = vlaneseq
    %v4469 = vshrl.u32 %v4468, 7
    %v4470 = vsub.s32 7, %v4469
    %v4471 = vrot.slane %v4315, %v4470
    %v4472 = vlaneseq
    %v4473 = vshrl.u32 %v4472, 7
    %v4474 = vsub.s32 0, %v4473
    %v4475 = vrot.slane %v4317, %v4474
    %v4476 = vlaneseq
    %v4477 = vshrl.u32 %v4476, 7
    %v4478 = vsub.s32 1, %v4477
    %v4479 = vrot.slane %v4317, %v4478
    %v4480 = vlaneseq
    %v4481 = vshrl.u32 %v4480, 7
    %v4482 = vsub.s32 2, %v4481
    %v4483 = vrot.slane %v4317, %v4482
    %v4484 = vlaneseq
    %v4485 = vshrl.u32 %v4484, 7
    %v4486 = vsub.s32 3, %v4485
    %v4487 = vrot.slane %v4317, %v4486
    %v4488 = vlaneseq
    %v4489 = vshrl.u32 %v4488, 7
    %v4490 = vsub.s32 4, %v4489
    %v4491 = vrot.slane %v4317, %v4490
    %v4492 = vlaneseq
    %v4493 = vshrl.u32 %v4492, 7
    %v4494 = vsub.s32 5, %v4493
    %v4495 = vrot.slane %v4317, %v4494
    %v4496 = vlaneseq
    %v4497 = vshrl.u32 %v4496, 7
    %v4498 = vsub.s32 6, %v4497
    %v4499 = vrot.slane %v4317, %v4498
    %v4500 = vlaneseq
    %v4501 = vshrl.u32 %v4500, 7
    %v4502 = vsub.s32 7, %v4501
    %v4503 = vrot.slane %v4317, %v4502
    %v4504 = vlaneseq
    %v4505 = vshrl.u32 %v4504, 7
    %v4506 = vsub.s32 0, %v4505
    %v4507 = vrot.slane %v4319, %v4506
    %v4508 = vlaneseq
    %v4509 = vshrl.u32 %v4508, 7
    %v4510 = vsub.s32 1, %v4509
    %v4511 = vrot.slane %v4319, %v4510
    %v4512 = vlaneseq
    %v4513 = vshrl.u32 %v4512, 7
    %v4514 = vsub.s32 2, %v4513
    %v4515 = vrot.slane %v4319, %v4514
    %v4516 = vlaneseq
    %v4517 = vshrl.u32 %v4516, 7
    %v4518 = vsub.s32 3, %v4517
    %v4519 = vrot.slane %v4319, %v4518
    %v4520 = vlaneseq
    %v4521 = vshrl.u32 %v4520, 7
    %v4522 = vsub.s32 4, %v4521
    %v4523 = vrot.slane %v4319, %v4522
    %v4524 = vlaneseq
    %v4525 = vshrl.u32 %v4524, 7
    %v4526 = vsub.s32 5, %v4525
    %v4527 = vrot.slane %v4319, %v4526
    %v4528 = vlaneseq
    %v4529 = vshrl.u32 %v4528, 7
    %v4530 = vsub.s32 6, %v4529
    %v4531 = vrot.slane %v4319, %v4530
    %v4532 = vlaneseq
    %v4533 = vshrl.u32 %v4532, 7
    %v4534 = vsub.s32 7, %v4533
    %v4535 = vrot.slane %v4319, %v4534
    %v4536 = vlaneseq
    %v4537 = vshrl.u32 %v4536, 7
    %v4538 = vsub.s32 0, %v4537
    %v4539 = vrot.slane %v4321, %v4538
    %v4540 = vlaneseq
    %v4541 = vshrl.u32 %v4540, 7
    %v4542 = vsub.s32 1, %v4541
    %v4543 = vrot.slane %v4321, %v4542
    %v4544 = vlaneseq
    %v4545 = vshrl.u32 %v4544, 7
    %v4546 = vsub.s32 2, %v4545
    %v4547 = vrot.slane %v4321, %v4546
    %v4548 = vlaneseq
    %v4549 = vshrl.u32 %v4548, 7
    %v4550 = vsub.s32 3, %v4549
    %v4551 = vrot.slane %v4321, %v4550
    %v4552 = vlaneseq
    %v4553 = vshrl.u32 %v4552, 7
    %v4554 = vsub.s32 4, %v4553
    %v4555 = vrot.slane %v4321, %v4554
    %v4556 = vlaneseq
    %v4557 = vshrl.u32 %v4556, 7
    %v4558 = vsub.s32 5, %v4557
    %v4559 = vrot.slane %v4321, %v4558
    %v4560 = vlaneseq
    %v4561 = vshrl.u32 %v4560, 7
    %v4562 = vsub.s32 6, %v4561
    %v4563 = vrot.slane %v4321, %v4562
    %v4564 = vlaneseq
    %v4565 = vshrl.u32 %v4564, 7
    %v4566 = vsub.s32 7, %v4565
    %v4567 = vrot.slane %v4321, %v4566
    %v4568 = vlaneseq
    %v4569 = vshrl.u32 %v4568, 7
    %v4570 = vsub.s32 0, %v4569
    %v4571 = vrot.slane %v4323, %v4570
    %v4572 = vlaneseq
    %v4573 = vshrl.u32 %v4572, 7
    %v4574 = vsub.s32 1, %v4573
    %v4575 = vrot.slane %v4323, %v4574
    %v4576 = vlaneseq
    %v4577 = vshrl.u32 %v4576, 7
    %v4578 = vsub.s32 2, %v4577
    %v4579 = vrot.slane %v4323, %v4578
    %v4580 = vlaneseq
    %v4581 = vshrl.u32 %v4580, 7
    %v4582 = vsub.s32 3, %v4581
    %v4583 = vrot.slane %v4323, %v4582
    %v4584 = vlaneseq
    %v4585 = vshrl.u32 %v4584, 7
    %v4586 = vsub.s32 4, %v4585
    %v4587 = vrot.slane %v4323, %v4586
    %v4588 = vlaneseq
    %v4589 = vshrl.u32 %v4588, 7
    %v4590 = vsub.s32 5, %v4589
    %v4591 = vrot.slane %v4323, %v4590
    %v4592 = vlaneseq
    %v4593 = vshrl.u32 %v4592, 7
    %v4594 = vsub.s32 6, %v4593
    %v4595 = vrot.slane %v4323, %v4594
    %v4596 = vlaneseq
    %v4597 = vshrl.u32 %v4596, 7
    %v4598 = vsub.s32 7, %v4597
    %v4599 = vrot.slane %v4323, %v4598
    %v4600 = vlaneseq
    %v4601 = vshrl.u32 %v4600, 7
    %v4602 = vsub.s32 0, %v4601
    %v4603 = vrot.slane %v4325, %v4602
    %v4604 = vlaneseq
    %v4605 = vshrl.u32 %v4604, 7
    %v4606 = vsub.s32 1, %v4605
    %v4607 = vrot.slane %v4325, %v4606
    %v4608 = vlaneseq
    %v4609 = vshrl.u32 %v4608, 7
    %v4610 = vsub.s32 2, %v4609
    %v4611 = vrot.slane %v4325, %v4610
    %v4612 = vlaneseq
    %v4613 = vshrl.u32 %v4612, 7
    %v4614 = vsub.s32 3, %v4613
    %v4615 = vrot.slane %v4325, %v4614
    %v4616 = vlaneseq
    %v4617 = vshrl.u32 %v4616, 7
    %v4618 = vsub.s32 4, %v4617
    %v4619 = vrot.slane %v4325, %v4618
    %v4620 = vlaneseq
    %v4621 = vshrl.u32 %v4620, 7
    %v4622 = vsub.s32 5, %v4621
    %v4623 = vrot.slane %v4325, %v4622
    %v4624 = vlaneseq
    %v4625 = vshrl.u32 %v4624, 7
    %v4626 = vsub.s32 6, %v4625
    %v4627 = vrot.slane %v4325, %v4626
    %v4628 = vlaneseq
    %v4629 = vshrl.u32 %v4628, 7
    %v4630 = vsub.s32 7, %v4629
    %v4631 = vrot.slane %v4325, %v4630
    %v4632 = vlaneseq
    %v4633 = vshrl.u32 %v4632, 7
    %v4634 = vsub.s32 0, %v4633
    %v4635 = vrot.slane %v4327, %v4634
    %v4636 = vlaneseq
    %v4637 = vshrl.u32 %v4636, 7
    %v4638 = vsub.s32 1, %v4637
    %v4639 = vrot.slane %v4327, %v4638
    %v4640 = vlaneseq
    %v4641 = vshrl.u32 %v4640, 7
    %v4642 = vsub.s32 2, %v4641
    %v4643 = vrot.slane %v4327, %v4642
    %v4644 = vlaneseq
    %v4645 = vshrl.u32 %v4644, 7
    %v4646 = vsub.s32 3, %v4645
    %v4647 = vrot.slane %v4327, %v4646
    %v4648 = vlaneseq
    %v4649 = vshrl.u32 %v4648, 7
    %v4650 = vsub.s32 4, %v4649
    %v4651 = vrot.slane %v4327, %v4650
    %v4652 = vlaneseq
    %v4653 = vshrl.u32 %v4652, 7
    %v4654 = vsub.s32 5, %v4653
    %v4655 = vrot.slane %v4327, %v4654
    %v4656 = vlaneseq
    %v4657 = vshrl.u32 %v4656, 7
    %v4658 = vsub.s32 6, %v4657
    %v4659 = vrot.slane %v4327, %v4658
    %v4660 = vlaneseq
    %v4661 = vshrl.u32 %v4660, 7
    %v4662 = vsub.s32 7, %v4661
    %v4663 = vrot.slane %v4327, %v4662
    %v4664 = vlaneseq
    %v4665 = vshrl.u32 %v4664, 7
    %v4666 = vsub.s32 0, %v4665
    %v4667 = vrot.slane %v4329, %v4666
    %v4668 = vlaneseq
    %v4669 = vshrl.u32 %v4668, 7
    %v4670 = vsub.s32 1, %v4669
    %v4671 = vrot.slane %v4329, %v4670
    %v4672 = vlaneseq
    %v4673 = vshrl.u32 %v4672, 7
    %v4674 = vsub.s32 2, %v4673
    %v4675 = vrot.slane %v4329, %v4674
    %v4676 = vlaneseq
    %v4677 = vshrl.u32 %v4676, 7
    %v4678 = vsub.s32 3, %v4677
    %v4679 = vrot.slane %v4329, %v4678
    %v4680 = vlaneseq
    %v4681 = vshrl.u32 %v4680, 7
    %v4682 = vsub.s32 4, %v4681
    %v4683 = vrot.slane %v4329, %v4682
    %v4684 = vlaneseq
    %v4685 = vshrl.u32 %v4684, 7
    %v4686 = vsub.s32 5, %v4685
    %v4687 = vrot.slane %v4329, %v4686
    %v4688 = vlaneseq
    %v4689 = vshrl.u32 %v4688, 7
    %v4690 = vsub.s32 6, %v4689
    %v4691 = vrot.slane %v4329, %v4690
    %v4692 = vlaneseq
    %v4693 = vshrl.u32 %v4692, 7
    %v4694 = vsub.s32 7, %v4693
    %v4695 = vrot.slane %v4329, %v4694
    %v4696 = vlaneseq
    %v4697 = vshrl.u32 %v4696, 7
    %v4698 = vsub.s32 0, %v4697
    %v4699 = vrot.slane %v4331, %v4698
    %v4700 = vlaneseq
    %v4701 = vshrl.u32 %v4700, 7
    %v4702 = vsub.s32 1, %v4701
    %v4703 = vrot.slane %v4331, %v4702
    %v4704 = vlaneseq
    %v4705 = vshrl.u32 %v4704, 7
    %v4706 = vsub.s32 2, %v4705
    %v4707 = vrot.slane %v4331, %v4706
    %v4708 = vlaneseq
    %v4709 = vshrl.u32 %v4708, 7
    %v4710 = vsub.s32 3, %v4709
    %v4711 = vrot.slane %v4331, %v4710
    %v4712 = vlaneseq
    %v4713 = vshrl.u32 %v4712, 7
    %v4714 = vsub.s32 4, %v4713
    %v4715 = vrot.slane %v4331, %v4714
    %v4716 = vlaneseq
    %v4717 = vshrl.u32 %v4716, 7
    %v4718 = vsub.s32 5, %v4717
    %v4719 = vrot.slane %v4331, %v4718
    %v4720 = vlaneseq
    %v4721 = vshrl.u32 %v4720, 7
    %v4722 = vsub.s32 6, %v4721
    %v4723 = vrot.slane %v4331, %v4722
    %v4724 = vlaneseq
    %v4725 = vshrl.u32 %v4724, 7
    %v4726 = vsub.s32 7, %v4725
    %v4727 = vrot.slane %v4331, %v4726
    %v4728 = vlaneseq
    %v4729 = vshrl.u32 %v4728, 7
    %v4730 = vsub.s32 0, %v4729
    %v4731 = vrot.slane %v4333, %v4730
    %v4732 = vlaneseq
    %v4733 = vshrl.u32 %v4732, 7
    %v4734 = vsub.s32 1, %v4733
    %v4735 = vrot.slane %v4333, %v4734
    %v4736 = vlaneseq
    %v4737 = vshrl.u32 %v4736, 7
    %v4738 = vsub.s32 2, %v4737
    %v4739 = vrot.slane %v4333, %v4738
    %v4740 = vlaneseq
    %v4741 = vshrl.u32 %v4740, 7
    %v4742 = vsub.s32 3, %v4741
    %v4743 = vrot.slane %v4333, %v4742
    %v4744 = vlaneseq
    %v4745 = vshrl.u32 %v4744, 7
    %v4746 = vsub.s32 4, %v4745
    %v4747 = vrot.slane %v4333, %v4746
    %v4748 = vlaneseq
    %v4749 = vshrl.u32 %v4748, 7
    %v4750 = vsub.s32 5, %v4749
    %v4751 = vrot.slane %v4333, %v4750
    %v4752 = vlaneseq
    %v4753 = vshrl.u32 %v4752, 7
    %v4754 = vsub.s32 6, %v4753
    %v4755 = vrot.slane %v4333, %v4754
    %v4756 = vlaneseq
    %v4757 = vshrl.u32 %v4756, 7
    %v4758 = vsub.s32 7, %v4757
    %v4759 = vrot.slane %v4333, %v4758
    %v4760 = vlaneseq
    %v4761 = vshrl.u32 %v4760, 7
    %v4762 = vsub.s32 0, %v4761
    %v4763 = vrot.slane %v4335, %v4762
    %v4764 = vlaneseq
    %v4765 = vshrl.u32 %v4764, 7
    %v4766 = vsub.s32 1, %v4765
    %v4767 = vrot.slane %v4335, %v4766
    %v4768 = vlaneseq
    %v4769 = vshrl.u32 %v4768, 7
    %v4770 = vsub.s32 2, %v4769
    %v4771 = vrot.slane %v4335, %v4770
    %v4772 = vlaneseq
    %v4773 = vshrl.u32 %v4772, 7
    %v4774 = vsub.s32 3, %v4773
    %v4775 = vrot.slane %v4335, %v4774
    %v4776 = vlaneseq
    %v4777 = vshrl.u32 %v4776, 7
    %v4778 = vsub.s32 4, %v4777
    %v4779 = vrot.slane %v4335, %v4778
    %v4780 = vlaneseq
    %v4781 = vshrl.u32 %v4780, 7
    %v4782 = vsub.s32 5, %v4781
    %v4783 = vrot.slane %v4335, %v4782
    %v4784 = vlaneseq
    %v4785 = vshrl.u32 %v4784, 7
    %v4786 = vsub.s32 6, %v4785
    %v4787 = vrot.slane %v4335, %v4786
    %v4788 = vlaneseq
    %v4789 = vshrl.u32 %v4788, 7
    %v4790 = vsub.s32 7, %v4789
    %v4791 = vrot.slane %v4335, %v4790
    %v4792 = vlaneseq
    %v4793 = vshrl.u32 %v4792, 7
    %v4794 = vsub.s32 0, %v4793
    %v4795 = vrot.slane %v4337, %v4794
    %v4796 = vlaneseq
    %v4797 = vshrl.u32 %v4796, 7
    %v4798 = vsub.s32 1, %v4797
    %v4799 = vrot.slane %v4337, %v4798
    %v4800 = vlaneseq
    %v4801 = vshrl.u32 %v4800, 7
    %v4802 = vsub.s32 2, %v4801
    %v4803 = vrot.slane %v4337, %v4802
    %v4804 = vlaneseq
    %v4805 = vshrl.u32 %v4804, 7
    %v4806 = vsub.s32 3, %v4805
    %v4807 = vrot.slane %v4337, %v4806
    %v4808 = vlaneseq
    %v4809 = vshrl.u32 %v4808, 7
    %v4810 = vsub.s32 4, %v4809
    %v4811 = vrot.slane %v4337, %v4810
    %v4812 = vlaneseq
    %v4813 = vshrl.u32 %v4812, 7
    %v4814 = vsub.s32 5, %v4813
    %v4815 = vrot.slane %v4337, %v4814
    %v4816 = vlaneseq
    %v4817 = vshrl.u32 %v4816, 7
    %v4818 = vsub.s32 6, %v4817
    %v4819 = vrot.slane %v4337, %v4818
    %v4820 = vlaneseq
    %v4821 = vshrl.u32 %v4820, 7
    %v4822 = vsub.s32 7, %v4821
    %v4823 = vrot.slane %v4337, %v4822
    %v4824 = vlaneseq
    %v4825 = vshrl.u32 %v4824, 7
    %v4826 = vsub.s32 0, %v4825
    %v4827 = vrot.slane %v4339, %v4826
    %v4828 = vlaneseq
    %v4829 = vshrl.u32 %v4828, 7
    %v4830 = vsub.s32 1, %v4829
    %v4831 = vrot.slane %v4339, %v4830
    %v4832 = vlaneseq
    %v4833 = vshrl.u32 %v4832, 7
    %v4834 = vsub.s32 2, %v4833
    %v4835 = vrot.slane %v4339, %v4834
    %v4836 = vlaneseq
    %v4837 = vshrl.u32 %v4836, 7
    %v4838 = vsub.s32 3, %v4837
    %v4839 = vrot.slane %v4339, %v4838
    %v4840 = vlaneseq
    %v4841 = vshrl.u32 %v4840, 7
    %v4842 = vsub.s32 4, %v4841
    %v4843 = vrot.slane %v4339, %v4842
    %v4844 = vlaneseq
    %v4845 = vshrl.u32 %v4844, 7
    %v4846 = vsub.s32 5, %v4845
    %v4847 = vrot.slane %v4339, %v4846
    %v4848 = vlaneseq
    %v4849 = vshrl.u32 %v4848, 7
    %v4850 = vsub.s32 6, %v4849
    %v4851 = vrot.slane %v4339, %v4850
    %v4852 = vlaneseq
    %v4853 = vshrl.u32 %v4852, 7
    %v4854 = vsub.s32 7, %v4853
    %v4855 = vrot.slane %v4339, %v4854
    %v4856 = vlaneseq
    %v4857 = vshrl.u32 %v4856, 7
    %v4858 = vsub.s32 0, %v4857
    %v4859 = vrot.slane %v4341, %v4858
    %v4860 = vlaneseq
    %v4861 = vshrl.u32 %v4860, 7
    %v4862 = vsub.s32 1, %v4861
    %v4863 = vrot.slane %v4341, %v4862
    %v4864 = vlaneseq
    %v4865 = vshrl.u32 %v4864, 7
    %v4866 = vsub.s32 2, %v4865
    %v4867 = vrot.slane %v4341, %v4866
    %v4868 = vlaneseq
    %v4869 = vshrl.u32 %v4868, 7
    %v4870 = vsub.s32 3, %v4869
    %v4871 = vrot.slane %v4341, %v4870
    %v4872 = vlaneseq
    %v4873 = vshrl.u32 %v4872, 7
    %v4874 = vsub.s32 4, %v4873
    %v4875 = vrot.slane %v4341, %v4874
    %v4876 = vlaneseq
    %v4877 = vshrl.u32 %v4876, 7
    %v4878 = vsub.s32 5, %v4877
    %v4879 = vrot.slane %v4341, %v4878
    %v4880 = vlaneseq
    %v4881 = vshrl.u32 %v4880, 7
    %v4882 = vsub.s32 6, %v4881
    %v4883 = vrot.slane %v4341, %v4882
    %v4884 = vlaneseq
    %v4885 = vshrl.u32 %v4884, 7
    %v4886 = vsub.s32 7, %v4885
    %v4887 = vrot.slane %v4341, %v4886
    %v4888 = vlaneseq
    %v4889 = vshrl.u32 %v4888, 7
    %v4890 = vsub.s32 0, %v4889
    %v4891 = vrot.slane %v4343, %v4890
    %v4892 = vlaneseq
    %v4893 = vshrl.u32 %v4892, 7
    %v4894 = vsub.s32 1, %v4893
    %v4895 = vrot.slane %v4343, %v4894
    %v4896 = vlaneseq
    %v4897 = vshrl.u32 %v4896, 7
    %v4898 = vsub.s32 2, %v4897
    %v4899 = vrot.slane %v4343, %v4898
    %v4900 = vlaneseq
    %v4901 = vshrl.u32 %v4900, 7
    %v4902 = vsub.s32 3, %v4901
    %v4903 = vrot.slane %v4343, %v4902
    %v4904 = vlaneseq
    %v4905 = vshrl.u32 %v4904, 7
    %v4906 = vsub.s32 4, %v4905
    %v4907 = vrot.slane %v4343, %v4906
    %v4908 = vlaneseq
    %v4909 = vshrl.u32 %v4908, 7
    %v4910 = vsub.s32 5, %v4909
    %v4911 = vrot.slane %v4343, %v4910
    %v4912 = vlaneseq
    %v4913 = vshrl.u32 %v4912, 7
    %v4914 = vsub.s32 6, %v4913
    %v4915 = vrot.slane %v4343, %v4914
    %v4916 = vlaneseq
    %v4917 = vshrl.u32 %v4916, 7
    %v4918 = vsub.s32 7, %v4917
    %v4919 = vrot.slane %v4343, %v4918
    %v4920 = vlaneseq
    %v4921 = vshrl.u32 %v4920, 7
    %v4922 = vsub.s32 0, %v4921
    %v4923 = vrot.slane %v4345, %v4922
    %v4924 = vlaneseq
    %v4925 = vshrl.u32 %v4924, 7
    %v4926 = vsub.s32 1, %v4925
    %v4927 = vrot.slane %v4345, %v4926
    %v4928 = vlaneseq
    %v4929 = vshrl.u32 %v4928, 7
    %v4930 = vsub.s32 2, %v4929
    %v4931 = vrot.slane %v4345, %v4930
    %v4932 = vlaneseq
    %v4933 = vshrl.u32 %v4932, 7
    %v4934 = vsub.s32 3, %v4933
    %v4935 = vrot.slane %v4345, %v4934
    %v4936 = vlaneseq
    %v4937 = vshrl.u32 %v4936, 7
    %v4938 = vsub.s32 4, %v4937
    %v4939 = vrot.slane %v4345, %v4938
    %v4940 = vlaneseq
    %v4941 = vshrl.u32 %v4940, 7
    %v4942 = vsub.s32 5, %v4941
    %v4943 = vrot.slane %v4345, %v4942
    %v4944 = vlaneseq
    %v4945 = vshrl.u32 %v4944, 7
    %v4946 = vsub.s32 6, %v4945
    %v4947 = vrot.slane %v4345, %v4946
    %v4948 = vlaneseq
    %v4949 = vshrl.u32 %v4948, 7
    %v4950 = vsub.s32 7, %v4949
    %v4951 = vrot.slane %v4345, %v4950
    %v4952 = vlaneseq
    %v4953 = vshrl.u32 %v4952, 7
    %v4954 = vsub.s32 0, %v4953
    %v4955 = vrot.slane %v4347, %v4954
    %v4956 = vlaneseq
    %v4957 = vshrl.u32 %v4956, 7
    %v4958 = vsub.s32 1, %v4957
    %v4959 = vrot.slane %v4347, %v4958
    %v4960 = vlaneseq
    %v4961 = vshrl.u32 %v4960, 7
    %v4962 = vsub.s32 2, %v4961
    %v4963 = vrot.slane %v4347, %v4962
    %v4964 = vlaneseq
    %v4965 = vshrl.u32 %v4964, 7
    %v4966 = vsub.s32 3, %v4965
    %v4967 = vrot.slane %v4347, %v4966
    %v4968 = vlaneseq
    %v4969 = vshrl.u32 %v4968, 7
    %v4970 = vsub.s32 4, %v4969
    %v4971 = vrot.slane %v4347, %v4970
    %v4972 = vlaneseq
    %v4973 = vshrl.u32 %v4972, 7
    %v4974 = vsub.s32 5, %v4973
    %v4975 = vrot.slane %v4347, %v4974
    %v4976 = vlaneseq
    %v4977 = vshrl.u32 %v4976, 7
    %v4978 = vsub.s32 6, %v4977
    %v4979 = vrot.slane %v4347, %v4978
    %v4980 = vlaneseq
    %v4981 = vshrl.u32 %v4980, 7
    %v4982 = vsub.s32 7, %v4981
    %v4983 = vrot.slane %v4347, %v4982
    %v4984 = vlaneseq
    %v4985 = vshrl.u32 %v4984, 7
    %v4986 = vsub.s32 0, %v4985
    %v4987 = vrot.slane %v4349, %v4986
    %v4988 = vlaneseq
    %v4989 = vshrl.u32 %v4988, 7
    %v4990 = vsub.s32 1, %v4989
    %v4991 = vrot.slane %v4349, %v4990
    %v4992 = vlaneseq
    %v4993 = vshrl.u32 %v4992, 7
    %v4994 = vsub.s32 2, %v4993
    %v4995 = vrot.slane %v4349, %v4994
    %v4996 = vlaneseq
    %v4997 = vshrl.u32 %v4996, 7
    %v4998 = vsub.s32 3, %v4997
    %v4999 = vrot.slane %v4349, %v4998
    %v5000 = vlaneseq
    %v5001 = vshrl.u32 %v5000, 7
    %v5002 = vsub.s32 4, %v5001
    %v5003 = vrot.slane %v4349, %v5002
    %v5004 = vlaneseq
    %v5005 = vshrl.u32 %v5004, 7
    %v5006 = vsub.s32 5, %v5005
    %v5007 = vrot.slane %v4349, %v5006
    %v5008 = vlaneseq
    %v5009 = vshrl.u32 %v5008, 7
    %v5010 = vsub.s32 6, %v5009
    %v5011 = vrot.slane %v4349, %v5010
    %v5012 = vlaneseq
    %v5013 = vshrl.u32 %v5012, 7
    %v5014 = vsub.s32 7, %v5013
    %v5015 = vrot.slane %v4349, %v5014
    %v5016 = vlaneseq
    %v5017 = vshrl.u32 %v5016, 7
    %v5018 = vsub.s32 0, %v5017
    %v5019 = vrot.slane %v4351, %v5018
    %v5020 = vlaneseq
    %v5021 = vshrl.u32 %v5020, 7
    %v5022 = vsub.s32 1, %v5021
    %v5023 = vrot.slane %v4351, %v5022
    %v5024 = vlaneseq
    %v5025 = vshrl.u32 %v5024, 7
    %v5026 = vsub.s32 2, %v5025
    %v5027 = vrot.slane %v4351, %v5026
    %v5028 = vlaneseq
    %v5029 = vshrl.u32 %v5028, 7
    %v5030 = vsub.s32 3, %v5029
    %v5031 = vrot.slane %v4351, %v5030
    %v5032 = vlaneseq
    %v5033 = vshrl.u32 %v5032, 7
    %v5034 = vsub.s32 4, %v5033
    %v5035 = vrot.slane %v4351, %v5034
    %v5036 = vlaneseq
    %v5037 = vshrl.u32 %v5036, 7
    %v5038 = vsub.s32 5, %v5037
    %v5039 = vrot.slane %v4351, %v5038
    %v5040 = vlaneseq
    %v5041 = vshrl.u32 %v5040, 7
    %v5042 = vsub.s32 6, %v5041
    %v5043 = vrot.slane %v4351, %v5042
    %v5044 = vlaneseq
    %v5045 = vshrl.u32 %v5044, 7
    %v5046 = vsub.s32 7, %v5045
    %v5047 = vrot.slane %v4351, %v5046
    %v5048 = vlaneseq
    %v5049 = vshrl.u32 %v5048, 7
    %v5050 = vsub.s32 0, %v5049
    %v5051 = vrot.slane %v4353, %v5050
    %v5052 = vlaneseq
    %v5053 = vshrl.u32 %v5052, 7
    %v5054 = vsub.s32 1, %v5053
    %v5055 = vrot.slane %v4353, %v5054
    %v5056 = vlaneseq
    %v5057 = vshrl.u32 %v5056, 7
    %v5058 = vsub.s32 2, %v5057
    %v5059 = vrot.slane %v4353, %v5058
    %v5060 = vlaneseq
    %v5061 = vshrl.u32 %v5060, 7
    %v5062 = vsub.s32 3, %v5061
    %v5063 = vrot.slane %v4353, %v5062
    %v5064 = vlaneseq
    %v5065 = vshrl.u32 %v5064, 7
    %v5066 = vsub.s32 4, %v5065
    %v5067 = vrot.slane %v4353, %v5066
    %v5068 = vlaneseq
    %v5069 = vshrl.u32 %v5068, 7
    %v5070 = vsub.s32 5, %v5069
    %v5071 = vrot.slane %v4353, %v5070
    %v5072 = vlaneseq
    %v5073 = vshrl.u32 %v5072, 7
    %v5074 = vsub.s32 6, %v5073
    %v5075 = vrot.slane %v4353, %v5074
    %v5076 = vlaneseq
    %v5077 = vshrl.u32 %v5076, 7
    %v5078 = vsub.s32 7, %v5077
    %v5079 = vrot.slane %v4353, %v5078
    %v5080 = vlaneseq
    %v5081 = vshrl.u32 %v5080, 7
    %v5082 = vsub.s32 0, %v5081
    %v5083 = vrot.slane %v4355, %v5082
    %v5084 = vlaneseq
    %v5085 = vshrl.u32 %v5084, 7
    %v5086 = vsub.s32 1, %v5085
    %v5087 = vrot.slane %v4355, %v5086
    %v5088 = vlaneseq
    %v5089 = vshrl.u32 %v5088, 7
    %v5090 = vsub.s32 2, %v5089
    %v5091 = vrot.slane %v4355, %v5090
    %v5092 = vlaneseq
    %v5093 = vshrl.u32 %v5092, 7
    %v5094 = vsub.s32 3, %v5093
    %v5095 = vrot.slane %v4355, %v5094
    %v5096 = vlaneseq
    %v5097 = vshrl.u32 %v5096, 7
    %v5098 = vsub.s32 4, %v5097
    %v5099 = vrot.slane %v4355, %v5098
    %v5100 = vlaneseq
    %v5101 = vshrl.u32 %v5100, 7
    %v5102 = vsub.s32 5, %v5101
    %v5103 = vrot.slane %v4355, %v5102
    %v5104 = vlaneseq
    %v5105 = vshrl.u32 %v5104, 7
    %v5106 = vsub.s32 6, %v5105
    %v5107 = vrot.slane %v4355, %v5106
    %v5108 = vlaneseq
    %v5109 = vshrl.u32 %v5108, 7
    %v5110 = vsub.s32 7, %v5109
    %v5111 = vrot.slane %v4355, %v5110
    %v5112 = vlaneseq
    %v5113 = vshrl.u32 %v5112, 7
    %v5114 = vsub.s32 0, %v5113
    %v5115 = vrot.slane %v4357, %v5114
    %v5116 = vlaneseq
    %v5117 = vshrl.u32 %v5116, 7
    %v5118 = vsub.s32 1, %v5117
    %v5119 = vrot.slane %v4357, %v5118
    %v5120 = vlaneseq
    %v5121 = vshrl.u32 %v5120, 7
    %v5122 = vsub.s32 2, %v5121
    %v5123 = vrot.slane %v4357, %v5122
    %v5124 = vlaneseq
    %v5125 = vshrl.u32 %v5124, 7
    %v5126 = vsub.s32 3, %v5125
    %v5127 = vrot.slane %v4357, %v5126
    %v5128 = vlaneseq
    %v5129 = vshrl.u32 %v5128, 7
    %v5130 = vsub.s32 4, %v5129
    %v5131 = vrot.slane %v4357, %v5130
    %v5132 = vlaneseq
    %v5133 = vshrl.u32 %v5132, 7
    %v5134 = vsub.s32 5, %v5133
    %v5135 = vrot.slane %v4357, %v5134
    %v5136 = vlaneseq
    %v5137 = vshrl.u32 %v5136, 7
    %v5138 = vsub.s32 6, %v5137
    %v5139 = vrot.slane %v4357, %v5138
    %v5140 = vlaneseq
    %v5141 = vshrl.u32 %v5140, 7
    %v5142 = vsub.s32 7, %v5141
    %v5143 = vrot.slane %v4357, %v5142
    %v5144 = vlaneseq
    %v5145 = vshrl.u32 %v5144, 7
    %v5146 = vsub.s32 0, %v5145
    %v5147 = vrot.slane %v4359, %v5146
    %v5148 = vlaneseq
    %v5149 = vshrl.u32 %v5148, 7
    %v5150 = vsub.s32 1, %v5149
    %v5151 = vrot.slane %v4359, %v5150
    %v5152 = vlaneseq
    %v5153 = vshrl.u32 %v5152, 7
    %v5154 = vsub.s32 2, %v5153
    %v5155 = vrot.slane %v4359, %v5154
    %v5156 = vlaneseq
    %v5157 = vshrl.u32 %v5156, 7
    %v5158 = vsub.s32 3, %v5157
    %v5159 = vrot.slane %v4359, %v5158
    %v5160 = vlaneseq
    %v5161 = vshrl.u32 %v5160, 7
    %v5162 = vsub.s32 4, %v5161
    %v5163 = vrot.slane %v4359, %v5162
    %v5164 = vlaneseq
    %v5165 = vshrl.u32 %v5164, 7
    %v5166 = vsub.s32 5, %v5165
    %v5167 = vrot.slane %v4359, %v5166
    %v5168 = vlaneseq
    %v5169 = vshrl.u32 %v5168, 7
    %v5170 = vsub.s32 6, %v5169
    %v5171 = vrot.slane %v4359, %v5170
    %v5172 = vlaneseq
    %v5173 = vshrl.u32 %v5172, 7
    %v5174 = vsub.s32 7, %v5173
    %v5175 = vrot.slane %v4359, %v5174
    %v5176 = vlaneseq
    %v5177 = vshrl.u32 %v5176, 7
    %v5178 = vsub.s32 0, %v5177
    %v5179 = vrot.slane %v4361, %v5178
    %v5180 = vlaneseq
    %v5181 = vshrl.u32 %v5180, 7
    %v5182 = vsub.s32 1, %v5181
    %v5183 = vrot.slane %v4361, %v5182
    %v5184 = vlaneseq
    %v5185 = vshrl.u32 %v5184, 7
    %v5186 = vsub.s32 2, %v5185
    %v5187 = vrot.slane %v4361, %v5186
    %v5188 = vlaneseq
    %v5189 = vshrl.u32 %v5188, 7
    %v5190 = vsub.s32 3, %v5189
    %v5191 = vrot.slane %v4361, %v5190
    %v5192 = vlaneseq
    %v5193 = vshrl.u32 %v5192, 7
    %v5194 = vsub.s32 4, %v5193
    %v5195 = vrot.slane %v4361, %v5194
    %v5196 = vlaneseq
    %v5197 = vshrl.u32 %v5196, 7
    %v5198 = vsub.s32 5, %v5197
    %v5199 = vrot.slane %v4361, %v5198
    %v5200 = vlaneseq
    %v5201 = vshrl.u32 %v5200, 7
    %v5202 = vsub.s32 6, %v5201
    %v5203 = vrot.slane %v4361, %v5202
    %v5204 = vlaneseq
    %v5205 = vshrl.u32 %v5204, 7
    %v5206 = vsub.s32 7, %v5205
    %v5207 = vrot.slane %v4361, %v5206
    %v5208 = vlaneseq
    %v5209 = vshrl.u32 %v5208, 7
    %v5210 = vsub.s32 0, %v5209
    %v5211 = vrot.slane %v4363, %v5210
    %v5212 = vlaneseq
    %v5213 = vshrl.u32 %v5212, 7
    %v5214 = vsub.s32 1, %v5213
    %v5215 = vrot.slane %v4363, %v5214
    %v5216 = vlaneseq
    %v5217 = vshrl.u32 %v5216, 7
    %v5218 = vsub.s32 2, %v5217
    %v5219 = vrot.slane %v4363, %v5218
    %v5220 = vlaneseq
    %v5221 = vshrl.u32 %v5220, 7
    %v5222 = vsub.s32 3, %v5221
    %v5223 = vrot.slane %v4363, %v5222
    %v5224 = vlaneseq
    %v5225 = vshrl.u32 %v5224, 7
    %v5226 = vsub.s32 4, %v5225
    %v5227 = vrot.slane %v4363, %v5226
    %v5228 = vlaneseq
    %v5229 = vshrl.u32 %v5228, 7
    %v5230 = vsub.s32 5, %v5229
    %v5231 = vrot.slane %v4363, %v5230
    %v5232 = vlaneseq
    %v5233 = vshrl.u32 %v5232, 7
    %v5234 = vsub.s32 6, %v5233
    %v5235 = vrot.slane %v4363, %v5234
    %v5236 = vlaneseq
    %v5237 = vshrl.u32 %v5236, 7
    %v5238 = vsub.s32 7, %v5237
    %v5239 = vrot.slane %v4363, %v5238
    %v5240 = vlaneseq
    %v5241 = vshrl.u32 %v5240, 7
    %v5242 = vsub.s32 0, %v5241
    %v5243 = vrot.slane %v4365, %v5242
    %v5244 = vlaneseq
    %v5245 = vshrl.u32 %v5244, 7
    %v5246 = vsub.s32 1, %v5245
    %v5247 = vrot.slane %v4365, %v5246
    %v5248 = vlaneseq
    %v5249 = vshrl.u32 %v5248, 7
    %v5250 = vsub.s32 2, %v5249
    %v5251 = vrot.slane %v4365, %v5250
    %v5252 = vlaneseq
    %v5253 = vshrl.u32 %v5252, 7
    %v5254 = vsub.s32 3, %v5253
    %v5255 = vrot.slane %v4365, %v5254
    %v5256 = vlaneseq
    %v5257 = vshrl.u32 %v5256, 7
    %v5258 = vsub.s32 4, %v5257
    %v5259 = vrot.slane %v4365, %v5258
    %v5260 = vlaneseq
    %v5261 = vshrl.u32 %v5260, 7
    %v5262 = vsub.s32 5, %v5261
    %v5263 = vrot.slane %v4365, %v5262
    %v5264 = vlaneseq
    %v5265 = vshrl.u32 %v5264, 7
    %v5266 = vsub.s32 6, %v5265
    %v5267 = vrot.slane %v4365, %v5266
    %v5268 = vlaneseq
    %v5269 = vshrl.u32 %v5268, 7
    %v5270 = vsub.s32 7, %v5269
    %v5271 = vrot.slane %v4365, %v5270
    %v5272 = vlaneseq
    %v5273 = vshrl.u32 %v5272, 7
    %v5274 = vsub.s32 0, %v5273
    %v5275 = vrot.slane %v4367, %v5274
    %v5276 = vlaneseq
    %v5277 = vshrl.u32 %v5276, 7
    %v5278 = vsub.s32 1, %v5277
    %v5279 = vrot.slane %v4367, %v5278
    %v5280 = vlaneseq
    %v5281 = vshrl.u32 %v5280, 7
    %v5282 = vsub.s32 2, %v5281
    %v5283 = vrot.slane %v4367, %v5282
    %v5284 = vlaneseq
    %v5285 = vshrl.u32 %v5284, 7
    %v5286 = vsub.s32 3, %v5285
    %v5287 = vrot.slane %v4367, %v5286
    %v5288 = vlaneseq
    %v5289 = vshrl.u32 %v5288, 7
    %v5290 = vsub.s32 4, %v5289
    %v5291 = vrot.slane %v4367, %v5290
    %v5292 = vlaneseq
    %v5293 = vshrl.u32 %v5292, 7
    %v5294 = vsub.s32 5, %v5293
    %v5295 = vrot.slane %v4367, %v5294
    %v5296 = vlaneseq
    %v5297 = vshrl.u32 %v5296, 7
    %v5298 = vsub.s32 6, %v5297
    %v5299 = vrot.slane %v4367, %v5298
    %v5300 = vlaneseq
    %v5301 = vshrl.u32 %v5300, 7
    %v5302 = vsub.s32 7, %v5301
    %v5303 = vrot.slane %v4367, %v5302
    %v5304 = vlaneseq
    %v5305 = vshrl.u32 %v5304, 7
    %v5306 = vsub.s32 0, %v5305
    %v5307 = vrot.slane %v4369, %v5306
    %v5308 = vlaneseq
    %v5309 = vshrl.u32 %v5308, 7
    %v5310 = vsub.s32 1, %v5309
    %v5311 = vrot.slane %v4369, %v5310
    %v5312 = vlaneseq
    %v5313 = vshrl.u32 %v5312, 7
    %v5314 = vsub.s32 2, %v5313
    %v5315 = vrot.slane %v4369, %v5314
    %v5316 = vlaneseq
    %v5317 = vshrl.u32 %v5316, 7
    %v5318 = vsub.s32 3, %v5317
    %v5319 = vrot.slane %v4369, %v5318
    %v5320 = vlaneseq
    %v5321 = vshrl.u32 %v5320, 7
    %v5322 = vsub.s32 4, %v5321
    %v5323 = vrot.slane %v4369, %v5322
    %v5324 = vlaneseq
    %v5325 = vshrl.u32 %v5324, 7
    %v5326 = vsub.s32 5, %v5325
    %v5327 = vrot.slane %v4369, %v5326
    %v5328 = vlaneseq
    %v5329 = vshrl.u32 %v5328, 7
    %v5330 = vsub.s32 6, %v5329
    %v5331 = vrot.slane %v4369, %v5330
    %v5332 = vlaneseq
    %v5333 = vshrl.u32 %v5332, 7
    %v5334 = vsub.s32 7, %v5333
    %v5335 = vrot.slane %v4369, %v5334
    %v5336 = vlaneseq
    %v5337 = vshrl.u32 %v5336, 7
    %v5338 = vsub.s32 0, %v5337
    %v5339 = vrot.slane %v4371, %v5338
    %v5340 = vlaneseq
    %v5341 = vshrl.u32 %v5340, 7
    %v5342 = vsub.s32 1, %v5341
    %v5343 = vrot.slane %v4371, %v5342
    %v5344 = vlaneseq
    %v5345 = vshrl.u32 %v5344, 7
    %v5346 = vsub.s32 2, %v5345
    %v5347 = vrot.slane %v4371, %v5346
    %v5348 = vlaneseq
    %v5349 = vshrl.u32 %v5348, 7
    %v5350 = vsub.s32 3, %v5349
    %v5351 = vrot.slane %v4371, %v5350
    %v5352 = vlaneseq
    %v5353 = vshrl.u32 %v5352, 7
    %v5354 = vsub.s32 4, %v5353
    %v5355 = vrot.slane %v4371, %v5354
    %v5356 = vlaneseq
    %v5357 = vshrl.u32 %v5356, 7
    %v5358 = vsub.s32 5, %v5357
    %v5359 = vrot.slane %v4371, %v5358
    %v5360 = vlaneseq
    %v5361 = vshrl.u32 %v5360, 7
    %v5362 = vsub.s32 6, %v5361
    %v5363 = vrot.slane %v4371, %v5362
    %v5364 = vlaneseq
    %v5365 = vshrl.u32 %v5364, 7
    %v5366 = vsub.s32 7, %v5365
    %v5367 = vrot.slane %v4371, %v5366
    %v5368 = vlaneseq
    %v5369 = vshrl.u32 %v5368, 7
    %v5370 = vsub.s32 0, %v5369
    %v5371 = vrot.slane %v4373, %v5370
    %v5372 = vlaneseq
    %v5373 = vshrl.u32 %v5372, 7
    %v5374 = vsub.s32 1, %v5373
    %v5375 = vrot.slane %v4373, %v5374
    %v5376 = vlaneseq
    %v5377 = vshrl.u32 %v5376, 7
    %v5378 = vsub.s32 2, %v5377
    %v5379 = vrot.slane %v4373, %v5378
    %v5380 = vlaneseq
    %v5381 = vshrl.u32 %v5380, 7
    %v5382 = vsub.s32 3, %v5381
    %v5383 = vrot.slane %v4373, %v5382
    %v5384 = vlaneseq
    %v5385 = vshrl.u32 %v5384, 7
    %v5386 = vsub.s32 4, %v5385
    %v5387 = vrot.slane %v4373, %v5386
    %v5388 = vlaneseq
    %v5389 = vshrl.u32 %v5388, 7
    %v5390 = vsub.s32 5, %v5389
    %v5391 = vrot.slane %v4373, %v5390
    %v5392 = vlaneseq
    %v5393 = vshrl.u32 %v5392, 7
    %v5394 = vsub.s32 6, %v5393
    %v5395 = vrot.slane %v4373, %v5394
    %v5396 = vlaneseq
    %v5397 = vshrl.u32 %v5396, 7
    %v5398 = vsub.s32 7, %v5397
    %v5399 = vrot.slane %v4373, %v5398
    %v5400 = vlaneseq
    %v5401 = vshrl.u32 %v5400, 7
    %v5402 = vsub.s32 0, %v5401
    %v5403 = vrot.slane %v4375, %v5402
    %v5404 = vlaneseq
    %v5405 = vshrl.u32 %v5404, 7
    %v5406 = vsub.s32 1, %v5405
    %v5407 = vrot.slane %v4375, %v5406
    %v5408 = vlaneseq
    %v5409 = vshrl.u32 %v5408, 7
    %v5410 = vsub.s32 2, %v5409
    %v5411 = vrot.slane %v4375, %v5410
    %v5412 = vlaneseq
    %v5413 = vshrl.u32 %v5412, 7
    %v5414 = vsub.s32 3, %v5413
    %v5415 = vrot.slane %v4375, %v5414
    %v5416 = vlaneseq
    %v5417 = vshrl.u32 %v5416, 7
    %v5418 = vsub.s32 4, %v5417
    %v5419 = vrot.slane %v4375, %v5418
    %v5420 = vlaneseq
    %v5421 = vshrl.u32 %v5420, 7
    %v5422 = vsub.s32 5, %v5421
    %v5423 = vrot.slane %v4375, %v5422
    %v5424 = vlaneseq
    %v5425 = vshrl.u32 %v5424, 7
    %v5426 = vsub.s32 6, %v5425
    %v5427 = vrot.slane %v4375, %v5426
    %v5428 = vlaneseq
    %v5429 = vshrl.u32 %v5428, 7
    %v5430 = vsub.s32 7, %v5429
    %v5431 = vrot.slane %v4375, %v5430
    %v5432 = vcombine.low %v4411, %v4415
    %v5433 = vcombine.low %v4419, %v4423
    %v5434 = vcombine.low %v4427, %v4431
    %v5435 = vcombine.low %v4435, %v4439
    %v5437 = vunpack.c.l.s4 1966171168
    %v5438 = vunpack.c.0.s8 %v5437
    %v5439 = vlaneseq
    %v5440 = vshrl.u32 %v5439, 7
    %v5441 = vsub.s32 %v5438, %v5440
    %v5442 = vrot.slane %v5432, %v5441
    %v5444 = vunpack.c.l.s4 1966171168
    %v5445 = vunpack.c.0.s8 %v5444
    %v5446 = vlaneseq
    %v5447 = vshrl.u32 %v5446, 7
    %v5448 = vsub.s32 %v5445, %v5447
    %v5449 = vrot.slane %v5433, %v5448
    %v5451 = vunpack.c.l.s4 1966171168
    %v5452 = vunpack.c.0.s8 %v5451
    %v5453 = vlaneseq
    %v5454 = vshrl.u32 %v5453, 7
    %v5455 = vsub.s32 %v5452, %v5454
    %v5456 = vrot.slane %v5434, %v5455
    %v5458 = vunpack.c.l.s4 1966171168
    %v5459 = vunpack.c.0.s8 %v5458
    %v5460 = vlaneseq
    %v5461 = vshrl.u32 %v5460, 7
    %v5462 = vsub.s32 %v5459, %v5461
    %v5463 = vrot.slane %v5435, %v5462
    %v5464 = vcombine.low %v5442, %v5449
    %v5465 = vcombine.low %v5456, %v5463
    %v5467 = vunpack.c.l.s4 1966171168
    %v5468 = vunpack.c.0.s8 %v5467
    %v5469 = vlaneseq
    %v5470 = vshrl.u32 %v5469, 7
    %v5471 = vsub.s32 %v5468, %v5470
    %v5472 = vrot.slane %v5464, %v5471
    %v5474 = vunpack.c.l.s4 1966171168
    %v5475 = vunpack.c.0.s8 %v5474
    %v5476 = vlaneseq
    %v5477 = vshrl.u32 %v5476, 7
    %v5478 = vsub.s32 %v5475, %v5477
    %v5479 = vrot.slane %v5465, %v5478
    %v5480 = vcombine.low %v5472, %v5479
    %v5481 = vcombine.low %v4443, %v4447
    %v5482 = vcombine.low %v4451, %v4455
    %v5483 = vcombine.low %v4459, %v4463
    %v5484 = vcombine.low %v4467, %v4471
    %v5486 = vunpack.c.l.s4 1966171168
    %v5487 = vunpack.c.0.s8 %v5486
    %v5488 = vlaneseq
    %v5489 = vshrl.u32 %v5488, 7
    %v5490 = vsub.s32 %v5487, %v5489
    %v5491 = vrot.slane %v5481, %v5490
    %v5493 = vunpack.c.l.s4 1966171168
    %v5494 = vunpack.c.0.s8 %v5493
    %v5495 = vlaneseq
    %v5496 = vshrl.u32 %v5495, 7
    %v5497 = vsub.s32 %v5494, %v5496
    %v5498 = vrot.slane %v5482, %v5497
    %v5500 = vunpack.c.l.s4 1966171168
    %v5501 = vunpack.c.0.s8 %v5500
    %v5502 = vlaneseq
    %v5503 = vshrl.u32 %v5502, 7
    %v5504 = vsub.s32 %v5501, %v5503
    %v5505 = vrot.slane %v5483, %v5504
    %v5507 = vunpack.c.l.s4 1966171168
    %v5508 = vunpack.c.0.s8 %v5507
    %v5509 = vlaneseq
    %v5510 = vshrl.u32 %v5509, 7
    %v5511 = vsub.s32 %v5508, %v5510
    %v5512 = vrot.slane %v5484, %v5511
    %v5513 = vcombine.low %v5491, %v5498
    %v5514 = vcombine.low %v5505, %v5512
    %v5516 = vunpack.c.l.s4 1966171168
    %v5517 = vunpack.c.0.s8 %v5516
    %v5518 = vlaneseq
    %v5519 = vshrl.u32 %v5518, 7
    %v5520 = vsub.s32 %v5517, %v5519
    %v5521 = vrot.slane %v5513, %v5520
    %v5523 = vunpack.c.l.s4 1966171168
    %v5524 = vunpack.c.0.s8 %v5523
    %v5525 = vlaneseq
    %v5526 = vshrl.u32 %v5525, 7
    %v5527 = vsub.s32 %v5524, %v5526
    %v5528 = vrot.slane %v5514, %v5527
    %v5529 = vcombine.low %v5521, %v5528
    %v5530 = vcombine.low %v4475, %v4479
    %v5531 = vcombine.low %v4483, %v4487
    %v5532 = vcombine.low %v4491, %v4495
    %v5533 = vcombine.low %v4499, %v4503
    %v5535 = vunpack.c.l.s4 1966171168
    %v5536 = vunpack.c.0.s8 %v5535
    %v5537 = vlaneseq
    %v5538 = vshrl.u32 %v5537, 7
    %v5539 = vsub.s32 %v5536, %v5538
    %v5540 = vrot.slane %v5530, %v5539
    %v5542 = vunpack.c.l.s4 1966171168
    %v5543 = vunpack.c.0.s8 %v5542
    %v5544 = vlaneseq
    %v5545 = vshrl.u32 %v5544, 7
    %v5546 = vsub.s32 %v5543, %v5545
    %v5547 = vrot.slane %v5531, %v5546
    %v5549 = vunpack.c.l.s4 1966171168
    %v5550 = vunpack.c.0.s8 %v5549
    %v5551 = vlaneseq
    %v5552 = vshrl.u32 %v5551, 7
    %v5553 = vsub.s32 %v5550, %v5552
    %v5554 = vrot.slane %v5532, %v5553
    %v5556 = vunpack.c.l.s4 1966171168
    %v5557 = vunpack.c.0.s8 %v5556
    %v5558 = vlaneseq
    %v5559 = vshrl.u32 %v5558, 7
    %v5560 = vsub.s32 %v5557, %v5559
    %v5561 = vrot.slane %v5533, %v5560
    %v5562 = vcombine.low %v5540, %v5547
    %v5563 = vcombine.low %v5554, %v5561
    %v5565 = vunpack.c.l.s4 1966171168
    %v5566 = vunpack.c.0.s8 %v5565
    %v5567 = vlaneseq
    %v5568 = vshrl.u32 %v5567, 7
    %v5569 = vsub.s32 %v5566, %v5568
    %v5570 = vrot.slane %v5562, %v5569
    %v5572 = vunpack.c.l.s4 1966171168
    %v5573 = vunpack.c.0.s8 %v5572
    %v5574 = vlaneseq
    %v5575 = vshrl.u32 %v5574, 7
    %v5576 = vsub.s32 %v5573, %v5575
    %v5577 = vrot.slane %v5563, %v5576
    %v5578 = vcombine.low %v5570, %v5577
    %v5579 = vcombine.low %v4507, %v4511
    %v5580 = vcombine.low %v4515, %v4519
    %v5581 = vcombine.low %v4523, %v4527
    %v5582 = vcombine.low %v4531, %v4535
    %v5584 = vunpack.c.l.s4 1966171168
    %v5585 = vunpack.c.0.s8 %v5584
    %v5586 = vlaneseq
    %v5587 = vshrl.u32 %v5586, 7
    %v5588 = vsub.s32 %v5585, %v5587
    %v5589 = vrot.slane %v5579, %v5588
    %v5591 = vunpack.c.l.s4 1966171168
    %v5592 = vunpack.c.0.s8 %v5591
    %v5593 = vlaneseq
    %v5594 = vshrl.u32 %v5593, 7
    %v5595 = vsub.s32 %v5592, %v5594
    %v5596 = vrot.slane %v5580, %v5595
    %v5598 = vunpack.c.l.s4 1966171168
    %v5599 = vunpack.c.0.s8 %v5598
    %v5600 = vlaneseq
    %v5601 = vshrl.u32 %v5600, 7
    %v5602 = vsub.s32 %v5599, %v5601
    %v5603 = vrot.slane %v5581, %v5602
    %v5605 = vunpack.c.l.s4 1966171168
    %v5606 = vunpack.c.0.s8 %v5605
    %v5607 = vlaneseq
    %v5608 = vshrl.u32 %v5607, 7
    %v5609 = vsub.s32 %v5606, %v5608
    %v5610 = vrot.slane %v5582, %v5609
    %v5611 = vcombine.low %v5589, %v5596
    %v5612 = vcombine.low %v5603, %v5610
    %v5614 = vunpack.c.l.s4 1966171168
    %v5615 = vunpack.c.0.s8 %v5614
    %v5616 = vlaneseq
    %v5617 = vshrl.u32 %v5616, 7
    %v5618 = vsub.s32 %v5615, %v5617
    %v5619 = vrot.slane %v5611, %v5618
    %v5621 = vunpack.c.l.s4 1966171168
    %v5622 = vunpack.c.0.s8 %v5621
    %v5623 = vlaneseq
    %v5624 = vshrl.u32 %v5623, 7
    %v5625 = vsub.s32 %v5622, %v5624
    %v5626 = vrot.slane %v5612, %v5625
    %v5627 = vcombine.low %v5619, %v5626
    %v5628 = vcombine.low %v4539, %v4543
    %v5629 = vcombine.low %v4547, %v4551
    %v5630 = vcombine.low %v4555, %v4559
    %v5631 = vcombine.low %v4563, %v4567
    %v5633 = vunpack.c.l.s4 1966171168
    %v5634 = vunpack.c.0.s8 %v5633
    %v5635 = vlaneseq
    %v5636 = vshrl.u32 %v5635, 7
    %v5637 = vsub.s32 %v5634, %v5636
    %v5638 = vrot.slane %v5628, %v5637
    %v5640 = vunpack.c.l.s4 1966171168
    %v5641 = vunpack.c.0.s8 %v5640
    %v5642 = vlaneseq
    %v5643 = vshrl.u32 %v5642, 7
    %v5644 = vsub.s32 %v5641, %v5643
    %v5645 = vrot.slane %v5629, %v5644
    %v5647 = vunpack.c.l.s4 1966171168
    %v5648 = vunpack.c.0.s8 %v5647
    %v5649 = vlaneseq
    %v5650 = vshrl.u32 %v5649, 7
    %v5651 = vsub.s32 %v5648, %v5650
    %v5652 = vrot.slane %v5630, %v5651
    %v5654 = vunpack.c.l.s4 1966171168
    %v5655 = vunpack.c.0.s8 %v5654
    %v5656 = vlaneseq
    %v5657 = vshrl.u32 %v5656, 7
    %v5658 = vsub.s32 %v5655, %v5657
    %v5659 = vrot.slane %v5631, %v5658
    %v5660 = vcombine.low %v5638, %v5645
    %v5661 = vcombine.low %v5652, %v5659
    %v5663 = vunpack.c.l.s4 1966171168
    %v5664 = vunpack.c.0.s8 %v5663
    %v5665 = vlaneseq
    %v5666 = vshrl.u32 %v5665, 7
    %v5667 = vsub.s32 %v5664, %v5666
    %v5668 = vrot.slane %v5660, %v5667
    %v5670 = vunpack.c.l.s4 1966171168
    %v5671 = vunpack.c.0.s8 %v5670
    %v5672 = vlaneseq
    %v5673 = vshrl.u32 %v5672, 7
    %v5674 = vsub.s32 %v5671, %v5673
    %v5675 = vrot.slane %v5661, %v5674
    %v5676 = vcombine.low %v5668, %v5675
    %v5677 = vcombine.low %v4571, %v4575
    %v5678 = vcombine.low %v4579, %v4583
    %v5679 = vcombine.low %v4587, %v4591
    %v5680 = vcombine.low %v4595, %v4599
    %v5682 = vunpack.c.l.s4 1966171168
    %v5683 = vunpack.c.0.s8 %v5682
    %v5684 = vlaneseq
    %v5685 = vshrl.u32 %v5684, 7
    %v5686 = vsub.s32 %v5683, %v5685
    %v5687 = vrot.slane %v5677, %v5686
    %v5689 = vunpack.c.l.s4 1966171168
    %v5690 = vunpack.c.0.s8 %v5689
    %v5691 = vlaneseq
    %v5692 = vshrl.u32 %v5691, 7
    %v5693 = vsub.s32 %v5690, %v5692
    %v5694 = vrot.slane %v5678, %v5693
    %v5696 = vunpack.c.l.s4 1966171168
    %v5697 = vunpack.c.0.s8 %v5696
    %v5698 = vlaneseq
    %v5699 = vshrl.u32 %v5698, 7
    %v5700 = vsub.s32 %v5697, %v5699
    %v5701 = vrot.slane %v5679, %v5700
    %v5703 = vunpack.c.l.s4 1966171168
    %v5704 = vunpack.c.0.s8 %v5703
    %v5705 = vlaneseq
    %v5706 = vshrl.u32 %v5705, 7
    %v5707 = vsub.s32 %v5704, %v5706
    %v5708 = vrot.slane %v5680, %v5707
    %v5709 = vcombine.low %v5687, %v5694
    %v5710 = vcombine.low %v5701, %v5708
    %v5712 = vunpack.c.l.s4 1966171168
    %v5713 = vunpack.c.0.s8 %v5712
    %v5714 = vlaneseq
    %v5715 = vshrl.u32 %v5714, 7
    %v5716 = vsub.s32 %v5713, %v5715
    %v5717 = vrot.slane %v5709, %v5716
    %v5719 = vunpack.c.l.s4 1966171168
    %v5720 = vunpack.c.0.s8 %v5719
    %v5721 = vlaneseq
    %v5722 = vshrl.u32 %v5721, 7
    %v5723 = vsub.s32 %v5720, %v5722
    %v5724 = vrot.slane %v5710, %v5723
    %v5725 = vcombine.low %v5717, %v5724
    %v5726 = vcombine.low %v4603, %v4607
    %v5727 = vcombine.low %v4611, %v4615
    %v5728 = vcombine.low %v4619, %v4623
    %v5729 = vcombine.low %v4627, %v4631
    %v5731 = vunpack.c.l.s4 1966171168
    %v5732 = vunpack.c.0.s8 %v5731
    %v5733 = vlaneseq
    %v5734 = vshrl.u32 %v5733, 7
    %v5735 = vsub.s32 %v5732, %v5734
    %v5736 = vrot.slane %v5726, %v5735
    %v5738 = vunpack.c.l.s4 1966171168
    %v5739 = vunpack.c.0.s8 %v5738
    %v5740 = vlaneseq
    %v5741 = vshrl.u32 %v5740, 7
    %v5742 = vsub.s32 %v5739, %v5741
    %v5743 = vrot.slane %v5727, %v5742
    %v5745 = vunpack.c.l.s4 1966171168
    %v5746 = vunpack.c.0.s8 %v5745
    %v5747 = vlaneseq
    %v5748 = vshrl.u32 %v5747, 7
    %v5749 = vsub.s32 %v5746, %v5748
    %v5750 = vrot.slane %v5728, %v5749
    %v5752 = vunpack.c.l.s4 1966171168
    %v5753 = vunpack.c.0.s8 %v5752
    %v5754 = vlaneseq
    %v5755 = vshrl.u32 %v5754, 7
    %v5756 = vsub.s32 %v5753, %v5755
    %v5757 = vrot.slane %v5729, %v5756
    %v5758 = vcombine.low %v5736, %v5743
    %v5759 = vcombine.low %v5750, %v5757
    %v5761 = vunpack.c.l.s4 1966171168
    %v5762 = vunpack.c.0.s8 %v5761
    %v5763 = vlaneseq
    %v5764 = vshrl.u32 %v5763, 7
    %v5765 = vsub.s32 %v5762, %v5764
    %v5766 = vrot.slane %v5758, %v5765
    %v5768 = vunpack.c.l.s4 1966171168
    %v5769 = vunpack.c.0.s8 %v5768
    %v5770 = vlaneseq
    %v5771 = vshrl.u32 %v5770, 7
    %v5772 = vsub.s32 %v5769, %v5771
    %v5773 = vrot.slane %v5759, %v5772
    %v5774 = vcombine.low %v5766, %v5773
    %v5775 = vcombine.low %v4635, %v4639
    %v5776 = vcombine.low %v4643, %v4647
    %v5777 = vcombine.low %v4651, %v4655
    %v5778 = vcombine.low %v4659, %v4663
    %v5780 = vunpack.c.l.s4 1966171168
    %v5781 = vunpack.c.0.s8 %v5780
    %v5782 = vlaneseq
    %v5783 = vshrl.u32 %v5782, 7
    %v5784 = vsub.s32 %v5781, %v5783
    %v5785 = vrot.slane %v5775, %v5784
    %v5787 = vunpack.c.l.s4 1966171168
    %v5788 = vunpack.c.0.s8 %v5787
    %v5789 = vlaneseq
    %v5790 = vshrl.u32 %v5789, 7
    %v5791 = vsub.s32 %v5788, %v5790
    %v5792 = vrot.slane %v5776, %v5791
    %v5794 = vunpack.c.l.s4 1966171168
    %v5795 = vunpack.c.0.s8 %v5794
    %v5796 = vlaneseq
    %v5797 = vshrl.u32 %v5796, 7
    %v5798 = vsub.s32 %v5795, %v5797
    %v5799 = vrot.slane %v5777, %v5798
    %v5801 = vunpack.c.l.s4 1966171168
    %v5802 = vunpack.c.0.s8 %v5801
    %v5803 = vlaneseq
    %v5804 = vshrl.u32 %v5803, 7
    %v5805 = vsub.s32 %v5802, %v5804
    %v5806 = vrot.slane %v5778, %v5805
    %v5807 = vcombine.low %v5785, %v5792
    %v5808 = vcombine.low %v5799, %v5806
    %v5810 = vunpack.c.l.s4 1966171168
    %v5811 = vunpack.c.0.s8 %v5810
    %v5812 = vlaneseq
    %v5813 = vshrl.u32 %v5812, 7
    %v5814 = vsub.s32 %v5811, %v5813
    %v5815 = vrot.slane %v5807, %v5814
    %v5817 = vunpack.c.l.s4 1966171168
    %v5818 = vunpack.c.0.s8 %v5817
    %v5819 = vlaneseq
    %v5820 = vshrl.u32 %v5819, 7
    %v5821 = vsub.s32 %v5818, %v5820
    %v5822 = vrot.slane %v5808, %v5821
    %v5823 = vcombine.low %v5815, %v5822
    %v5824 = vcombine.low %v4667, %v4671
    %v5825 = vcombine.low %v4675, %v4679
    %v5826 = vcombine.low %v4683, %v4687
    %v5827 = vcombine.low %v4691, %v4695
    %v5829 = vunpack.c.l.s4 1966171168
    %v5830 = vunpack.c.0.s8 %v5829
    %v5831 = vlaneseq
    %v5832 = vshrl.u32 %v5831, 7
    %v5833 = vsub.s32 %v5830, %v5832
    %v5834 = vrot.slane %v5824, %v5833
    %v5836 = vunpack.c.l.s4 1966171168
    %v5837 = vunpack.c.0.s8 %v5836
    %v5838 = vlaneseq
    %v5839 = vshrl.u32 %v5838, 7
    %v5840 = vsub.s32 %v5837, %v5839
    %v5841 = vrot.slane %v5825, %v5840
    %v5843 = vunpack.c.l.s4 1966171168
    %v5844 = vunpack.c.0.s8 %v5843
    %v5845 = vlaneseq
    %v5846 = vshrl.u32 %v5845, 7
    %v5847 = vsub.s32 %v5844, %v5846
    %v5848 = vrot.slane %v5826, %v5847
    %v5850 = vunpack.c.l.s4 1966171168
    %v5851 = vunpack.c.0.s8 %v5850
    %v5852 = vlaneseq
    %v5853 = vshrl.u32 %v5852, 7
    %v5854 = vsub.s32 %v5851, %v5853
    %v5855 = vrot.slane %v5827, %v5854
    %v5856 = vcombine.low %v5834, %v5841
    %v5857 = vcombine.low %v5848, %v5855
    %v5859 = vunpack.c.l.s4 1966171168
    %v5860 = vunpack.c.0.s8 %v5859
    %v5861 = vlaneseq
    %v5862 = vshrl.u32 %v5861, 7
    %v5863 = vsub.s32 %v5860, %v5862
    %v5864 = vrot.slane %v5856, %v5863
    %v5866 = vunpack.c.l.s4 1966171168
    %v5867 = vunpack.c.0.s8 %v5866
    %v5868 = vlaneseq
    %v5869 = vshrl.u32 %v5868, 7
    %v5870 = vsub.s32 %v5867, %v5869
    %v5871 = vrot.slane %v5857, %v5870
    %v5872 = vcombine.low %v5864, %v5871
    %v5873 = vcombine.low %v4699, %v4703
    %v5874 = vcombine.low %v4707, %v4711
    %v5875 = vcombine.low %v4715, %v4719
    %v5876 = vcombine.low %v4723, %v4727
    %v5878 = vunpack.c.l.s4 1966171168
    %v5879 = vunpack.c.0.s8 %v5878
    %v5880 = vlaneseq
    %v5881 = vshrl.u32 %v5880, 7
    %v5882 = vsub.s32 %v5879, %v5881
    %v5883 = vrot.slane %v5873, %v5882
    %v5885 = vunpack.c.l.s4 1966171168
    %v5886 = vunpack.c.0.s8 %v5885
    %v5887 = vlaneseq
    %v5888 = vshrl.u32 %v5887, 7
    %v5889 = vsub.s32 %v5886, %v5888
    %v5890 = vrot.slane %v5874, %v5889
    %v5892 = vunpack.c.l.s4 1966171168
    %v5893 = vunpack.c.0.s8 %v5892
    %v5894 = vlaneseq
    %v5895 = vshrl.u32 %v5894, 7
    %v5896 = vsub.s32 %v5893, %v5895
    %v5897 = vrot.slane %v5875, %v5896
    %v5899 = vunpack.c.l.s4 1966171168
    %v5900 = vunpack.c.0.s8 %v5899
    %v5901 = vlaneseq
    %v5902 = vshrl.u32 %v5901, 7
    %v5903 = vsub.s32 %v5900, %v5902
    %v5904 = vrot.slane %v5876, %v5903
    %v5905 = vcombine.low %v5883, %v5890
    %v5906 = vcombine.low %v5897, %v5904
    %v5908 = vunpack.c.l.s4 1966171168
    %v5909 = vunpack.c.0.s8 %v5908
    %v5910 = vlaneseq
    %v5911 = vshrl.u32 %v5910, 7
    %v5912 = vsub.s32 %v5909, %v5911
    %v5913 = vrot.slane %v5905, %v5912
    %v5915 = vunpack.c.l.s4 1966171168
    %v5916 = vunpack.c.0.s8 %v5915
    %v5917 = vlaneseq
    %v5918 = vshrl.u32 %v5917, 7
    %v5919 = vsub.s32 %v5916, %v5918
    %v5920 = vrot.slane %v5906, %v5919
    %v5921 = vcombine.low %v5913, %v5920
    %v5922 = vcombine.low %v4731, %v4735
    %v5923 = vcombine.low %v4739, %v4743
    %v5924 = vcombine.low %v4747, %v4751
    %v5925 = vcombine.low %v4755, %v4759
    %v5927 = vunpack.c.l.s4 1966171168
    %v5928 = vunpack.c.0.s8 %v5927
    %v5929 = vlaneseq
    %v5930 = vshrl.u32 %v5929, 7
    %v5931 = vsub.s32 %v5928, %v5930
    %v5932 = vrot.slane %v5922, %v5931
    %v5934 = vunpack.c.l.s4 1966171168
    %v5935 = vunpack.c.0.s8 %v5934
    %v5936 = vlaneseq
    %v5937 = vshrl.u32 %v5936, 7
    %v5938 = vsub.s32 %v5935, %v5937
    %v5939 = vrot.slane %v5923, %v5938
    %v5941 = vunpack.c.l.s4 1966171168
    %v5942 = vunpack.c.0.s8 %v5941
    %v5943 = vlaneseq
    %v5944 = vshrl.u32 %v5943, 7
    %v5945 = vsub.s32 %v5942, %v5944
    %v5946 = vrot.slane %v5924, %v5945
    %v5948 = vunpack.c.l.s4 1966171168
    %v5949 = vunpack.c.0.s8 %v5948
    %v5950 = vlaneseq
    %v5951 = vshrl.u32 %v5950, 7
    %v5952 = vsub.s32 %v5949, %v5951
    %v5953 = vrot.slane %v5925, %v5952
    %v5954 = vcombine.low %v5932, %v5939
    %v5955 = vcombine.low %v5946, %v5953
    %v5957 = vunpack.c.l.s4 1966171168
    %v5958 = vunpack.c.0.s8 %v5957
    %v5959 = vlaneseq
    %v5960 = vshrl.u32 %v5959, 7
    %v5961 = vsub.s32 %v5958, %v5960
    %v5962 = vrot.slane %v5954, %v5961
    %v5964 = vunpack.c.l.s4 1966171168
    %v5965 = vunpack.c.0.s8 %v5964
    %v5966 = vlaneseq
    %v5967 = vshrl.u32 %v5966, 7
    %v5968 = vsub.s32 %v5965, %v5967
    %v5969 = vrot.slane %v5955, %v5968
    %v5970 = vcombine.low %v5962, %v5969
    %v5971 = vcombine.low %v4763, %v4767
    %v5972 = vcombine.low %v4771, %v4775
    %v5973 = vcombine.low %v4779, %v4783
    %v5974 = vcombine.low %v4787, %v4791
    %v5976 = vunpack.c.l.s4 1966171168
    %v5977 = vunpack.c.0.s8 %v5976
    %v5978 = vlaneseq
    %v5979 = vshrl.u32 %v5978, 7
    %v5980 = vsub.s32 %v5977, %v5979
    %v5981 = vrot.slane %v5971, %v5980
    %v5983 = vunpack.c.l.s4 1966171168
    %v5984 = vunpack.c.0.s8 %v5983
    %v5985 = vlaneseq
    %v5986 = vshrl.u32 %v5985, 7
    %v5987 = vsub.s32 %v5984, %v5986
    %v5988 = vrot.slane %v5972, %v5987
    %v5990 = vunpack.c.l.s4 1966171168
    %v5991 = vunpack.c.0.s8 %v5990
    %v5992 = vlaneseq
    %v5993 = vshrl.u32 %v5992, 7
    %v5994 = vsub.s32 %v5991, %v5993
    %v5995 = vrot.slane %v5973, %v5994
    %v5997 = vunpack.c.l.s4 1966171168
    %v5998 = vunpack.c.0.s8 %v5997
    %v5999 = vlaneseq
    %v6000 = vshrl.u32 %v5999, 7
    %v6001 = vsub.s32 %v5998, %v6000
    %v6002 = vrot.slane %v5974, %v6001
    %v6003 = vcombine.low %v5981, %v5988
    %v6004 = vcombine.low %v5995, %v6002
    %v6006 = vunpack.c.l.s4 1966171168
    %v6007 = vunpack.c.0.s8 %v6006
    %v6008 = vlaneseq
    %v6009 = vshrl.u32 %v6008, 7
    %v6010 = vsub.s32 %v6007, %v6009
    %v6011 = vrot.slane %v6003, %v6010
    %v6013 = vunpack.c.l.s4 1966171168
    %v6014 = vunpack.c.0.s8 %v6013
    %v6015 = vlaneseq
    %v6016 = vshrl.u32 %v6015, 7
    %v6017 = vsub.s32 %v6014, %v6016
    %v6018 = vrot.slane %v6004, %v6017
    %v6019 = vcombine.low %v6011, %v6018
    %v6020 = vcombine.low %v4795, %v4799
    %v6021 = vcombine.low %v4803, %v4807
    %v6022 = vcombine.low %v4811, %v4815
    %v6023 = vcombine.low %v4819, %v4823
    %v6025 = vunpack.c.l.s4 1966171168
    %v6026 = vunpack.c.0.s8 %v6025
    %v6027 = vlaneseq
    %v6028 = vshrl.u32 %v6027, 7
    %v6029 = vsub.s32 %v6026, %v6028
    %v6030 = vrot.slane %v6020, %v6029
    %v6032 = vunpack.c.l.s4 1966171168
    %v6033 = vunpack.c.0.s8 %v6032
    %v6034 = vlaneseq
    %v6035 = vshrl.u32 %v6034, 7
    %v6036 = vsub.s32 %v6033, %v6035
    %v6037 = vrot.slane %v6021, %v6036
    %v6039 = vunpack.c.l.s4 1966171168
    %v6040 = vunpack.c.0.s8 %v6039
    %v6041 = vlaneseq
    %v6042 = vshrl.u32 %v6041, 7
    %v6043 = vsub.s32 %v6040, %v6042
    %v6044 = vrot.slane %v6022, %v6043
    %v6046 = vunpack.c.l.s4 1966171168
    %v6047 = vunpack.c.0.s8 %v6046
    %v6048 = vlaneseq
    %v6049 = vshrl.u32 %v6048, 7
    %v6050 = vsub.s32 %v6047, %v6049
    %v6051 = vrot.slane %v6023, %v6050
    %v6052 = vcombine.low %v6030, %v6037
    %v6053 = vcombine.low %v6044, %v6051
    %v6055 = vunpack.c.l.s4 1966171168
    %v6056 = vunpack.c.0.s8 %v6055
    %v6057 = vlaneseq
    %v6058 = vshrl.u32 %v6057, 7
    %v6059 = vsub.s32 %v6056, %v6058
    %v6060 = vrot.slane %v6052, %v6059
    %v6062 = vunpack.c.l.s4 1966171168
    %v6063 = vunpack.c.0.s8 %v6062
    %v6064 = vlaneseq
    %v6065 = vshrl.u32 %v6064, 7
    %v6066 = vsub.s32 %v6063, %v6065
    %v6067 = vrot.slane %v6053, %v6066
    %v6068 = vcombine.low %v6060, %v6067
    %v6069 = vcombine.low %v4827, %v4831
    %v6070 = vcombine.low %v4835, %v4839
    %v6071 = vcombine.low %v4843, %v4847
    %v6072 = vcombine.low %v4851, %v4855
    %v6074 = vunpack.c.l.s4 1966171168
    %v6075 = vunpack.c.0.s8 %v6074
    %v6076 = vlaneseq
    %v6077 = vshrl.u32 %v6076, 7
    %v6078 = vsub.s32 %v6075, %v6077
    %v6079 = vrot.slane %v6069, %v6078
    %v6081 = vunpack.c.l.s4 1966171168
    %v6082 = vunpack.c.0.s8 %v6081
    %v6083 = vlaneseq
    %v6084 = vshrl.u32 %v6083, 7
    %v6085 = vsub.s32 %v6082, %v6084
    %v6086 = vrot.slane %v6070, %v6085
    %v6088 = vunpack.c.l.s4 1966171168
    %v6089 = vunpack.c.0.s8 %v6088
    %v6090 = vlaneseq
    %v6091 = vshrl.u32 %v6090, 7
    %v6092 = vsub.s32 %v6089, %v6091
    %v6093 = vrot.slane %v6071, %v6092
    %v6095 = vunpack.c.l.s4 1966171168
    %v6096 = vunpack.c.0.s8 %v6095
    %v6097 = vlaneseq
    %v6098 = vshrl.u32 %v6097, 7
    %v6099 = vsub.s32 %v6096, %v6098
    %v6100 = vrot.slane %v6072, %v6099
    %v6101 = vcombine.low %v6079, %v6086
    %v6102 = vcombine.low %v6093, %v6100
    %v6104 = vunpack.c.l.s4 1966171168
    %v6105 = vunpack.c.0.s8 %v6104
    %v6106 = vlaneseq
    %v6107 = vshrl.u32 %v6106, 7
    %v6108 = vsub.s32 %v6105, %v6107
    %v6109 = vrot.slane %v6101, %v6108
    %v6111 = vunpack.c.l.s4 1966171168
    %v6112 = vunpack.c.0.s8 %v6111
    %v6113 = vlaneseq
    %v6114 = vshrl.u32 %v6113, 7
    %v6115 = vsub.s32 %v6112, %v6114
    %v6116 = vrot.slane %v6102, %v6115
    %v6117 = vcombine.low %v6109, %v6116
    %v6118 = vcombine.low %v4859, %v4863
    %v6119 = vcombine.low %v4867, %v4871
    %v6120 = vcombine.low %v4875, %v4879
    %v6121 = vcombine.low %v4883, %v4887
    %v6123 = vunpack.c.l.s4 1966171168
    %v6124 = vunpack.c.0.s8 %v6123
    %v6125 = vlaneseq
    %v6126 = vshrl.u32 %v6125, 7
    %v6127 = vsub.s32 %v6124, %v6126
    %v6128 = vrot.slane %v6118, %v6127
    %v6130 = vunpack.c.l.s4 1966171168
    %v6131 = vunpack.c.0.s8 %v6130
    %v6132 = vlaneseq
    %v6133 = vshrl.u32 %v6132, 7
    %v6134 = vsub.s32 %v6131, %v6133
    %v6135 = vrot.slane %v6119, %v6134
    %v6137 = vunpack.c.l.s4 1966171168
    %v6138 = vunpack.c.0.s8 %v6137
    %v6139 = vlaneseq
    %v6140 = vshrl.u32 %v6139, 7
    %v6141 = vsub.s32 %v6138, %v6140
    %v6142 = vrot.slane %v6120, %v6141
    %v6144 = vunpack.c.l.s4 1966171168
    %v6145 = vunpack.c.0.s8 %v6144
    %v6146 = vlaneseq
    %v6147 = vshrl.u32 %v6146, 7
    %v6148 = vsub.s32 %v6145, %v6147
    %v6149 = vrot.slane %v6121, %v6148
    %v6150 = vcombine.low %v6128, %v6135
    %v6151 = vcombine.low %v6142, %v6149
    %v6153 = vunpack.c.l.s4 1966171168
    %v6154 = vunpack.c.0.s8 %v6153
    %v6155 = vlaneseq
    %v6156 = vshrl.u32 %v6155, 7
    %v6157 = vsub.s32 %v6154, %v6156
    %v6158 = vrot.slane %v6150, %v6157
    %v6160 = vunpack.c.l.s4 1966171168
    %v6161 = vunpack.c.0.s8 %v6160
    %v6162 = vlaneseq
    %v6163 = vshrl.u32 %v6162, 7
    %v6164 = vsub.s32 %v6161, %v6163
    %v6165 = vrot.slane %v6151, %v6164
    %v6166 = vcombine.low %v6158, %v6165
    %v6167 = vcombine.low %v4891, %v4895
    %v6168 = vcombine.low %v4899, %v4903
    %v6169 = vcombine.low %v4907, %v4911
    %v6170 = vcombine.low %v4915, %v4919
    %v6172 = vunpack.c.l.s4 1966171168
    %v6173 = vunpack.c.0.s8 %v6172
    %v6174 = vlaneseq
    %v6175 = vshrl.u32 %v6174, 7
    %v6176 = vsub.s32 %v6173, %v6175
    %v6177 = vrot.slane %v6167, %v6176
    %v6179 = vunpack.c.l.s4 1966171168
    %v6180 = vunpack.c.0.s8 %v6179
    %v6181 = vlaneseq
    %v6182 = vshrl.u32 %v6181, 7
    %v6183 = vsub.s32 %v6180, %v6182
    %v6184 = vrot.slane %v6168, %v6183
    %v6186 = vunpack.c.l.s4 1966171168
    %v6187 = vunpack.c.0.s8 %v6186
    %v6188 = vlaneseq
    %v6189 = vshrl.u32 %v6188, 7
    %v6190 = vsub.s32 %v6187, %v6189
    %v6191 = vrot.slane %v6169, %v6190
    %v6193 = vunpack.c.l.s4 1966171168
    %v6194 = vunpack.c.0.s8 %v6193
    %v6195 = vlaneseq
    %v6196 = vshrl.u32 %v6195, 7
    %v6197 = vsub.s32 %v6194, %v6196
    %v6198 = vrot.slane %v6170, %v6197
    %v6199 = vcombine.low %v6177, %v6184
    %v6200 = vcombine.low %v6191, %v6198
    %v6202 = vunpack.c.l.s4 1966171168
    %v6203 = vunpack.c.0.s8 %v6202
    %v6204 = vlaneseq
    %v6205 = vshrl.u32 %v6204, 7
    %v6206 = vsub.s32 %v6203, %v6205
    %v6207 = vrot.slane %v6199, %v6206
    %v6209 = vunpack.c.l.s4 1966171168
    %v6210 = vunpack.c.0.s8 %v6209
    %v6211 = vlaneseq
    %v6212 = vshrl.u32 %v6211, 7
    %v6213 = vsub.s32 %v6210, %v6212
    %v6214 = vrot.slane %v6200, %v6213
    %v6215 = vcombine.low %v6207, %v6214
    %v6216 = vcombine.low %v4923, %v4927
    %v6217 = vcombine.low %v4931, %v4935
    %v6218 = vcombine.low %v4939, %v4943
    %v6219 = vcombine.low %v4947, %v4951
    %v6221 = vunpack.c.l.s4 1966171168
    %v6222 = vunpack.c.0.s8 %v6221
    %v6223 = vlaneseq
    %v6224 = vshrl.u32 %v6223, 7
    %v6225 = vsub.s32 %v6222, %v6224
    %v6226 = vrot.slane %v6216, %v6225
    %v6228 = vunpack.c.l.s4 1966171168
    %v6229 = vunpack.c.0.s8 %v6228
    %v6230 = vlaneseq
    %v6231 = vshrl.u32 %v6230, 7
    %v6232 = vsub.s32 %v6229, %v6231
    %v6233 = vrot.slane %v6217, %v6232
    %v6235 = vunpack.c.l.s4 1966171168
    %v6236 = vunpack.c.0.s8 %v6235
    %v6237 = vlaneseq
    %v6238 = vshrl.u32 %v6237, 7
    %v6239 = vsub.s32 %v6236, %v6238
    %v6240 = vrot.slane %v6218, %v6239
    %v6242 = vunpack.c.l.s4 1966171168
    %v6243 = vunpack.c.0.s8 %v6242
    %v6244 = vlaneseq
    %v6245 = vshrl.u32 %v6244, 7
    %v6246 = vsub.s32 %v6243, %v6245
    %v6247 = vrot.slane %v6219, %v6246
    %v6248 = vcombine.low %v6226, %v6233
    %v6249 = vcombine.low %v6240, %v6247
    %v6251 = vunpack.c.l.s4 1966171168
    %v6252 = vunpack.c.0.s8 %v6251
    %v6253 = vlaneseq
    %v6254 = vshrl.u32 %v6253, 7
    %v6255 = vsub.s32 %v6252, %v6254
    %v6256 = vrot.slane %v6248, %v6255
    %v6258 = vunpack.c.l.s4 1966171168
    %v6259 = vunpack.c.0.s8 %v6258
    %v6260 = vlaneseq
    %v6261 = vshrl.u32 %v6260, 7
    %v6262 = vsub.s32 %v6259, %v6261
    %v6263 = vrot.slane %v6249, %v6262
    %v6264 = vcombine.low %v6256, %v6263
    %v6265 = vcombine.low %v4955, %v4959
    %v6266 = vcombine.low %v4963, %v4967
    %v6267 = vcombine.low %v4971, %v4975
    %v6268 = vcombine.low %v4979, %v4983
    %v6270 = vunpack.c.l.s4 1966171168
    %v6271 = vunpack.c.0.s8 %v6270
    %v6272 = vlaneseq
    %v6273 = vshrl.u32 %v6272, 7
    %v6274 = vsub.s32 %v6271, %v6273
    %v6275 = vrot.slane %v6265, %v6274
    %v6277 = vunpack.c.l.s4 1966171168
    %v6278 = vunpack.c.0.s8 %v6277
    %v6279 = vlaneseq
    %v6280 = vshrl.u32 %v6279, 7
    %v6281 = vsub.s32 %v6278, %v6280
    %v6282 = vrot.slane %v6266, %v6281
    %v6284 = vunpack.c.l.s4 1966171168
    %v6285 = vunpack.c.0.s8 %v6284
    %v6286 = vlaneseq
    %v6287 = vshrl.u32 %v6286, 7
    %v6288 = vsub.s32 %v6285, %v6287
    %v6289 = vrot.slane %v6267, %v6288
    %v6291 = vunpack.c.l.s4 1966171168
    %v6292 = vunpack.c.0.s8 %v6291
    %v6293 = vlaneseq
    %v6294 = vshrl.u32 %v6293, 7
    %v6295 = vsub.s32 %v6292, %v6294
    %v6296 = vrot.slane %v6268, %v6295
    %v6297 = vcombine.low %v6275, %v6282
    %v6298 = vcombine.low %v6289, %v6296
    %v6300 = vunpack.c.l.s4 1966171168
    %v6301 = vunpack.c.0.s8 %v6300
    %v6302 = vlaneseq
    %v6303 = vshrl.u32 %v6302, 7
    %v6304 = vsub.s32 %v6301, %v6303
    %v6305 = vrot.slane %v6297, %v6304
    %v6307 = vunpack.c.l.s4 1966171168
    %v6308 = vunpack.c.0.s8 %v6307
    %v6309 = vlaneseq
    %v6310 = vshrl.u32 %v6309, 7
    %v6311 = vsub.s32 %v6308, %v6310
    %v6312 = vrot.slane %v6298, %v6311
    %v6313 = vcombine.low %v6305, %v6312
    %v6314 = vcombine.low %v4987, %v4991
    %v6315 = vcombine.low %v4995, %v4999
    %v6316 = vcombine.low %v5003, %v5007
    %v6317 = vcombine.low %v5011, %v5015
    %v6319 = vunpack.c.l.s4 1966171168
    %v6320 = vunpack.c.0.s8 %v6319
    %v6321 = vlaneseq
    %v6322 = vshrl.u32 %v6321, 7
    %v6323 = vsub.s32 %v6320, %v6322
    %v6324 = vrot.slane %v6314, %v6323
    %v6326 = vunpack.c.l.s4 1966171168
    %v6327 = vunpack.c.0.s8 %v6326
    %v6328 = vlaneseq
    %v6329 = vshrl.u32 %v6328, 7
    %v6330 = vsub.s32 %v6327, %v6329
    %v6331 = vrot.slane %v6315, %v6330
    %v6333 = vunpack.c.l.s4 1966171168
    %v6334 = vunpack.c.0.s8 %v6333
    %v6335 = vlaneseq
    %v6336 = vshrl.u32 %v6335, 7
    %v6337 = vsub.s32 %v6334, %v6336
    %v6338 = vrot.slane %v6316, %v6337
    %v6340 = vunpack.c.l.s4 1966171168
    %v6341 = vunpack.c.0.s8 %v6340
    %v6342 = vlaneseq
    %v6343 = vshrl.u32 %v6342, 7
    %v6344 = vsub.s32 %v6341, %v6343
    %v6345 = vrot.slane %v6317, %v6344
    %v6346 = vcombine.low %v6324, %v6331
    %v6347 = vcombine.low %v6338, %v6345
    %v6349 = vunpack.c.l.s4 1966171168
    %v6350 = vunpack.c.0.s8 %v6349
    %v6351 = vlaneseq
    %v6352 = vshrl.u32 %v6351, 7
    %v6353 = vsub.s32 %v6350, %v6352
    %v6354 = vrot.slane %v6346, %v6353
    %v6356 = vunpack.c.l.s4 1966171168
    %v6357 = vunpack.c.0.s8 %v6356
    %v6358 = vlaneseq
    %v6359 = vshrl.u32 %v6358, 7
    %v6360 = vsub.s32 %v6357, %v6359
    %v6361 = vrot.slane %v6347, %v6360
    %v6362 = vcombine.low %v6354, %v6361
    %v6363 = vcombine.low %v5019, %v5023
    %v6364 = vcombine.low %v5027, %v5031
    %v6365 = vcombine.low %v5035, %v5039
    %v6366 = vcombine.low %v5043, %v5047
    %v6368 = vunpack.c.l.s4 1966171168
    %v6369 = vunpack.c.0.s8 %v6368
    %v6370 = vlaneseq
    %v6371 = vshrl.u32 %v6370, 7
    %v6372 = vsub.s32 %v6369, %v6371
    %v6373 = vrot.slane %v6363, %v6372
    %v6375 = vunpack.c.l.s4 1966171168
    %v6376 = vunpack.c.0.s8 %v6375
    %v6377 = vlaneseq
    %v6378 = vshrl.u32 %v6377, 7
    %v6379 = vsub.s32 %v6376, %v6378
    %v6380 = vrot.slane %v6364, %v6379
    %v6382 = vunpack.c.l.s4 1966171168
    %v6383 = vunpack.c.0.s8 %v6382
    %v6384 = vlaneseq
    %v6385 = vshrl.u32 %v6384, 7
    %v6386 = vsub.s32 %v6383, %v6385
    %v6387 = vrot.slane %v6365, %v6386
    %v6389 = vunpack.c.l.s4 1966171168
    %v6390 = vunpack.c.0.s8 %v6389
    %v6391 = vlaneseq
    %v6392 = vshrl.u32 %v6391, 7
    %v6393 = vsub.s32 %v6390, %v6392
    %v6394 = vrot.slane %v6366, %v6393
    %v6395 = vcombine.low %v6373, %v6380
    %v6396 = vcombine.low %v6387, %v6394
    %v6398 = vunpack.c.l.s4 1966171168
    %v6399 = vunpack.c.0.s8 %v6398
    %v6400 = vlaneseq
    %v6401 = vshrl.u32 %v6400, 7
    %v6402 = vsub.s32 %v6399, %v6401
    %v6403 = vrot.slane %v6395, %v6402
    %v6405 = vunpack.c.l.s4 1966171168
    %v6406 = vunpack.c.0.s8 %v6405
    %v6407 = vlaneseq
    %v6408 = vshrl.u32 %v6407, 7
    %v6409 = vsub.s32 %v6406, %v6408
    %v6410 = vrot.slane %v6396, %v6409
    %v6411 = vcombine.low %v6403, %v6410
    %v6412 = vcombine.low %v5051, %v5055
    %v6413 = vcombine.low %v5059, %v5063
    %v6414 = vcombine.low %v5067, %v5071
    %v6415 = vcombine.low %v5075, %v5079
    %v6417 = vunpack.c.l.s4 1966171168
    %v6418 = vunpack.c.0.s8 %v6417
    %v6419 = vlaneseq
    %v6420 = vshrl.u32 %v6419, 7
    %v6421 = vsub.s32 %v6418, %v6420
    %v6422 = vrot.slane %v6412, %v6421
    %v6424 = vunpack.c.l.s4 1966171168
    %v6425 = vunpack.c.0.s8 %v6424
    %v6426 = vlaneseq
    %v6427 = vshrl.u32 %v6426, 7
    %v6428 = vsub.s32 %v6425, %v6427
    %v6429 = vrot.slane %v6413, %v6428
    %v6431 = vunpack.c.l.s4 1966171168
    %v6432 = vunpack.c.0.s8 %v6431
    %v6433 = vlaneseq
    %v6434 = vshrl.u32 %v6433, 7
    %v6435 = vsub.s32 %v6432, %v6434
    %v6436 = vrot.slane %v6414, %v6435
    %v6438 = vunpack.c.l.s4 1966171168
    %v6439 = vunpack.c.0.s8 %v6438
    %v6440 = vlaneseq
    %v6441 = vshrl.u32 %v6440, 7
    %v6442 = vsub.s32 %v6439, %v6441
    %v6443 = vrot.slane %v6415, %v6442
    %v6444 = vcombine.low %v6422, %v6429
    %v6445 = vcombine.low %v6436, %v6443
    %v6447 = vunpack.c.l.s4 1966171168
    %v6448 = vunpack.c.0.s8 %v6447
    %v6449 = vlaneseq
    %v6450 = vshrl.u32 %v6449, 7
    %v6451 = vsub.s32 %v6448, %v6450
    %v6452 = vrot.slane %v6444, %v6451
    %v6454 = vunpack.c.l.s4 1966171168
    %v6455 = vunpack.c.0.s8 %v6454
    %v6456 = vlaneseq
    %v6457 = vshrl.u32 %v6456, 7
    %v6458 = vsub.s32 %v6455, %v6457
    %v6459 = vrot.slane %v6445, %v6458
    %v6460 = vcombine.low %v6452, %v6459
    %v6461 = vcombine.low %v5083, %v5087
    %v6462 = vcombine.low %v5091, %v5095
    %v6463 = vcombine.low %v5099, %v5103
    %v6464 = vcombine.low %v5107, %v5111
    %v6466 = vunpack.c.l.s4 1966171168
    %v6467 = vunpack.c.0.s8 %v6466
    %v6468 = vlaneseq
    %v6469 = vshrl.u32 %v6468, 7
    %v6470 = vsub.s32 %v6467, %v6469
    %v6471 = vrot.slane %v6461, %v6470
    %v6473 = vunpack.c.l.s4 1966171168
    %v6474 = vunpack.c.0.s8 %v6473
    %v6475 = vlaneseq
    %v6476 = vshrl.u32 %v6475, 7
    %v6477 = vsub.s32 %v6474, %v6476
    %v6478 = vrot.slane %v6462, %v6477
    %v6480 = vunpack.c.l.s4 1966171168
    %v6481 = vunpack.c.0.s8 %v6480
    %v6482 = vlaneseq
    %v6483 = vshrl.u32 %v6482, 7
    %v6484 = vsub.s32 %v6481, %v6483
    %v6485 = vrot.slane %v6463, %v6484
    %v6487 = vunpack.c.l.s4 1966171168
    %v6488 = vunpack.c.0.s8 %v6487
    %v6489 = vlaneseq
    %v6490 = vshrl.u32 %v6489, 7
    %v6491 = vsub.s32 %v6488, %v6490
    %v6492 = vrot.slane %v6464, %v6491
    %v6493 = vcombine.low %v6471, %v6478
    %v6494 = vcombine.low %v6485, %v6492
    %v6496 = vunpack.c.l.s4 1966171168
    %v6497 = vunpack.c.0.s8 %v6496
    %v6498 = vlaneseq
    %v6499 = vshrl.u32 %v6498, 7
    %v6500 = vsub.s32 %v6497, %v6499
    %v6501 = vrot.slane %v6493, %v6500
    %v6503 = vunpack.c.l.s4 1966171168
    %v6504 = vunpack.c.0.s8 %v6503
    %v6505 = vlaneseq
    %v6506 = vshrl.u32 %v6505, 7
    %v6507 = vsub.s32 %v6504, %v6506
    %v6508 = vrot.slane %v6494, %v6507
    %v6509 = vcombine.low %v6501, %v6508
    %v6510 = vcombine.low %v5115, %v5119
    %v6511 = vcombine.low %v5123, %v5127
    %v6512 = vcombine.low %v5131, %v5135
    %v6513 = vcombine.low %v5139, %v5143
    %v6515 = vunpack.c.l.s4 1966171168
    %v6516 = vunpack.c.0.s8 %v6515
    %v6517 = vlaneseq
    %v6518 = vshrl.u32 %v6517, 7
    %v6519 = vsub.s32 %v6516, %v6518
    %v6520 = vrot.slane %v6510, %v6519
    %v6522 = vunpack.c.l.s4 1966171168
    %v6523 = vunpack.c.0.s8 %v6522
    %v6524 = vlaneseq
    %v6525 = vshrl.u32 %v6524, 7
    %v6526 = vsub.s32 %v6523, %v6525
    %v6527 = vrot.slane %v6511, %v6526
    %v6529 = vunpack.c.l.s4 1966171168
    %v6530 = vunpack.c.0.s8 %v6529
    %v6531 = vlaneseq
    %v6532 = vshrl.u32 %v6531, 7
    %v6533 = vsub.s32 %v6530, %v6532
    %v6534 = vrot.slane %v6512, %v6533
    %v6536 = vunpack.c.l.s4 1966171168
    %v6537 = vunpack.c.0.s8 %v6536
    %v6538 = vlaneseq
    %v6539 = vshrl.u32 %v6538, 7
    %v6540 = vsub.s32 %v6537, %v6539
    %v6541 = vrot.slane %v6513, %v6540
    %v6542 = vcombine.low %v6520, %v6527
    %v6543 = vcombine.low %v6534, %v6541
    %v6545 = vunpack.c.l.s4 1966171168
    %v6546 = vunpack.c.0.s8 %v6545
    %v6547 = vlaneseq
    %v6548 = vshrl.u32 %v6547, 7
    %v6549 = vsub.s32 %v6546, %v6548
    %v6550 = vrot.slane %v6542, %v6549
    %v6552 = vunpack.c.l.s4 1966171168
    %v6553 = vunpack.c.0.s8 %v6552
    %v6554 = vlaneseq
    %v6555 = vshrl.u32 %v6554, 7
    %v6556 = vsub.s32 %v6553, %v6555
    %v6557 = vrot.slane %v6543, %v6556
    %v6558 = vcombine.low %v6550, %v6557
    %v6559 = vcombine.low %v5147, %v5151
    %v6560 = vcombine.low %v5155, %v5159
    %v6561 = vcombine.low %v5163, %v5167
    %v6562 = vcombine.low %v5171, %v5175
    %v6564 = vunpack.c.l.s4 1966171168
    %v6565 = vunpack.c.0.s8 %v6564
    %v6566 = vlaneseq
    %v6567 = vshrl.u32 %v6566, 7
    %v6568 = vsub.s32 %v6565, %v6567
    %v6569 = vrot.slane %v6559, %v6568
    %v6571 = vunpack.c.l.s4 1966171168
    %v6572 = vunpack.c.0.s8 %v6571
    %v6573 = vlaneseq
    %v6574 = vshrl.u32 %v6573, 7
    %v6575 = vsub.s32 %v6572, %v6574
    %v6576 = vrot.slane %v6560, %v6575
    %v6578 = vunpack.c.l.s4 1966171168
    %v6579 = vunpack.c.0.s8 %v6578
    %v6580 = vlaneseq
    %v6581 = vshrl.u32 %v6580, 7
    %v6582 = vsub.s32 %v6579, %v6581
    %v6583 = vrot.slane %v6561, %v6582
    %v6585 = vunpack.c.l.s4 1966171168
    %v6586 = vunpack.c.0.s8 %v6585
    %v6587 = vlaneseq
    %v6588 = vshrl.u32 %v6587, 7
    %v6589 = vsub.s32 %v6586, %v6588
    %v6590 = vrot.slane %v6562, %v6589
    %v6591 = vcombine.low %v6569, %v6576
    %v6592 = vcombine.low %v6583, %v6590
    %v6594 = vunpack.c.l.s4 1966171168
    %v6595 = vunpack.c.0.s8 %v6594
    %v6596 = vlaneseq
    %v6597 = vshrl.u32 %v6596, 7
    %v6598 = vsub.s32 %v6595, %v6597
    %v6599 = vrot.slane %v6591, %v6598
    %v6601 = vunpack.c.l.s4 1966171168
    %v6602 = vunpack.c.0.s8 %v6601
    %v6603 = vlaneseq
    %v6604 = vshrl.u32 %v6603, 7
    %v6605 = vsub.s32 %v6602, %v6604
    %v6606 = vrot.slane %v6592, %v6605
    %v6607 = vcombine.low %v6599, %v6606
    %v6608 = vcombine.low %v5179, %v5183
    %v6609 = vcombine.low %v5187, %v5191
    %v6610 = vcombine.low %v5195, %v5199
    %v6611 = vcombine.low %v5203, %v5207
    %v6613 = vunpack.c.l.s4 1966171168
    %v6614 = vunpack.c.0.s8 %v6613
    %v6615 = vlaneseq
    %v6616 = vshrl.u32 %v6615, 7
    %v6617 = vsub.s32 %v6614, %v6616
    %v6618 = vrot.slane %v6608, %v6617
    %v6620 = vunpack.c.l.s4 1966171168
    %v6621 = vunpack.c.0.s8 %v6620
    %v6622 = vlaneseq
    %v6623 = vshrl.u32 %v6622, 7
    %v6624 = vsub.s32 %v6621, %v6623
    %v6625 = vrot.slane %v6609, %v6624
    %v6627 = vunpack.c.l.s4 1966171168
    %v6628 = vunpack.c.0.s8 %v6627
    %v6629 = vlaneseq
    %v6630 = vshrl.u32 %v6629, 7
    %v6631 = vsub.s32 %v6628, %v6630
    %v6632 = vrot.slane %v6610, %v6631
    %v6634 = vunpack.c.l.s4 1966171168
    %v6635 = vunpack.c.0.s8 %v6634
    %v6636 = vlaneseq
    %v6637 = vshrl.u32 %v6636, 7
    %v6638 = vsub.s32 %v6635, %v6637
    %v6639 = vrot.slane %v6611, %v6638
    %v6640 = vcombine.low %v6618, %v6625
    %v6641 = vcombine.low %v6632, %v6639
    %v6643 = vunpack.c.l.s4 1966171168
    %v6644 = vunpack.c.0.s8 %v6643
    %v6645 = vlaneseq
    %v6646 = vshrl.u32 %v6645, 7
    %v6647 = vsub.s32 %v6644, %v6646
    %v6648 = vrot.slane %v6640, %v6647
    %v6650 = vunpack.c.l.s4 1966171168
    %v6651 = vunpack.c.0.s8 %v6650
    %v6652 = vlaneseq
    %v6653 = vshrl.u32 %v6652, 7
    %v6654 = vsub.s32 %v6651, %v6653
    %v6655 = vrot.slane %v6641, %v6654
    %v6656 = vcombine.low %v6648, %v6655
    %v6657 = vcombine.low %v5211, %v5215
    %v6658 = vcombine.low %v5219, %v5223
    %v6659 = vcombine.low %v5227, %v5231
    %v6660 = vcombine.low %v5235, %v5239
    %v6662 = vunpack.c.l.s4 1966171168
    %v6663 = vunpack.c.0.s8 %v6662
    %v6664 = vlaneseq
    %v6665 = vshrl.u32 %v6664, 7
    %v6666 = vsub.s32 %v6663, %v6665
    %v6667 = vrot.slane %v6657, %v6666
    %v6669 = vunpack.c.l.s4 1966171168
    %v6670 = vunpack.c.0.s8 %v6669
    %v6671 = vlaneseq
    %v6672 = vshrl.u32 %v6671, 7
    %v6673 = vsub.s32 %v6670, %v6672
    %v6674 = vrot.slane %v6658, %v6673
    %v6676 = vunpack.c.l.s4 1966171168
    %v6677 = vunpack.c.0.s8 %v6676
    %v6678 = vlaneseq
    %v6679 = vshrl.u32 %v6678, 7
    %v6680 = vsub.s32 %v6677, %v6679
    %v6681 = vrot.slane %v6659, %v6680
    %v6683 = vunpack.c.l.s4 1966171168
    %v6684 = vunpack.c.0.s8 %v6683
    %v6685 = vlaneseq
    %v6686 = vshrl.u32 %v6685, 7
    %v6687 = vsub.s32 %v6684, %v6686
    %v6688 = vrot.slane %v6660, %v6687
    %v6689 = vcombine.low %v6667, %v6674
    %v6690 = vcombine.low %v6681, %v6688
    %v6692 = vunpack.c.l.s4 1966171168
    %v6693 = vunpack.c.0.s8 %v6692
    %v6694 = vlaneseq
    %v6695 = vshrl.u32 %v6694, 7
    %v6696 = vsub.s32 %v6693, %v6695
    %v6697 = vrot.slane %v6689, %v6696
    %v6699 = vunpack.c.l.s4 1966171168
    %v6700 = vunpack.c.0.s8 %v6699
    %v6701 = vlaneseq
    %v6702 = vshrl.u32 %v6701, 7
    %v6703 = vsub.s32 %v6700, %v6702
    %v6704 = vrot.slane %v6690, %v6703
    %v6705 = vcombine.low %v6697, %v6704
    %v6706 = vcombine.low %v5243, %v5247
    %v6707 = vcombine.low %v5251, %v5255
    %v6708 = vcombine.low %v5259, %v5263
    %v6709 = vcombine.low %v5267, %v5271
    %v6711 = vunpack.c.l.s4 1966171168
    %v6712 = vunpack.c.0.s8 %v6711
    %v6713 = vlaneseq
    %v6714 = vshrl.u32 %v6713, 7
    %v6715 = vsub.s32 %v6712, %v6714
    %v6716 = vrot.slane %v6706, %v6715
    %v6718 = vunpack.c.l.s4 1966171168
    %v6719 = vunpack.c.0.s8 %v6718
    %v6720 = vlaneseq
    %v6721 = vshrl.u32 %v6720, 7
    %v6722 = vsub.s32 %v6719, %v6721
    %v6723 = vrot.slane %v6707, %v6722
    %v6725 = vunpack.c.l.s4 1966171168
    %v6726 = vunpack.c.0.s8 %v6725
    %v6727 = vlaneseq
    %v6728 = vshrl.u32 %v6727, 7
    %v6729 = vsub.s32 %v6726, %v6728
    %v6730 = vrot.slane %v6708, %v6729
    %v6732 = vunpack.c.l.s4 1966171168
    %v6733 = vunpack.c.0.s8 %v6732
    %v6734 = vlaneseq
    %v6735 = vshrl.u32 %v6734, 7
    %v6736 = vsub.s32 %v6733, %v6735
    %v6737 = vrot.slane %v6709, %v6736
    %v6738 = vcombine.low %v6716, %v6723
    %v6739 = vcombine.low %v6730, %v6737
    %v6741 = vunpack.c.l.s4 1966171168
    %v6742 = vunpack.c.0.s8 %v6741
    %v6743 = vlaneseq
    %v6744 = vshrl.u32 %v6743, 7
    %v6745 = vsub.s32 %v6742, %v6744
    %v6746 = vrot.slane %v6738, %v6745
    %v6748 = vunpack.c.l.s4 1966171168
    %v6749 = vunpack.c.0.s8 %v6748
    %v6750 = vlaneseq
    %v6751 = vshrl.u32 %v6750, 7
    %v6752 = vsub.s32 %v6749, %v6751
    %v6753 = vrot.slane %v6739, %v6752
    %v6754 = vcombine.low %v6746, %v6753
    %v6755 = vcombine.low %v5275, %v5279
    %v6756 = vcombine.low %v5283, %v5287
    %v6757 = vcombine.low %v5291, %v5295
    %v6758 = vcombine.low %v5299, %v5303
    %v6760 = vunpack.c.l.s4 1966171168
    %v6761 = vunpack.c.0.s8 %v6760
    %v6762 = vlaneseq
    %v6763 = vshrl.u32 %v6762, 7
    %v6764 = vsub.s32 %v6761, %v6763
    %v6765 = vrot.slane %v6755, %v6764
    %v6767 = vunpack.c.l.s4 1966171168
    %v6768 = vunpack.c.0.s8 %v6767
    %v6769 = vlaneseq
    %v6770 = vshrl.u32 %v6769, 7
    %v6771 = vsub.s32 %v6768, %v6770
    %v6772 = vrot.slane %v6756, %v6771
    %v6774 = vunpack.c.l.s4 1966171168
    %v6775 = vunpack.c.0.s8 %v6774
    %v6776 = vlaneseq
    %v6777 = vshrl.u32 %v6776, 7
    %v6778 = vsub.s32 %v6775, %v6777
    %v6779 = vrot.slane %v6757, %v6778
    %v6781 = vunpack.c.l.s4 1966171168
    %v6782 = vunpack.c.0.s8 %v6781
    %v6783 = vlaneseq
    %v6784 = vshrl.u32 %v6783, 7
    %v6785 = vsub.s32 %v6782, %v6784
    %v6786 = vrot.slane %v6758, %v6785
    %v6787 = vcombine.low %v6765, %v6772
    %v6788 = vcombine.low %v6779, %v6786
    %v6790 = vunpack.c.l.s4 1966171168
    %v6791 = vunpack.c.0.s8 %v6790
    %v6792 = vlaneseq
    %v6793 = vshrl.u32 %v6792, 7
    %v6794 = vsub.s32 %v6791, %v6793
    %v6795 = vrot.slane %v6787, %v6794
    %v6797 = vunpack.c.l.s4 1966171168
    %v6798 = vunpack.c.0.s8 %v6797
    %v6799 = vlaneseq
    %v6800 = vshrl.u32 %v6799, 7
    %v6801 = vsub.s32 %v6798, %v6800
    %v6802 = vrot.slane %v6788, %v6801
    %v6803 = vcombine.low %v6795, %v6802
    %v6804 = vcombine.low %v5307, %v5311
    %v6805 = vcombine.low %v5315, %v5319
    %v6806 = vcombine.low %v5323, %v5327
    %v6807 = vcombine.low %v5331, %v5335
    %v6809 = vunpack.c.l.s4 1966171168
    %v6810 = vunpack.c.0.s8 %v6809
    %v6811 = vlaneseq
    %v6812 = vshrl.u32 %v6811, 7
    %v6813 = vsub.s32 %v6810, %v6812
    %v6814 = vrot.slane %v6804, %v6813
    %v6816 = vunpack.c.l.s4 1966171168
    %v6817 = vunpack.c.0.s8 %v6816
    %v6818 = vlaneseq
    %v6819 = vshrl.u32 %v6818, 7
    %v6820 = vsub.s32 %v6817, %v6819
    %v6821 = vrot.slane %v6805, %v6820
    %v6823 = vunpack.c.l.s4 1966171168
    %v6824 = vunpack.c.0.s8 %v6823
    %v6825 = vlaneseq
    %v6826 = vshrl.u32 %v6825, 7
    %v6827 = vsub.s32 %v6824, %v6826
    %v6828 = vrot.slane %v6806, %v6827
    %v6830 = vunpack.c.l.s4 1966171168
    %v6831 = vunpack.c.0.s8 %v6830
    %v6832 = vlaneseq
    %v6833 = vshrl.u32 %v6832, 7
    %v6834 = vsub.s32 %v6831, %v6833
    %v6835 = vrot.slane %v6807, %v6834
    %v6836 = vcombine.low %v6814, %v6821
    %v6837 = vcombine.low %v6828, %v6835
    %v6839 = vunpack.c.l.s4 1966171168
    %v6840 = vunpack.c.0.s8 %v6839
    %v6841 = vlaneseq
    %v6842 = vshrl.u32 %v6841, 7
    %v6843 = vsub.s32 %v6840, %v6842
    %v6844 = vrot.slane %v6836, %v6843
    %v6846 = vunpack.c.l.s4 1966171168
    %v6847 = vunpack.c.0.s8 %v6846
    %v6848 = vlaneseq
    %v6849 = vshrl.u32 %v6848, 7
    %v6850 = vsub.s32 %v6847, %v6849
    %v6851 = vrot.slane %v6837, %v6850
    %v6852 = vcombine.low %v6844, %v6851
    %v6853 = vcombine.low %v5339, %v5343
    %v6854 = vcombine.low %v5347, %v5351
    %v6855 = vcombine.low %v5355, %v5359
    %v6856 = vcombine.low %v5363, %v5367
    %v6858 = vunpack.c.l.s4 1966171168
    %v6859 = vunpack.c.0.s8 %v6858
    %v6860 = vlaneseq
    %v6861 = vshrl.u32 %v6860, 7
    %v6862 = vsub.s32 %v6859, %v6861
    %v6863 = vrot.slane %v6853, %v6862
    %v6865 = vunpack.c.l.s4 1966171168
    %v6866 = vunpack.c.0.s8 %v6865
    %v6867 = vlaneseq
    %v6868 = vshrl.u32 %v6867, 7
    %v6869 = vsub.s32 %v6866, %v6868
    %v6870 = vrot.slane %v6854, %v6869
    %v6872 = vunpack.c.l.s4 1966171168
    %v6873 = vunpack.c.0.s8 %v6872
    %v6874 = vlaneseq
    %v6875 = vshrl.u32 %v6874, 7
    %v6876 = vsub.s32 %v6873, %v6875
    %v6877 = vrot.slane %v6855, %v6876
    %v6879 = vunpack.c.l.s4 1966171168
    %v6880 = vunpack.c.0.s8 %v6879
    %v6881 = vlaneseq
    %v6882 = vshrl.u32 %v6881, 7
    %v6883 = vsub.s32 %v6880, %v6882
    %v6884 = vrot.slane %v6856, %v6883
    %v6885 = vcombine.low %v6863, %v6870
    %v6886 = vcombine.low %v6877, %v6884
    %v6888 = vunpack.c.l.s4 1966171168
    %v6889 = vunpack.c.0.s8 %v6888
    %v6890 = vlaneseq
    %v6891 = vshrl.u32 %v6890, 7
    %v6892 = vsub.s32 %v6889, %v6891
    %v6893 = vrot.slane %v6885, %v6892
    %v6895 = vunpack.c.l.s4 1966171168
    %v6896 = vunpack.c.0.s8 %v6895
    %v6897 = vlaneseq
    %v6898 = vshrl.u32 %v6897, 7
    %v6899 = vsub.s32 %v6896, %v6898
    %v6900 = vrot.slane %v6886, %v6899
    %v6901 = vcombine.low %v6893, %v6900
    %v6902 = vcombine.low %v5371, %v5375
    %v6903 = vcombine.low %v5379, %v5383
    %v6904 = vcombine.low %v5387, %v5391
    %v6905 = vcombine.low %v5395, %v5399
    %v6907 = vunpack.c.l.s4 1966171168
    %v6908 = vunpack.c.0.s8 %v6907
    %v6909 = vlaneseq
    %v6910 = vshrl.u32 %v6909, 7
    %v6911 = vsub.s32 %v6908, %v6910
    %v6912 = vrot.slane %v6902, %v6911
    %v6914 = vunpack.c.l.s4 1966171168
    %v6915 = vunpack.c.0.s8 %v6914
    %v6916 = vlaneseq
    %v6917 = vshrl.u32 %v6916, 7
    %v6918 = vsub.s32 %v6915, %v6917
    %v6919 = vrot.slane %v6903, %v6918
    %v6921 = vunpack.c.l.s4 1966171168
    %v6922 = vunpack.c.0.s8 %v6921
    %v6923 = vlaneseq
    %v6924 = vshrl.u32 %v6923, 7
    %v6925 = vsub.s32 %v6922, %v6924
    %v6926 = vrot.slane %v6904, %v6925
    %v6928 = vunpack.c.l.s4 1966171168
    %v6929 = vunpack.c.0.s8 %v6928
    %v6930 = vlaneseq
    %v6931 = vshrl.u32 %v6930, 7
    %v6932 = vsub.s32 %v6929, %v6931
    %v6933 = vrot.slane %v6905, %v6932
    %v6934 = vcombine.low %v6912, %v6919
    %v6935 = vcombine.low %v6926, %v6933
    %v6937 = vunpack.c.l.s4 1966171168
    %v6938 = vunpack.c.0.s8 %v6937
    %v6939 = vlaneseq
    %v6940 = vshrl.u32 %v6939, 7
    %v6941 = vsub.s32 %v6938, %v6940
    %v6942 = vrot.slane %v6934, %v6941
    %v6944 = vunpack.c.l.s4 1966171168
    %v6945 = vunpack.c.0.s8 %v6944
    %v6946 = vlaneseq
    %v6947 = vshrl.u32 %v6946, 7
    %v6948 = vsub.s32 %v6945, %v6947
    %v6949 = vrot.slane %v6935, %v6948
    %v6950 = vcombine.low %v6942, %v6949
    %v6951 = vcombine.low %v5403, %v5407
    %v6952 = vcombine.low %v5411, %v5415
    %v6953 = vcombine.low %v5419, %v5423
    %v6954 = vcombine.low %v5427, %v5431
    %v6956 = vunpack.c.l.s4 1966171168
    %v6957 = vunpack.c.0.s8 %v6956
    %v6958 = vlaneseq
    %v6959 = vshrl.u32 %v6958, 7
    %v6960 = vsub.s32 %v6957, %v6959
    %v6961 = vrot.slane %v6951, %v6960
    %v6963 = vunpack.c.l.s4 1966171168
    %v6964 = vunpack.c.0.s8 %v6963
    %v6965 = vlaneseq
    %v6966 = vshrl.u32 %v6965, 7
    %v6967 = vsub.s32 %v6964, %v6966
    %v6968 = vrot.slane %v6952, %v6967
    %v6970 = vunpack.c.l.s4 1966171168
    %v6971 = vunpack.c.0.s8 %v6970
    %v6972 = vlaneseq
    %v6973 = vshrl.u32 %v6972, 7
    %v6974 = vsub.s32 %v6971, %v6973
    %v6975 = vrot.slane %v6953, %v6974
    %v6977 = vunpack.c.l.s4 1966171168
    %v6978 = vunpack.c.0.s8 %v6977
    %v6979 = vlaneseq
    %v6980 = vshrl.u32 %v6979, 7
    %v6981 = vsub.s32 %v6978, %v6980
    %v6982 = vrot.slane %v6954, %v6981
    %v6983 = vcombine.low %v6961, %v6968
    %v6984 = vcombine.low %v6975, %v6982
    %v6986 = vunpack.c.l.s4 1966171168
    %v6987 = vunpack.c.0.s8 %v6986
    %v6988 = vlaneseq
    %v6989 = vshrl.u32 %v6988, 7
    %v6990 = vsub.s32 %v6987, %v6989
    %v6991 = vrot.slane %v6983, %v6990
    %v6993 = vunpack.c.l.s4 1966171168
    %v6994 = vunpack.c.0.s8 %v6993
    %v6995 = vlaneseq
    %v6996 = vshrl.u32 %v6995, 7
    %v6997 = vsub.s32 %v6994, %v6996
    %v6998 = vrot.slane %v6984, %v6997
    %v6999 = vcombine.low %v6991, %v6998
    %7000 = vset.pattern.permute.xlu0 0
    %7001 = vperm.xlu0 %7000, %v5480
    %v7002 = vpop.permute.xlu0 %7001
    %7003 = vset.pattern.permute.xlu0 0
    %7004 = vperm.xlu0 %7003, %v5529
    %v7005 = vpop.permute.xlu0 %7004
    %7006 = vset.pattern.permute.xlu0 0
    %7007 = vperm.xlu0 %7006, %v5578
    %v7008 = vpop.permute.xlu0 %7007
    %7009 = vset.pattern.permute.xlu0 0
    %7010 = vperm.xlu0 %7009, %v5627
    %v7011 = vpop.permute.xlu0 %7010
    %7012 = vset.pattern.permute.xlu0 0
    %7013 = vperm.xlu0 %7012, %v5676
    %v7014 = vpop.permute.xlu0 %7013
    %7015 = vset.pattern.permute.xlu0 0
    %7016 = vperm.xlu0 %7015, %v5725
    %v7017 = vpop.permute.xlu0 %7016
    %7018 = vset.pattern.permute.xlu0 0
    %7019 = vperm.xlu0 %7018, %v5774
    %v7020 = vpop.permute.xlu0 %7019
    %7021 = vset.pattern.permute.xlu0 0
    %7022 = vperm.xlu0 %7021, %v5823
    %v7023 = vpop.permute.xlu0 %7022
    %7024 = vset.pattern.permute.xlu0 0
    %7025 = vperm.xlu0 %7024, %v5872
    %v7026 = vpop.permute.xlu0 %7025
    %7027 = vset.pattern.permute.xlu0 0
    %7028 = vperm.xlu0 %7027, %v5921
    %v7029 = vpop.permute.xlu0 %7028
    %7030 = vset.pattern.permute.xlu0 0
    %7031 = vperm.xlu0 %7030, %v5970
    %v7032 = vpop.permute.xlu0 %7031
    %7033 = vset.pattern.permute.xlu0 0
    %7034 = vperm.xlu0 %7033, %v6019
    %v7035 = vpop.permute.xlu0 %7034
    %7036 = vset.pattern.permute.xlu0 0
    %7037 = vperm.xlu0 %7036, %v6068
    %v7038 = vpop.permute.xlu0 %7037
    %7039 = vset.pattern.permute.xlu0 0
    %7040 = vperm.xlu0 %7039, %v6117
    %v7041 = vpop.permute.xlu0 %7040
    %7042 = vset.pattern.permute.xlu0 0
    %7043 = vperm.xlu0 %7042, %v6166
    %v7044 = vpop.permute.xlu0 %7043
    %7045 = vset.pattern.permute.xlu0 0
    %7046 = vperm.xlu0 %7045, %v6215
    %v7047 = vpop.permute.xlu0 %7046
    %7048 = vset.pattern.permute.xlu0 0
    %7049 = vperm.xlu0 %7048, %v6264
    %v7050 = vpop.permute.xlu0 %7049
    %7051 = vset.pattern.permute.xlu0 0
    %7052 = vperm.xlu0 %7051, %v6313
    %v7053 = vpop.permute.xlu0 %7052
    %7054 = vset.pattern.permute.xlu0 0
    %7055 = vperm.xlu0 %7054, %v6362
    %v7056 = vpop.permute.xlu0 %7055
    %7057 = vset.pattern.permute.xlu0 0
    %7058 = vperm.xlu0 %7057, %v6411
    %v7059 = vpop.permute.xlu0 %7058
    %7060 = vset.pattern.permute.xlu0 0
    %7061 = vperm.xlu0 %7060, %v6460
    %v7062 = vpop.permute.xlu0 %7061
    %7063 = vset.pattern.permute.xlu0 0
    %7064 = vperm.xlu0 %7063, %v6509
    %v7065 = vpop.permute.xlu0 %7064
    %7066 = vset.pattern.permute.xlu0 0
    %7067 = vperm.xlu0 %7066, %v6558
    %v7068 = vpop.permute.xlu0 %7067
    %7069 = vset.pattern.permute.xlu0 0
    %7070 = vperm.xlu0 %7069, %v6607
    %v7071 = vpop.permute.xlu0 %7070
    %7072 = vset.pattern.permute.xlu0 0
    %7073 = vperm.xlu0 %7072, %v6656
    %v7074 = vpop.permute.xlu0 %7073
    %7075 = vset.pattern.permute.xlu0 0
    %7076 = vperm.xlu0 %7075, %v6705
    %v7077 = vpop.permute.xlu0 %7076
    %7078 = vset.pattern.permute.xlu0 0
    %7079 = vperm.xlu0 %7078, %v6754
    %v7080 = vpop.permute.xlu0 %7079
    %7081 = vset.pattern.permute.xlu0 0
    %7082 = vperm.xlu0 %7081, %v6803
    %v7083 = vpop.permute.xlu0 %7082
    %7084 = vset.pattern.permute.xlu0 0
    %7085 = vperm.xlu0 %7084, %v6852
    %v7086 = vpop.permute.xlu0 %7085
    %7087 = vset.pattern.permute.xlu0 0
    %7088 = vperm.xlu0 %7087, %v6901
    %v7089 = vpop.permute.xlu0 %7088
    %7090 = vset.pattern.permute.xlu0 0
    %7091 = vperm.xlu0 %7090, %v6950
    %v7092 = vpop.permute.xlu0 %7091
    %7093 = vset.pattern.permute.xlu0 0
    %7094 = vperm.xlu0 %7093, %v6999
    %v7095 = vpop.permute.xlu0 %7094
    %v7096 = vlaneseq
    %v7097 = vand.u32 %v7096, 127
    %v7098 = vlaneseq
    %v7099 = vshrl.u32 %v7098, 7
    %v7100 = vsub.s32 %v7097, %v7099
    %v7101 = vrot.slane %v7002, %v7100
    %v7102 = vadd.s32 %v7097, 4294967288
    %v7103 = vlaneseq
    %v7104 = vshrl.u32 %v7103, 7
    %v7105 = vsub.s32 %v7102, %v7104
    %v7106 = vrot.slane %v7005, %v7105
    %vm7107 = vcmask 130112
    %v7108 = vsel %vm7107, %v7106, %v7101
    %v7109 = vadd.s32 %v7097, 4294967280
    %v7110 = vlaneseq
    %v7111 = vshrl.u32 %v7110, 7
    %v7112 = vsub.s32 %v7109, %v7111
    %v7113 = vrot.slane %v7008, %v7112
    %vm7114 = vcmask 195712
    %v7115 = vsel %vm7114, %v7113, %v7108
    %v7116 = vadd.s32 %v7097, 4294967272
    %v7117 = vlaneseq
    %v7118 = vshrl.u32 %v7117, 7
    %v7119 = vsub.s32 %v7116, %v7118
    %v7120 = vrot.slane %v7011, %v7119
    %vm7121 = vcmask 261312
    %v7122 = vsel %vm7121, %v7120, %v7115
    %v7123 = vadd.s32 %v7097, 4294967264
    %v7124 = vlaneseq
    %v7125 = vshrl.u32 %v7124, 7
    %v7126 = vsub.s32 %v7123, %v7125
    %v7127 = vrot.slane %v7014, %v7126
    %vm7128 = vcmask 326912
    %v7129 = vsel %vm7128, %v7127, %v7122
    %v7130 = vadd.s32 %v7097, 4294967256
    %v7131 = vlaneseq
    %v7132 = vshrl.u32 %v7131, 7
    %v7133 = vsub.s32 %v7130, %v7132
    %v7134 = vrot.slane %v7017, %v7133
    %vm7135 = vcmask 392512
    %v7136 = vsel %vm7135, %v7134, %v7129
    %v7137 = vadd.s32 %v7097, 4294967248
    %v7138 = vlaneseq
    %v7139 = vshrl.u32 %v7138, 7
    %v7140 = vsub.s32 %v7137, %v7139
    %v7141 = vrot.slane %v7020, %v7140
    %vm7142 = vcmask 458112
    %v7143 = vsel %vm7142, %v7141, %v7136
    %v7144 = vadd.s32 %v7097, 4294967240
    %v7145 = vlaneseq
    %v7146 = vshrl.u32 %v7145, 7
    %v7147 = vsub.s32 %v7144, %v7146
    %v7148 = vrot.slane %v7023, %v7147
    %vm7149 = vcmask 523712
    %v7150 = vsel %vm7149, %v7148, %v7143
    %v7151 = vadd.s32 %v7097, 4294967232
    %v7152 = vlaneseq
    %v7153 = vshrl.u32 %v7152, 7
    %v7154 = vsub.s32 %v7151, %v7153
    %v7155 = vrot.slane %v7026, %v7154
    %vm7156 = vcmask 589312
    %v7157 = vsel %vm7156, %v7155, %v7150
    %v7158 = vadd.s32 %v7097, 4294967224
    %v7159 = vlaneseq
    %v7160 = vshrl.u32 %v7159, 7
    %v7161 = vsub.s32 %v7158, %v7160
    %v7162 = vrot.slane %v7029, %v7161
    %vm7163 = vcmask 654912
    %v7164 = vsel %vm7163, %v7162, %v7157
    %v7165 = vadd.s32 %v7097, 4294967216
    %v7166 = vlaneseq
    %v7167 = vshrl.u32 %v7166, 7
    %v7168 = vsub.s32 %v7165, %v7167
    %v7169 = vrot.slane %v7032, %v7168
    %vm7170 = vcmask 720512
    %v7171 = vsel %vm7170, %v7169, %v7164
    %v7172 = vadd.s32 %v7097, 4294967208
    %v7173 = vlaneseq
    %v7174 = vshrl.u32 %v7173, 7
    %v7175 = vsub.s32 %v7172, %v7174
    %v7176 = vrot.slane %v7035, %v7175
    %vm7177 = vcmask 786112
    %v7178 = vsel %vm7177, %v7176, %v7171
    %v7179 = vadd.s32 %v7097, 4294967200
    %v7180 = vlaneseq
    %v7181 = vshrl.u32 %v7180, 7
    %v7182 = vsub.s32 %v7179, %v7181
    %v7183 = vrot.slane %v7038, %v7182
    %vm7184 = vcmask 851712
    %v7185 = vsel %vm7184, %v7183, %v7178
    %v7186 = vadd.s32 %v7097, 4294967192
    %v7187 = vlaneseq
    %v7188 = vshrl.u32 %v7187, 7
    %v7189 = vsub.s32 %v7186, %v7188
    %v7190 = vrot.slane %v7041, %v7189
    %vm7191 = vcmask 917312
    %v7192 = vsel %vm7191, %v7190, %v7185
    %v7193 = vadd.s32 %v7097, 4294967184
    %v7194 = vlaneseq
    %v7195 = vshrl.u32 %v7194, 7
    %v7196 = vsub.s32 %v7193, %v7195
    %v7197 = vrot.slane %v7044, %v7196
    %vm7198 = vcmask 982912
    %v7199 = vsel %vm7198, %v7197, %v7192
    %v7200 = vadd.s32 %v7097, 4294967176
    %v7201 = vlaneseq
    %v7202 = vshrl.u32 %v7201, 7
    %v7203 = vsub.s32 %v7200, %v7202
    %v7204 = vrot.slane %v7047, %v7203
    %vm7205 = vcmask 1048512
    %v7206 = vsel %vm7205, %v7204, %v7199
    %v7207 = vlaneseq
    %v7208 = vshrl.u32 %v7207, 7
    %v7209 = vsub.s32 %v7097, %v7208
    %v7210 = vrot.slane %v7050, %v7209
    %v7211 = vlaneseq
    %v7212 = vshrl.u32 %v7211, 7
    %v7213 = vsub.s32 %v7102, %v7212
    %v7214 = vrot.slane %v7053, %v7213
    %v7215 = vsel %vm7107, %v7214, %v7210
    %v7216 = vlaneseq
    %v7217 = vshrl.u32 %v7216, 7
    %v7218 = vsub.s32 %v7109, %v7217
    %v7219 = vrot.slane %v7056, %v7218
    %v7220 = vsel %vm7114, %v7219, %v7215
    %v7221 = vlaneseq
    %v7222 = vshrl.u32 %v7221, 7
    %v7223 = vsub.s32 %v7116, %v7222
    %v7224 = vrot.slane %v7059, %v7223
    %v7225 = vsel %vm7121, %v7224, %v7220
    %v7226 = vlaneseq
    %v7227 = vshrl.u32 %v7226, 7
    %v7228 = vsub.s32 %v7123, %v7227
    %v7229 = vrot.slane %v7062, %v7228
    %v7230 = vsel %vm7128, %v7229, %v7225
    %v7231 = vlaneseq
    %v7232 = vshrl.u32 %v7231, 7
    %v7233 = vsub.s32 %v7130, %v7232
    %v7234 = vrot.slane %v7065, %v7233
    %v7235 = vsel %vm7135, %v7234, %v7230
    %v7236 = vlaneseq
    %v7237 = vshrl.u32 %v7236, 7
    %v7238 = vsub.s32 %v7137, %v7237
    %v7239 = vrot.slane %v7068, %v7238
    %v7240 = vsel %vm7142, %v7239, %v7235
    %v7241 = vlaneseq
    %v7242 = vshrl.u32 %v7241, 7
    %v7243 = vsub.s32 %v7144, %v7242
    %v7244 = vrot.slane %v7071, %v7243
    %v7245 = vsel %vm7149, %v7244, %v7240
    %v7246 = vlaneseq
    %v7247 = vshrl.u32 %v7246, 7
    %v7248 = vsub.s32 %v7151, %v7247
    %v7249 = vrot.slane %v7074, %v7248
    %v7250 = vsel %vm7156, %v7249, %v7245
    %v7251 = vlaneseq
    %v7252 = vshrl.u32 %v7251, 7
    %v7253 = vsub.s32 %v7158, %v7252
    %v7254 = vrot.slane %v7077, %v7253
    %v7255 = vsel %vm7163, %v7254, %v7250
    %v7256 = vlaneseq
    %v7257 = vshrl.u32 %v7256, 7
    %v7258 = vsub.s32 %v7165, %v7257
    %v7259 = vrot.slane %v7080, %v7258
    %v7260 = vsel %vm7170, %v7259, %v7255
    %v7261 = vlaneseq
    %v7262 = vshrl.u32 %v7261, 7
    %v7263 = vsub.s32 %v7172, %v7262
    %v7264 = vrot.slane %v7083, %v7263
    %v7265 = vsel %vm7177, %v7264, %v7260
    %v7266 = vlaneseq
    %v7267 = vshrl.u32 %v7266, 7
    %v7268 = vsub.s32 %v7179, %v7267
    %v7269 = vrot.slane %v7086, %v7268
    %v7270 = vsel %vm7184, %v7269, %v7265
    %v7271 = vlaneseq
    %v7272 = vshrl.u32 %v7271, 7
    %v7273 = vsub.s32 %v7186, %v7272
    %v7274 = vrot.slane %v7089, %v7273
    %v7275 = vsel %vm7191, %v7274, %v7270
    %v7276 = vlaneseq
    %v7277 = vshrl.u32 %v7276, 7
    %v7278 = vsub.s32 %v7193, %v7277
    %v7279 = vrot.slane %v7092, %v7278
    %v7280 = vsel %vm7198, %v7279, %v7275
    %v7281 = vlaneseq
    %v7282 = vshrl.u32 %v7281, 7
    %v7283 = vsub.s32 %v7200, %v7282
    %v7284 = vrot.slane %v7095, %v7283
    %v7285 = vsel %vm7205, %v7284, %v7280
    %v7286 = vcombine.low %v7206, %v7285
    %v7288 = vunpack.c.l.s4 1966171168
    %v7289 = vunpack.c.0.s8 %v7288
    %v7290 = vlaneseq
    %v7291 = vshrl.u32 %v7290, 7
    %v7292 = vsub.s32 %v7289, %v7291
    %v7293 = vrot.slane %v7286, %v7292
    %v7295 = vunpack.c.l.s4 1966171168
    %v7296 = vunpack.c.0.s8 %v7295
    %v7297 = vlaneseq
    %v7298 = vshrl.u32 %v7297, 7
    %v7299 = vsub.s32 %v7296, %v7298
    %v7300 = vrot.slane %v7293, %v7299
    %v7302 = vlaneseq
    %vm7303 = vcmp.ge.s32.totalorder %v7302, 0
    %vm7304 = vcmp.lt.s32.totalorder %v7302, 256
    %vm7305 = vmand %vm7303, %vm7304
    %7306 = vst.msk [vmem:[#allocation3] sm:$0x3] %vm7305, %v7300
    // Predicated region
    $region30: #{tpu_custom_call.1} parent=1 // pred_check
      _
    $region31: #{tpu_custom_call.1} parent=1 // pred_check_branch
      %7308 = sbr.rel (0) target = $region33
    $region32: #{tpu_custom_call.1} parent=1 // pred_region
      %s7310 = ssub.s32 32, 32
      %7311 = vsyncadd [#allocation4], %s7310
      %s7313 = sshll.u32 [#allocation3], 4
      %s7314 = int_to_ptr.vmem [resolvable:$true] %s7313
      %7316 = dma.vmem_to_hbm [thread:$0]  %s7314, 32, %s7, [#allocation4]
    $region33: #{tpu_custom_call.1} parent=1 // pred_fallthru
      _
    // Predicated region
    $region34: #{tpu_custom_call.1} parent=1 // pred_check
      _
    $region35: #{tpu_custom_call.1} parent=1 // pred_check_branch
      %7318 = sbr.rel (0) target = $region37
    $region36: #{tpu_custom_call.1} parent=1 // pred_region
      %7319 = dma.done [#allocation4], 32
    $region37: #{tpu_custom_call.1} parent=1 // pred_fallthru
      _
    %7320 = vsyncpa [#allocation4], 1

</llo_original>
